<compile_context>
chip_gen: v7x
topology: tpu7x:2x2x1
jax: 0.10.0
libtpu: 0.0.40
codegen_flags: <defaults>
</compile_context>

<pallas_src>
import functools

import jax
import jax.numpy as jnp
from jax import lax
from jax.experimental import pallas as pl
from jax.experimental.pallas import tpu as pltpu


def _relu(x):
    return jnp.maximum(x, 0.0)


def _sigmoid(x):
    # numerically stable sigmoid
    z = jnp.exp(-jnp.abs(x))
    return jnp.where(x >= 0, 1.0 / (1.0 + z), z / (1.0 + z))


def _round_up(n, m):
    return ((n + m - 1) // m) * m


def deep_rna_dti_kernel(
    # ---- per-batch-tile inputs ----
    rna_ref,      # (TB, Lr, 640)  bf16
    rmask_ref,    # (TB, Lr, 1)    f32   (rna token in 4..7)
    comp_ref,     # (TB, Lc, 300)  bf16  (unpadded compound features)
    cmask_ref,    # (TB, Lc, 1)    f32   (to_dense_batch validity)
    # ---- parameters (block index constant across the grid) ----
    wr_ref, br_ref,        # rna_linear        (640,128) bf16, (1,128) f32
    wc1_ref, bc1_ref,      # compound_linear   (300,128) bf16, (1,128) f32
    wc2_ref, bc2_ref,      # compound_linear2  (128,128) bf16, (1,128) f32
    aw_ref,                # att_weight1 @ att_weight2  (128,128) bf16
    w0_ref, b0_ref,        # shared_linear0    (128,64) bf16, (1,64) f32
    w1_ref, b1_ref,        # shared_linear1    (64,32)  bf16, (1,32) f32
    wd1_ref, bd1_ref,      # dti_linear1       (32,16) f32, (1,16) f32
    wd2_ref, bd2_ref,      # dti_linear2       (16,1)  f32, (1,1)  f32
    wb1_ref, bb1_ref,      # bs_linear1        (32,16) bf16, (1,16) f32
    wb2_ref, bb2_ref,      # bs_linear2        (16,1)  bf16, (1,1)  f32
    # ---- output ----
    out_ref,               # (TB, 1, Lr1p) f32; lanes [0,Lr) BS prob, lane Lr raw DTI logit
):
    f32, bf16 = jnp.float32, jnp.bfloat16
    TB, Lr, Dr = rna_ref.shape
    Lc, Dc = comp_ref.shape[1], comp_ref.shape[2]
    Lr1, Lc1 = Lr + 1, Lc + 1
    Lr1p, Lc1p = _round_up(Lr1, 8), _round_up(Lc1, 8)

    # ---------------- RNA branch (batch folded into matmul M) ----------------
    x = rna_ref[...].reshape(TB * Lr, Dr)                                        # bf16
    r = _relu(jnp.dot(x, wr_ref[...], preferred_element_type=f32) + br_ref[...])
    r = r * rmask_ref[...].reshape(TB * Lr, 1)                                   # (TB*Lr, 128)
    r3 = r.reshape(TB, Lr, 128)
    r_glob = jnp.sum(r3, axis=1, keepdims=True) * (1.0 / Lr)                     # (TB, 1, 128)
    rna_pieces = [r3, r_glob]
    if Lr1p > Lr1:
        rna_pieces.append(jnp.zeros((TB, Lr1p - Lr1, 128), f32))
    rna_cat = jnp.concatenate(rna_pieces, axis=1).astype(bf16)                   # (TB, Lr1p, 128)

    # ---------------- compound branch ----------------
    c = comp_ref[...].reshape(TB * Lc, Dc)                                       # bf16, K=300
    c = _relu(jnp.dot(c, wc1_ref[...], preferred_element_type=f32) + bc1_ref[...])
    c = _relu(jnp.dot(c.astype(bf16), wc2_ref[...], preferred_element_type=f32) + bc2_ref[...])
    c = c * cmask_ref[...].reshape(TB * Lc, 1)                                   # (TB*Lc, 128)
    c3 = c.reshape(TB, Lc, 128)
    c_glob = jnp.sum(c3, axis=1, keepdims=True) * (1.0 / Lc)                     # (TB, 1, 128)
    comp_pieces = [c3, c_glob]
    if Lc1p > Lc1:
        comp_pieces.append(jnp.zeros((TB, Lc1p - Lc1, 128), f32))
    comp_cat = jnp.concatenate(comp_pieces, axis=1).astype(bf16)                 # (TB, Lc1p, 128)

    # ---------------- bilinear attention: rna @ (aw1@aw2) @ comp^T, all on the MXU ----
    rw = jnp.dot(rna_cat.reshape(TB * Lr1p, 128), aw_ref[...],
                 preferred_element_type=f32)                                     # (TB*Lr1p, 128)
    rw3 = rw.reshape(TB, Lr1p, 128).astype(bf16)
    att = jnp.einsum("brd,bcd->brc", rw3, comp_cat,
                     preferred_element_type=f32)                                 # (TB, Lr1p, Lc1p)

    # ---------------- interaction tensor (bf16) + shared MLP (one big-M matmul) ------
    rcmp = (att.astype(bf16)[..., None]
            * rna_cat[:, :, None, :]
            * comp_cat[:, None, :, :])                                           # (TB,Lr1p,Lc1p,128) bf16
    N = TB * Lr1p * Lc1p
    rc0 = _relu(jnp.dot(rcmp.reshape(N, 128), w0_ref[...],
                        preferred_element_type=f32) + b0_ref[...])               # (N, 64)
    rc1 = _relu(jnp.dot(rc0.astype(bf16), w1_ref[...],
                        preferred_element_type=f32) + b1_ref[...])               # (N, 32)

    # value of the artificial zero-padded rows/cols (inputs exactly 0; same dtype path)
    rc0_pad = _relu(b0_ref[...])                                                 # (1, 64)
    rc_pad = _relu(jnp.dot(rc0_pad.astype(bf16), w1_ref[...],
                           preferred_element_type=f32) + b1_ref[...])            # (1, 32)

    # ---------------- DTI classifier: mean over the (Lr1 x Lc1) positions ----------
    rc3 = rc1.reshape(TB, Lr1p * Lc1p, 32)
    full_sum = jnp.sum(rc3, axis=1)                                              # (TB, 32)
    n_pad_cells = Lr1p * Lc1p - Lr1 * Lc1
    att_mean = (full_sum - float(n_pad_cells) * rc_pad) * (1.0 / (Lr1 * Lc1))
    hd = _relu(jnp.dot(att_mean, wd1_ref[...], preferred_element_type=f32) + bd1_ref[...])
    dti = jnp.dot(hd, wd2_ref[...], preferred_element_type=f32) + bd2_ref[...]   # (TB, 1) raw logit

    # ---------------- BS classifier --------------------------------------------------
    sig = _sigmoid(dti)                                                          # (TB, 1)
    # sig is a per-batch scalar, so it commutes with bs_linear1: Y = rc1 @ wb1 once.
    y = jnp.dot(rc1.astype(bf16), wb1_ref[...], preferred_element_type=f32)      # (N, 16)
    y3 = y.reshape(TB, Lr1p * Lc1p, 16)
    hb = _relu(sig[:, :, None] * y3 + bb1_ref[...])                              # (TB, ., 16)
    # project 16 -> 1 early (MXU), then reduce the compound axis on a scalar field
    s = jnp.dot(hb.reshape(N, 16).astype(bf16), wb2_ref[...],
                preferred_element_type=f32)                                      # (N, 1)
    s4 = s.reshape(TB, Lr1p, Lc1p, 1)
    colmask = lax.broadcasted_iota(jnp.int32, (1, 1, Lc1p, 1), 2) < Lc           # real compound cols
    s_sum = jnp.sum(jnp.where(colmask, s4, 0.0), axis=2)                         # (TB, Lr1p, 1)
    bs_logit = jnp.sum(s_sum, axis=-1) * (1.0 / Lc) + bb2_ref[...]               # (TB, Lr1p)
    bs_prob = _sigmoid(bs_logit)

    # fold the raw DTI logit into the global-token lane (discarded by the BS task)
    lane = lax.broadcasted_iota(jnp.int32, (TB, Lr1p), 1)
    out = jnp.where(lane == Lr, dti, bs_prob)                                    # (TB, Lr1p)
    out_ref[...] = out[:, None, :]                                               # (TB, 1, Lr1p)


_PARAM_SHAPES = (
    ("wr", (640, 128)), ("br", (1, 128)),
    ("wc1", (300, 128)), ("bc1", (1, 128)),
    ("wc2", (128, 128)), ("bc2", (1, 128)),
    ("aw1", (128, 8)), ("aw2", (8, 128)),
    ("w0", (128, 64)), ("b0", (1, 64)),
    ("w1", (64, 32)), ("b1", (1, 32)),
    ("wd1", (32, 16)), ("bd1", (1, 16)),
    ("wd2", (16, 1)), ("bd2", (1, 1)),
    ("wb1", (32, 16)), ("bb1", (1, 16)),
    ("wb2", (16, 1)), ("bb2", (1, 1)),
)


def init_params(key):
    keys = jax.random.split(key, len(_PARAM_SHAPES))
    params = []
    for k, (_, shp) in zip(keys, _PARAM_SHAPES):
        fan_in = shp[0] if shp[0] > 1 else shp[1]
        params.append(
            (jax.random.normal(k, shp, jnp.float32) / jnp.sqrt(float(fan_in))).astype(jnp.float32))
    return tuple(params)


def _vmem_limit_bytes():
    # Leave headroom on v7x (64 MiB physical VMEM); use the larger VMEM on v5e/v6e.
    try:
        cap = getattr(pltpu.get_tpu_info(), "vmem_capacity_bytes", None)
        if cap:
            return min(int(cap) * 3 // 4, 112 * 1024 * 1024)
    except Exception:
        pass
    return 64 * 1024 * 1024


def _pick_batch_tile(B, requested):
    if requested is not None:
        return requested if (requested >= 1 and B % requested == 0) else 1
    # Largest divisor of B that keeps >= 2 grid steps (both v7x TensorCores busy and
    # DMA/compute overlap). On 1-TC chips (v5e/v6e) pass a larger batch_tile explicitly.
    best = 1
    for tb in range(1, max(B // 2, 1) + 1):
        if B % tb == 0 and B // tb >= 2:
            best = tb
    return best


@functools.partial(jax.jit, static_argnames=("task", "batch_tile"))
def deep_rna_dti_forward(rna_tok, rna_repr, comp_feat, comp_mask, params,
                         task="bs", batch_tile=None):
    f32, bf16 = jnp.float32, jnp.bfloat16
    B, Lr = rna_tok.shape
    Lc, Dc = comp_feat.shape[1], comp_feat.shape[2]
    Lr1p = _round_up(Lr + 1, 8)
    TB = _pick_batch_tile(B, batch_tile)

    (wr, br, wc1, bc1, wc2, bc2, aw1, aw2, w0, b0, w1, b1,
     wd1, bd1, wd2, bd2, wb1, bb1, wb2, bb2) = params

    # wrapper-side layout plumbing / parameter-only precompute (no padded HBM copies)
    rna_mask = ((rna_tok >= 4) & (rna_tok <= 7)).astype(f32)[:, :, None]         # (B, Lr, 1)
    comp_mask3 = comp_mask.astype(f32)[:, :, None]                               # (B, Lc, 1)
    rna_repr_bf = rna_repr.astype(bf16)
    comp_feat_bf = comp_feat.astype(bf16)                                        # unpadded (ragged K)

    aw = jnp.dot(aw1, aw2).astype(bf16)                                          # (128, 128)

    kernel_params = (
        wr.astype(bf16), br,
        wc1.astype(bf16), bc1,
        wc2.astype(bf16), bc2,
        aw,
        w0.astype(bf16), b0,
        w1.astype(bf16), b1,
        wd1, bd1, wd2, bd2,
        wb1.astype(bf16), bb1,
        wb2.astype(bf16), bb2)

    def batched3(L, D):
        return pl.BlockSpec((TB, L, D), lambda b: (b, 0, 0))

    def full2(shape):
        return pl.BlockSpec(shape, lambda b: (0, 0))

    in_specs = ([batched3(Lr, 640), batched3(Lr, 1), batched3(Lc, Dc), batched3(Lc, 1)]
                + [full2(p.shape) for p in kernel_params])
    out_specs = pl.BlockSpec((TB, 1, Lr1p), lambda b: (b, 0, 0))
    out_shape = jax.ShapeDtypeStruct((B, 1, Lr1p), f32)

    grid_spec = pltpu.PrefetchScalarGridSpec(
        num_scalar_prefetch=0,
        grid=(B // TB,),
        in_specs=in_specs,
        out_specs=out_specs,
    )

    fused = pl.pallas_call(
        deep_rna_dti_kernel,
        out_shape=out_shape,
        grid_spec=grid_spec,
        compiler_params=pltpu.CompilerParams(
            dimension_semantics=("parallel",),
            vmem_limit_bytes=_vmem_limit_bytes(),
        ),
    )(rna_repr_bf, rna_mask, comp_feat_bf, comp_mask3, *kernel_params)

    if task == "dti":
        return fused[:, 0, Lr:Lr + 1]                          # (B, 1) raw logit
    elif task == "bs":
        # lanes [0, Lr) are the per-RNA-position BS probabilities -> (B, Lr, 1)
        return jnp.transpose(fused[:, :, :Lr], (0, 2, 1))
    else:
        raise ValueError(f"unknown task {task}")


if __name__ == "__main__":
    key = jax.random.PRNGKey(0)
    k_tok, k_rna, k_comp, k_par = jax.random.split(key, 4)

    B, Lr, Lc = 4, 16, 16
    rna_tok = jax.random.randint(k_tok, (B, Lr), 0, 12, dtype=jnp.int32)
    rna_repr = jax.random.normal(k_rna, (B, Lr, 640), jnp.float32)
    comp_feat = jax.random.normal(k_comp, (B, Lc, 300), jnp.float32)
    # to_dense_batch style validity mask (varying number of real nodes per graph)
    n_nodes = jnp.array([Lc, Lc - 3, Lc, Lc - 5], jnp.int32)
    comp_mask = (jnp.arange(Lc)[None, :] < n_nodes[:, None]).astype(jnp.float32)

    params = init_params(k_par)

    bs_pred = deep_rna_dti_forward(rna_tok, rna_repr, comp_feat, comp_mask, params, task="bs")
    dti_pred = deep_rna_dti_forward(rna_tok, rna_repr, comp_feat, comp_mask, params, task="dti")
    jax.block_until_ready((bs_pred, dti_pred))

    assert bs_pred.shape == (B, Lr, 1)
    assert dti_pred.shape == (B, 1)
    assert bool(jnp.all(jnp.isfinite(bs_pred)))
    assert bool(jnp.all(jnp.isfinite(dti_pred)))
    assert bool(jnp.all((bs_pred >= 0.0) & (bs_pred <= 1.0)))
    print("KERNEL_OK")
</pallas_src>

<mosaic_0001>
module attributes {stable_mosaic.version = 11 : i64} {
  func.func @deep_rna_dti_kernel(%arg0: i32, %arg1: memref<2x16x640xbf16, #tpu.memory_space<vmem>>, %arg2: memref<2x16x1xf32, #tpu.memory_space<vmem>>, %arg3: memref<2x16x300xbf16, #tpu.memory_space<vmem>>, %arg4: memref<2x16x1xf32, #tpu.memory_space<vmem>>, %arg5: memref<640x128xbf16, #tpu.memory_space<vmem>>, %arg6: memref<1x128xf32, #tpu.memory_space<vmem>>, %arg7: memref<300x128xbf16, #tpu.memory_space<vmem>>, %arg8: memref<1x128xf32, #tpu.memory_space<vmem>>, %arg9: memref<128x128xbf16, #tpu.memory_space<vmem>>, %arg10: memref<1x128xf32, #tpu.memory_space<vmem>>, %arg11: memref<128x128xbf16, #tpu.memory_space<vmem>>, %arg12: memref<128x64xbf16, #tpu.memory_space<vmem>>, %arg13: memref<1x64xf32, #tpu.memory_space<vmem>>, %arg14: memref<64x32xbf16, #tpu.memory_space<vmem>>, %arg15: memref<1x32xf32, #tpu.memory_space<vmem>>, %arg16: memref<32x16xf32, #tpu.memory_space<vmem>>, %arg17: memref<1x16xf32, #tpu.memory_space<vmem>>, %arg18: memref<16x1xf32, #tpu.memory_space<vmem>>, %arg19: memref<1x1xf32, #tpu.memory_space<vmem>>, %arg20: memref<32x16xbf16, #tpu.memory_space<vmem>>, %arg21: memref<1x16xf32, #tpu.memory_space<vmem>>, %arg22: memref<16x1xbf16, #tpu.memory_space<vmem>>, %arg23: memref<1x1xf32, #tpu.memory_space<vmem>>, %arg24: memref<2x1x24xf32, #tpu.memory_space<vmem>>) attributes {dimension_semantics = [#tpu.dimension_semantics<parallel>], iteration_bounds = array<i64: 2>, scalar_prefetch = 0 : i64, scratch_operands = 0 : i64, tpu.core_type = #tpu.core_type<tc>, window_params = [{transform_indices = @transform_0, window_bounds = array<i64: 2, 16, 640>}, {transform_indices = @transform_1, window_bounds = array<i64: 2, 16, 1>}, {transform_indices = @transform_2, window_bounds = array<i64: 2, 16, 300>}, {transform_indices = @transform_3, window_bounds = array<i64: 2, 16, 1>}, {pipeline_mode = #tpu.pipeline_mode<synchronous>, transform_indices = @transform_4, window_bounds = array<i64: 640, 128>}, {pipeline_mode = #tpu.pipeline_mode<synchronous>, transform_indices = @transform_5, window_bounds = array<i64: 1, 128>}, {pipeline_mode = #tpu.pipeline_mode<synchronous>, transform_indices = @transform_6, window_bounds = array<i64: 300, 128>}, {pipeline_mode = #tpu.pipeline_mode<synchronous>, transform_indices = @transform_7, window_bounds = array<i64: 1, 128>}, {pipeline_mode = #tpu.pipeline_mode<synchronous>, transform_indices = @transform_8, window_bounds = array<i64: 128, 128>}, {pipeline_mode = #tpu.pipeline_mode<synchronous>, transform_indices = @transform_9, window_bounds = array<i64: 1, 128>}, {pipeline_mode = #tpu.pipeline_mode<synchronous>, transform_indices = @transform_10, window_bounds = array<i64: 128, 128>}, {pipeline_mode = #tpu.pipeline_mode<synchronous>, transform_indices = @transform_11, window_bounds = array<i64: 128, 64>}, {pipeline_mode = #tpu.pipeline_mode<synchronous>, transform_indices = @transform_12, window_bounds = array<i64: 1, 64>}, {pipeline_mode = #tpu.pipeline_mode<synchronous>, transform_indices = @transform_13, window_bounds = array<i64: 64, 32>}, {pipeline_mode = #tpu.pipeline_mode<synchronous>, transform_indices = @transform_14, window_bounds = array<i64: 1, 32>}, {pipeline_mode = #tpu.pipeline_mode<synchronous>, transform_indices = @transform_15, window_bounds = array<i64: 32, 16>}, {pipeline_mode = #tpu.pipeline_mode<synchronous>, transform_indices = @transform_16, window_bounds = array<i64: 1, 16>}, {pipeline_mode = #tpu.pipeline_mode<synchronous>, transform_indices = @transform_17, window_bounds = array<i64: 16, 1>}, {pipeline_mode = #tpu.pipeline_mode<synchronous>, transform_indices = @transform_18, window_bounds = array<i64: 1, 1>}, {pipeline_mode = #tpu.pipeline_mode<synchronous>, transform_indices = @transform_19, window_bounds = array<i64: 32, 16>}, {pipeline_mode = #tpu.pipeline_mode<synchronous>, transform_indices = @transform_20, window_bounds = array<i64: 1, 16>}, {pipeline_mode = #tpu.pipeline_mode<synchronous>, transform_indices = @transform_21, window_bounds = array<i64: 16, 1>}, {pipeline_mode = #tpu.pipeline_mode<synchronous>, transform_indices = @transform_22, window_bounds = array<i64: 1, 1>}, {transform_indices = @transform_23, window_bounds = array<i64: 2, 1, 24>}]} {
    %c0 = arith.constant 0 : index
    %c0_0 = arith.constant 0 : index
    %c0_1 = arith.constant 0 : index
    %0 = vector.load %arg1[%c0, %c0_0, %c0_1] : memref<2x16x640xbf16, #tpu.memory_space<vmem>>, vector<2x16x640xbf16>
    %1 = vector.shape_cast %0 : vector<2x16x640xbf16> to vector<32x640xbf16>
    %c0_2 = arith.constant 0 : index
    %c0_3 = arith.constant 0 : index
    %2 = vector.load %arg5[%c0_2, %c0_3] : memref<640x128xbf16, #tpu.memory_space<vmem>>, vector<640x128xbf16>
    %cst = arith.constant dense<0.000000e+00> : vector<32x128xf32>
    %3 = tpu.matmul %1, %2, %cst {dimension_numbers = #tpu.dot_dimension_numbers<[1], [0], [0], [1], [0, 0, 1, 1], [], []>} : vector<32x640xbf16>, vector<640x128xbf16>, vector<32x128xf32> -> vector<32x128xf32>
    %c0_4 = arith.constant 0 : index
    %c0_5 = arith.constant 0 : index
    %4 = vector.load %arg6[%c0_4, %c0_5] : memref<1x128xf32, #tpu.memory_space<vmem>>, vector<1x128xf32>
    %5 = vector.broadcast %4 : vector<1x128xf32> to vector<32x128xf32>
    %6 = arith.addf %3, %5 : vector<32x128xf32>
    %cst_6 = arith.constant 0.000000e+00 : f32
    %7 = vector.broadcast %cst_6 : f32 to vector<32x128xf32>
    %8 = arith.maximumf %6, %7 : vector<32x128xf32>
    %c0_7 = arith.constant 0 : index
    %c0_8 = arith.constant 0 : index
    %c0_9 = arith.constant 0 : index
    %9 = vector.load %arg2[%c0_7, %c0_8, %c0_9] : memref<2x16x1xf32, #tpu.memory_space<vmem>>, vector<2x16x1xf32>
    %10 = vector.shape_cast %9 : vector<2x16x1xf32> to vector<32x1xf32>
    %11 = vector.broadcast %10 : vector<32x1xf32> to vector<32x128xf32>
    %12 = arith.mulf %8, %11 : vector<32x128xf32>
    %13 = vector.shape_cast %12 : vector<32x128xf32> to vector<2x16x128xf32>
    %cst_10 = arith.constant dense<0.000000e+00> : vector<2x128xf32>
    %14 = vector.multi_reduction <add>, %13, %cst_10 [1] : vector<2x16x128xf32> to vector<2x128xf32>
    %15 = vector.shape_cast %14 : vector<2x128xf32> to vector<2x1x128xf32>
    %cst_11 = arith.constant 6.250000e-02 : f32
    %16 = vector.broadcast %cst_11 : f32 to vector<2x1x128xf32>
    %17 = arith.mulf %15, %16 : vector<2x1x128xf32>
    %cst_12 = arith.constant 0.000000e+00 : f32
    %18 = vector.broadcast %cst_12 : f32 to vector<2x7x128xf32>
    %19 = tpu.concatenate %13, %17, %18 in 1 : vector<2x16x128xf32>, vector<2x1x128xf32>, vector<2x7x128xf32> -> vector<2x24x128xf32>
    %20 = arith.truncf %19 : vector<2x24x128xf32> to vector<2x24x128xbf16>
    %c0_13 = arith.constant 0 : index
    %c0_14 = arith.constant 0 : index
    %c0_15 = arith.constant 0 : index
    %21 = vector.load %arg3[%c0_13, %c0_14, %c0_15] : memref<2x16x300xbf16, #tpu.memory_space<vmem>>, vector<2x16x300xbf16>
    %22 = vector.shape_cast %21 : vector<2x16x300xbf16> to vector<32x300xbf16>
    %c0_16 = arith.constant 0 : index
    %c0_17 = arith.constant 0 : index
    %23 = vector.load %arg7[%c0_16, %c0_17] : memref<300x128xbf16, #tpu.memory_space<vmem>>, vector<300x128xbf16>
    %cst_18 = arith.constant dense<0.000000e+00> : vector<32x128xf32>
    %24 = tpu.matmul %22, %23, %cst_18 {dimension_numbers = #tpu.dot_dimension_numbers<[1], [0], [0], [1], [0, 0, 1, 1], [], []>} : vector<32x300xbf16>, vector<300x128xbf16>, vector<32x128xf32> -> vector<32x128xf32>
    %c0_19 = arith.constant 0 : index
    %c0_20 = arith.constant 0 : index
    %25 = vector.load %arg8[%c0_19, %c0_20] : memref<1x128xf32, #tpu.memory_space<vmem>>, vector<1x128xf32>
    %26 = vector.broadcast %25 : vector<1x128xf32> to vector<32x128xf32>
    %27 = arith.addf %24, %26 : vector<32x128xf32>
    %cst_21 = arith.constant 0.000000e+00 : f32
    %28 = vector.broadcast %cst_21 : f32 to vector<32x128xf32>
    %29 = arith.maximumf %27, %28 : vector<32x128xf32>
    %30 = arith.truncf %29 : vector<32x128xf32> to vector<32x128xbf16>
    %c0_22 = arith.constant 0 : index
    %c0_23 = arith.constant 0 : index
    %31 = vector.load %arg9[%c0_22, %c0_23] : memref<128x128xbf16, #tpu.memory_space<vmem>>, vector<128x128xbf16>
    %cst_24 = arith.constant dense<0.000000e+00> : vector<32x128xf32>
    %32 = tpu.matmul %30, %31, %cst_24 {dimension_numbers = #tpu.dot_dimension_numbers<[1], [0], [0], [1], [0, 0, 1, 1], [], []>} : vector<32x128xbf16>, vector<128x128xbf16>, vector<32x128xf32> -> vector<32x128xf32>
    %c0_25 = arith.constant 0 : index
    %c0_26 = arith.constant 0 : index
    %33 = vector.load %arg10[%c0_25, %c0_26] : memref<1x128xf32, #tpu.memory_space<vmem>>, vector<1x128xf32>
    %34 = vector.broadcast %33 : vector<1x128xf32> to vector<32x128xf32>
    %35 = arith.addf %32, %34 : vector<32x128xf32>
    %cst_27 = arith.constant 0.000000e+00 : f32
    %36 = vector.broadcast %cst_27 : f32 to vector<32x128xf32>
    %37 = arith.maximumf %35, %36 : vector<32x128xf32>
    %c0_28 = arith.constant 0 : index
    %c0_29 = arith.constant 0 : index
    %c0_30 = arith.constant 0 : index
    %38 = vector.load %arg4[%c0_28, %c0_29, %c0_30] : memref<2x16x1xf32, #tpu.memory_space<vmem>>, vector<2x16x1xf32>
    %39 = vector.shape_cast %38 : vector<2x16x1xf32> to vector<32x1xf32>
    %40 = vector.broadcast %39 : vector<32x1xf32> to vector<32x128xf32>
    %41 = arith.mulf %37, %40 : vector<32x128xf32>
    %42 = vector.shape_cast %41 : vector<32x128xf32> to vector<2x16x128xf32>
    %cst_31 = arith.constant dense<0.000000e+00> : vector<2x128xf32>
    %43 = vector.multi_reduction <add>, %42, %cst_31 [1] : vector<2x16x128xf32> to vector<2x128xf32>
    %44 = vector.shape_cast %43 : vector<2x128xf32> to vector<2x1x128xf32>
    %cst_32 = arith.constant 6.250000e-02 : f32
    %45 = vector.broadcast %cst_32 : f32 to vector<2x1x128xf32>
    %46 = arith.mulf %44, %45 : vector<2x1x128xf32>
    %cst_33 = arith.constant 0.000000e+00 : f32
    %47 = vector.broadcast %cst_33 : f32 to vector<2x7x128xf32>
    %48 = tpu.concatenate %42, %46, %47 in 1 : vector<2x16x128xf32>, vector<2x1x128xf32>, vector<2x7x128xf32> -> vector<2x24x128xf32>
    %49 = arith.truncf %48 : vector<2x24x128xf32> to vector<2x24x128xbf16>
    %50 = vector.shape_cast %20 : vector<2x24x128xbf16> to vector<48x128xbf16>
    %c0_34 = arith.constant 0 : index
    %c0_35 = arith.constant 0 : index
    %51 = vector.load %arg11[%c0_34, %c0_35] : memref<128x128xbf16, #tpu.memory_space<vmem>>, vector<128x128xbf16>
    %cst_36 = arith.constant dense<0.000000e+00> : vector<48x128xf32>
    %52 = tpu.matmul %50, %51, %cst_36 {dimension_numbers = #tpu.dot_dimension_numbers<[1], [0], [0], [1], [0, 0, 1, 1], [], []>} : vector<48x128xbf16>, vector<128x128xbf16>, vector<48x128xf32> -> vector<48x128xf32>
    %53 = vector.shape_cast %52 : vector<48x128xf32> to vector<2x24x128xf32>
    %54 = arith.truncf %53 : vector<2x24x128xf32> to vector<2x24x128xbf16>
    "tpu.trace_start"() <{level = 10 : i32, message = "brd,bcd->brc"}> : () -> ()
    %cst_37 = arith.constant dense<0.000000e+00> : vector<2x24x24xf32>
    %55 = tpu.matmul %54, %49, %cst_37 {dimension_numbers = #tpu.dot_dimension_numbers<[2], [2], [1], [1], [0, 0, 0, 1, 1, 1], [0], [0]>} : vector<2x24x128xbf16>, vector<2x24x128xbf16>, vector<2x24x24xf32> -> vector<2x24x24xf32>
    "tpu.trace_stop"() : () -> ()
    %56 = arith.truncf %55 : vector<2x24x24xf32> to vector<2x24x24xbf16>
    %57 = vector.shape_cast %56 : vector<2x24x24xbf16> to vector<2x24x24x1xbf16>
    %58 = vector.shape_cast %20 : vector<2x24x128xbf16> to vector<2x24x1x128xbf16>
    %59 = vector.broadcast %57 : vector<2x24x24x1xbf16> to vector<2x24x24x128xbf16>
    %60 = vector.broadcast %58 : vector<2x24x1x128xbf16> to vector<2x24x24x128xbf16>
    %61 = arith.mulf %59, %60 : vector<2x24x24x128xbf16>
    %62 = vector.shape_cast %49 : vector<2x24x128xbf16> to vector<2x1x24x128xbf16>
    %63 = vector.broadcast %62 : vector<2x1x24x128xbf16> to vector<2x24x24x128xbf16>
    %64 = arith.mulf %61, %63 : vector<2x24x24x128xbf16>
    %65 = vector.shape_cast %64 : vector<2x24x24x128xbf16> to vector<1152x128xbf16>
    %c0_38 = arith.constant 0 : index
    %c0_39 = arith.constant 0 : index
    %66 = vector.load %arg12[%c0_38, %c0_39] : memref<128x64xbf16, #tpu.memory_space<vmem>>, vector<128x64xbf16>
    %cst_40 = arith.constant dense<0.000000e+00> : vector<1152x64xf32>
    %67 = tpu.matmul %65, %66, %cst_40 {dimension_numbers = #tpu.dot_dimension_numbers<[1], [0], [0], [1], [0, 0, 1, 1], [], []>} : vector<1152x128xbf16>, vector<128x64xbf16>, vector<1152x64xf32> -> vector<1152x64xf32>
    %c0_41 = arith.constant 0 : index
    %c0_42 = arith.constant 0 : index
    %68 = vector.load %arg13[%c0_41, %c0_42] : memref<1x64xf32, #tpu.memory_space<vmem>>, vector<1x64xf32>
    %69 = vector.broadcast %68 : vector<1x64xf32> to vector<1152x64xf32>
    %70 = arith.addf %67, %69 : vector<1152x64xf32>
    %cst_43 = arith.constant 0.000000e+00 : f32
    %71 = vector.broadcast %cst_43 : f32 to vector<1152x64xf32>
    %72 = arith.maximumf %70, %71 : vector<1152x64xf32>
    %73 = arith.truncf %72 : vector<1152x64xf32> to vector<1152x64xbf16>
    %c0_44 = arith.constant 0 : index
    %c0_45 = arith.constant 0 : index
    %74 = vector.load %arg14[%c0_44, %c0_45] : memref<64x32xbf16, #tpu.memory_space<vmem>>, vector<64x32xbf16>
    %cst_46 = arith.constant dense<0.000000e+00> : vector<1152x32xf32>
    %75 = tpu.matmul %73, %74, %cst_46 {dimension_numbers = #tpu.dot_dimension_numbers<[1], [0], [0], [1], [0, 0, 1, 1], [], []>} : vector<1152x64xbf16>, vector<64x32xbf16>, vector<1152x32xf32> -> vector<1152x32xf32>
    %c0_47 = arith.constant 0 : index
    %c0_48 = arith.constant 0 : index
    %76 = vector.load %arg15[%c0_47, %c0_48] : memref<1x32xf32, #tpu.memory_space<vmem>>, vector<1x32xf32>
    %77 = vector.broadcast %76 : vector<1x32xf32> to vector<1152x32xf32>
    %78 = arith.addf %75, %77 : vector<1152x32xf32>
    %cst_49 = arith.constant 0.000000e+00 : f32
    %79 = vector.broadcast %cst_49 : f32 to vector<1152x32xf32>
    %80 = arith.maximumf %78, %79 : vector<1152x32xf32>
    %c0_50 = arith.constant 0 : index
    %c0_51 = arith.constant 0 : index
    %81 = vector.load %arg13[%c0_50, %c0_51] : memref<1x64xf32, #tpu.memory_space<vmem>>, vector<1x64xf32>
    %cst_52 = arith.constant 0.000000e+00 : f32
    %82 = vector.broadcast %cst_52 : f32 to vector<1x64xf32>
    %83 = arith.maximumf %81, %82 : vector<1x64xf32>
    %84 = arith.truncf %83 : vector<1x64xf32> to vector<1x64xbf16>
    %c0_53 = arith.constant 0 : index
    %c0_54 = arith.constant 0 : index
    %85 = vector.load %arg14[%c0_53, %c0_54] : memref<64x32xbf16, #tpu.memory_space<vmem>>, vector<64x32xbf16>
    %cst_55 = arith.constant dense<0.000000e+00> : vector<1x32xf32>
    %86 = tpu.matmul %84, %85, %cst_55 {dimension_numbers = #tpu.dot_dimension_numbers<[1], [0], [0], [1], [0, 0, 1, 1], [], []>} : vector<1x64xbf16>, vector<64x32xbf16>, vector<1x32xf32> -> vector<1x32xf32>
    %c0_56 = arith.constant 0 : index
    %c0_57 = arith.constant 0 : index
    %87 = vector.load %arg15[%c0_56, %c0_57] : memref<1x32xf32, #tpu.memory_space<vmem>>, vector<1x32xf32>
    %88 = arith.addf %86, %87 : vector<1x32xf32>
    %cst_58 = arith.constant 0.000000e+00 : f32
    %89 = vector.broadcast %cst_58 : f32 to vector<1x32xf32>
    %90 = arith.maximumf %88, %89 : vector<1x32xf32>
    %91 = vector.shape_cast %80 : vector<1152x32xf32> to vector<2x576x32xf32>
    %cst_59 = arith.constant dense<0.000000e+00> : vector<2x32xf32>
    %92 = vector.multi_reduction <add>, %91, %cst_59 [1] : vector<2x576x32xf32> to vector<2x32xf32>
    %cst_60 = arith.constant 2.870000e+02 : f32
    %93 = vector.broadcast %cst_60 : f32 to vector<1x32xf32>
    %94 = arith.mulf %93, %90 : vector<1x32xf32>
    %95 = vector.broadcast %94 : vector<1x32xf32> to vector<2x32xf32>
    %96 = arith.subf %92, %95 : vector<2x32xf32>
    %cst_61 = arith.constant 0.00346020772 : f32
    %97 = vector.broadcast %cst_61 : f32 to vector<2x32xf32>
    %98 = arith.mulf %96, %97 : vector<2x32xf32>
    %c0_62 = arith.constant 0 : index
    %c0_63 = arith.constant 0 : index
    %99 = vector.load %arg16[%c0_62, %c0_63] : memref<32x16xf32, #tpu.memory_space<vmem>>, vector<32x16xf32>
    %cst_64 = arith.constant dense<0.000000e+00> : vector<2x16xf32>
    %100 = tpu.matmul %98, %99, %cst_64 {dimension_numbers = #tpu.dot_dimension_numbers<[1], [0], [0], [1], [0, 0, 1, 1], [], []>} : vector<2x32xf32>, vector<32x16xf32>, vector<2x16xf32> -> vector<2x16xf32>
    %c0_65 = arith.constant 0 : index
    %c0_66 = arith.constant 0 : index
    %101 = vector.load %arg17[%c0_65, %c0_66] : memref<1x16xf32, #tpu.memory_space<vmem>>, vector<1x16xf32>
    %102 = vector.broadcast %101 : vector<1x16xf32> to vector<2x16xf32>
    %103 = arith.addf %100, %102 : vector<2x16xf32>
    %cst_67 = arith.constant 0.000000e+00 : f32
    %104 = vector.broadcast %cst_67 : f32 to vector<2x16xf32>
    %105 = arith.maximumf %103, %104 : vector<2x16xf32>
    %c0_68 = arith.constant 0 : index
    %c0_69 = arith.constant 0 : index
    %106 = vector.load %arg18[%c0_68, %c0_69] : memref<16x1xf32, #tpu.memory_space<vmem>>, vector<16x1xf32>
    %cst_70 = arith.constant dense<0.000000e+00> : vector<2x1xf32>
    %107 = tpu.matmul %105, %106, %cst_70 {dimension_numbers = #tpu.dot_dimension_numbers<[1], [0], [0], [1], [0, 0, 1, 1], [], []>} : vector<2x16xf32>, vector<16x1xf32>, vector<2x1xf32> -> vector<2x1xf32>
    %c0_71 = arith.constant 0 : index
    %c0_72 = arith.constant 0 : index
    %108 = vector.load %arg19[%c0_71, %c0_72] : memref<1x1xf32, #tpu.memory_space<vmem>>, vector<1x1xf32>
    %109 = vector.broadcast %108 : vector<1x1xf32> to vector<2x1xf32>
    %110 = arith.addf %107, %109 : vector<2x1xf32>
    %111 = math.absf %110 : vector<2x1xf32>
    %cst_73 = arith.constant 0.000000e+00 : f32
    %112 = vector.broadcast %cst_73 : f32 to vector<2x1xf32>
    %113 = arith.subf %112, %111 : vector<2x1xf32>
    %114 = math.exp %113 : vector<2x1xf32>
    %cst_74 = arith.constant 0.000000e+00 : f32
    %115 = vector.broadcast %cst_74 : f32 to vector<2x1xf32>
    %116 = arith.cmpf oge, %110, %115 : vector<2x1xf32>
    %cst_75 = arith.constant 1.000000e+00 : f32
    %117 = vector.broadcast %cst_75 : f32 to vector<2x1xf32>
    %118 = arith.addf %117, %114 : vector<2x1xf32>
    %cst_76 = arith.constant 1.000000e+00 : f32
    %119 = vector.broadcast %cst_76 : f32 to vector<2x1xf32>
    %120 = arith.divf %119, %118 : vector<2x1xf32>
    %cst_77 = arith.constant 1.000000e+00 : f32
    %121 = vector.broadcast %cst_77 : f32 to vector<2x1xf32>
    %122 = arith.addf %121, %114 : vector<2x1xf32>
    %123 = arith.divf %114, %122 : vector<2x1xf32>
    %124 = arith.select %116, %120, %123 : vector<2x1xi1>, vector<2x1xf32>
    %125 = arith.truncf %80 : vector<1152x32xf32> to vector<1152x32xbf16>
    %c0_78 = arith.constant 0 : index
    %c0_79 = arith.constant 0 : index
    %126 = vector.load %arg20[%c0_78, %c0_79] : memref<32x16xbf16, #tpu.memory_space<vmem>>, vector<32x16xbf16>
    %cst_80 = arith.constant dense<0.000000e+00> : vector<1152x16xf32>
    %127 = tpu.matmul %125, %126, %cst_80 {dimension_numbers = #tpu.dot_dimension_numbers<[1], [0], [0], [1], [0, 0, 1, 1], [], []>} : vector<1152x32xbf16>, vector<32x16xbf16>, vector<1152x16xf32> -> vector<1152x16xf32>
    %128 = vector.shape_cast %127 : vector<1152x16xf32> to vector<2x576x16xf32>
    %129 = vector.shape_cast %124 : vector<2x1xf32> to vector<2x1x1xf32>
    %130 = vector.broadcast %129 : vector<2x1x1xf32> to vector<2x576x16xf32>
    %131 = arith.mulf %130, %128 : vector<2x576x16xf32>
    %c0_81 = arith.constant 0 : index
    %c0_82 = arith.constant 0 : index
    %132 = vector.load %arg21[%c0_81, %c0_82] : memref<1x16xf32, #tpu.memory_space<vmem>>, vector<1x16xf32>
    %133 = vector.shape_cast %132 : vector<1x16xf32> to vector<1x1x16xf32>
    %134 = vector.broadcast %133 : vector<1x1x16xf32> to vector<2x576x16xf32>
    %135 = arith.addf %131, %134 : vector<2x576x16xf32>
    %cst_83 = arith.constant 0.000000e+00 : f32
    %136 = vector.broadcast %cst_83 : f32 to vector<2x576x16xf32>
    %137 = arith.maximumf %135, %136 : vector<2x576x16xf32>
    %138 = vector.shape_cast %137 : vector<2x576x16xf32> to vector<1152x16xf32>
    %139 = arith.truncf %138 : vector<1152x16xf32> to vector<1152x16xbf16>
    %c0_84 = arith.constant 0 : index
    %c0_85 = arith.constant 0 : index
    %140 = vector.load %arg22[%c0_84, %c0_85] : memref<16x1xbf16, #tpu.memory_space<vmem>>, vector<16x1xbf16>
    %cst_86 = arith.constant dense<0.000000e+00> : vector<1152x1xf32>
    %141 = tpu.matmul %139, %140, %cst_86 {dimension_numbers = #tpu.dot_dimension_numbers<[1], [0], [0], [1], [0, 0, 1, 1], [], []>} : vector<1152x16xbf16>, vector<16x1xbf16>, vector<1152x1xf32> -> vector<1152x1xf32>
    %142 = vector.shape_cast %141 : vector<1152x1xf32> to vector<2x24x24x1xf32>
    %143 = tpu.iota {dimensions = array<i32: 2>} : vector<1x1x24x1xi32>
    %c16_i32 = arith.constant 16 : i32
    %144 = vector.broadcast %c16_i32 : i32 to vector<1x1x24x1xi32>
    %145 = arith.cmpi slt, %143, %144 : vector<1x1x24x1xi32>
    %cst_87 = arith.constant 0.000000e+00 : f32
    %146 = vector.shape_cast %145 : vector<1x1x24x1xi1> to vector<1x1x24x1xi1>
    %147 = vector.broadcast %146 : vector<1x1x24x1xi1> to vector<2x24x24x1xi1>
    %148 = vector.broadcast %cst_87 : f32 to vector<2x24x24x1xf32>
    %149 = arith.select %147, %142, %148 : vector<2x24x24x1xi1>, vector<2x24x24x1xf32>
    %cst_88 = arith.constant dense<0.000000e+00> : vector<2x24x1xf32>
    %150 = vector.multi_reduction <add>, %149, %cst_88 [2] : vector<2x24x24x1xf32> to vector<2x24x1xf32>
    %cst_89 = arith.constant dense<0.000000e+00> : vector<2x24xf32>
    %151 = vector.multi_reduction <add>, %150, %cst_89 [2] : vector<2x24x1xf32> to vector<2x24xf32>
    %cst_90 = arith.constant 6.250000e-02 : f32
    %152 = vector.broadcast %cst_90 : f32 to vector<2x24xf32>
    %153 = arith.mulf %151, %152 : vector<2x24xf32>
    %c0_91 = arith.constant 0 : index
    %c0_92 = arith.constant 0 : index
    %154 = vector.load %arg23[%c0_91, %c0_92] : memref<1x1xf32, #tpu.memory_space<vmem>>, vector<1x1xf32>
    %155 = vector.broadcast %154 : vector<1x1xf32> to vector<2x24xf32>
    %156 = arith.addf %153, %155 : vector<2x24xf32>
    %157 = math.absf %156 : vector<2x24xf32>
    %cst_93 = arith.constant 0.000000e+00 : f32
    %158 = vector.broadcast %cst_93 : f32 to vector<2x24xf32>
    %159 = arith.subf %158, %157 : vector<2x24xf32>
    %160 = math.exp %159 : vector<2x24xf32>
    %cst_94 = arith.constant 0.000000e+00 : f32
    %161 = vector.broadcast %cst_94 : f32 to vector<2x24xf32>
    %162 = arith.cmpf oge, %156, %161 : vector<2x24xf32>
    %cst_95 = arith.constant 1.000000e+00 : f32
    %163 = vector.broadcast %cst_95 : f32 to vector<2x24xf32>
    %164 = arith.addf %163, %160 : vector<2x24xf32>
    %cst_96 = arith.constant 1.000000e+00 : f32
    %165 = vector.broadcast %cst_96 : f32 to vector<2x24xf32>
    %166 = arith.divf %165, %164 : vector<2x24xf32>
    %cst_97 = arith.constant 1.000000e+00 : f32
    %167 = vector.broadcast %cst_97 : f32 to vector<2x24xf32>
    %168 = arith.addf %167, %160 : vector<2x24xf32>
    %169 = arith.divf %160, %168 : vector<2x24xf32>
    %170 = arith.select %162, %166, %169 : vector<2x24xi1>, vector<2x24xf32>
    %171 = tpu.iota {dimensions = array<i32: 1>} : vector<2x24xi32>
    %c16_i32_98 = arith.constant 16 : i32
    %172 = vector.broadcast %c16_i32_98 : i32 to vector<2x24xi32>
    %173 = arith.cmpi eq, %171, %172 : vector<2x24xi32>
    %174 = vector.shape_cast %110 : vector<2x1xf32> to vector<2x1xf32>
    %175 = vector.broadcast %174 : vector<2x1xf32> to vector<2x24xf32>
    %176 = arith.select %173, %175, %170 : vector<2x24xi1>, vector<2x24xf32>
    %177 = vector.shape_cast %176 : vector<2x24xf32> to vector<2x1x24xf32>
    %c0_99 = arith.constant 0 : index
    %c0_100 = arith.constant 0 : index
    %c0_101 = arith.constant 0 : index
    %178 = vector.load %arg24[%c0_99, %c0_100, %c0_101] : memref<2x1x24xf32, #tpu.memory_space<vmem>>, vector<2x1x24xf32>
    tpu.vector_store %arg24[%c0_99, %c0_100, %c0_101], %177 {strides = array<i32>} : memref<2x1x24xf32, #tpu.memory_space<vmem>>, vector<2x1x24xf32>,
    return
  }
  func.func @transform_0(%arg0: i32) -> (i32, i32, i32) {
    %c0_i32 = arith.constant 0 : i32
    %c0_i32_0 = arith.constant 0 : i32
    %c0_i32_1 = arith.constant 0 : i32
    return %arg0, %c0_i32, %c0_i32_0 : i32, i32, i32
  }
  func.func @transform_1(%arg0: i32) -> (i32, i32, i32) {
    %c0_i32 = arith.constant 0 : i32
    %c0_i32_0 = arith.constant 0 : i32
    %c0_i32_1 = arith.constant 0 : i32
    return %arg0, %c0_i32, %c0_i32_0 : i32, i32, i32
  }
  func.func @transform_2(%arg0: i32) -> (i32, i32, i32) {
    %c0_i32 = arith.constant 0 : i32
    %c0_i32_0 = arith.constant 0 : i32
    %c0_i32_1 = arith.constant 0 : i32
    return %arg0, %c0_i32, %c0_i32_0 : i32, i32, i32
  }
  func.func @transform_3(%arg0: i32) -> (i32, i32, i32) {
    %c0_i32 = arith.constant 0 : i32
    %c0_i32_0 = arith.constant 0 : i32
    %c0_i32_1 = arith.constant 0 : i32
    return %arg0, %c0_i32, %c0_i32_0 : i32, i32, i32
  }
  func.func @transform_4(%arg0: i32) -> (i32, i32) {
    %c0_i32 = arith.constant 0 : i32
    %c0_i32_0 = arith.constant 0 : i32
    %c0_i32_1 = arith.constant 0 : i32
    return %c0_i32, %c0_i32_0 : i32, i32
  }
  func.func @transform_5(%arg0: i32) -> (i32, i32) {
    %c0_i32 = arith.constant 0 : i32
    %c0_i32_0 = arith.constant 0 : i32
    %c0_i32_1 = arith.constant 0 : i32
    return %c0_i32, %c0_i32_0 : i32, i32
  }
  func.func @transform_6(%arg0: i32) -> (i32, i32) {
    %c0_i32 = arith.constant 0 : i32
    %c0_i32_0 = arith.constant 0 : i32
    %c0_i32_1 = arith.constant 0 : i32
    return %c0_i32, %c0_i32_0 : i32, i32
  }
  func.func @transform_7(%arg0: i32) -> (i32, i32) {
    %c0_i32 = arith.constant 0 : i32
    %c0_i32_0 = arith.constant 0 : i32
    %c0_i32_1 = arith.constant 0 : i32
    return %c0_i32, %c0_i32_0 : i32, i32
  }
  func.func @transform_8(%arg0: i32) -> (i32, i32) {
    %c0_i32 = arith.constant 0 : i32
    %c0_i32_0 = arith.constant 0 : i32
    %c0_i32_1 = arith.constant 0 : i32
    return %c0_i32, %c0_i32_0 : i32, i32
  }
  func.func @transform_9(%arg0: i32) -> (i32, i32) {
    %c0_i32 = arith.constant 0 : i32
    %c0_i32_0 = arith.constant 0 : i32
    %c0_i32_1 = arith.constant 0 : i32
    return %c0_i32, %c0_i32_0 : i32, i32
  }
  func.func @transform_10(%arg0: i32) -> (i32, i32) {
    %c0_i32 = arith.constant 0 : i32
    %c0_i32_0 = arith.constant 0 : i32
    %c0_i32_1 = arith.constant 0 : i32
    return %c0_i32, %c0_i32_0 : i32, i32
  }
  func.func @transform_11(%arg0: i32) -> (i32, i32) {
    %c0_i32 = arith.constant 0 : i32
    %c0_i32_0 = arith.constant 0 : i32
    %c0_i32_1 = arith.constant 0 : i32
    return %c0_i32, %c0_i32_0 : i32, i32
  }
  func.func @transform_12(%arg0: i32) -> (i32, i32) {
    %c0_i32 = arith.constant 0 : i32
    %c0_i32_0 = arith.constant 0 : i32
    %c0_i32_1 = arith.constant 0 : i32
    return %c0_i32, %c0_i32_0 : i32, i32
  }
  func.func @transform_13(%arg0: i32) -> (i32, i32) {
    %c0_i32 = arith.constant 0 : i32
    %c0_i32_0 = arith.constant 0 : i32
    %c0_i32_1 = arith.constant 0 : i32
    return %c0_i32, %c0_i32_0 : i32, i32
  }
  func.func @transform_14(%arg0: i32) -> (i32, i32) {
    %c0_i32 = arith.constant 0 : i32
    %c0_i32_0 = arith.constant 0 : i32
    %c0_i32_1 = arith.constant 0 : i32
    return %c0_i32, %c0_i32_0 : i32, i32
  }
  func.func @transform_15(%arg0: i32) -> (i32, i32) {
    %c0_i32 = arith.constant 0 : i32
    %c0_i32_0 = arith.constant 0 : i32
    %c0_i32_1 = arith.constant 0 : i32
    return %c0_i32, %c0_i32_0 : i32, i32
  }
  func.func @transform_16(%arg0: i32) -> (i32, i32) {
    %c0_i32 = arith.constant 0 : i32
    %c0_i32_0 = arith.constant 0 : i32
    %c0_i32_1 = arith.constant 0 : i32
    return %c0_i32, %c0_i32_0 : i32, i32
  }
  func.func @transform_17(%arg0: i32) -> (i32, i32) {
    %c0_i32 = arith.constant 0 : i32
    %c0_i32_0 = arith.constant 0 : i32
    %c0_i32_1 = arith.constant 0 : i32
    return %c0_i32, %c0_i32_0 : i32, i32
  }
  func.func @transform_18(%arg0: i32) -> (i32, i32) {
    %c0_i32 = arith.constant 0 : i32
    %c0_i32_0 = arith.constant 0 : i32
    %c0_i32_1 = arith.constant 0 : i32
    return %c0_i32, %c0_i32_0 : i32, i32
  }
  func.func @transform_19(%arg0: i32) -> (i32, i32) {
    %c0_i32 = arith.constant 0 : i32
    %c0_i32_0 = arith.constant 0 : i32
    %c0_i32_1 = arith.constant 0 : i32
    return %c0_i32, %c0_i32_0 : i32, i32
  }
  func.func @transform_20(%arg0: i32) -> (i32, i32) {
    %c0_i32 = arith.constant 0 : i32
    %c0_i32_0 = arith.constant 0 : i32
    %c0_i32_1 = arith.constant 0 : i32
    return %c0_i32, %c0_i32_0 : i32, i32
  }
  func.func @transform_21(%arg0: i32) -> (i32, i32) {
    %c0_i32 = arith.constant 0 : i32
    %c0_i32_0 = arith.constant 0 : i32
    %c0_i32_1 = arith.constant 0 : i32
    return %c0_i32, %c0_i32_0 : i32, i32
  }
  func.func @transform_22(%arg0: i32) -> (i32, i32) {
    %c0_i32 = arith.constant 0 : i32
    %c0_i32_0 = arith.constant 0 : i32
    %c0_i32_1 = arith.constant 0 : i32
    return %c0_i32, %c0_i32_0 : i32, i32
  }
  func.func @transform_23(%arg0: i32) -> (i32, i32, i32) {
    %c0_i32 = arith.constant 0 : i32
    %c0_i32_0 = arith.constant 0 : i32
    %c0_i32_1 = arith.constant 0 : i32
    return %arg0, %c0_i32, %c0_i32_0 : i32, i32, i32
  }
}

</mosaic_0001>

<llo_original>
// kernel: deep_rna_dti_forward.1
$region0: #{deep_rna_dti_forward.1}
  #allocation0 [shape = 'u32[]', space=smem, size = 0x4, offset = 0x4, fixed_abs, tag = 'smem constant byte address 0x4 - core index']
  #allocation1 [shape = 'u32[144,128]{1,0:T(1,128)}', space=vmem, size = 0x12000, scoped, tag = 'internal scratch']
  #allocation2 [shape = 'f32[1,1]{1,0:T(1,128)S(1)}', space=vmem, size = 0x200, scoped, tag = 'scoped memory for deep_rna_dti_forward.1']
  #allocation3 [shape = 'f32[1,1]{1,0:T(1,128)S(1)}', space=vmem, size = 0x200, scoped, tag = 'scoped memory for deep_rna_dti_forward.1']
  %s0 = inlined_call_operand.hbm [shape: bf16[4,16,640], index: 0, kind: input, shape index: {}]
  %s1 = inlined_call_operand.hbm [shape: f32[4,16,1], index: 1, kind: input, shape index: {}]
  %s2 = inlined_call_operand.hbm [shape: bf16[4,16,300], index: 2, kind: input, shape index: {}]
  %s3 = inlined_call_operand.hbm [shape: f32[4,16,1], index: 3, kind: input, shape index: {}]
  %s4 = inlined_call_operand.hbm [shape: bf16[640,128], index: 4, kind: input, shape index: {}]
  %s5 = inlined_call_operand.hbm [shape: f32[1,128], index: 5, kind: input, shape index: {}]
  %s6 = inlined_call_operand.hbm [shape: bf16[300,128], index: 6, kind: input, shape index: {}]
  %s7 = inlined_call_operand.hbm [shape: f32[1,128], index: 7, kind: input, shape index: {}]
  %s8 = inlined_call_operand.hbm [shape: bf16[128,128], index: 8, kind: input, shape index: {}]
  %s9 = inlined_call_operand.hbm [shape: f32[1,128], index: 9, kind: input, shape index: {}]
  %s10 = inlined_call_operand.hbm [shape: bf16[128,128], index: 10, kind: input, shape index: {}]
  %s11 = inlined_call_operand.hbm [shape: bf16[128,64], index: 11, kind: input, shape index: {}]
  %s12 = inlined_call_operand.hbm [shape: f32[1,64], index: 12, kind: input, shape index: {}]
  %s13 = inlined_call_operand.hbm [shape: bf16[64,32], index: 13, kind: input, shape index: {}]
  %s14 = inlined_call_operand.hbm [shape: f32[1,32], index: 14, kind: input, shape index: {}]
  %s15 = inlined_call_operand.hbm [shape: f32[32,16], index: 15, kind: input, shape index: {}]
  %s16 = inlined_call_operand.hbm [shape: f32[1,16], index: 16, kind: input, shape index: {}]
  %s17 = inlined_call_operand.hbm [shape: f32[16,1], index: 17, kind: input, shape index: {}]
  %s18 = inlined_call_operand.<no memory space> [shape: f32[1,1], index: 18, kind: input, shape index: {}]
  %s19 = inlined_call_operand.hbm [shape: bf16[32,16], index: 19, kind: input, shape index: {}]
  %s20 = inlined_call_operand.hbm [shape: f32[1,16], index: 20, kind: input, shape index: {}]
  %s21 = inlined_call_operand.hbm [shape: bf16[16,1], index: 21, kind: input, shape index: {}]
  %s22 = inlined_call_operand.<no memory space> [shape: f32[1,1], index: 22, kind: input, shape index: {}]
  %s23 = inlined_call_operand.hbm [shape: f32[4,1,24], index: 23, kind: output, shape index: {}]
  %s24 = sld [smem:[#allocation0]]
  $region209: #{deep_rna_dti_forward.1} parent=0
    _
  %s26 = ssub.s32 1, %s24
  %s27 = scalar_select 0, %s26, %s24
  %v28 = vstv %s18
  %29 = vst [vmem:[#allocation2] sm:$0x1] %v28
  %v30 = vstv %s22
  %31 = vst [vmem:[#allocation3] sm:$0x1] %v30
  $region1: #{deep_rna_dti_forward.1} parent=0
    #allocation4 [shape = 'u8[81920]{0}', space=vmem, size = 0x14000, scoped, tag = 'input window, operand 0']
    #allocation5 [shape = 's32[2]{0}', space=sflag, size = 0x8, scoped, tag = 'scoped memory for deep_rna_dti_forward.1']
    #allocation6 [shape = 's32[2]{0}', space=sflag, size = 0x8, scoped, tag = 'scoped memory for deep_rna_dti_forward.1']
    #allocation7 [shape = 'u8[32768]{0}', space=vmem, size = 0x8000, scoped, tag = 'input window, operand 1']
    #allocation8 [shape = 's32[2]{0}', space=sflag, size = 0x8, scoped, tag = 'scoped memory for deep_rna_dti_forward.1']
    #allocation9 [shape = 'u8[49152]{0}', space=vmem, size = 0xc000, scoped, tag = 'input window, operand 2']
    #allocation10 [shape = 'u8[32768]{0}', space=vmem, size = 0x8000, scoped, tag = 'input window, operand 3']
    #allocation11 [shape = 's32[2]{0}', space=sflag, size = 0x8, scoped, tag = 'scoped memory for deep_rna_dti_forward.1']
    #allocation12 [shape = 'u8[163840]{0}', space=vmem, size = 0x28000, scoped, tag = 'input window, operand 4, single buffered']
    #allocation13 [shape = 'u8[512]{0}', space=vmem, size = 0x400, scoped, tag = 'input window, operand 5, single buffered']
    #allocation14 [shape = 's32[1]{0}', space=sflag, size = 0x4, scoped, tag = 'scoped memory for deep_rna_dti_forward.1']
    #allocation15 [shape = 'u8[77824]{0}', space=vmem, size = 0x13000, scoped, tag = 'input window, operand 6, single buffered']
    #allocation16 [shape = 'u8[512]{0}', space=vmem, size = 0x400, scoped, tag = 'input window, operand 7, single buffered']
    #allocation17 [shape = 's32[1]{0}', space=sflag, size = 0x4, scoped, tag = 'scoped memory for deep_rna_dti_forward.1']
    #allocation18 [shape = 'u8[32768]{0}', space=vmem, size = 0x8000, scoped, tag = 'input window, operand 8, single buffered']
    #allocation19 [shape = 'u8[512]{0}', space=vmem, size = 0x400, scoped, tag = 'input window, operand 9, single buffered']
    #allocation20 [shape = 's32[1]{0}', space=sflag, size = 0x4, scoped, tag = 'scoped memory for deep_rna_dti_forward.1']
    #allocation21 [shape = 'u8[32768]{0}', space=vmem, size = 0x8000, scoped, tag = 'input window, operand 10, single buffered']
    #allocation22 [shape = 'u8[32768]{0}', space=vmem, size = 0x8000, scoped, tag = 'input window, operand 11, single buffered']
    #allocation23 [shape = 's32[1]{0}', space=sflag, size = 0x4, scoped, tag = 'scoped memory for deep_rna_dti_forward.1']
    #allocation24 [shape = 'u8[512]{0}', space=vmem, size = 0x400, scoped, tag = 'input window, operand 12, single buffered']
    #allocation25 [shape = 'u8[16384]{0}', space=vmem, size = 0x4000, scoped, tag = 'input window, operand 13, single buffered']
    #allocation26 [shape = 's32[1]{0}', space=sflag, size = 0x4, scoped, tag = 'scoped memory for deep_rna_dti_forward.1']
    #allocation27 [shape = 'u8[512]{0}', space=vmem, size = 0x400, scoped, tag = 'input window, operand 14, single buffered']
    #allocation28 [shape = 'u8[16384]{0}', space=vmem, size = 0x4000, scoped, tag = 'input window, operand 15, single buffered']
    #allocation29 [shape = 's32[1]{0}', space=sflag, size = 0x4, scoped, tag = 'scoped memory for deep_rna_dti_forward.1']
    #allocation30 [shape = 'u8[512]{0}', space=vmem, size = 0x400, scoped, tag = 'input window, operand 16, single buffered']
    #allocation31 [shape = 'u8[8192]{0}', space=vmem, size = 0x2000, scoped, tag = 'input window, operand 17, single buffered']
    #allocation32 [shape = 's32[1]{0}', space=sflag, size = 0x4, scoped, tag = 'scoped memory for deep_rna_dti_forward.1']
    #allocation33 [shape = 'u8[8192]{0}', space=vmem, size = 0x2000, scoped, tag = 'input window, operand 19, single buffered']
    #allocation34 [shape = 'u8[512]{0}', space=vmem, size = 0x400, scoped, tag = 'input window, operand 20, single buffered']
    #allocation35 [shape = 's32[1]{0}', space=sflag, size = 0x4, scoped, tag = 'scoped memory for deep_rna_dti_forward.1']
    #allocation36 [shape = 'u8[4096]{0}', space=vmem, size = 0x1000, scoped, tag = 'input window, operand 21, single buffered']
    #allocation37 [shape = 'u8[2048]{0}', space=vmem, size = 0x800, scoped, tag = 'output window, operand 0']
    %32 = vsyncpa [#allocation5], 0
    %s33 = scalar_lea.sflag [#allocation5], 1
    %34 = vsyncpa %s33, 0
    %35 = vsyncpa [#allocation8], 0
    %s36 = scalar_lea.sflag [#allocation8], 1
    %37 = vsyncpa %s36, 0
    %38 = vsyncpa [#allocation11], 0
    %s39 = scalar_lea.sflag [#allocation11], 1
    %40 = vsyncpa %s39, 0
    %41 = vsyncpa [#allocation14], 0
    %42 = vsyncpa [#allocation17], 0
    %43 = vsyncpa [#allocation20], 0
    %44 = vsyncpa [#allocation23], 0
    %45 = vsyncpa [#allocation26], 0
    %46 = vsyncpa [#allocation29], 0
    %47 = vsyncpa [#allocation32], 0
    %48 = vsyncpa [#allocation35], 0
    %49 = vsyncpa [#allocation6], 0
    %s50 = scalar_lea.sflag [#allocation6], 1
    %51 = vsyncpa %s50, 0
    loop: start=0, step=1, limit=4
    $region2: #{deep_rna_dti_forward.1} parent=1 // loop_pre_header
      _
    $region3: #{deep_rna_dti_forward.1} parent=1 // loop_header
      %s53 = sphi 0, %s57
      %p54 = scmp.ge.s32.totalorder %s53, 4
      %s63 = sphi 0, %s65
      %s66 = sphi 0, %s63
      %s67 = sphi 0, %s66
      %s83 = sphi 0, %s67
      %s89 = sphi 0, %s91
      %s92 = sphi 0, %s89
      %s93 = sphi 0, %s92
      %s109 = sphi 0, %s93
      %s115 = sphi 0, %s117
      %s118 = sphi 0, %s115
      %s119 = sphi 0, %s118
      %s135 = sphi 0, %s119
      %s141 = sphi 0, %s143
      %s144 = sphi 0, %s141
      %s145 = sphi 0, %s144
      %s161 = sphi 0, %s145
      %s165 = sphi 0, %s165
      %s167 = sphi 0, %s165
      %s168 = sphi 0, %s167
      %s182 = sphi 0, %s168
      %s186 = sphi 0, %s186
      %s188 = sphi 0, %s186
      %s189 = sphi 0, %s188
      %s203 = sphi 0, %s189
      %s207 = sphi 0, %s207
      %s209 = sphi 0, %s207
      %s210 = sphi 0, %s209
      %s224 = sphi 0, %s210
      %s228 = sphi 0, %s228
      %s230 = sphi 0, %s228
      %s231 = sphi 0, %s230
      %s245 = sphi 0, %s231
      %s249 = sphi 0, %s249
      %s251 = sphi 0, %s249
      %s252 = sphi 0, %s251
      %s266 = sphi 0, %s252
      %s270 = sphi 0, %s270
      %s272 = sphi 0, %s270
      %s273 = sphi 0, %s272
      %s287 = sphi 0, %s273
      %s291 = sphi 0, %s291
      %s293 = sphi 0, %s291
      %s294 = sphi 0, %s293
      %s308 = sphi 0, %s294
      %s312 = sphi 0, %s312
      %s314 = sphi 0, %s312
      %s315 = sphi 0, %s314
      %s329 = sphi 0, %s315
      %s333 = sphi 0, %s333
      %s335 = sphi 0, %s333
      %s336 = sphi 0, %s335
      %s350 = sphi 0, %s336
      %s354 = sphi 0, %s354
      %s356 = sphi 0, %s354
      %s357 = sphi 0, %s356
      %s371 = sphi 0, %s357
      %s375 = sphi 0, %s375
      %s377 = sphi 0, %s375
      %s378 = sphi 0, %s377
      %s392 = sphi 0, %s378
      %s396 = sphi 0, %s396
      %s398 = sphi 0, %s396
      %s399 = sphi 0, %s398
      %s413 = sphi 0, %s399
      %s417 = sphi 0, %s417
      %s419 = sphi 0, %s417
      %s420 = sphi 0, %s419
      %s434 = sphi 0, %s420
      %s438 = sphi 0, %s438
      %s440 = sphi 0, %s438
      %s441 = sphi 0, %s440
      %s455 = sphi 0, %s441
      %s459 = sphi 0, %s459
      %s461 = sphi 0, %s459
      %s462 = sphi 0, %s461
      %s476 = sphi 0, %s462
      %s480 = sphi 0, %s480
      %s482 = sphi 0, %s480
      %s483 = sphi 0, %s482
      %s497 = sphi 0, %s483
      %s501 = sphi 0, %s501
      %s503 = sphi 0, %s501
      %s504 = sphi 0, %s503
      %s518 = sphi 0, %s504
      %s522 = sphi 0, %s522
      %s524 = sphi 0, %s522
      %s525 = sphi 0, %s524
      %s539 = sphi 0, %s525
      %s543 = sphi 0, %s543
      %s545 = sphi 0, %s543
      %s546 = sphi 0, %s545
      %s560 = sphi 0, %s546
      %s566 = sphi 0, %s568
      %s569 = sphi 0, %s566
      %s570 = sphi 0, %s569
      %s586 = sphi 0, %s570
    $region4: #{deep_rna_dti_forward.1} parent=1 // loop_header_branch
      %56 = sbr.rel (%p54) target = $region8
    $region5: #{deep_rna_dti_forward.1} parent=1 // loop_body
      %s58 = ssub.s32 %s53, 1
      %s59 = ssub.s32 %s53, 2
      %s60 = sadd.s32 %s53, 1
      %s61 = ssub.s32 %s53, %s60
      %p62 = scmp.eq.s32.totalorder %s61, 0
      %s64 = sadd.s32 %s63, 1
      %s65 = scalar_select %p62, %s63, %s64
      %p68 = pneg %p62
      %p69 = scmp.eq.s32.totalorder %s53, 1
      %p70 = por %p68, %p69
      %p71 = scmp.ne.s32.totalorder %s63, %s66
      %p72 = scmp.eq.s32.totalorder %s53, 0
      %p73 = por %p71, %p72
      %p74 = scmp.ne.s32.totalorder %s63, %s66
      %p75 = scmp.eq.s32.totalorder %s58, 1
      %p76 = por %p74, %p75
      %p77 = scmp.ne.s32.totalorder %s66, %s67
      %p78 = scmp.eq.s32.totalorder %s58, 0
      %p79 = por %p77, %p78
      %p80 = scmp.ne.s32.totalorder %s66, %s67
      %p81 = scmp.eq.s32.totalorder %s59, 1
      %p82 = por %p80, %p81
      %p84 = scmp.ne.s32.totalorder %s67, %s83
      %p85 = scmp.eq.s32.totalorder %s59, 0
      %p86 = por %p84, %p85
      %s87 = ssub.s32 %s53, %s60
      %p88 = scmp.eq.s32.totalorder %s87, 0
      %s90 = sadd.s32 %s89, 1
      %s91 = scalar_select %p88, %s89, %s90
      %p94 = pneg %p88
      %p95 = scmp.eq.s32.totalorder %s53, 1
      %p96 = por %p94, %p95
      %p97 = scmp.ne.s32.totalorder %s89, %s92
      %p98 = scmp.eq.s32.totalorder %s53, 0
      %p99 = por %p97, %p98
      %p100 = scmp.ne.s32.totalorder %s89, %s92
      %p101 = scmp.eq.s32.totalorder %s58, 1
      %p102 = por %p100, %p101
      %p103 = scmp.ne.s32.totalorder %s92, %s93
      %p104 = scmp.eq.s32.totalorder %s58, 0
      %p105 = por %p103, %p104
      %p106 = scmp.ne.s32.totalorder %s92, %s93
      %p107 = scmp.eq.s32.totalorder %s59, 1
      %p108 = por %p106, %p107
      %p110 = scmp.ne.s32.totalorder %s93, %s109
      %p111 = scmp.eq.s32.totalorder %s59, 0
      %p112 = por %p110, %p111
      %s113 = ssub.s32 %s53, %s60
      %p114 = scmp.eq.s32.totalorder %s113, 0
      %s116 = sadd.s32 %s115, 1
      %s117 = scalar_select %p114, %s115, %s116
      %p120 = pneg %p114
      %p121 = scmp.eq.s32.totalorder %s53, 1
      %p122 = por %p120, %p121
      %p123 = scmp.ne.s32.totalorder %s115, %s118
      %p124 = scmp.eq.s32.totalorder %s53, 0
      %p125 = por %p123, %p124
      %p126 = scmp.ne.s32.totalorder %s115, %s118
      %p127 = scmp.eq.s32.totalorder %s58, 1
      %p128 = por %p126, %p127
      %p129 = scmp.ne.s32.totalorder %s118, %s119
      %p130 = scmp.eq.s32.totalorder %s58, 0
      %p131 = por %p129, %p130
      %p132 = scmp.ne.s32.totalorder %s118, %s119
      %p133 = scmp.eq.s32.totalorder %s59, 1
      %p134 = por %p132, %p133
      %p136 = scmp.ne.s32.totalorder %s119, %s135
      %p137 = scmp.eq.s32.totalorder %s59, 0
      %p138 = por %p136, %p137
      %s139 = ssub.s32 %s53, %s60
      %p140 = scmp.eq.s32.totalorder %s139, 0
      %s142 = sadd.s32 %s141, 1
      %s143 = scalar_select %p140, %s141, %s142
      %p146 = pneg %p140
      %p147 = scmp.eq.s32.totalorder %s53, 1
      %p148 = por %p146, %p147
      %p149 = scmp.ne.s32.totalorder %s141, %s144
      %p150 = scmp.eq.s32.totalorder %s53, 0
      %p151 = por %p149, %p150
      %p152 = scmp.ne.s32.totalorder %s141, %s144
      %p153 = scmp.eq.s32.totalorder %s58, 1
      %p154 = por %p152, %p153
      %p155 = scmp.ne.s32.totalorder %s144, %s145
      %p156 = scmp.eq.s32.totalorder %s58, 0
      %p157 = por %p155, %p156
      %p158 = scmp.ne.s32.totalorder %s144, %s145
      %p159 = scmp.eq.s32.totalorder %s59, 1
      %p160 = por %p158, %p159
      %p162 = scmp.ne.s32.totalorder %s145, %s161
      %p163 = scmp.eq.s32.totalorder %s59, 0
      %p164 = por %p162, %p163
      %s166 = sadd.s32 %s165, 1
      %p169 = scmp.eq.s32.totalorder %s53, 1
      %p170 = scmp.ne.s32.totalorder %s165, %s167
      %p171 = scmp.eq.s32.totalorder %s53, 0
      %p172 = por %p170, %p171
      %p173 = scmp.ne.s32.totalorder %s165, %s167
      %p174 = scmp.eq.s32.totalorder %s58, 1
      %p175 = por %p173, %p174
      %p176 = scmp.ne.s32.totalorder %s167, %s168
      %p177 = scmp.eq.s32.totalorder %s58, 0
      %p178 = por %p176, %p177
      %p179 = scmp.ne.s32.totalorder %s167, %s168
      %p180 = scmp.eq.s32.totalorder %s59, 1
      %p181 = por %p179, %p180
      %p183 = scmp.ne.s32.totalorder %s168, %s182
      %p184 = scmp.eq.s32.totalorder %s59, 0
      %p185 = por %p183, %p184
      %s187 = sadd.s32 %s186, 1
      %p190 = scmp.eq.s32.totalorder %s53, 1
      %p191 = scmp.ne.s32.totalorder %s186, %s188
      %p192 = scmp.eq.s32.totalorder %s53, 0
      %p193 = por %p191, %p192
      %p194 = scmp.ne.s32.totalorder %s186, %s188
      %p195 = scmp.eq.s32.totalorder %s58, 1
      %p196 = por %p194, %p195
      %p197 = scmp.ne.s32.totalorder %s188, %s189
      %p198 = scmp.eq.s32.totalorder %s58, 0
      %p199 = por %p197, %p198
      %p200 = scmp.ne.s32.totalorder %s188, %s189
      %p201 = scmp.eq.s32.totalorder %s59, 1
      %p202 = por %p200, %p201
      %p204 = scmp.ne.s32.totalorder %s189, %s203
      %p205 = scmp.eq.s32.totalorder %s59, 0
      %p206 = por %p204, %p205
      %s208 = sadd.s32 %s207, 1
      %p211 = scmp.eq.s32.totalorder %s53, 1
      %p212 = scmp.ne.s32.totalorder %s207, %s209
      %p213 = scmp.eq.s32.totalorder %s53, 0
      %p214 = por %p212, %p213
      %p215 = scmp.ne.s32.totalorder %s207, %s209
      %p216 = scmp.eq.s32.totalorder %s58, 1
      %p217 = por %p215, %p216
      %p218 = scmp.ne.s32.totalorder %s209, %s210
      %p219 = scmp.eq.s32.totalorder %s58, 0
      %p220 = por %p218, %p219
      %p221 = scmp.ne.s32.totalorder %s209, %s210
      %p222 = scmp.eq.s32.totalorder %s59, 1
      %p223 = por %p221, %p222
      %p225 = scmp.ne.s32.totalorder %s210, %s224
      %p226 = scmp.eq.s32.totalorder %s59, 0
      %p227 = por %p225, %p226
      %s229 = sadd.s32 %s228, 1
      %p232 = scmp.eq.s32.totalorder %s53, 1
      %p233 = scmp.ne.s32.totalorder %s228, %s230
      %p234 = scmp.eq.s32.totalorder %s53, 0
      %p235 = por %p233, %p234
      %p236 = scmp.ne.s32.totalorder %s228, %s230
      %p237 = scmp.eq.s32.totalorder %s58, 1
      %p238 = por %p236, %p237
      %p239 = scmp.ne.s32.totalorder %s230, %s231
      %p240 = scmp.eq.s32.totalorder %s58, 0
      %p241 = por %p239, %p240
      %p242 = scmp.ne.s32.totalorder %s230, %s231
      %p243 = scmp.eq.s32.totalorder %s59, 1
      %p244 = por %p242, %p243
      %p246 = scmp.ne.s32.totalorder %s231, %s245
      %p247 = scmp.eq.s32.totalorder %s59, 0
      %p248 = por %p246, %p247
      %s250 = sadd.s32 %s249, 1
      %p253 = scmp.eq.s32.totalorder %s53, 1
      %p254 = scmp.ne.s32.totalorder %s249, %s251
      %p255 = scmp.eq.s32.totalorder %s53, 0
      %p256 = por %p254, %p255
      %p257 = scmp.ne.s32.totalorder %s249, %s251
      %p258 = scmp.eq.s32.totalorder %s58, 1
      %p259 = por %p257, %p258
      %p260 = scmp.ne.s32.totalorder %s251, %s252
      %p261 = scmp.eq.s32.totalorder %s58, 0
      %p262 = por %p260, %p261
      %p263 = scmp.ne.s32.totalorder %s251, %s252
      %p264 = scmp.eq.s32.totalorder %s59, 1
      %p265 = por %p263, %p264
      %p267 = scmp.ne.s32.totalorder %s252, %s266
      %p268 = scmp.eq.s32.totalorder %s59, 0
      %p269 = por %p267, %p268
      %s271 = sadd.s32 %s270, 1
      %p274 = scmp.eq.s32.totalorder %s53, 1
      %p275 = scmp.ne.s32.totalorder %s270, %s272
      %p276 = scmp.eq.s32.totalorder %s53, 0
      %p277 = por %p275, %p276
      %p278 = scmp.ne.s32.totalorder %s270, %s272
      %p279 = scmp.eq.s32.totalorder %s58, 1
      %p280 = por %p278, %p279
      %p281 = scmp.ne.s32.totalorder %s272, %s273
      %p282 = scmp.eq.s32.totalorder %s58, 0
      %p283 = por %p281, %p282
      %p284 = scmp.ne.s32.totalorder %s272, %s273
      %p285 = scmp.eq.s32.totalorder %s59, 1
      %p286 = por %p284, %p285
      %p288 = scmp.ne.s32.totalorder %s273, %s287
      %p289 = scmp.eq.s32.totalorder %s59, 0
      %p290 = por %p288, %p289
      %s292 = sadd.s32 %s291, 1
      %p295 = scmp.eq.s32.totalorder %s53, 1
      %p296 = scmp.ne.s32.totalorder %s291, %s293
      %p297 = scmp.eq.s32.totalorder %s53, 0
      %p298 = por %p296, %p297
      %p299 = scmp.ne.s32.totalorder %s291, %s293
      %p300 = scmp.eq.s32.totalorder %s58, 1
      %p301 = por %p299, %p300
      %p302 = scmp.ne.s32.totalorder %s293, %s294
      %p303 = scmp.eq.s32.totalorder %s58, 0
      %p304 = por %p302, %p303
      %p305 = scmp.ne.s32.totalorder %s293, %s294
      %p306 = scmp.eq.s32.totalorder %s59, 1
      %p307 = por %p305, %p306
      %p309 = scmp.ne.s32.totalorder %s294, %s308
      %p310 = scmp.eq.s32.totalorder %s59, 0
      %p311 = por %p309, %p310
      %s313 = sadd.s32 %s312, 1
      %p316 = scmp.eq.s32.totalorder %s53, 1
      %p317 = scmp.ne.s32.totalorder %s312, %s314
      %p318 = scmp.eq.s32.totalorder %s53, 0
      %p319 = por %p317, %p318
      %p320 = scmp.ne.s32.totalorder %s312, %s314
      %p321 = scmp.eq.s32.totalorder %s58, 1
      %p322 = por %p320, %p321
      %p323 = scmp.ne.s32.totalorder %s314, %s315
      %p324 = scmp.eq.s32.totalorder %s58, 0
      %p325 = por %p323, %p324
      %p326 = scmp.ne.s32.totalorder %s314, %s315
      %p327 = scmp.eq.s32.totalorder %s59, 1
      %p328 = por %p326, %p327
      %p330 = scmp.ne.s32.totalorder %s315, %s329
      %p331 = scmp.eq.s32.totalorder %s59, 0
      %p332 = por %p330, %p331
      %s334 = sadd.s32 %s333, 1
      %p337 = scmp.eq.s32.totalorder %s53, 1
      %p338 = scmp.ne.s32.totalorder %s333, %s335
      %p339 = scmp.eq.s32.totalorder %s53, 0
      %p340 = por %p338, %p339
      %p341 = scmp.ne.s32.totalorder %s333, %s335
      %p342 = scmp.eq.s32.totalorder %s58, 1
      %p343 = por %p341, %p342
      %p344 = scmp.ne.s32.totalorder %s335, %s336
      %p345 = scmp.eq.s32.totalorder %s58, 0
      %p346 = por %p344, %p345
      %p347 = scmp.ne.s32.totalorder %s335, %s336
      %p348 = scmp.eq.s32.totalorder %s59, 1
      %p349 = por %p347, %p348
      %p351 = scmp.ne.s32.totalorder %s336, %s350
      %p352 = scmp.eq.s32.totalorder %s59, 0
      %p353 = por %p351, %p352
      %s355 = sadd.s32 %s354, 1
      %p358 = scmp.eq.s32.totalorder %s53, 1
      %p359 = scmp.ne.s32.totalorder %s354, %s356
      %p360 = scmp.eq.s32.totalorder %s53, 0
      %p361 = por %p359, %p360
      %p362 = scmp.ne.s32.totalorder %s354, %s356
      %p363 = scmp.eq.s32.totalorder %s58, 1
      %p364 = por %p362, %p363
      %p365 = scmp.ne.s32.totalorder %s356, %s357
      %p366 = scmp.eq.s32.totalorder %s58, 0
      %p367 = por %p365, %p366
      %p368 = scmp.ne.s32.totalorder %s356, %s357
      %p369 = scmp.eq.s32.totalorder %s59, 1
      %p370 = por %p368, %p369
      %p372 = scmp.ne.s32.totalorder %s357, %s371
      %p373 = scmp.eq.s32.totalorder %s59, 0
      %p374 = por %p372, %p373
      %s376 = sadd.s32 %s375, 1
      %p379 = scmp.eq.s32.totalorder %s53, 1
      %p380 = scmp.ne.s32.totalorder %s375, %s377
      %p381 = scmp.eq.s32.totalorder %s53, 0
      %p382 = por %p380, %p381
      %p383 = scmp.ne.s32.totalorder %s375, %s377
      %p384 = scmp.eq.s32.totalorder %s58, 1
      %p385 = por %p383, %p384
      %p386 = scmp.ne.s32.totalorder %s377, %s378
      %p387 = scmp.eq.s32.totalorder %s58, 0
      %p388 = por %p386, %p387
      %p389 = scmp.ne.s32.totalorder %s377, %s378
      %p390 = scmp.eq.s32.totalorder %s59, 1
      %p391 = por %p389, %p390
      %p393 = scmp.ne.s32.totalorder %s378, %s392
      %p394 = scmp.eq.s32.totalorder %s59, 0
      %p395 = por %p393, %p394
      %s397 = sadd.s32 %s396, 1
      %p400 = scmp.eq.s32.totalorder %s53, 1
      %p401 = scmp.ne.s32.totalorder %s396, %s398
      %p402 = scmp.eq.s32.totalorder %s53, 0
      %p403 = por %p401, %p402
      %p404 = scmp.ne.s32.totalorder %s396, %s398
      %p405 = scmp.eq.s32.totalorder %s58, 1
      %p406 = por %p404, %p405
      %p407 = scmp.ne.s32.totalorder %s398, %s399
      %p408 = scmp.eq.s32.totalorder %s58, 0
      %p409 = por %p407, %p408
      %p410 = scmp.ne.s32.totalorder %s398, %s399
      %p411 = scmp.eq.s32.totalorder %s59, 1
      %p412 = por %p410, %p411
      %p414 = scmp.ne.s32.totalorder %s399, %s413
      %p415 = scmp.eq.s32.totalorder %s59, 0
      %p416 = por %p414, %p415
      %s418 = sadd.s32 %s417, 1
      %p421 = scmp.eq.s32.totalorder %s53, 1
      %p422 = scmp.ne.s32.totalorder %s417, %s419
      %p423 = scmp.eq.s32.totalorder %s53, 0
      %p424 = por %p422, %p423
      %p425 = scmp.ne.s32.totalorder %s417, %s419
      %p426 = scmp.eq.s32.totalorder %s58, 1
      %p427 = por %p425, %p426
      %p428 = scmp.ne.s32.totalorder %s419, %s420
      %p429 = scmp.eq.s32.totalorder %s58, 0
      %p430 = por %p428, %p429
      %p431 = scmp.ne.s32.totalorder %s419, %s420
      %p432 = scmp.eq.s32.totalorder %s59, 1
      %p433 = por %p431, %p432
      %p435 = scmp.ne.s32.totalorder %s420, %s434
      %p436 = scmp.eq.s32.totalorder %s59, 0
      %p437 = por %p435, %p436
      %s439 = sadd.s32 %s438, 1
      %p442 = scmp.eq.s32.totalorder %s53, 1
      %p443 = scmp.ne.s32.totalorder %s438, %s440
      %p444 = scmp.eq.s32.totalorder %s53, 0
      %p445 = por %p443, %p444
      %p446 = scmp.ne.s32.totalorder %s438, %s440
      %p447 = scmp.eq.s32.totalorder %s58, 1
      %p448 = por %p446, %p447
      %p449 = scmp.ne.s32.totalorder %s440, %s441
      %p450 = scmp.eq.s32.totalorder %s58, 0
      %p451 = por %p449, %p450
      %p452 = scmp.ne.s32.totalorder %s440, %s441
      %p453 = scmp.eq.s32.totalorder %s59, 1
      %p454 = por %p452, %p453
      %p456 = scmp.ne.s32.totalorder %s441, %s455
      %p457 = scmp.eq.s32.totalorder %s59, 0
      %p458 = por %p456, %p457
      %s460 = sadd.s32 %s459, 1
      %p463 = scmp.eq.s32.totalorder %s53, 1
      %p464 = scmp.ne.s32.totalorder %s459, %s461
      %p465 = scmp.eq.s32.totalorder %s53, 0
      %p466 = por %p464, %p465
      %p467 = scmp.ne.s32.totalorder %s459, %s461
      %p468 = scmp.eq.s32.totalorder %s58, 1
      %p469 = por %p467, %p468
      %p470 = scmp.ne.s32.totalorder %s461, %s462
      %p471 = scmp.eq.s32.totalorder %s58, 0
      %p472 = por %p470, %p471
      %p473 = scmp.ne.s32.totalorder %s461, %s462
      %p474 = scmp.eq.s32.totalorder %s59, 1
      %p475 = por %p473, %p474
      %p477 = scmp.ne.s32.totalorder %s462, %s476
      %p478 = scmp.eq.s32.totalorder %s59, 0
      %p479 = por %p477, %p478
      %s481 = sadd.s32 %s480, 1
      %p484 = scmp.eq.s32.totalorder %s53, 1
      %p485 = scmp.ne.s32.totalorder %s480, %s482
      %p486 = scmp.eq.s32.totalorder %s53, 0
      %p487 = por %p485, %p486
      %p488 = scmp.ne.s32.totalorder %s480, %s482
      %p489 = scmp.eq.s32.totalorder %s58, 1
      %p490 = por %p488, %p489
      %p491 = scmp.ne.s32.totalorder %s482, %s483
      %p492 = scmp.eq.s32.totalorder %s58, 0
      %p493 = por %p491, %p492
      %p494 = scmp.ne.s32.totalorder %s482, %s483
      %p495 = scmp.eq.s32.totalorder %s59, 1
      %p496 = por %p494, %p495
      %p498 = scmp.ne.s32.totalorder %s483, %s497
      %p499 = scmp.eq.s32.totalorder %s59, 0
      %p500 = por %p498, %p499
      %s502 = sadd.s32 %s501, 1
      %p505 = scmp.eq.s32.totalorder %s53, 1
      %p506 = scmp.ne.s32.totalorder %s501, %s503
      %p507 = scmp.eq.s32.totalorder %s53, 0
      %p508 = por %p506, %p507
      %p509 = scmp.ne.s32.totalorder %s501, %s503
      %p510 = scmp.eq.s32.totalorder %s58, 1
      %p511 = por %p509, %p510
      %p512 = scmp.ne.s32.totalorder %s503, %s504
      %p513 = scmp.eq.s32.totalorder %s58, 0
      %p514 = por %p512, %p513
      %p515 = scmp.ne.s32.totalorder %s503, %s504
      %p516 = scmp.eq.s32.totalorder %s59, 1
      %p517 = por %p515, %p516
      %p519 = scmp.ne.s32.totalorder %s504, %s518
      %p520 = scmp.eq.s32.totalorder %s59, 0
      %p521 = por %p519, %p520
      %s523 = sadd.s32 %s522, 1
      %p526 = scmp.eq.s32.totalorder %s53, 1
      %p527 = scmp.ne.s32.totalorder %s522, %s524
      %p528 = scmp.eq.s32.totalorder %s53, 0
      %p529 = por %p527, %p528
      %p530 = scmp.ne.s32.totalorder %s522, %s524
      %p531 = scmp.eq.s32.totalorder %s58, 1
      %p532 = por %p530, %p531
      %p533 = scmp.ne.s32.totalorder %s524, %s525
      %p534 = scmp.eq.s32.totalorder %s58, 0
      %p535 = por %p533, %p534
      %p536 = scmp.ne.s32.totalorder %s524, %s525
      %p537 = scmp.eq.s32.totalorder %s59, 1
      %p538 = por %p536, %p537
      %p540 = scmp.ne.s32.totalorder %s525, %s539
      %p541 = scmp.eq.s32.totalorder %s59, 0
      %p542 = por %p540, %p541
      %s544 = sadd.s32 %s543, 1
      %p547 = scmp.eq.s32.totalorder %s53, 1
      %p548 = scmp.ne.s32.totalorder %s543, %s545
      %p549 = scmp.eq.s32.totalorder %s53, 0
      %p550 = por %p548, %p549
      %p551 = scmp.ne.s32.totalorder %s543, %s545
      %p552 = scmp.eq.s32.totalorder %s58, 1
      %p553 = por %p551, %p552
      %p554 = scmp.ne.s32.totalorder %s545, %s546
      %p555 = scmp.eq.s32.totalorder %s58, 0
      %p556 = por %p554, %p555
      %p557 = scmp.ne.s32.totalorder %s545, %s546
      %p558 = scmp.eq.s32.totalorder %s59, 1
      %p559 = por %p557, %p558
      %p561 = scmp.ne.s32.totalorder %s546, %s560
      %p562 = scmp.eq.s32.totalorder %s59, 0
      %p563 = por %p561, %p562
      %s564 = ssub.s32 %s53, %s60
      %p565 = scmp.eq.s32.totalorder %s564, 0
      %s567 = sadd.s32 %s566, 1
      %s568 = scalar_select %p565, %s566, %s567
      %p571 = pneg %p565
      %p572 = scmp.eq.s32.totalorder %s53, 1
      %p573 = por %p571, %p572
      %p574 = scmp.ne.s32.totalorder %s566, %s569
      %p575 = scmp.eq.s32.totalorder %s53, 0
      %p576 = por %p574, %p575
      %p577 = scmp.ne.s32.totalorder %s566, %s569
      %p578 = scmp.eq.s32.totalorder %s58, 1
      %p579 = por %p577, %p578
      %p580 = scmp.ne.s32.totalorder %s569, %s570
      %p581 = scmp.eq.s32.totalorder %s58, 0
      %p582 = por %p580, %p581
      %p583 = scmp.ne.s32.totalorder %s569, %s570
      %p584 = scmp.eq.s32.totalorder %s59, 1
      %p585 = por %p583, %p584
      %p587 = scmp.ne.s32.totalorder %s570, %s586
      %p588 = scmp.eq.s32.totalorder %s59, 0
      %p589 = por %p587, %p588
      %p590 = scmp.le.s32.totalorder 1, %s53
      %p591 = scmp.lt.s32.totalorder %s53, 3
      %p592 = pnand %p590, %p591
      %p593 = pneg %p592
      // Predicated region
      $region9: #{deep_rna_dti_forward.1} parent=5 // pred_check
        _
      $region10: #{deep_rna_dti_forward.1} parent=5 // pred_check_branch
        %595 = sbr.rel (%p592) target = $region12
      $region11: #{deep_rna_dti_forward.1} parent=5 // pred_region
        %s596 = ssub.s32 %s53, 1
        // Predicated region
        $region13: #{deep_rna_dti_forward.1} parent=11 // pred_check
          %p597 = pneg %p178
        $region14: #{deep_rna_dti_forward.1} parent=11 // pred_check_branch
          %599 = sbr.rel (%p597) target = $region16
        $region15: #{deep_rna_dti_forward.1} parent=11 // pred_region
          %s601 = ssub.s32 5120, 5120
          %602 = vsyncadd [#allocation11], %s601
          %s603 = sshll.u32 [#allocation12], 4
          %s604 = int_to_ptr.vmem [resolvable:$true] %s603
          %609 = dma.hbm_to_vmem [thread:$0]  %s4, 5120, %s604, [#allocation11], 64, 64, 4
        $region16: #{deep_rna_dti_forward.1} parent=11 // pred_fallthru
          _
        // Predicated region
        $region17: #{deep_rna_dti_forward.1} parent=11 // pred_check
          %p610 = pneg %p199
        $region18: #{deep_rna_dti_forward.1} parent=11 // pred_check_branch
          %612 = sbr.rel (%p610) target = $region20
        $region19: #{deep_rna_dti_forward.1} parent=11 // pred_region
          %s614 = ssub.s32 16, 16
          %615 = vsyncadd [#allocation14], %s614
          %s617 = sshll.u32 [#allocation13], 4
          %s618 = int_to_ptr.vmem [resolvable:$true] %s617
          %620 = dma.hbm_to_vmem [thread:$0]  %s5, 16, %s618, [#allocation14]
        $region20: #{deep_rna_dti_forward.1} parent=11 // pred_fallthru
          _
        // Predicated region
        $region21: #{deep_rna_dti_forward.1} parent=11 // pred_check
          %p621 = pneg %p220
        $region22: #{deep_rna_dti_forward.1} parent=11 // pred_check_branch
          %623 = sbr.rel (%p621) target = $region24
        $region23: #{deep_rna_dti_forward.1} parent=11 // pred_region
          %s625 = ssub.s32 2432, 2432
          %626 = vsyncadd [#allocation14], %s625
          %s627 = sshll.u32 [#allocation15], 4
          %s628 = int_to_ptr.vmem [resolvable:$true] %s627
          %633 = dma.hbm_to_vmem [thread:$0]  %s6, 2432, %s628, [#allocation14], 64, 64, 4
        $region24: #{deep_rna_dti_forward.1} parent=11 // pred_fallthru
          _
        // Predicated region
        $region25: #{deep_rna_dti_forward.1} parent=11 // pred_check
          %p634 = pneg %p241
        $region26: #{deep_rna_dti_forward.1} parent=11 // pred_check_branch
          %636 = sbr.rel (%p634) target = $region28
        $region27: #{deep_rna_dti_forward.1} parent=11 // pred_region
          %s638 = ssub.s32 16, 16
          %639 = vsyncadd [#allocation17], %s638
          %s641 = sshll.u32 [#allocation16], 4
          %s642 = int_to_ptr.vmem [resolvable:$true] %s641
          %644 = dma.hbm_to_vmem [thread:$0]  %s7, 16, %s642, [#allocation17]
        $region28: #{deep_rna_dti_forward.1} parent=11 // pred_fallthru
          _
        // Predicated region
        $region29: #{deep_rna_dti_forward.1} parent=11 // pred_check
          %p645 = pneg %p262
        $region30: #{deep_rna_dti_forward.1} parent=11 // pred_check_branch
          %647 = sbr.rel (%p645) target = $region32
        $region31: #{deep_rna_dti_forward.1} parent=11 // pred_region
          %s649 = ssub.s32 1024, 1024
          %650 = vsyncadd [#allocation17], %s649
          %s651 = sshll.u32 [#allocation18], 4
          %s652 = int_to_ptr.vmem [resolvable:$true] %s651
          %657 = dma.hbm_to_vmem [thread:$0]  %s8, 1024, %s652, [#allocation17], 64, 64, 4
        $region32: #{deep_rna_dti_forward.1} parent=11 // pred_fallthru
          _
        // Predicated region
        $region33: #{deep_rna_dti_forward.1} parent=11 // pred_check
          %p658 = pneg %p283
        $region34: #{deep_rna_dti_forward.1} parent=11 // pred_check_branch
          %660 = sbr.rel (%p658) target = $region36
        $region35: #{deep_rna_dti_forward.1} parent=11 // pred_region
          %s662 = ssub.s32 16, 16
          %663 = vsyncadd [#allocation20], %s662
          %s665 = sshll.u32 [#allocation19], 4
          %s666 = int_to_ptr.vmem [resolvable:$true] %s665
          %668 = dma.hbm_to_vmem [thread:$0]  %s9, 16, %s666, [#allocation20]
        $region36: #{deep_rna_dti_forward.1} parent=11 // pred_fallthru
          _
        // Predicated region
        $region37: #{deep_rna_dti_forward.1} parent=11 // pred_check
          %p669 = pneg %p304
        $region38: #{deep_rna_dti_forward.1} parent=11 // pred_check_branch
          %671 = sbr.rel (%p669) target = $region40
        $region39: #{deep_rna_dti_forward.1} parent=11 // pred_region
          %s673 = ssub.s32 1024, 1024
          %674 = vsyncadd [#allocation20], %s673
          %s675 = sshll.u32 [#allocation21], 4
          %s676 = int_to_ptr.vmem [resolvable:$true] %s675
          %681 = dma.hbm_to_vmem [thread:$0]  %s10, 1024, %s676, [#allocation20], 64, 64, 4
        $region40: #{deep_rna_dti_forward.1} parent=11 // pred_fallthru
          _
        // Predicated region
        $region41: #{deep_rna_dti_forward.1} parent=11 // pred_check
          %p682 = pneg %p325
        $region42: #{deep_rna_dti_forward.1} parent=11 // pred_check_branch
          %684 = sbr.rel (%p682) target = $region44
        $region43: #{deep_rna_dti_forward.1} parent=11 // pred_region
          %s686 = ssub.s32 1024, 1024
          %687 = vsyncadd [#allocation23], %s686
          %s688 = sshll.u32 [#allocation22], 4
          %s689 = int_to_ptr.vmem [resolvable:$true] %s688
          %694 = dma.hbm_to_vmem [thread:$0]  %s11, 1024, %s689, [#allocation23], 64, 64, 4
        $region44: #{deep_rna_dti_forward.1} parent=11 // pred_fallthru
          _
        // Predicated region
        $region45: #{deep_rna_dti_forward.1} parent=11 // pred_check
          %p695 = pneg %p346
        $region46: #{deep_rna_dti_forward.1} parent=11 // pred_check_branch
          %697 = sbr.rel (%p695) target = $region48
        $region47: #{deep_rna_dti_forward.1} parent=11 // pred_region
          %s699 = ssub.s32 16, 16
          %700 = vsyncadd [#allocation23], %s699
          %s702 = sshll.u32 [#allocation24], 4
          %s703 = int_to_ptr.vmem [resolvable:$true] %s702
          %705 = dma.hbm_to_vmem [thread:$0]  %s12, 16, %s703, [#allocation23]
        $region48: #{deep_rna_dti_forward.1} parent=11 // pred_fallthru
          _
        // Predicated region
        $region49: #{deep_rna_dti_forward.1} parent=11 // pred_check
          %p706 = pneg %p367
        $region50: #{deep_rna_dti_forward.1} parent=11 // pred_check_branch
          %708 = sbr.rel (%p706) target = $region52
        $region51: #{deep_rna_dti_forward.1} parent=11 // pred_region
          %s710 = ssub.s32 512, 512
          %711 = vsyncadd [#allocation26], %s710
          %s712 = sshll.u32 [#allocation25], 4
          %s713 = int_to_ptr.vmem [resolvable:$true] %s712
          %718 = dma.hbm_to_vmem [thread:$0]  %s13, 512, %s713, [#allocation26], 64, 64, 4
        $region52: #{deep_rna_dti_forward.1} parent=11 // pred_fallthru
          _
        // Predicated region
        $region53: #{deep_rna_dti_forward.1} parent=11 // pred_check
          %p719 = pneg %p388
        $region54: #{deep_rna_dti_forward.1} parent=11 // pred_check_branch
          %721 = sbr.rel (%p719) target = $region56
        $region55: #{deep_rna_dti_forward.1} parent=11 // pred_region
          %s723 = ssub.s32 16, 16
          %724 = vsyncadd [#allocation26], %s723
          %s726 = sshll.u32 [#allocation27], 4
          %s727 = int_to_ptr.vmem [resolvable:$true] %s726
          %729 = dma.hbm_to_vmem [thread:$0]  %s14, 16, %s727, [#allocation26]
        $region56: #{deep_rna_dti_forward.1} parent=11 // pred_fallthru
          _
        // Predicated region
        $region57: #{deep_rna_dti_forward.1} parent=11 // pred_check
          %p730 = pneg %p409
        $region58: #{deep_rna_dti_forward.1} parent=11 // pred_check_branch
          %732 = sbr.rel (%p730) target = $region60
        $region59: #{deep_rna_dti_forward.1} parent=11 // pred_region
          %s734 = ssub.s32 512, 512
          %735 = vsyncadd [#allocation29], %s734
          %s736 = sshll.u32 [#allocation28], 4
          %s737 = int_to_ptr.vmem [resolvable:$true] %s736
          %742 = dma.hbm_to_vmem [thread:$0]  %s15, 512, %s737, [#allocation29], 128, 128, 8
        $region60: #{deep_rna_dti_forward.1} parent=11 // pred_fallthru
          _
        // Predicated region
        $region61: #{deep_rna_dti_forward.1} parent=11 // pred_check
          %p743 = pneg %p430
        $region62: #{deep_rna_dti_forward.1} parent=11 // pred_check_branch
          %745 = sbr.rel (%p743) target = $region64
        $region63: #{deep_rna_dti_forward.1} parent=11 // pred_region
          %s747 = ssub.s32 16, 16
          %748 = vsyncadd [#allocation29], %s747
          %s750 = sshll.u32 [#allocation30], 4
          %s751 = int_to_ptr.vmem [resolvable:$true] %s750
          %753 = dma.hbm_to_vmem [thread:$0]  %s16, 16, %s751, [#allocation29]
        $region64: #{deep_rna_dti_forward.1} parent=11 // pred_fallthru
          _
        // Predicated region
        $region65: #{deep_rna_dti_forward.1} parent=11 // pred_check
          %p754 = pneg %p451
        $region66: #{deep_rna_dti_forward.1} parent=11 // pred_check_branch
          %756 = sbr.rel (%p754) target = $region68
        $region67: #{deep_rna_dti_forward.1} parent=11 // pred_region
          %s758 = ssub.s32 256, 256
          %759 = vsyncadd [#allocation32], %s758
          %s760 = sshll.u32 [#allocation31], 4
          %s761 = int_to_ptr.vmem [resolvable:$true] %s760
          %766 = dma.hbm_to_vmem [thread:$0]  %s17, 256, %s761, [#allocation32], 128, 128, 8
        $region68: #{deep_rna_dti_forward.1} parent=11 // pred_fallthru
          _
        // Predicated region
        $region69: #{deep_rna_dti_forward.1} parent=11 // pred_check
          %p767 = pneg %p472
        $region70: #{deep_rna_dti_forward.1} parent=11 // pred_check_branch
          %769 = sbr.rel (%p767) target = $region72
        $region71: #{deep_rna_dti_forward.1} parent=11 // pred_region
          _
        $region72: #{deep_rna_dti_forward.1} parent=11 // pred_fallthru
          _
        // Predicated region
        $region73: #{deep_rna_dti_forward.1} parent=11 // pred_check
          %p770 = pneg %p493
        $region74: #{deep_rna_dti_forward.1} parent=11 // pred_check_branch
          %772 = sbr.rel (%p770) target = $region76
        $region75: #{deep_rna_dti_forward.1} parent=11 // pred_region
          %s774 = ssub.s32 256, 256
          %775 = vsyncadd [#allocation32], %s774
          %s776 = sshll.u32 [#allocation33], 4
          %s777 = int_to_ptr.vmem [resolvable:$true] %s776
          %782 = dma.hbm_to_vmem [thread:$0]  %s19, 256, %s777, [#allocation32], 64, 64, 4
        $region76: #{deep_rna_dti_forward.1} parent=11 // pred_fallthru
          _
        // Predicated region
        $region77: #{deep_rna_dti_forward.1} parent=11 // pred_check
          %p783 = pneg %p514
        $region78: #{deep_rna_dti_forward.1} parent=11 // pred_check_branch
          %785 = sbr.rel (%p783) target = $region80
        $region79: #{deep_rna_dti_forward.1} parent=11 // pred_region
          %s787 = ssub.s32 16, 16
          %788 = vsyncadd [#allocation35], %s787
          %s790 = sshll.u32 [#allocation34], 4
          %s791 = int_to_ptr.vmem [resolvable:$true] %s790
          %793 = dma.hbm_to_vmem [thread:$0]  %s20, 16, %s791, [#allocation35]
        $region80: #{deep_rna_dti_forward.1} parent=11 // pred_fallthru
          _
        // Predicated region
        $region81: #{deep_rna_dti_forward.1} parent=11 // pred_check
          %p794 = pneg %p535
        $region82: #{deep_rna_dti_forward.1} parent=11 // pred_check_branch
          %796 = sbr.rel (%p794) target = $region84
        $region83: #{deep_rna_dti_forward.1} parent=11 // pred_region
          %s798 = ssub.s32 128, 128
          %799 = vsyncadd [#allocation35], %s798
          %s800 = sshll.u32 [#allocation36], 4
          %s801 = int_to_ptr.vmem [resolvable:$true] %s800
          %806 = dma.hbm_to_vmem [thread:$0]  %s21, 128, %s801, [#allocation35], 64, 64, 4
        $region84: #{deep_rna_dti_forward.1} parent=11 // pred_fallthru
          _
        // Predicated region
        $region85: #{deep_rna_dti_forward.1} parent=11 // pred_check
          %p807 = pneg %p556
        $region86: #{deep_rna_dti_forward.1} parent=11 // pred_check_branch
          %809 = sbr.rel (%p807) target = $region88
        $region87: #{deep_rna_dti_forward.1} parent=11 // pred_region
          _
        $region88: #{deep_rna_dti_forward.1} parent=11 // pred_fallthru
          _
      $region12: #{deep_rna_dti_forward.1} parent=5 // pred_fallthru
        _
      %p810 = scmp.lt.s32.totalorder %s53, 2
      // Predicated region
      $region89: #{deep_rna_dti_forward.1} parent=5 // pred_check
        %p811 = pneg %p810
      $region90: #{deep_rna_dti_forward.1} parent=5 // pred_check_branch
        %813 = sbr.rel (%p811) target = $region92
      $region91: #{deep_rna_dti_forward.1} parent=5 // pred_region
        // Predicated region
        $region93: #{deep_rna_dti_forward.1} parent=91 // pred_check
          %p814 = pneg %p73
        $region94: #{deep_rna_dti_forward.1} parent=91 // pred_check_branch
          %816 = sbr.rel (%p814) target = $region96
        $region95: #{deep_rna_dti_forward.1} parent=91 // pred_region
          %s817 = sand.u32 %s63, 1
          %s818 = scalar_lea.sflag [#allocation5], %s817
          %s819 = sand.u32 %s63, 1
          %s820 = smul.addr %s819, 80
          %s821 = scalar_lea.vmem [#allocation4], %s820
          %s822 = smul.u32 2, %s53
          %s824 = ssub.s32 1280, 1280
          %825 = vsyncadd %s818, %s824
          %s826 = smul.addr %s822, 10
          %s827 = smul.addr %s826, 64
          %s828 = scalar_lea.hbm %s0, %s827
          %s829 = sshll.u32 %s821, 4
          %s830 = int_to_ptr.vmem [resolvable:$true] %s829
          %835 = dma.hbm_to_vmem [thread:$0]  %s828, 1280, %s830, %s818, 320, 320, 20
        $region96: #{deep_rna_dti_forward.1} parent=91 // pred_fallthru
          _
        // Predicated region
        $region97: #{deep_rna_dti_forward.1} parent=91 // pred_check
          %p836 = pneg %p99
        $region98: #{deep_rna_dti_forward.1} parent=91 // pred_check_branch
          %838 = sbr.rel (%p836) target = $region100
        $region99: #{deep_rna_dti_forward.1} parent=91 // pred_region
          %s839 = sand.u32 %s53, 1
          %s840 = scalar_lea.sflag [#allocation8], %s839
          %s841 = sand.u32 %s89, 1
          %s842 = smul.addr %s841, 32
          %s843 = scalar_lea.vmem [#allocation7], %s842
          %s844 = smul.u32 2, %s53
          %s846 = ssub.s32 512, 512
          %847 = vsyncadd %s840, %s846
          %s848 = smul.addr %s844, 2
          %s849 = smul.addr %s848, 128
          %s850 = scalar_lea.hbm %s1, %s849
          %s851 = sshll.u32 %s843, 4
          %s852 = int_to_ptr.vmem [resolvable:$true] %s851
          %857 = dma.hbm_to_vmem [thread:$0]  %s850, 512, %s852, %s840, 128, 128, 8
        $region100: #{deep_rna_dti_forward.1} parent=91 // pred_fallthru
          _
        // Predicated region
        $region101: #{deep_rna_dti_forward.1} parent=91 // pred_check
          %p858 = pneg %p125
        $region102: #{deep_rna_dti_forward.1} parent=91 // pred_check_branch
          %860 = sbr.rel (%p858) target = $region104
        $region103: #{deep_rna_dti_forward.1} parent=91 // pred_region
          %s861 = sand.u32 %s53, 1
          %s862 = scalar_lea.sflag [#allocation8], %s861
          %s863 = sand.u32 %s115, 1
          %s864 = smul.addr %s863, 48
          %s865 = scalar_lea.vmem [#allocation9], %s864
          %s866 = smul.u32 2, %s53
          %s868 = ssub.s32 768, 768
          %869 = vsyncadd %s862, %s868
          %s870 = smul.addr %s866, 6
          %s871 = smul.addr %s870, 64
          %s872 = scalar_lea.hbm %s2, %s871
          %s873 = sshll.u32 %s865, 4
          %s874 = int_to_ptr.vmem [resolvable:$true] %s873
          %879 = dma.hbm_to_vmem [thread:$0]  %s872, 768, %s874, %s862, 192, 192, 12
        $region104: #{deep_rna_dti_forward.1} parent=91 // pred_fallthru
          _
        // Predicated region
        $region105: #{deep_rna_dti_forward.1} parent=91 // pred_check
          %p880 = pneg %p151
        $region106: #{deep_rna_dti_forward.1} parent=91 // pred_check_branch
          %882 = sbr.rel (%p880) target = $region108
        $region107: #{deep_rna_dti_forward.1} parent=91 // pred_region
          %s883 = sand.u32 %s53, 1
          %s884 = scalar_lea.sflag [#allocation11], %s883
          %s885 = sand.u32 %s141, 1
          %s886 = smul.addr %s885, 32
          %s887 = scalar_lea.vmem [#allocation10], %s886
          %s888 = smul.u32 2, %s53
          %s890 = ssub.s32 512, 512
          %891 = vsyncadd %s884, %s890
          %s892 = smul.addr %s888, 2
          %s893 = smul.addr %s892, 128
          %s894 = scalar_lea.hbm %s3, %s893
          %s895 = sshll.u32 %s887, 4
          %s896 = int_to_ptr.vmem [resolvable:$true] %s895
          %901 = dma.hbm_to_vmem [thread:$0]  %s894, 512, %s896, %s884, 128, 128, 8
        $region108: #{deep_rna_dti_forward.1} parent=91 // pred_fallthru
          _
      $region92: #{deep_rna_dti_forward.1} parent=5 // pred_fallthru
        _
      %p902 = scmp.le.s32.totalorder 1, %s53
      %p903 = scmp.lt.s32.totalorder %s53, 3
      %p904 = pnand %p902, %p903
      %p905 = pneg %p904
      // Predicated region
      $region109: #{deep_rna_dti_forward.1} parent=5 // pred_check
        _
      $region110: #{deep_rna_dti_forward.1} parent=5 // pred_check_branch
        %907 = sbr.rel (%p904) target = $region112
      $region111: #{deep_rna_dti_forward.1} parent=5 // pred_region
        %s908 = ssub.s32 %s53, 1
        %s909 = sand.u32 %s66, 1
        %s910 = scalar_lea.sflag [#allocation5], %s909
        %s911 = sand.u32 %s66, 1
        %s912 = smul.addr %s911, 80
        %s913 = scalar_lea.vmem [#allocation4], %s912
        // Predicated region
        $region113: #{deep_rna_dti_forward.1} parent=111 // pred_check
          %p914 = pneg %p79
        $region114: #{deep_rna_dti_forward.1} parent=111 // pred_check_branch
          %916 = sbr.rel (%p914) target = $region116
        $region115: #{deep_rna_dti_forward.1} parent=111 // pred_region
          %917 = dma.done %s910, 1280
        $region116: #{deep_rna_dti_forward.1} parent=111 // pred_fallthru
          _
        %s918 = sand.u32 %s58, 1
        %s919 = scalar_lea.sflag [#allocation8], %s918
        %s920 = sand.u32 %s92, 1
        %s921 = smul.addr %s920, 32
        %s922 = scalar_lea.vmem [#allocation7], %s921
        // Predicated region
        $region117: #{deep_rna_dti_forward.1} parent=111 // pred_check
          %p923 = pneg %p105
        $region118: #{deep_rna_dti_forward.1} parent=111 // pred_check_branch
          %925 = sbr.rel (%p923) target = $region120
        $region119: #{deep_rna_dti_forward.1} parent=111 // pred_region
          %926 = dma.done %s919, 512
        $region120: #{deep_rna_dti_forward.1} parent=111 // pred_fallthru
          _
        %s927 = sand.u32 %s58, 1
        %s928 = scalar_lea.sflag [#allocation8], %s927
        %s929 = sand.u32 %s118, 1
        %s930 = smul.addr %s929, 48
        %s931 = scalar_lea.vmem [#allocation9], %s930
        // Predicated region
        $region121: #{deep_rna_dti_forward.1} parent=111 // pred_check
          %p932 = pneg %p131
        $region122: #{deep_rna_dti_forward.1} parent=111 // pred_check_branch
          %934 = sbr.rel (%p932) target = $region124
        $region123: #{deep_rna_dti_forward.1} parent=111 // pred_region
          %935 = dma.done %s928, 768
        $region124: #{deep_rna_dti_forward.1} parent=111 // pred_fallthru
          _
        %s936 = sand.u32 %s58, 1
        %s937 = scalar_lea.sflag [#allocation11], %s936
        %s938 = sand.u32 %s144, 1
        %s939 = smul.addr %s938, 32
        %s940 = scalar_lea.vmem [#allocation10], %s939
        // Predicated region
        $region125: #{deep_rna_dti_forward.1} parent=111 // pred_check
          %p941 = pneg %p157
        $region126: #{deep_rna_dti_forward.1} parent=111 // pred_check_branch
          %943 = sbr.rel (%p941) target = $region128
        $region127: #{deep_rna_dti_forward.1} parent=111 // pred_region
          %944 = dma.done %s937, 512
        $region128: #{deep_rna_dti_forward.1} parent=111 // pred_fallthru
          _
        // Predicated region
        $region129: #{deep_rna_dti_forward.1} parent=111 // pred_check
          %p945 = pneg %p178
        $region130: #{deep_rna_dti_forward.1} parent=111 // pred_check_branch
          %947 = sbr.rel (%p945) target = $region132
        $region131: #{deep_rna_dti_forward.1} parent=111 // pred_region
          %948 = dma.done [#allocation11], 5120
        $region132: #{deep_rna_dti_forward.1} parent=111 // pred_fallthru
          _
        // Predicated region
        $region133: #{deep_rna_dti_forward.1} parent=111 // pred_check
          %p949 = pneg %p199
        $region134: #{deep_rna_dti_forward.1} parent=111 // pred_check_branch
          %951 = sbr.rel (%p949) target = $region136
        $region135: #{deep_rna_dti_forward.1} parent=111 // pred_region
          %952 = dma.done [#allocation14], 16
        $region136: #{deep_rna_dti_forward.1} parent=111 // pred_fallthru
          _
        // Predicated region
        $region137: #{deep_rna_dti_forward.1} parent=111 // pred_check
          %p953 = pneg %p220
        $region138: #{deep_rna_dti_forward.1} parent=111 // pred_check_branch
          %955 = sbr.rel (%p953) target = $region140
        $region139: #{deep_rna_dti_forward.1} parent=111 // pred_region
          %956 = dma.done [#allocation14], 2432
        $region140: #{deep_rna_dti_forward.1} parent=111 // pred_fallthru
          _
        // Predicated region
        $region141: #{deep_rna_dti_forward.1} parent=111 // pred_check
          %p957 = pneg %p241
        $region142: #{deep_rna_dti_forward.1} parent=111 // pred_check_branch
          %959 = sbr.rel (%p957) target = $region144
        $region143: #{deep_rna_dti_forward.1} parent=111 // pred_region
          %960 = dma.done [#allocation17], 16
        $region144: #{deep_rna_dti_forward.1} parent=111 // pred_fallthru
          _
        // Predicated region
        $region145: #{deep_rna_dti_forward.1} parent=111 // pred_check
          %p961 = pneg %p262
        $region146: #{deep_rna_dti_forward.1} parent=111 // pred_check_branch
          %963 = sbr.rel (%p961) target = $region148
        $region147: #{deep_rna_dti_forward.1} parent=111 // pred_region
          %964 = dma.done [#allocation17], 1024
        $region148: #{deep_rna_dti_forward.1} parent=111 // pred_fallthru
          _
        // Predicated region
        $region149: #{deep_rna_dti_forward.1} parent=111 // pred_check
          %p965 = pneg %p283
        $region150: #{deep_rna_dti_forward.1} parent=111 // pred_check_branch
          %967 = sbr.rel (%p965) target = $region152
        $region151: #{deep_rna_dti_forward.1} parent=111 // pred_region
          %968 = dma.done [#allocation20], 16
        $region152: #{deep_rna_dti_forward.1} parent=111 // pred_fallthru
          _
        // Predicated region
        $region153: #{deep_rna_dti_forward.1} parent=111 // pred_check
          %p969 = pneg %p304
        $region154: #{deep_rna_dti_forward.1} parent=111 // pred_check_branch
          %971 = sbr.rel (%p969) target = $region156
        $region155: #{deep_rna_dti_forward.1} parent=111 // pred_region
          %972 = dma.done [#allocation20], 1024
        $region156: #{deep_rna_dti_forward.1} parent=111 // pred_fallthru
          _
        // Predicated region
        $region157: #{deep_rna_dti_forward.1} parent=111 // pred_check
          %p973 = pneg %p325
        $region158: #{deep_rna_dti_forward.1} parent=111 // pred_check_branch
          %975 = sbr.rel (%p973) target = $region160
        $region159: #{deep_rna_dti_forward.1} parent=111 // pred_region
          %976 = dma.done [#allocation23], 1024
        $region160: #{deep_rna_dti_forward.1} parent=111 // pred_fallthru
          _
        // Predicated region
        $region161: #{deep_rna_dti_forward.1} parent=111 // pred_check
          %p977 = pneg %p346
        $region162: #{deep_rna_dti_forward.1} parent=111 // pred_check_branch
          %979 = sbr.rel (%p977) target = $region164
        $region163: #{deep_rna_dti_forward.1} parent=111 // pred_region
          %980 = dma.done [#allocation23], 16
        $region164: #{deep_rna_dti_forward.1} parent=111 // pred_fallthru
          _
        // Predicated region
        $region165: #{deep_rna_dti_forward.1} parent=111 // pred_check
          %p981 = pneg %p367
        $region166: #{deep_rna_dti_forward.1} parent=111 // pred_check_branch
          %983 = sbr.rel (%p981) target = $region168
        $region167: #{deep_rna_dti_forward.1} parent=111 // pred_region
          %984 = dma.done [#allocation26], 512
        $region168: #{deep_rna_dti_forward.1} parent=111 // pred_fallthru
          _
        // Predicated region
        $region169: #{deep_rna_dti_forward.1} parent=111 // pred_check
          %p985 = pneg %p388
        $region170: #{deep_rna_dti_forward.1} parent=111 // pred_check_branch
          %987 = sbr.rel (%p985) target = $region172
        $region171: #{deep_rna_dti_forward.1} parent=111 // pred_region
          %988 = dma.done [#allocation26], 16
        $region172: #{deep_rna_dti_forward.1} parent=111 // pred_fallthru
          _
        // Predicated region
        $region173: #{deep_rna_dti_forward.1} parent=111 // pred_check
          %p989 = pneg %p409
        $region174: #{deep_rna_dti_forward.1} parent=111 // pred_check_branch
          %991 = sbr.rel (%p989) target = $region176
        $region175: #{deep_rna_dti_forward.1} parent=111 // pred_region
          %992 = dma.done [#allocation29], 512
        $region176: #{deep_rna_dti_forward.1} parent=111 // pred_fallthru
          _
        // Predicated region
        $region177: #{deep_rna_dti_forward.1} parent=111 // pred_check
          %p993 = pneg %p430
        $region178: #{deep_rna_dti_forward.1} parent=111 // pred_check_branch
          %995 = sbr.rel (%p993) target = $region180
        $region179: #{deep_rna_dti_forward.1} parent=111 // pred_region
          %996 = dma.done [#allocation29], 16
        $region180: #{deep_rna_dti_forward.1} parent=111 // pred_fallthru
          _
        // Predicated region
        $region181: #{deep_rna_dti_forward.1} parent=111 // pred_check
          %p997 = pneg %p451
        $region182: #{deep_rna_dti_forward.1} parent=111 // pred_check_branch
          %999 = sbr.rel (%p997) target = $region184
        $region183: #{deep_rna_dti_forward.1} parent=111 // pred_region
          %1000 = dma.done [#allocation32], 256
        $region184: #{deep_rna_dti_forward.1} parent=111 // pred_fallthru
          _
        // Predicated region
        $region185: #{deep_rna_dti_forward.1} parent=111 // pred_check
          %p1001 = pneg %p493
        $region186: #{deep_rna_dti_forward.1} parent=111 // pred_check_branch
          %1003 = sbr.rel (%p1001) target = $region188
        $region187: #{deep_rna_dti_forward.1} parent=111 // pred_region
          %1004 = dma.done [#allocation32], 256
        $region188: #{deep_rna_dti_forward.1} parent=111 // pred_fallthru
          _
        // Predicated region
        $region189: #{deep_rna_dti_forward.1} parent=111 // pred_check
          %p1005 = pneg %p514
        $region190: #{deep_rna_dti_forward.1} parent=111 // pred_check_branch
          %1007 = sbr.rel (%p1005) target = $region192
        $region191: #{deep_rna_dti_forward.1} parent=111 // pred_region
          %1008 = dma.done [#allocation35], 16
        $region192: #{deep_rna_dti_forward.1} parent=111 // pred_fallthru
          _
        // Predicated region
        $region193: #{deep_rna_dti_forward.1} parent=111 // pred_check
          %p1009 = pneg %p535
        $region194: #{deep_rna_dti_forward.1} parent=111 // pred_check_branch
          %1011 = sbr.rel (%p1009) target = $region196
        $region195: #{deep_rna_dti_forward.1} parent=111 // pred_region
          %1012 = dma.done [#allocation35], 128
        $region196: #{deep_rna_dti_forward.1} parent=111 // pred_fallthru
          _
        %s1013 = sand.u32 %s66, 1
        %s1014 = scalar_lea.sflag [#allocation5], %s1013
        %s1015 = sand.u32 %s66, 1
        %s1016 = smul.addr %s1015, 80
        %s1017 = scalar_lea.vmem [#allocation4], %s1016
        %p1018 = pneg %p79
        %p1019 = pneg %p76
        %s1020 = sand.u32 %s58, 1
        %s1021 = scalar_lea.sflag [#allocation8], %s1020
        %s1022 = sand.u32 %s92, 1
        %s1023 = smul.addr %s1022, 32
        %s1024 = scalar_lea.vmem [#allocation7], %s1023
        %p1025 = pneg %p105
        %p1026 = pneg %p102
        %s1027 = sand.u32 %s58, 1
        %s1028 = scalar_lea.sflag [#allocation8], %s1027
        %s1029 = sand.u32 %s118, 1
        %s1030 = smul.addr %s1029, 48
        %s1031 = scalar_lea.vmem [#allocation9], %s1030
        %p1032 = pneg %p131
        %p1033 = pneg %p128
        %s1034 = sand.u32 %s58, 1
        %s1035 = scalar_lea.sflag [#allocation11], %s1034
        %s1036 = sand.u32 %s144, 1
        %s1037 = smul.addr %s1036, 32
        %s1038 = scalar_lea.vmem [#allocation10], %s1037
        %p1039 = pneg %p157
        %p1040 = pneg %p154
        %p1041 = pneg %p178
        %p1042 = pneg %p175
        %p1043 = pneg %p199
        %p1044 = pneg %p196
        %p1045 = pneg %p220
        %p1046 = pneg %p217
        %p1047 = pneg %p241
        %p1048 = pneg %p238
        %p1049 = pneg %p262
        %p1050 = pneg %p259
        %p1051 = pneg %p283
        %p1052 = pneg %p280
        %p1053 = pneg %p304
        %p1054 = pneg %p301
        %p1055 = pneg %p325
        %p1056 = pneg %p322
        %p1057 = pneg %p346
        %p1058 = pneg %p343
        %p1059 = pneg %p367
        %p1060 = pneg %p364
        %p1061 = pneg %p388
        %p1062 = pneg %p385
        %p1063 = pneg %p409
        %p1064 = pneg %p406
        %p1065 = pneg %p430
        %p1066 = pneg %p427
        %p1067 = pneg %p451
        %p1068 = pneg %p448
        %p1069 = pneg %p472
        %p1070 = pneg %p469
        %p1071 = pneg %p493
        %p1072 = pneg %p490
        %p1073 = pneg %p514
        %p1074 = pneg %p511
        %p1075 = pneg %p535
        %p1076 = pneg %p532
        %p1077 = pneg %p556
        %p1078 = pneg %p553
        %p1079 = pneg %p582
        %p1080 = pneg %p579
        %s1081 = sand.u32 %s569, 1
        %s1082 = scalar_lea.sflag [#allocation6], %s1081
        %s1083 = sand.u32 %s569, 1
        %s1084 = smul.addr %s1083, 2
        %s1085 = scalar_lea.vmem [#allocation37], %s1084
        %s1086 = smul.u32 2, %s58
        %s1087 = smul.u32 2, %s58
        %s1088 = smul.u32 2, %s58
        %s1089 = smul.u32 2, %s58
        %s1090 = smul.u32 2, %s58
        %v1092 = vld [vmem:[%s913] sm:$0xff]
        %v1093 = vld [vmem:[%s913 + $0x8] sm:$0xff]
        %v1094 = vld [vmem:[%s913 + $0x10] sm:$0xf]
        %v1095 = vld [vmem:[%s913 + $0x14] sm:$0xff]
        %v1096 = vld [vmem:[%s913 + $0x1c] sm:$0xff]
        %v1097 = vld [vmem:[%s913 + $0x24] sm:$0xf]
        %v1098 = vld [vmem:[%s913 + $0x28] sm:$0xff]
        %v1099 = vld [vmem:[%s913 + $0x30] sm:$0xff]
        %v1100 = vld [vmem:[%s913 + $0x38] sm:$0xf]
        %v1101 = vld [vmem:[%s913 + $0x3c] sm:$0xff]
        %v1102 = vld [vmem:[%s913 + $0x44] sm:$0xff]
        %v1103 = vld [vmem:[%s913 + $0x4c] sm:$0xf]
        %v1104 = vld [vmem:[#allocation12] sm:$0xf]
        %v1105 = vld [vmem:[#allocation12 + $0x4] sm:$0xf]
        %v1106 = vld [vmem:[#allocation12 + $0x8] sm:$0xf]
        %v1107 = vld [vmem:[#allocation12 + $0xc] sm:$0xf]
        %v1108 = vld [vmem:[#allocation12 + $0x10] sm:$0xf]
        %v1109 = vld [vmem:[#allocation12 + $0x14] sm:$0xf]
        %v1110 = vld [vmem:[#allocation12 + $0x18] sm:$0xf]
        %v1111 = vld [vmem:[#allocation12 + $0x1c] sm:$0xf]
        %v1112 = vld [vmem:[#allocation12 + $0x20] sm:$0xf]
        %v1113 = vld [vmem:[#allocation12 + $0x24] sm:$0xf]
        %v1114 = vld [vmem:[#allocation12 + $0x28] sm:$0xf]
        %v1115 = vld [vmem:[#allocation12 + $0x2c] sm:$0xf]
        %v1116 = vld [vmem:[#allocation12 + $0x30] sm:$0xf]
        %v1117 = vld [vmem:[#allocation12 + $0x34] sm:$0xf]
        %v1118 = vld [vmem:[#allocation12 + $0x38] sm:$0xf]
        %v1119 = vld [vmem:[#allocation12 + $0x3c] sm:$0xf]
        %v1120 = vld [vmem:[#allocation12 + $0x40] sm:$0xf]
        %v1121 = vld [vmem:[#allocation12 + $0x44] sm:$0xf]
        %v1122 = vld [vmem:[#allocation12 + $0x48] sm:$0xf]
        %v1123 = vld [vmem:[#allocation12 + $0x4c] sm:$0xf]
        %v1124 = vld [vmem:[#allocation12 + $0x50] sm:$0xf]
        %v1125 = vld [vmem:[#allocation12 + $0x54] sm:$0xf]
        %v1126 = vld [vmem:[#allocation12 + $0x58] sm:$0xf]
        %v1127 = vld [vmem:[#allocation12 + $0x5c] sm:$0xf]
        %v1128 = vld [vmem:[#allocation12 + $0x60] sm:$0xf]
        %v1129 = vld [vmem:[#allocation12 + $0x64] sm:$0xf]
        %v1130 = vld [vmem:[#allocation12 + $0x68] sm:$0xf]
        %v1131 = vld [vmem:[#allocation12 + $0x6c] sm:$0xf]
        %v1132 = vld [vmem:[#allocation12 + $0x70] sm:$0xf]
        %v1133 = vld [vmem:[#allocation12 + $0x74] sm:$0xf]
        %v1134 = vld [vmem:[#allocation12 + $0x78] sm:$0xf]
        %v1135 = vld [vmem:[#allocation12 + $0x7c] sm:$0xf]
        %v1136 = vld [vmem:[#allocation12 + $0x80] sm:$0xf]
        %v1137 = vld [vmem:[#allocation12 + $0x84] sm:$0xf]
        %v1138 = vld [vmem:[#allocation12 + $0x88] sm:$0xf]
        %v1139 = vld [vmem:[#allocation12 + $0x8c] sm:$0xf]
        %v1140 = vld [vmem:[#allocation12 + $0x90] sm:$0xf]
        %v1141 = vld [vmem:[#allocation12 + $0x94] sm:$0xf]
        %v1142 = vld [vmem:[#allocation12 + $0x98] sm:$0xf]
        %v1143 = vld [vmem:[#allocation12 + $0x9c] sm:$0xf]
        %v1144 = vld [vmem:[#allocation12 + $0xa0] sm:$0xf]
        %v1145 = vld [vmem:[#allocation12 + $0xa4] sm:$0xf]
        %v1146 = vld [vmem:[#allocation12 + $0xa8] sm:$0xf]
        %v1147 = vld [vmem:[#allocation12 + $0xac] sm:$0xf]
        %v1148 = vld [vmem:[#allocation12 + $0xb0] sm:$0xf]
        %v1149 = vld [vmem:[#allocation12 + $0xb4] sm:$0xf]
        %v1150 = vld [vmem:[#allocation12 + $0xb8] sm:$0xf]
        %v1151 = vld [vmem:[#allocation12 + $0xbc] sm:$0xf]
        %v1152 = vld [vmem:[#allocation12 + $0xc0] sm:$0xf]
        %v1153 = vld [vmem:[#allocation12 + $0xc4] sm:$0xf]
        %v1154 = vld [vmem:[#allocation12 + $0xc8] sm:$0xf]
        %v1155 = vld [vmem:[#allocation12 + $0xcc] sm:$0xf]
        %v1156 = vld [vmem:[#allocation12 + $0xd0] sm:$0xf]
        %v1157 = vld [vmem:[#allocation12 + $0xd4] sm:$0xf]
        %v1158 = vld [vmem:[#allocation12 + $0xd8] sm:$0xf]
        %v1159 = vld [vmem:[#allocation12 + $0xdc] sm:$0xf]
        %v1160 = vld [vmem:[#allocation12 + $0xe0] sm:$0xf]
        %v1161 = vld [vmem:[#allocation12 + $0xe4] sm:$0xf]
        %v1162 = vld [vmem:[#allocation12 + $0xe8] sm:$0xf]
        %v1163 = vld [vmem:[#allocation12 + $0xec] sm:$0xf]
        %v1164 = vld [vmem:[#allocation12 + $0xf0] sm:$0xf]
        %v1165 = vld [vmem:[#allocation12 + $0xf4] sm:$0xf]
        %v1166 = vld [vmem:[#allocation12 + $0xf8] sm:$0xf]
        %v1167 = vld [vmem:[#allocation12 + $0xfc] sm:$0xf]
        %v1168 = vld [vmem:[#allocation12 + $0x100] sm:$0xf]
        %v1169 = vld [vmem:[#allocation12 + $0x104] sm:$0xf]
        %v1170 = vld [vmem:[#allocation12 + $0x108] sm:$0xf]
        %v1171 = vld [vmem:[#allocation12 + $0x10c] sm:$0xf]
        %v1172 = vld [vmem:[#allocation12 + $0x110] sm:$0xf]
        %v1173 = vld [vmem:[#allocation12 + $0x114] sm:$0xf]
        %v1174 = vld [vmem:[#allocation12 + $0x118] sm:$0xf]
        %v1175 = vld [vmem:[#allocation12 + $0x11c] sm:$0xf]
        %v1176 = vld [vmem:[#allocation12 + $0x120] sm:$0xf]
        %v1177 = vld [vmem:[#allocation12 + $0x124] sm:$0xf]
        %v1178 = vld [vmem:[#allocation12 + $0x128] sm:$0xf]
        %v1179 = vld [vmem:[#allocation12 + $0x12c] sm:$0xf]
        %v1180 = vld [vmem:[#allocation12 + $0x130] sm:$0xf]
        %v1181 = vld [vmem:[#allocation12 + $0x134] sm:$0xf]
        %v1182 = vld [vmem:[#allocation12 + $0x138] sm:$0xf]
        %v1183 = vld [vmem:[#allocation12 + $0x13c] sm:$0xf]
        %v1184 = vld [vmem:[#allocation13] sm:$0x1]
        %v1186 = vlaneseq
        %v1187 = vshrl.u32 %v1186, 7
        %v1188 = vsub.s32 0, %v1187
        %v1189 = vrot.slane %v1184, %v1188
        %v1203 = vunpack.c.l.b16 %v1092
        %v1204 = vunpack.c.h.b16 %v1092
        %v1205 = vunpack.c.l.b16 %v1093
        %v1206 = vunpack.c.h.b16 %v1093
        %v1207 = vunpack.c.l.b16 %v1094
        %v1208 = vunpack.c.l.b16 %v1095
        %v1209 = vunpack.c.h.b16 %v1095
        %v1210 = vunpack.c.l.b16 %v1096
        %v1211 = vunpack.c.h.b16 %v1096
        %v1212 = vunpack.c.l.b16 %v1097
        %v1213 = vunpack.c.l.b16 %v1098
        %v1214 = vunpack.c.h.b16 %v1098
        %v1215 = vunpack.c.l.b16 %v1099
        %v1216 = vunpack.c.h.b16 %v1099
        %v1217 = vunpack.c.l.b16 %v1100
        %v1218 = vunpack.c.l.b16 %v1101
        %v1219 = vunpack.c.h.b16 %v1101
        %v1220 = vunpack.c.l.b16 %v1102
        %v1221 = vunpack.c.h.b16 %v1102
        %v1222 = vunpack.c.l.b16 %v1103
        %v1223 = vpack.c.b16 %v1208, %v1203
        %v1224 = vpack.c.b16 %v1209, %v1204
        %v1225 = vpack.c.b16 %v1210, %v1205
        %v1226 = vpack.c.b16 %v1211, %v1206
        %v1227 = vpack.c.b16 %v1212, %v1207
        %v1228 = vpack.c.b16 %v1218, %v1213
        %v1229 = vpack.c.b16 %v1219, %v1214
        %v1230 = vpack.c.b16 %v1220, %v1215
        %v1231 = vpack.c.b16 %v1221, %v1216
        %v1232 = vpack.c.b16 %v1222, %v1217
        %v1323 = vunpack.c.l.b16 %v1104
        %v1324 = vunpack.c.l.b16 %v1105
        %v1325 = vunpack.c.l.b16 %v1106
        %v1326 = vunpack.c.l.b16 %v1107
        %v1327 = vunpack.c.l.b16 %v1108
        %v1328 = vunpack.c.l.b16 %v1109
        %v1329 = vunpack.c.l.b16 %v1110
        %v1330 = vunpack.c.l.b16 %v1111
        %v1331 = vunpack.c.l.b16 %v1112
        %v1332 = vunpack.c.l.b16 %v1113
        %v1333 = vunpack.c.l.b16 %v1114
        %v1334 = vunpack.c.l.b16 %v1115
        %v1335 = vunpack.c.l.b16 %v1116
        %v1336 = vunpack.c.l.b16 %v1117
        %v1337 = vunpack.c.l.b16 %v1118
        %v1338 = vunpack.c.l.b16 %v1119
        %v1339 = vunpack.c.l.b16 %v1120
        %v1340 = vunpack.c.l.b16 %v1121
        %v1341 = vunpack.c.l.b16 %v1122
        %v1342 = vunpack.c.l.b16 %v1123
        %v1343 = vunpack.c.l.b16 %v1124
        %v1344 = vunpack.c.l.b16 %v1125
        %v1345 = vunpack.c.l.b16 %v1126
        %v1346 = vunpack.c.l.b16 %v1127
        %v1347 = vunpack.c.l.b16 %v1128
        %v1348 = vunpack.c.l.b16 %v1129
        %v1349 = vunpack.c.l.b16 %v1130
        %v1350 = vunpack.c.l.b16 %v1131
        %v1351 = vunpack.c.l.b16 %v1132
        %v1352 = vunpack.c.l.b16 %v1133
        %v1353 = vunpack.c.l.b16 %v1134
        %v1354 = vunpack.c.l.b16 %v1135
        %v1355 = vunpack.c.l.b16 %v1136
        %v1356 = vunpack.c.l.b16 %v1137
        %v1357 = vunpack.c.l.b16 %v1138
        %v1358 = vunpack.c.l.b16 %v1139
        %v1359 = vunpack.c.l.b16 %v1140
        %v1360 = vunpack.c.l.b16 %v1141
        %v1361 = vunpack.c.l.b16 %v1142
        %v1362 = vunpack.c.l.b16 %v1143
        %v1363 = vunpack.c.l.b16 %v1144
        %v1364 = vunpack.c.l.b16 %v1145
        %v1365 = vunpack.c.l.b16 %v1146
        %v1366 = vunpack.c.l.b16 %v1147
        %v1367 = vunpack.c.l.b16 %v1148
        %v1368 = vunpack.c.l.b16 %v1149
        %v1369 = vunpack.c.l.b16 %v1150
        %v1370 = vunpack.c.l.b16 %v1151
        %v1371 = vunpack.c.l.b16 %v1152
        %v1372 = vunpack.c.l.b16 %v1153
        %v1373 = vunpack.c.l.b16 %v1154
        %v1374 = vunpack.c.l.b16 %v1155
        %v1375 = vunpack.c.l.b16 %v1156
        %v1376 = vunpack.c.l.b16 %v1157
        %v1377 = vunpack.c.l.b16 %v1158
        %v1378 = vunpack.c.l.b16 %v1159
        %v1379 = vunpack.c.l.b16 %v1160
        %v1380 = vunpack.c.l.b16 %v1161
        %v1381 = vunpack.c.l.b16 %v1162
        %v1382 = vunpack.c.l.b16 %v1163
        %v1383 = vunpack.c.l.b16 %v1164
        %v1384 = vunpack.c.l.b16 %v1165
        %v1385 = vunpack.c.l.b16 %v1166
        %v1386 = vunpack.c.l.b16 %v1167
        %v1387 = vunpack.c.l.b16 %v1168
        %v1388 = vunpack.c.l.b16 %v1169
        %v1389 = vunpack.c.l.b16 %v1170
        %v1390 = vunpack.c.l.b16 %v1171
        %v1391 = vunpack.c.l.b16 %v1172
        %v1392 = vunpack.c.l.b16 %v1173
        %v1393 = vunpack.c.l.b16 %v1174
        %v1394 = vunpack.c.l.b16 %v1175
        %v1395 = vunpack.c.l.b16 %v1176
        %v1396 = vunpack.c.l.b16 %v1177
        %v1397 = vunpack.c.l.b16 %v1178
        %v1398 = vunpack.c.l.b16 %v1179
        %v1399 = vunpack.c.l.b16 %v1180
        %v1400 = vunpack.c.l.b16 %v1181
        %v1401 = vunpack.c.l.b16 %v1182
        %v1402 = vunpack.c.l.b16 %v1183
        %v1403 = vpack.c.b16 %v1324, %v1323
        %v1404 = vpack.c.b16 %v1326, %v1325
        %v1405 = vpack.c.b16 %v1328, %v1327
        %v1406 = vpack.c.b16 %v1330, %v1329
        %v1407 = vpack.c.b16 %v1332, %v1331
        %v1408 = vpack.c.b16 %v1334, %v1333
        %v1409 = vpack.c.b16 %v1336, %v1335
        %v1410 = vpack.c.b16 %v1338, %v1337
        %v1411 = vpack.c.b16 %v1340, %v1339
        %v1412 = vpack.c.b16 %v1342, %v1341
        %v1413 = vpack.c.b16 %v1344, %v1343
        %v1414 = vpack.c.b16 %v1346, %v1345
        %v1415 = vpack.c.b16 %v1348, %v1347
        %v1416 = vpack.c.b16 %v1350, %v1349
        %v1417 = vpack.c.b16 %v1352, %v1351
        %v1418 = vpack.c.b16 %v1354, %v1353
        %v1419 = vpack.c.b16 %v1356, %v1355
        %v1420 = vpack.c.b16 %v1358, %v1357
        %v1421 = vpack.c.b16 %v1360, %v1359
        %v1422 = vpack.c.b16 %v1362, %v1361
        %v1423 = vpack.c.b16 %v1364, %v1363
        %v1424 = vpack.c.b16 %v1366, %v1365
        %v1425 = vpack.c.b16 %v1368, %v1367
        %v1426 = vpack.c.b16 %v1370, %v1369
        %v1427 = vpack.c.b16 %v1372, %v1371
        %v1428 = vpack.c.b16 %v1374, %v1373
        %v1429 = vpack.c.b16 %v1376, %v1375
        %v1430 = vpack.c.b16 %v1378, %v1377
        %v1431 = vpack.c.b16 %v1380, %v1379
        %v1432 = vpack.c.b16 %v1382, %v1381
        %v1433 = vpack.c.b16 %v1384, %v1383
        %v1434 = vpack.c.b16 %v1386, %v1385
        %v1435 = vpack.c.b16 %v1388, %v1387
        %v1436 = vpack.c.b16 %v1390, %v1389
        %v1437 = vpack.c.b16 %v1392, %v1391
        %v1438 = vpack.c.b16 %v1394, %v1393
        %v1439 = vpack.c.b16 %v1396, %v1395
        %v1440 = vpack.c.b16 %v1398, %v1397
        %v1441 = vpack.c.b16 %v1400, %v1399
        %v1442 = vpack.c.b16 %v1402, %v1401
        %1483 = vmatprep.subr.bf16.mxu0 0
        %1484 = vmatpush1.bf16.msra.mxu0 %v1403
        %1485 = vmatprep.subr.bf16.mxu0 0
        %1486 = vmatpush1.bf16.msra.mxu0 %v1404
        %1487 = vmatprep.subr.bf16.mxu0 0
        %1488 = vmatpush1.bf16.msra.mxu0 %v1405
        %1489 = vmatprep.subr.bf16.mxu0 0
        %1490 = vmatpush1.bf16.msra.mxu0 %v1406
        %1491 = vmatprep.subr.bf16.mxu0 0
        %1492 = vmatpush1.bf16.msra.mxu0 %v1407
        %1493 = vmatprep.subr.bf16.mxu0 0
        %1494 = vmatpush1.bf16.msra.mxu0 %v1408
        %1495 = vmatprep.subr.bf16.mxu0 0
        %1496 = vmatpush1.bf16.msra.mxu0 %v1409
        %1497 = vmatprep.subr.bf16.mxu0 0
        %1498 = vmatpush1.bf16.msra.mxu0 %v1410
        %1499 = vmatprep.subr.bf16.mxu0 0
        %1500 = vmatpush1.bf16.msra.mxu0 %v1411
        %1501 = vmatprep.subr.bf16.mxu0 0
        %1502 = vmatpush1.bf16.msra.mxu0 %v1412
        %1503 = vmatprep.subr.bf16.mxu0 0
        %1504 = vmatpush1.bf16.msra.mxu0 %v1413
        %1505 = vmatprep.subr.bf16.mxu0 0
        %1506 = vmatpush1.bf16.msra.mxu0 %v1414
        %1507 = vmatprep.subr.bf16.mxu0 0
        %1508 = vmatpush1.bf16.msra.mxu0 %v1415
        %1509 = vmatprep.subr.bf16.mxu0 0
        %1510 = vmatpush1.bf16.msra.mxu0 %v1416
        %1511 = vmatprep.subr.bf16.mxu0 0
        %1512 = vmatpush1.bf16.msra.mxu0 %v1417
        %1513 = vmatprep.subr.bf16.mxu0 0
        %1514 = vmatpush1.bf16.msra.mxu0 %v1418
        %1515 = vmatprep.mubr.bf16.mxu0 %v1224
        %1516 = vmatmul.mubr.bf16.gmra.mrb[0].mxu0 %v1223
        %v1517 = vpop.f32.mrb[0].mxu0
        %v1518 = vadd.f32 %v1189, %v1517
        %v1519 = vpop.f32.mrb[0].mxu0
        %v1520 = vpop.f32.mrb[0].mxu0
        %v1521 = vadd.f32 %v1189, %v1520
        %v1522 = vpop.f32.mrb[0].mxu0
        %1523 = vmatprep.mubr.bf16.mxu0 %v1229
        %1524 = vmatmul.mubr.bf16.gmra.mrb[0].mxu0 %v1228
        %v1525 = vpop.f32.mrb[0].mxu0
        %v1526 = vadd.f32 %v1189, %v1525
        %v1527 = vpop.f32.mrb[0].mxu0
        %v1528 = vpop.f32.mrb[0].mxu0
        %v1529 = vadd.f32 %v1189, %v1528
        %v1530 = vpop.f32.mrb[0].mxu0
        %1531 = vdwg.mxu0
        %1532 = vmatprep.subr.bf16.mxu0 0
        %1533 = vmatpush1.bf16.msra.mxu0 %v1419
        %1534 = vmatprep.subr.bf16.mxu0 0
        %1535 = vmatpush1.bf16.msra.mxu0 %v1420
        %1536 = vmatprep.subr.bf16.mxu0 0
        %1537 = vmatpush1.bf16.msra.mxu0 %v1421
        %1538 = vmatprep.subr.bf16.mxu0 0
        %1539 = vmatpush1.bf16.msra.mxu0 %v1422
        %1540 = vmatprep.subr.bf16.mxu0 0
        %1541 = vmatpush1.bf16.msra.mxu0 %v1423
        %1542 = vmatprep.subr.bf16.mxu0 0
        %1543 = vmatpush1.bf16.msra.mxu0 %v1424
        %1544 = vmatprep.subr.bf16.mxu0 0
        %1545 = vmatpush1.bf16.msra.mxu0 %v1425
        %1546 = vmatprep.subr.bf16.mxu0 0
        %1547 = vmatpush1.bf16.msra.mxu0 %v1426
        %1548 = vmatprep.subr.bf16.mxu0 0
        %1549 = vmatpush1.bf16.msra.mxu0 %v1427
        %1550 = vmatprep.subr.bf16.mxu0 0
        %1551 = vmatpush1.bf16.msra.mxu0 %v1428
        %1552 = vmatprep.subr.bf16.mxu0 0
        %1553 = vmatpush1.bf16.msra.mxu0 %v1429
        %1554 = vmatprep.subr.bf16.mxu0 0
        %1555 = vmatpush1.bf16.msra.mxu0 %v1430
        %1556 = vmatprep.subr.bf16.mxu0 0
        %1557 = vmatpush1.bf16.msra.mxu0 %v1431
        %1558 = vmatprep.subr.bf16.mxu0 0
        %1559 = vmatpush1.bf16.msra.mxu0 %v1432
        %1560 = vmatprep.subr.bf16.mxu0 0
        %1561 = vmatpush1.bf16.msra.mxu0 %v1433
        %1562 = vmatprep.subr.bf16.mxu0 0
        %1563 = vmatpush1.bf16.msra.mxu0 %v1434
        %1564 = vmatprep.mubr.bf16.mxu0 %v1226
        %1565 = vmatmul.mubr.bf16.gmra.mrb[0].mxu0 %v1225
        %v1566 = vpop.f32.mrb[0].mxu0
        %v1567 = vadd.f32 %v1518, %v1566
        %v1568 = vpop.f32.mrb[0].mxu0
        %v1569 = vpop.f32.mrb[0].mxu0
        %v1570 = vadd.f32 %v1521, %v1569
        %v1571 = vpop.f32.mrb[0].mxu0
        %1572 = vmatprep.mubr.bf16.mxu0 %v1231
        %1573 = vmatmul.mubr.bf16.gmra.mrb[0].mxu0 %v1230
        %v1574 = vpop.f32.mrb[0].mxu0
        %v1575 = vadd.f32 %v1526, %v1574
        %v1576 = vpop.f32.mrb[0].mxu0
        %v1577 = vpop.f32.mrb[0].mxu0
        %v1578 = vadd.f32 %v1529, %v1577
        %v1579 = vpop.f32.mrb[0].mxu0
        %1580 = vdwg.mxu0
        %1581 = vmatprep.subr.bf16.mxu0 0
        %1582 = vmatpush1.bf16.msra.mxu0 %v1435
        %1583 = vmatprep.subr.bf16.mxu0 0
        %1584 = vmatpush1.bf16.msra.mxu0 %v1436
        %1585 = vmatprep.subr.bf16.mxu0 0
        %1586 = vmatpush1.bf16.msra.mxu0 %v1437
        %1587 = vmatprep.subr.bf16.mxu0 0
        %1588 = vmatpush1.bf16.msra.mxu0 %v1438
        %1589 = vmatprep.subr.bf16.mxu0 0
        %1590 = vmatpush1.bf16.msra.mxu0 %v1439
        %1591 = vmatprep.subr.bf16.mxu0 0
        %1592 = vmatpush1.bf16.msra.mxu0 %v1440
        %1593 = vmatprep.subr.bf16.mxu0 0
        %1594 = vmatpush1.bf16.msra.mxu0 %v1441
        %1595 = vmatprep.subr.bf16.mxu0 0
        %1596 = vmatpush1.bf16.msra.mxu0 %v1442
        %1597 = vmatprep.subr.bf16.mxu0 0
        %1598 = vmatpush1.bf16.msra.mxu0 0
        %1599 = vmatprep.subr.bf16.mxu0 0
        %1600 = vmatpush1.bf16.msra.mxu0 0
        %1601 = vmatprep.subr.bf16.mxu0 0
        %1602 = vmatpush1.bf16.msra.mxu0 0
        %1603 = vmatprep.subr.bf16.mxu0 0
        %1604 = vmatpush1.bf16.msra.mxu0 0
        %1605 = vmatprep.subr.bf16.mxu0 0
        %1606 = vmatpush1.bf16.msra.mxu0 0
        %1607 = vmatprep.subr.bf16.mxu0 0
        %1608 = vmatpush1.bf16.msra.mxu0 0
        %1609 = vmatprep.subr.bf16.mxu0 0
        %1610 = vmatpush1.bf16.msra.mxu0 0
        %1611 = vmatprep.subr.bf16.mxu0 0
        %1612 = vmatpush1.bf16.msra.mxu0 0
        %1613 = vmatprep.mubr.bf16.mxu0 0
        %1614 = vmatmul.mubr.bf16.gmra.mrb[0].mxu0 %v1227
        %v1615 = vpop.f32.mrb[0].mxu0
        %v1616 = vadd.f32 %v1567, %v1615
        %v1617 = vpop.f32.mrb[0].mxu0
        %v1618 = vpop.f32.mrb[0].mxu0
        %v1619 = vadd.f32 %v1570, %v1618
        %v1620 = vpop.f32.mrb[0].mxu0
        %1621 = vmatprep.mubr.bf16.mxu0 0
        %1622 = vmatmul.mubr.bf16.gmra.mrb[0].mxu0 %v1232
        %v1623 = vpop.f32.mrb[0].mxu0
        %v1624 = vadd.f32 %v1575, %v1623
        %v1625 = vpop.f32.mrb[0].mxu0
        %v1626 = vpop.f32.mrb[0].mxu0
        %v1627 = vadd.f32 %v1578, %v1626
        %v1628 = vpop.f32.mrb[0].mxu0
        %1629 = vdwg.mxu0
        %v1630 = vmax.f32 %v1616, 0.0
        %v1631 = vmax.f32 %v1619, 0.0
        %v1632 = vmax.f32 %v1624, 0.0
        %v1633 = vmax.f32 %v1627, 0.0
        %v1634 = vld [vmem:[%s922] sm:$0xff]
        %v1635 = vld [vmem:[%s922 + $0x8] sm:$0xff]
        %v1636 = vld [vmem:[%s922 + $0x10] sm:$0xff]
        %v1637 = vld [vmem:[%s922 + $0x18] sm:$0xff]
        %1639 = vset.pattern.permute.xlu0 0
        %1640 = vperm.xlu0 %1639, %v1634
        %v1641 = vpop.permute.xlu0 %1640
        %1644 = vset.pattern.permute.xlu0 0
        %1645 = vperm.xlu0 %1644, %v1635
        %v1646 = vpop.permute.xlu0 %1645
        %1649 = vset.pattern.permute.xlu0 0
        %1650 = vperm.xlu0 %1649, %v1636
        %v1651 = vpop.permute.xlu0 %1650
        %1654 = vset.pattern.permute.xlu0 0
        %1655 = vperm.xlu0 %1654, %v1637
        %v1656 = vpop.permute.xlu0 %1655
        %v1658 = vmul.f32 %v1630, %v1641
        %v1659 = vmul.f32 %v1631, %v1646
        %v1660 = vmul.f32 %v1632, %v1651
        %v1661 = vmul.f32 %v1633, %v1656
        %v1662 = vadd.f32 %v1658, %v1659
        %v1663 = vrot.slane %v1662, 4
        %v1664 = vadd.f32 %v1662, %v1663
        %v1665 = vrot.slane %v1664, 2
        %v1666 = vadd.f32 %v1664, %v1665
        %v1667 = vrot.slane %v1666, 1
        %v1668 = vadd.f32 %v1666, %v1667
        %v1669 = vadd.f32 %v1660, %v1661
        %v1670 = vrot.slane %v1669, 4
        %v1671 = vadd.f32 %v1669, %v1670
        %v1672 = vrot.slane %v1671, 2
        %v1673 = vadd.f32 %v1671, %v1672
        %v1674 = vrot.slane %v1673, 1
        %v1675 = vadd.f32 %v1673, %v1674
        %v1676 = vmul.f32 %v1668, 0.0625
        %v1677 = vmul.f32 %v1675, 0.0625
        %vm1678 = vcmask 1040384
        %v1679 = vsel %vm1678, %v1676, 0.0
        %v1680 = vsel %vm1678, %v1677, 0.0
        %v1681 = vpack.c.bf16 %v1659, %v1658
        %v1682 = vpack.c.bf16 %v1679, %v1679
        %v1683 = vpack.c.bf16 %v1661, %v1660
        %v1684 = vpack.c.bf16 %v1680, %v1680
        %v1685 = vld [vmem:[%s931] sm:$0xff]
        %v1686 = vld [vmem:[%s931 + $0x8] sm:$0xf]
        %v1687 = vld [vmem:[%s931 + $0xc] sm:$0xff]
        %v1688 = vld [vmem:[%s931 + $0x14] sm:$0xf]
        %v1689 = vld [vmem:[%s931 + $0x18] sm:$0xff]
        %v1690 = vld [vmem:[%s931 + $0x20] sm:$0xf]
        %v1691 = vld [vmem:[%s931 + $0x24] sm:$0xff]
        %v1692 = vld [vmem:[%s931 + $0x2c] sm:$0xf]
        %v1693 = vld [vmem:[#allocation15] sm:$0xf]
        %v1694 = vld [vmem:[#allocation15 + $0x4] sm:$0xf]
        %v1695 = vld [vmem:[#allocation15 + $0x8] sm:$0xf]
        %v1696 = vld [vmem:[#allocation15 + $0xc] sm:$0xf]
        %v1697 = vld [vmem:[#allocation15 + $0x10] sm:$0xf]
        %v1698 = vld [vmem:[#allocation15 + $0x14] sm:$0xf]
        %v1699 = vld [vmem:[#allocation15 + $0x18] sm:$0xf]
        %v1700 = vld [vmem:[#allocation15 + $0x1c] sm:$0xf]
        %v1701 = vld [vmem:[#allocation15 + $0x20] sm:$0xf]
        %v1702 = vld [vmem:[#allocation15 + $0x24] sm:$0xf]
        %v1703 = vld [vmem:[#allocation15 + $0x28] sm:$0xf]
        %v1704 = vld [vmem:[#allocation15 + $0x2c] sm:$0xf]
        %v1705 = vld [vmem:[#allocation15 + $0x30] sm:$0xf]
        %v1706 = vld [vmem:[#allocation15 + $0x34] sm:$0xf]
        %v1707 = vld [vmem:[#allocation15 + $0x38] sm:$0xf]
        %v1708 = vld [vmem:[#allocation15 + $0x3c] sm:$0xf]
        %v1709 = vld [vmem:[#allocation15 + $0x40] sm:$0xf]
        %v1710 = vld [vmem:[#allocation15 + $0x44] sm:$0xf]
        %v1711 = vld [vmem:[#allocation15 + $0x48] sm:$0xf]
        %v1712 = vld [vmem:[#allocation15 + $0x4c] sm:$0xf]
        %v1713 = vld [vmem:[#allocation15 + $0x50] sm:$0xf]
        %v1714 = vld [vmem:[#allocation15 + $0x54] sm:$0xf]
        %v1715 = vld [vmem:[#allocation15 + $0x58] sm:$0xf]
        %v1716 = vld [vmem:[#allocation15 + $0x5c] sm:$0xf]
        %v1717 = vld [vmem:[#allocation15 + $0x60] sm:$0xf]
        %v1718 = vld [vmem:[#allocation15 + $0x64] sm:$0xf]
        %v1719 = vld [vmem:[#allocation15 + $0x68] sm:$0xf]
        %v1720 = vld [vmem:[#allocation15 + $0x6c] sm:$0xf]
        %v1721 = vld [vmem:[#allocation15 + $0x70] sm:$0xf]
        %v1722 = vld [vmem:[#allocation15 + $0x74] sm:$0xf]
        %v1723 = vld [vmem:[#allocation15 + $0x78] sm:$0xf]
        %v1724 = vld [vmem:[#allocation15 + $0x7c] sm:$0xf]
        %v1725 = vld [vmem:[#allocation15 + $0x80] sm:$0xf]
        %v1726 = vld [vmem:[#allocation15 + $0x84] sm:$0xf]
        %v1727 = vld [vmem:[#allocation15 + $0x88] sm:$0xf]
        %v1728 = vld [vmem:[#allocation15 + $0x8c] sm:$0xf]
        %v1729 = vld [vmem:[#allocation15 + $0x90] sm:$0xf]
        %v1730 = vld [vmem:[#allocation15 + $0x94] sm:$0x3]
        %v1731 = vld [vmem:[#allocation16] sm:$0x1]
        %v1733 = vlaneseq
        %v1734 = vshrl.u32 %v1733, 7
        %v1735 = vsub.s32 0, %v1734
        %v1736 = vrot.slane %v1731, %v1735
        %v1746 = vunpack.c.l.b16 %v1685
        %v1747 = vunpack.c.h.b16 %v1685
        %v1748 = vunpack.c.l.b16 %v1686
        %v1749 = vunpack.c.l.b16 %v1687
        %v1750 = vunpack.c.h.b16 %v1687
        %v1751 = vunpack.c.l.b16 %v1688
        %v1752 = vunpack.c.l.b16 %v1689
        %v1753 = vunpack.c.h.b16 %v1689
        %v1754 = vunpack.c.l.b16 %v1690
        %v1755 = vunpack.c.l.b16 %v1691
        %v1756 = vunpack.c.h.b16 %v1691
        %v1757 = vunpack.c.l.b16 %v1692
        %v1758 = vpack.c.b16 %v1749, %v1746
        %v1759 = vpack.c.b16 %v1750, %v1747
        %v1760 = vpack.c.b16 %v1751, %v1748
        %v1761 = vpack.c.b16 %v1755, %v1752
        %v1762 = vpack.c.b16 %v1756, %v1753
        %v1763 = vpack.c.b16 %v1757, %v1754
        %v1806 = vunpack.c.l.b16 %v1693
        %v1807 = vunpack.c.l.b16 %v1694
        %v1808 = vunpack.c.l.b16 %v1695
        %v1809 = vunpack.c.l.b16 %v1696
        %v1810 = vunpack.c.l.b16 %v1697
        %v1811 = vunpack.c.l.b16 %v1698
        %v1812 = vunpack.c.l.b16 %v1699
        %v1813 = vunpack.c.l.b16 %v1700
        %v1814 = vunpack.c.l.b16 %v1701
        %v1815 = vunpack.c.l.b16 %v1702
        %v1816 = vunpack.c.l.b16 %v1703
        %v1817 = vunpack.c.l.b16 %v1704
        %v1818 = vunpack.c.l.b16 %v1705
        %v1819 = vunpack.c.l.b16 %v1706
        %v1820 = vunpack.c.l.b16 %v1707
        %v1821 = vunpack.c.l.b16 %v1708
        %v1822 = vunpack.c.l.b16 %v1709
        %v1823 = vunpack.c.l.b16 %v1710
        %v1824 = vunpack.c.l.b16 %v1711
        %v1825 = vunpack.c.l.b16 %v1712
        %v1826 = vunpack.c.l.b16 %v1713
        %v1827 = vunpack.c.l.b16 %v1714
        %v1828 = vunpack.c.l.b16 %v1715
        %v1829 = vunpack.c.l.b16 %v1716
        %v1830 = vunpack.c.l.b16 %v1717
        %v1831 = vunpack.c.l.b16 %v1718
        %v1832 = vunpack.c.l.b16 %v1719
        %v1833 = vunpack.c.l.b16 %v1720
        %v1834 = vunpack.c.l.b16 %v1721
        %v1835 = vunpack.c.l.b16 %v1722
        %v1836 = vunpack.c.l.b16 %v1723
        %v1837 = vunpack.c.l.b16 %v1724
        %v1838 = vunpack.c.l.b16 %v1725
        %v1839 = vunpack.c.l.b16 %v1726
        %v1840 = vunpack.c.l.b16 %v1727
        %v1841 = vunpack.c.l.b16 %v1728
        %v1842 = vunpack.c.l.b16 %v1729
        %v1843 = vunpack.c.l.b16 %v1730
        %v1844 = vpack.c.b16 %v1807, %v1806
        %v1845 = vpack.c.b16 %v1809, %v1808
        %v1846 = vpack.c.b16 %v1811, %v1810
        %v1847 = vpack.c.b16 %v1813, %v1812
        %v1848 = vpack.c.b16 %v1815, %v1814
        %v1849 = vpack.c.b16 %v1817, %v1816
        %v1850 = vpack.c.b16 %v1819, %v1818
        %v1851 = vpack.c.b16 %v1821, %v1820
        %v1852 = vpack.c.b16 %v1823, %v1822
        %v1853 = vpack.c.b16 %v1825, %v1824
        %v1854 = vpack.c.b16 %v1827, %v1826
        %v1855 = vpack.c.b16 %v1829, %v1828
        %v1856 = vpack.c.b16 %v1831, %v1830
        %v1857 = vpack.c.b16 %v1833, %v1832
        %v1858 = vpack.c.b16 %v1835, %v1834
        %v1859 = vpack.c.b16 %v1837, %v1836
        %v1860 = vpack.c.b16 %v1839, %v1838
        %v1861 = vpack.c.b16 %v1841, %v1840
        %v1862 = vpack.c.b16 %v1843, %v1842
        %vm1881 = vcmask 359424
        %v1883 = vsel %vm1881, %v1760, 0
        %v1886 = vsel %vm1881, %v1763, 0
        %vm1888 = vcmask 1045504
        %v1890 = vsel %vm1888, %v1862, 0
        %1892 = vmatprep.subr.bf16.mxu0 0
        %1893 = vmatpush1.bf16.msra.mxu0 %v1844
        %1894 = vmatprep.subr.bf16.mxu0 0
        %1895 = vmatpush1.bf16.msra.mxu0 %v1845
        %1896 = vmatprep.subr.bf16.mxu0 0
        %1897 = vmatpush1.bf16.msra.mxu0 %v1846
        %1898 = vmatprep.subr.bf16.mxu0 0
        %1899 = vmatpush1.bf16.msra.mxu0 %v1847
        %1900 = vmatprep.subr.bf16.mxu0 0
        %1901 = vmatpush1.bf16.msra.mxu0 %v1848
        %1902 = vmatprep.subr.bf16.mxu0 0
        %1903 = vmatpush1.bf16.msra.mxu0 %v1849
        %1904 = vmatprep.subr.bf16.mxu0 0
        %1905 = vmatpush1.bf16.msra.mxu0 %v1850
        %1906 = vmatprep.subr.bf16.mxu0 0
        %1907 = vmatpush1.bf16.msra.mxu0 %v1851
        %1908 = vmatprep.subr.bf16.mxu0 0
        %1909 = vmatpush1.bf16.msra.mxu0 %v1852
        %1910 = vmatprep.subr.bf16.mxu0 0
        %1911 = vmatpush1.bf16.msra.mxu0 %v1853
        %1912 = vmatprep.subr.bf16.mxu0 0
        %1913 = vmatpush1.bf16.msra.mxu0 %v1854
        %1914 = vmatprep.subr.bf16.mxu0 0
        %1915 = vmatpush1.bf16.msra.mxu0 %v1855
        %1916 = vmatprep.subr.bf16.mxu0 0
        %1917 = vmatpush1.bf16.msra.mxu0 %v1856
        %1918 = vmatprep.subr.bf16.mxu0 0
        %1919 = vmatpush1.bf16.msra.mxu0 %v1857
        %1920 = vmatprep.subr.bf16.mxu0 0
        %1921 = vmatpush1.bf16.msra.mxu0 %v1858
        %1922 = vmatprep.subr.bf16.mxu0 0
        %1923 = vmatpush1.bf16.msra.mxu0 %v1859
        %1924 = vmatprep.mubr.bf16.mxu0 %v1759
        %1925 = vmatmul.mubr.bf16.gmra.mrb[0].mxu0 %v1758
        %v1926 = vpop.f32.mrb[0].mxu0
        %v1927 = vadd.f32 %v1736, %v1926
        %v1928 = vpop.f32.mrb[0].mxu0
        %v1929 = vpop.f32.mrb[0].mxu0
        %v1930 = vadd.f32 %v1736, %v1929
        %v1931 = vpop.f32.mrb[0].mxu0
        %1932 = vmatprep.mubr.bf16.mxu0 %v1762
        %1933 = vmatmul.mubr.bf16.gmra.mrb[0].mxu0 %v1761
        %v1934 = vpop.f32.mrb[0].mxu0
        %v1935 = vadd.f32 %v1736, %v1934
        %v1936 = vpop.f32.mrb[0].mxu0
        %v1937 = vpop.f32.mrb[0].mxu0
        %v1938 = vadd.f32 %v1736, %v1937
        %v1939 = vpop.f32.mrb[0].mxu0
        %1940 = vdwg.mxu0
        %1941 = vmatprep.subr.bf16.mxu0 0
        %1942 = vmatpush1.bf16.msra.mxu0 %v1860
        %1943 = vmatprep.subr.bf16.mxu0 0
        %1944 = vmatpush1.bf16.msra.mxu0 %v1861
        %1945 = vmatprep.subr.bf16.mxu0 0
        %1946 = vmatpush1.bf16.msra.mxu0 %v1890
        %1947 = vmatprep.subr.bf16.mxu0 0
        %1948 = vmatpush1.bf16.msra.mxu0 0
        %1949 = vmatprep.subr.bf16.mxu0 0
        %1950 = vmatpush1.bf16.msra.mxu0 0
        %1951 = vmatprep.subr.bf16.mxu0 0
        %1952 = vmatpush1.bf16.msra.mxu0 0
        %1953 = vmatprep.subr.bf16.mxu0 0
        %1954 = vmatpush1.bf16.msra.mxu0 0
        %1955 = vmatprep.subr.bf16.mxu0 0
        %1956 = vmatpush1.bf16.msra.mxu0 0
        %1957 = vmatprep.subr.bf16.mxu0 0
        %1958 = vmatpush1.bf16.msra.mxu0 0
        %1959 = vmatprep.subr.bf16.mxu0 0
        %1960 = vmatpush1.bf16.msra.mxu0 0
        %1961 = vmatprep.subr.bf16.mxu0 0
        %1962 = vmatpush1.bf16.msra.mxu0 0
        %1963 = vmatprep.subr.bf16.mxu0 0
        %1964 = vmatpush1.bf16.msra.mxu0 0
        %1965 = vmatprep.subr.bf16.mxu0 0
        %1966 = vmatpush1.bf16.msra.mxu0 0
        %1967 = vmatprep.subr.bf16.mxu0 0
        %1968 = vmatpush1.bf16.msra.mxu0 0
        %1969 = vmatprep.subr.bf16.mxu0 0
        %1970 = vmatpush1.bf16.msra.mxu0 0
        %1971 = vmatprep.subr.bf16.mxu0 0
        %1972 = vmatpush1.bf16.msra.mxu0 0
        %1973 = vmatprep.mubr.bf16.mxu0 0
        %1974 = vmatmul.mubr.bf16.gmra.mrb[0].mxu0 %v1883
        %v1975 = vpop.f32.mrb[0].mxu0
        %v1976 = vadd.f32 %v1927, %v1975
        %v1977 = vpop.f32.mrb[0].mxu0
        %v1978 = vpop.f32.mrb[0].mxu0
        %v1979 = vadd.f32 %v1930, %v1978
        %v1980 = vpop.f32.mrb[0].mxu0
        %1981 = vmatprep.mubr.bf16.mxu0 0
        %1982 = vmatmul.mubr.bf16.gmra.mrb[0].mxu0 %v1886
        %v1983 = vpop.f32.mrb[0].mxu0
        %v1984 = vadd.f32 %v1935, %v1983
        %v1985 = vpop.f32.mrb[0].mxu0
        %v1986 = vpop.f32.mrb[0].mxu0
        %v1987 = vadd.f32 %v1938, %v1986
        %v1988 = vpop.f32.mrb[0].mxu0
        %1989 = vdwg.mxu0
        %v1990 = vmax.f32 %v1976, 0.0
        %v1991 = vmax.f32 %v1979, 0.0
        %v1992 = vmax.f32 %v1984, 0.0
        %v1993 = vmax.f32 %v1987, 0.0
        %v1994 = vpack.c.bf16 %v1991, %v1990
        %v1995 = vpack.c.bf16 %v1993, %v1992
        %v1996 = vld [vmem:[#allocation18] sm:$0xf]
        %v1997 = vld [vmem:[#allocation18 + $0x4] sm:$0xf]
        %v1998 = vld [vmem:[#allocation18 + $0x8] sm:$0xf]
        %v1999 = vld [vmem:[#allocation18 + $0xc] sm:$0xf]
        %v2000 = vld [vmem:[#allocation18 + $0x10] sm:$0xf]
        %v2001 = vld [vmem:[#allocation18 + $0x14] sm:$0xf]
        %v2002 = vld [vmem:[#allocation18 + $0x18] sm:$0xf]
        %v2003 = vld [vmem:[#allocation18 + $0x1c] sm:$0xf]
        %v2004 = vld [vmem:[#allocation18 + $0x20] sm:$0xf]
        %v2005 = vld [vmem:[#allocation18 + $0x24] sm:$0xf]
        %v2006 = vld [vmem:[#allocation18 + $0x28] sm:$0xf]
        %v2007 = vld [vmem:[#allocation18 + $0x2c] sm:$0xf]
        %v2008 = vld [vmem:[#allocation18 + $0x30] sm:$0xf]
        %v2009 = vld [vmem:[#allocation18 + $0x34] sm:$0xf]
        %v2010 = vld [vmem:[#allocation18 + $0x38] sm:$0xf]
        %v2011 = vld [vmem:[#allocation18 + $0x3c] sm:$0xf]
        %v2012 = vld [vmem:[#allocation19] sm:$0x1]
        %v2014 = vlaneseq
        %v2015 = vshrl.u32 %v2014, 7
        %v2016 = vsub.s32 0, %v2015
        %v2017 = vrot.slane %v2012, %v2016
        %v2035 = vunpack.c.l.b16 %v1996
        %v2036 = vunpack.c.l.b16 %v1997
        %v2037 = vunpack.c.l.b16 %v1998
        %v2038 = vunpack.c.l.b16 %v1999
        %v2039 = vunpack.c.l.b16 %v2000
        %v2040 = vunpack.c.l.b16 %v2001
        %v2041 = vunpack.c.l.b16 %v2002
        %v2042 = vunpack.c.l.b16 %v2003
        %v2043 = vunpack.c.l.b16 %v2004
        %v2044 = vunpack.c.l.b16 %v2005
        %v2045 = vunpack.c.l.b16 %v2006
        %v2046 = vunpack.c.l.b16 %v2007
        %v2047 = vunpack.c.l.b16 %v2008
        %v2048 = vunpack.c.l.b16 %v2009
        %v2049 = vunpack.c.l.b16 %v2010
        %v2050 = vunpack.c.l.b16 %v2011
        %v2051 = vpack.c.b16 %v2036, %v2035
        %v2052 = vpack.c.b16 %v2038, %v2037
        %v2053 = vpack.c.b16 %v2040, %v2039
        %v2054 = vpack.c.b16 %v2042, %v2041
        %v2055 = vpack.c.b16 %v2044, %v2043
        %v2056 = vpack.c.b16 %v2046, %v2045
        %v2057 = vpack.c.b16 %v2048, %v2047
        %v2058 = vpack.c.b16 %v2050, %v2049
        %2067 = vmatprep.subr.bf16.mxu0 0
        %2068 = vmatpush1.bf16.msra.mxu0 %v2051
        %2069 = vmatprep.subr.bf16.mxu0 0
        %2070 = vmatpush1.bf16.msra.mxu0 %v2052
        %2071 = vmatprep.subr.bf16.mxu0 0
        %2072 = vmatpush1.bf16.msra.mxu0 %v2053
        %2073 = vmatprep.subr.bf16.mxu0 0
        %2074 = vmatpush1.bf16.msra.mxu0 %v2054
        %2075 = vmatprep.subr.bf16.mxu0 0
        %2076 = vmatpush1.bf16.msra.mxu0 %v2055
        %2077 = vmatprep.subr.bf16.mxu0 0
        %2078 = vmatpush1.bf16.msra.mxu0 %v2056
        %2079 = vmatprep.subr.bf16.mxu0 0
        %2080 = vmatpush1.bf16.msra.mxu0 %v2057
        %2081 = vmatprep.subr.bf16.mxu0 0
        %2082 = vmatpush1.bf16.msra.mxu0 %v2058
        %2083 = vmatprep.subr.bf16.mxu0 0
        %2084 = vmatpush1.bf16.msra.mxu0 0
        %2085 = vmatprep.subr.bf16.mxu0 0
        %2086 = vmatpush1.bf16.msra.mxu0 0
        %2087 = vmatprep.subr.bf16.mxu0 0
        %2088 = vmatpush1.bf16.msra.mxu0 0
        %2089 = vmatprep.subr.bf16.mxu0 0
        %2090 = vmatpush1.bf16.msra.mxu0 0
        %2091 = vmatprep.subr.bf16.mxu0 0
        %2092 = vmatpush1.bf16.msra.mxu0 0
        %2093 = vmatprep.subr.bf16.mxu0 0
        %2094 = vmatpush1.bf16.msra.mxu0 0
        %2095 = vmatprep.subr.bf16.mxu0 0
        %2096 = vmatpush1.bf16.msra.mxu0 0
        %2097 = vmatprep.subr.bf16.mxu0 0
        %2098 = vmatpush1.bf16.msra.mxu0 0
        %2099 = vmatprep.mubr.bf16.mxu0 0
        %2100 = vmatmul.mubr.bf16.gmra.mrb[0].mxu0 %v1994
        %v2101 = vpop.f32.mrb[0].mxu0
        %v2102 = vadd.f32 %v2017, %v2101
        %v2103 = vpop.f32.mrb[0].mxu0
        %v2104 = vpop.f32.mrb[0].mxu0
        %v2105 = vadd.f32 %v2017, %v2104
        %v2106 = vpop.f32.mrb[0].mxu0
        %2107 = vmatprep.mubr.bf16.mxu0 0
        %2108 = vmatmul.mubr.bf16.gmra.mrb[0].mxu0 %v1995
        %v2109 = vpop.f32.mrb[0].mxu0
        %v2110 = vadd.f32 %v2017, %v2109
        %v2111 = vpop.f32.mrb[0].mxu0
        %v2112 = vpop.f32.mrb[0].mxu0
        %v2113 = vadd.f32 %v2017, %v2112
        %v2114 = vpop.f32.mrb[0].mxu0
        %2115 = vdwg.mxu0
        %v2116 = vmax.f32 %v2102, 0.0
        %v2117 = vmax.f32 %v2105, 0.0
        %v2118 = vmax.f32 %v2110, 0.0
        %v2119 = vmax.f32 %v2113, 0.0
        %v2120 = vld [vmem:[%s940] sm:$0xff]
        %v2121 = vld [vmem:[%s940 + $0x8] sm:$0xff]
        %v2122 = vld [vmem:[%s940 + $0x10] sm:$0xff]
        %v2123 = vld [vmem:[%s940 + $0x18] sm:$0xff]
        %2125 = vset.pattern.permute.xlu0 0
        %2126 = vperm.xlu0 %2125, %v2120
        %v2127 = vpop.permute.xlu0 %2126
        %2130 = vset.pattern.permute.xlu0 0
        %2131 = vperm.xlu0 %2130, %v2121
        %v2132 = vpop.permute.xlu0 %2131
        %2135 = vset.pattern.permute.xlu0 0
        %2136 = vperm.xlu0 %2135, %v2122
        %v2137 = vpop.permute.xlu0 %2136
        %2140 = vset.pattern.permute.xlu0 0
        %2141 = vperm.xlu0 %2140, %v2123
        %v2142 = vpop.permute.xlu0 %2141
        %v2144 = vmul.f32 %v2116, %v2127
        %v2145 = vmul.f32 %v2117, %v2132
        %v2146 = vmul.f32 %v2118, %v2137
        %v2147 = vmul.f32 %v2119, %v2142
        %v2148 = vadd.f32 %v2144, %v2145
        %v2149 = vrot.slane %v2148, 4
        %v2150 = vadd.f32 %v2148, %v2149
        %v2151 = vrot.slane %v2150, 2
        %v2152 = vadd.f32 %v2150, %v2151
        %v2153 = vrot.slane %v2152, 1
        %v2154 = vadd.f32 %v2152, %v2153
        %v2155 = vadd.f32 %v2146, %v2147
        %v2156 = vrot.slane %v2155, 4
        %v2157 = vadd.f32 %v2155, %v2156
        %v2158 = vrot.slane %v2157, 2
        %v2159 = vadd.f32 %v2157, %v2158
        %v2160 = vrot.slane %v2159, 1
        %v2161 = vadd.f32 %v2159, %v2160
        %v2162 = vmul.f32 %v2154, 0.0625
        %v2163 = vmul.f32 %v2161, 0.0625
        %v2164 = vsel %vm1678, %v2162, 0.0
        %v2165 = vsel %vm1678, %v2163, 0.0
        %v2166 = vpack.c.bf16 %v2145, %v2144
        %v2167 = vpack.c.bf16 %v2164, %v2164
        %v2168 = vpack.c.bf16 %v2147, %v2146
        %v2169 = vpack.c.bf16 %v2165, %v2165
        %v2174 = vunpack.c.l.b16 %v1681
        %v2175 = vunpack.c.h.b16 %v1681
        %v2176 = vunpack.c.l.b16 %v1682
        %v2177 = vunpack.c.l.b16 %v1683
        %v2178 = vunpack.c.h.b16 %v1683
        %v2179 = vunpack.c.l.b16 %v1684
        %v2180 = vld [vmem:[#allocation21] sm:$0xf]
        %v2181 = vld [vmem:[#allocation21 + $0x4] sm:$0xf]
        %v2182 = vld [vmem:[#allocation21 + $0x8] sm:$0xf]
        %v2183 = vld [vmem:[#allocation21 + $0xc] sm:$0xf]
        %v2184 = vld [vmem:[#allocation21 + $0x10] sm:$0xf]
        %v2185 = vld [vmem:[#allocation21 + $0x14] sm:$0xf]
        %v2186 = vld [vmem:[#allocation21 + $0x18] sm:$0xf]
        %v2187 = vld [vmem:[#allocation21 + $0x1c] sm:$0xf]
        %v2188 = vld [vmem:[#allocation21 + $0x20] sm:$0xf]
        %v2189 = vld [vmem:[#allocation21 + $0x24] sm:$0xf]
        %v2190 = vld [vmem:[#allocation21 + $0x28] sm:$0xf]
        %v2191 = vld [vmem:[#allocation21 + $0x2c] sm:$0xf]
        %v2192 = vld [vmem:[#allocation21 + $0x30] sm:$0xf]
        %v2193 = vld [vmem:[#allocation21 + $0x34] sm:$0xf]
        %v2194 = vld [vmem:[#allocation21 + $0x38] sm:$0xf]
        %v2195 = vld [vmem:[#allocation21 + $0x3c] sm:$0xf]
        %v2196 = vpack.c.b16 %v2175, %v2174
        %v2197 = vpack.c.b16 %v2177, %v2176
        %v2198 = vpack.c.b16 %v2179, %v2178
        %v2218 = vunpack.c.l.b16 %v2180
        %v2219 = vunpack.c.l.b16 %v2181
        %v2220 = vunpack.c.l.b16 %v2182
        %v2221 = vunpack.c.l.b16 %v2183
        %v2222 = vunpack.c.l.b16 %v2184
        %v2223 = vunpack.c.l.b16 %v2185
        %v2224 = vunpack.c.l.b16 %v2186
        %v2225 = vunpack.c.l.b16 %v2187
        %v2226 = vunpack.c.l.b16 %v2188
        %v2227 = vunpack.c.l.b16 %v2189
        %v2228 = vunpack.c.l.b16 %v2190
        %v2229 = vunpack.c.l.b16 %v2191
        %v2230 = vunpack.c.l.b16 %v2192
        %v2231 = vunpack.c.l.b16 %v2193
        %v2232 = vunpack.c.l.b16 %v2194
        %v2233 = vunpack.c.l.b16 %v2195
        %v2234 = vpack.c.b16 %v2219, %v2218
        %v2235 = vpack.c.b16 %v2221, %v2220
        %v2236 = vpack.c.b16 %v2223, %v2222
        %v2237 = vpack.c.b16 %v2225, %v2224
        %v2238 = vpack.c.b16 %v2227, %v2226
        %v2239 = vpack.c.b16 %v2229, %v2228
        %v2240 = vpack.c.b16 %v2231, %v2230
        %v2241 = vpack.c.b16 %v2233, %v2232
        %2250 = vmatprep.subr.bf16.mxu0 0
        %2251 = vmatpush1.bf16.msra.mxu0 %v2234
        %2252 = vmatprep.subr.bf16.mxu0 0
        %2253 = vmatpush1.bf16.msra.mxu0 %v2235
        %2254 = vmatprep.subr.bf16.mxu0 0
        %2255 = vmatpush1.bf16.msra.mxu0 %v2236
        %2256 = vmatprep.subr.bf16.mxu0 0
        %2257 = vmatpush1.bf16.msra.mxu0 %v2237
        %2258 = vmatprep.subr.bf16.mxu0 0
        %2259 = vmatpush1.bf16.msra.mxu0 %v2238
        %2260 = vmatprep.subr.bf16.mxu0 0
        %2261 = vmatpush1.bf16.msra.mxu0 %v2239
        %2262 = vmatprep.subr.bf16.mxu0 0
        %2263 = vmatpush1.bf16.msra.mxu0 %v2240
        %2264 = vmatprep.subr.bf16.mxu0 0
        %2265 = vmatpush1.bf16.msra.mxu0 %v2241
        %2266 = vmatprep.subr.bf16.mxu0 0
        %2267 = vmatpush1.bf16.msra.mxu0 0
        %2268 = vmatprep.subr.bf16.mxu0 0
        %2269 = vmatpush1.bf16.msra.mxu0 0
        %2270 = vmatprep.subr.bf16.mxu0 0
        %2271 = vmatpush1.bf16.msra.mxu0 0
        %2272 = vmatprep.subr.bf16.mxu0 0
        %2273 = vmatpush1.bf16.msra.mxu0 0
        %2274 = vmatprep.subr.bf16.mxu0 0
        %2275 = vmatpush1.bf16.msra.mxu0 0
        %2276 = vmatprep.subr.bf16.mxu0 0
        %2277 = vmatpush1.bf16.msra.mxu0 0
        %2278 = vmatprep.subr.bf16.mxu0 0
        %2279 = vmatpush1.bf16.msra.mxu0 0
        %2280 = vmatprep.subr.bf16.mxu0 0
        %2281 = vmatpush1.bf16.msra.mxu0 0
        %2282 = vmatprep.mubr.bf16.mxu0 0
        %2283 = vmatmul.mubr.bf16.gmra.mrb[0].mxu0 %v2196
        %v2284 = vpop.f32.mrb[0].mxu0
        %v2285 = vadd.f32 0.0, %v2284
        %v2286 = vpop.f32.mrb[0].mxu0
        %v2287 = vpop.f32.mrb[0].mxu0
        %v2288 = vadd.f32 0.0, %v2287
        %v2289 = vpop.f32.mrb[0].mxu0
        %2290 = vmatprep.mubr.bf16.mxu0 0
        %2291 = vmatmul.mubr.bf16.gmra.mrb[0].mxu0 %v2197
        %v2292 = vpop.f32.mrb[0].mxu0
        %v2293 = vadd.f32 0.0, %v2292
        %v2294 = vpop.f32.mrb[0].mxu0
        %v2295 = vpop.f32.mrb[0].mxu0
        %v2296 = vadd.f32 0.0, %v2295
        %v2297 = vpop.f32.mrb[0].mxu0
        %2298 = vmatprep.mubr.bf16.mxu0 0
        %2299 = vmatmul.mubr.bf16.gmra.mrb[0].mxu0 %v2198
        %v2300 = vpop.f32.mrb[0].mxu0
        %v2301 = vadd.f32 0.0, %v2300
        %v2302 = vpop.f32.mrb[0].mxu0
        %v2303 = vpop.f32.mrb[0].mxu0
        %v2304 = vadd.f32 0.0, %v2303
        %v2305 = vpop.f32.mrb[0].mxu0
        %2306 = vdwg.mxu0
        %v2307 = vpack.c.bf16 %v2288, %v2285
        %v2308 = vpack.c.bf16 %v2293, %v2293
        %v2309 = vpack.c.bf16 %v2301, %v2296
        %v2310 = vpack.c.bf16 %v2304, %v2304
        %2311 = vmatprep.subr.bf16.mxu0 0
        %2312 = vmatpush1.bf16.xpose.msra.mxu0 %v2166
        %2313 = vmatprep.subr.bf16.mxu0 0
        %2314 = vmatpush1.bf16.xpose.msra.mxu0 %v2167
        %2315 = vmatprep.subr.bf16.mxu0 0
        %2316 = vmatpush1.bf16.xpose.msra.mxu0 0
        %2317 = vmatprep.subr.bf16.mxu0 0
        %2318 = vmatpush1.bf16.xpose.msra.mxu0 0
        %2319 = vmatprep.subr.bf16.mxu0 0
        %2320 = vmatpush1.bf16.xpose.msra.mxu0 0
        %2321 = vmatprep.subr.bf16.mxu0 0
        %2322 = vmatpush1.bf16.xpose.msra.mxu0 0
        %2323 = vmatprep.subr.bf16.mxu0 0
        %2324 = vmatpush1.bf16.xpose.msra.mxu0 0
        %2325 = vmatprep.subr.bf16.mxu0 0
        %2326 = vmatpush1.bf16.xpose.msra.mxu0 0
        %2327 = vmatprep.subr.bf16.mxu0 0
        %2328 = vmatpush1.bf16.xpose.msra.mxu0 0
        %2329 = vmatprep.subr.bf16.mxu0 0
        %2330 = vmatpush1.bf16.xpose.msra.mxu0 0
        %2331 = vmatprep.subr.bf16.mxu0 0
        %2332 = vmatpush1.bf16.xpose.msra.mxu0 0
        %2333 = vmatprep.subr.bf16.mxu0 0
        %2334 = vmatpush1.bf16.xpose.msra.mxu0 0
        %2335 = vmatprep.subr.bf16.mxu0 0
        %2336 = vmatpush1.bf16.xpose.msra.mxu0 0
        %2337 = vmatprep.subr.bf16.mxu0 0
        %2338 = vmatpush1.bf16.xpose.msra.mxu0 0
        %2339 = vmatprep.subr.bf16.mxu0 0
        %2340 = vmatpush1.bf16.xpose.msra.mxu0 0
        %2341 = vmatprep.subr.bf16.mxu0 0
        %2342 = vmatpush1.bf16.xpose.msra.mxu0 0
        %2343 = vmatprep.mubr.bf16.mxu0 0
        %2344 = vmatmul.mubr.bf16.gmra.mrb[0].mxu0 %v2307
        %v2345 = vpop.f32.mrb[0].mxu0
        %v2346 = vadd.f32 0.0, %v2345
        %v2347 = vpop.f32.mrb[0].mxu0
        %v2348 = vpop.f32.mrb[0].mxu0
        %v2349 = vadd.f32 0.0, %v2348
        %v2350 = vpop.f32.mrb[0].mxu0
        %2351 = vmatprep.mubr.bf16.mxu0 0
        %2352 = vmatmul.mubr.bf16.gmra.mrb[0].mxu0 %v2308
        %v2353 = vpop.f32.mrb[0].mxu0
        %v2354 = vadd.f32 0.0, %v2353
        %v2355 = vpop.f32.mrb[0].mxu0
        %v2356 = vpop.f32.mrb[0].mxu0
        %v2357 = vpop.f32.mrb[0].mxu0
        %2358 = vdwg.mxu0
        %2359 = vmatprep.subr.bf16.mxu0 0
        %2360 = vmatpush1.bf16.xpose.msra.mxu0 %v2168
        %2361 = vmatprep.subr.bf16.mxu0 0
        %2362 = vmatpush1.bf16.xpose.msra.mxu0 %v2169
        %2363 = vmatprep.subr.bf16.mxu0 0
        %2364 = vmatpush1.bf16.xpose.msra.mxu0 0
        %2365 = vmatprep.subr.bf16.mxu0 0
        %2366 = vmatpush1.bf16.xpose.msra.mxu0 0
        %2367 = vmatprep.subr.bf16.mxu0 0
        %2368 = vmatpush1.bf16.xpose.msra.mxu0 0
        %2369 = vmatprep.subr.bf16.mxu0 0
        %2370 = vmatpush1.bf16.xpose.msra.mxu0 0
        %2371 = vmatprep.subr.bf16.mxu0 0
        %2372 = vmatpush1.bf16.xpose.msra.mxu0 0
        %2373 = vmatprep.subr.bf16.mxu0 0
        %2374 = vmatpush1.bf16.xpose.msra.mxu0 0
        %2375 = vmatprep.subr.bf16.mxu0 0
        %2376 = vmatpush1.bf16.xpose.msra.mxu0 0
        %2377 = vmatprep.subr.bf16.mxu0 0
        %2378 = vmatpush1.bf16.xpose.msra.mxu0 0
        %2379 = vmatprep.subr.bf16.mxu0 0
        %2380 = vmatpush1.bf16.xpose.msra.mxu0 0
        %2381 = vmatprep.subr.bf16.mxu0 0
        %2382 = vmatpush1.bf16.xpose.msra.mxu0 0
        %2383 = vmatprep.subr.bf16.mxu0 0
        %2384 = vmatpush1.bf16.xpose.msra.mxu0 0
        %2385 = vmatprep.subr.bf16.mxu0 0
        %2386 = vmatpush1.bf16.xpose.msra.mxu0 0
        %2387 = vmatprep.subr.bf16.mxu0 0
        %2388 = vmatpush1.bf16.xpose.msra.mxu0 0
        %2389 = vmatprep.subr.bf16.mxu0 0
        %2390 = vmatpush1.bf16.xpose.msra.mxu0 0
        %2391 = vmatprep.mubr.bf16.mxu0 0
        %2392 = vmatmul.mubr.bf16.gmra.mrb[0].mxu0 %v2309
        %v2393 = vpop.f32.mrb[0].mxu0
        %v2394 = vadd.f32 0.0, %v2393
        %v2395 = vpop.f32.mrb[0].mxu0
        %v2396 = vpop.f32.mrb[0].mxu0
        %v2397 = vadd.f32 0.0, %v2396
        %v2398 = vpop.f32.mrb[0].mxu0
        %2399 = vmatprep.mubr.bf16.mxu0 0
        %2400 = vmatmul.mubr.bf16.gmra.mrb[0].mxu0 %v2310
        %v2401 = vpop.f32.mrb[0].mxu0
        %v2402 = vadd.f32 0.0, %v2401
        %v2403 = vpop.f32.mrb[0].mxu0
        %v2404 = vpop.f32.mrb[0].mxu0
        %v2405 = vpop.f32.mrb[0].mxu0
        %2406 = vdwg.mxu0
        %v2407 = vpack.c.bf16 %v2349, %v2346
        %v2408 = vpack.c.bf16 %v2354, %v2354
        %v2409 = vpack.c.bf16 %v2397, %v2394
        %v2410 = vpack.c.bf16 %v2402, %v2402
        %v2412 = vpack.i.b16 %v2407, %v2407
        %v2414 = vlaneseq
        %v2415 = vshrl.u32 %v2414, 7
        %v2416 = vsub.s32 0, %v2415
        %v2417 = vrot.slane %v2412, %v2416
        %2419 = vbcast.lane.c.b16.xlu0 %v2417, 256
        %v2420 = vpop.permute.xlu0 %2419
        %s2422 = sor.u32 256, 16
        %2423 = vbcast.lane.c.b16.xlu0 %v2417, %s2422
        %v2424 = vpop.permute.xlu0 %2423
        %v2425 = vshrl.u32 %v2407, 16
        %v2426 = vpack.i.b16 %v2425, %v2425
        %v2428 = vlaneseq
        %v2429 = vshrl.u32 %v2428, 7
        %v2430 = vsub.s32 0, %v2429
        %v2431 = vrot.slane %v2426, %v2430
        %2433 = vbcast.lane.c.b16.xlu0 %v2431, 256
        %v2434 = vpop.permute.xlu0 %2433
        %s2436 = sor.u32 256, 16
        %2437 = vbcast.lane.c.b16.xlu0 %v2431, %s2436
        %v2438 = vpop.permute.xlu0 %2437
        %v2439 = vlaneseq
        %v2440 = vshrl.u32 %v2439, 7
        %v2441 = vsub.s32 1, %v2440
        %v2442 = vrot.slane %v2412, %v2441
        %2444 = vbcast.lane.c.b16.xlu0 %v2442, 256
        %v2445 = vpop.permute.xlu0 %2444
        %s2447 = sor.u32 256, 16
        %2448 = vbcast.lane.c.b16.xlu0 %v2442, %s2447
        %v2449 = vpop.permute.xlu0 %2448
        %v2450 = vlaneseq
        %v2451 = vshrl.u32 %v2450, 7
        %v2452 = vsub.s32 1, %v2451
        %v2453 = vrot.slane %v2426, %v2452
        %2455 = vbcast.lane.c.b16.xlu0 %v2453, 256
        %v2456 = vpop.permute.xlu0 %2455
        %s2458 = sor.u32 256, 16
        %2459 = vbcast.lane.c.b16.xlu0 %v2453, %s2458
        %v2460 = vpop.permute.xlu0 %2459
        %v2461 = vlaneseq
        %v2462 = vshrl.u32 %v2461, 7
        %v2463 = vsub.s32 2, %v2462
        %v2464 = vrot.slane %v2412, %v2463
        %2466 = vbcast.lane.c.b16.xlu0 %v2464, 256
        %v2467 = vpop.permute.xlu0 %2466
        %s2469 = sor.u32 256, 16
        %2470 = vbcast.lane.c.b16.xlu0 %v2464, %s2469
        %v2471 = vpop.permute.xlu0 %2470
        %v2472 = vlaneseq
        %v2473 = vshrl.u32 %v2472, 7
        %v2474 = vsub.s32 2, %v2473
        %v2475 = vrot.slane %v2426, %v2474
        %2477 = vbcast.lane.c.b16.xlu0 %v2475, 256
        %v2478 = vpop.permute.xlu0 %2477
        %s2480 = sor.u32 256, 16
        %2481 = vbcast.lane.c.b16.xlu0 %v2475, %s2480
        %v2482 = vpop.permute.xlu0 %2481
        %v2483 = vlaneseq
        %v2484 = vshrl.u32 %v2483, 7
        %v2485 = vsub.s32 3, %v2484
        %v2486 = vrot.slane %v2412, %v2485
        %2488 = vbcast.lane.c.b16.xlu0 %v2486, 256
        %v2489 = vpop.permute.xlu0 %2488
        %s2491 = sor.u32 256, 16
        %2492 = vbcast.lane.c.b16.xlu0 %v2486, %s2491
        %v2493 = vpop.permute.xlu0 %2492
        %v2494 = vlaneseq
        %v2495 = vshrl.u32 %v2494, 7
        %v2496 = vsub.s32 3, %v2495
        %v2497 = vrot.slane %v2426, %v2496
        %2499 = vbcast.lane.c.b16.xlu0 %v2497, 256
        %v2500 = vpop.permute.xlu0 %2499
        %s2502 = sor.u32 256, 16
        %2503 = vbcast.lane.c.b16.xlu0 %v2497, %s2502
        %v2504 = vpop.permute.xlu0 %2503
        %v2505 = vlaneseq
        %v2506 = vshrl.u32 %v2505, 7
        %v2507 = vsub.s32 4, %v2506
        %v2508 = vrot.slane %v2412, %v2507
        %2510 = vbcast.lane.c.b16.xlu0 %v2508, 256
        %v2511 = vpop.permute.xlu0 %2510
        %s2513 = sor.u32 256, 16
        %2514 = vbcast.lane.c.b16.xlu0 %v2508, %s2513
        %v2515 = vpop.permute.xlu0 %2514
        %v2516 = vlaneseq
        %v2517 = vshrl.u32 %v2516, 7
        %v2518 = vsub.s32 4, %v2517
        %v2519 = vrot.slane %v2426, %v2518
        %2521 = vbcast.lane.c.b16.xlu0 %v2519, 256
        %v2522 = vpop.permute.xlu0 %2521
        %s2524 = sor.u32 256, 16
        %2525 = vbcast.lane.c.b16.xlu0 %v2519, %s2524
        %v2526 = vpop.permute.xlu0 %2525
        %v2527 = vlaneseq
        %v2528 = vshrl.u32 %v2527, 7
        %v2529 = vsub.s32 5, %v2528
        %v2530 = vrot.slane %v2412, %v2529
        %2532 = vbcast.lane.c.b16.xlu0 %v2530, 256
        %v2533 = vpop.permute.xlu0 %2532
        %s2535 = sor.u32 256, 16
        %2536 = vbcast.lane.c.b16.xlu0 %v2530, %s2535
        %v2537 = vpop.permute.xlu0 %2536
        %v2538 = vlaneseq
        %v2539 = vshrl.u32 %v2538, 7
        %v2540 = vsub.s32 5, %v2539
        %v2541 = vrot.slane %v2426, %v2540
        %2543 = vbcast.lane.c.b16.xlu0 %v2541, 256
        %v2544 = vpop.permute.xlu0 %2543
        %s2546 = sor.u32 256, 16
        %2547 = vbcast.lane.c.b16.xlu0 %v2541, %s2546
        %v2548 = vpop.permute.xlu0 %2547
        %v2549 = vlaneseq
        %v2550 = vshrl.u32 %v2549, 7
        %v2551 = vsub.s32 6, %v2550
        %v2552 = vrot.slane %v2412, %v2551
        %2554 = vbcast.lane.c.b16.xlu0 %v2552, 256
        %v2555 = vpop.permute.xlu0 %2554
        %s2557 = sor.u32 256, 16
        %2558 = vbcast.lane.c.b16.xlu0 %v2552, %s2557
        %v2559 = vpop.permute.xlu0 %2558
        %v2560 = vlaneseq
        %v2561 = vshrl.u32 %v2560, 7
        %v2562 = vsub.s32 6, %v2561
        %v2563 = vrot.slane %v2426, %v2562
        %2565 = vbcast.lane.c.b16.xlu0 %v2563, 256
        %v2566 = vpop.permute.xlu0 %2565
        %s2568 = sor.u32 256, 16
        %2569 = vbcast.lane.c.b16.xlu0 %v2563, %s2568
        %v2570 = vpop.permute.xlu0 %2569
        %v2571 = vlaneseq
        %v2572 = vshrl.u32 %v2571, 7
        %v2573 = vsub.s32 7, %v2572
        %v2574 = vrot.slane %v2412, %v2573
        %2576 = vbcast.lane.c.b16.xlu0 %v2574, 256
        %v2577 = vpop.permute.xlu0 %2576
        %s2579 = sor.u32 256, 16
        %2580 = vbcast.lane.c.b16.xlu0 %v2574, %s2579
        %v2581 = vpop.permute.xlu0 %2580
        %v2582 = vlaneseq
        %v2583 = vshrl.u32 %v2582, 7
        %v2584 = vsub.s32 7, %v2583
        %v2585 = vrot.slane %v2426, %v2584
        %2587 = vbcast.lane.c.b16.xlu0 %v2585, 256
        %v2588 = vpop.permute.xlu0 %2587
        %s2590 = sor.u32 256, 16
        %2591 = vbcast.lane.c.b16.xlu0 %v2585, %s2590
        %v2592 = vpop.permute.xlu0 %2591
        %v2594 = vpack.i.b16 %v2408, %v2408
        %v2596 = vlaneseq
        %v2597 = vshrl.u32 %v2596, 7
        %v2598 = vsub.s32 0, %v2597
        %v2599 = vrot.slane %v2594, %v2598
        %2601 = vbcast.lane.c.b16.xlu0 %v2599, 256
        %v2602 = vpop.permute.xlu0 %2601
        %s2604 = sor.u32 256, 16
        %2605 = vbcast.lane.c.b16.xlu0 %v2599, %s2604
        %v2606 = vpop.permute.xlu0 %2605
        %v2607 = vshrl.u32 %v2408, 16
        %v2608 = vpack.i.b16 %v2607, %v2607
        %v2610 = vlaneseq
        %v2611 = vshrl.u32 %v2610, 7
        %v2612 = vsub.s32 0, %v2611
        %v2613 = vrot.slane %v2608, %v2612
        %2615 = vbcast.lane.c.b16.xlu0 %v2613, 256
        %v2616 = vpop.permute.xlu0 %2615
        %s2618 = sor.u32 256, 16
        %2619 = vbcast.lane.c.b16.xlu0 %v2613, %s2618
        %v2620 = vpop.permute.xlu0 %2619
        %v2621 = vlaneseq
        %v2622 = vshrl.u32 %v2621, 7
        %v2623 = vsub.s32 1, %v2622
        %v2624 = vrot.slane %v2594, %v2623
        %2626 = vbcast.lane.c.b16.xlu0 %v2624, 256
        %v2627 = vpop.permute.xlu0 %2626
        %s2629 = sor.u32 256, 16
        %2630 = vbcast.lane.c.b16.xlu0 %v2624, %s2629
        %v2631 = vpop.permute.xlu0 %2630
        %v2632 = vlaneseq
        %v2633 = vshrl.u32 %v2632, 7
        %v2634 = vsub.s32 1, %v2633
        %v2635 = vrot.slane %v2608, %v2634
        %2637 = vbcast.lane.c.b16.xlu0 %v2635, 256
        %v2638 = vpop.permute.xlu0 %2637
        %s2640 = sor.u32 256, 16
        %2641 = vbcast.lane.c.b16.xlu0 %v2635, %s2640
        %v2642 = vpop.permute.xlu0 %2641
        %v2643 = vlaneseq
        %v2644 = vshrl.u32 %v2643, 7
        %v2645 = vsub.s32 2, %v2644
        %v2646 = vrot.slane %v2594, %v2645
        %2648 = vbcast.lane.c.b16.xlu0 %v2646, 256
        %v2649 = vpop.permute.xlu0 %2648
        %s2651 = sor.u32 256, 16
        %2652 = vbcast.lane.c.b16.xlu0 %v2646, %s2651
        %v2653 = vpop.permute.xlu0 %2652
        %v2654 = vlaneseq
        %v2655 = vshrl.u32 %v2654, 7
        %v2656 = vsub.s32 2, %v2655
        %v2657 = vrot.slane %v2608, %v2656
        %2659 = vbcast.lane.c.b16.xlu0 %v2657, 256
        %v2660 = vpop.permute.xlu0 %2659
        %s2662 = sor.u32 256, 16
        %2663 = vbcast.lane.c.b16.xlu0 %v2657, %s2662
        %v2664 = vpop.permute.xlu0 %2663
        %v2665 = vlaneseq
        %v2666 = vshrl.u32 %v2665, 7
        %v2667 = vsub.s32 3, %v2666
        %v2668 = vrot.slane %v2594, %v2667
        %2670 = vbcast.lane.c.b16.xlu0 %v2668, 256
        %v2671 = vpop.permute.xlu0 %2670
        %s2673 = sor.u32 256, 16
        %2674 = vbcast.lane.c.b16.xlu0 %v2668, %s2673
        %v2675 = vpop.permute.xlu0 %2674
        %v2676 = vlaneseq
        %v2677 = vshrl.u32 %v2676, 7
        %v2678 = vsub.s32 3, %v2677
        %v2679 = vrot.slane %v2608, %v2678
        %2681 = vbcast.lane.c.b16.xlu0 %v2679, 256
        %v2682 = vpop.permute.xlu0 %2681
        %s2684 = sor.u32 256, 16
        %2685 = vbcast.lane.c.b16.xlu0 %v2679, %s2684
        %v2686 = vpop.permute.xlu0 %2685
        %v2688 = vpack.i.b16 %v2409, %v2409
        %v2690 = vlaneseq
        %v2691 = vshrl.u32 %v2690, 7
        %v2692 = vsub.s32 0, %v2691
        %v2693 = vrot.slane %v2688, %v2692
        %2695 = vbcast.lane.c.b16.xlu0 %v2693, 256
        %v2696 = vpop.permute.xlu0 %2695
        %s2698 = sor.u32 256, 16
        %2699 = vbcast.lane.c.b16.xlu0 %v2693, %s2698
        %v2700 = vpop.permute.xlu0 %2699
        %v2701 = vshrl.u32 %v2409, 16
        %v2702 = vpack.i.b16 %v2701, %v2701
        %v2704 = vlaneseq
        %v2705 = vshrl.u32 %v2704, 7
        %v2706 = vsub.s32 0, %v2705
        %v2707 = vrot.slane %v2702, %v2706
        %2709 = vbcast.lane.c.b16.xlu0 %v2707, 256
        %v2710 = vpop.permute.xlu0 %2709
        %s2712 = sor.u32 256, 16
        %2713 = vbcast.lane.c.b16.xlu0 %v2707, %s2712
        %v2714 = vpop.permute.xlu0 %2713
        %v2715 = vlaneseq
        %v2716 = vshrl.u32 %v2715, 7
        %v2717 = vsub.s32 1, %v2716
        %v2718 = vrot.slane %v2688, %v2717
        %2720 = vbcast.lane.c.b16.xlu0 %v2718, 256
        %v2721 = vpop.permute.xlu0 %2720
        %s2723 = sor.u32 256, 16
        %2724 = vbcast.lane.c.b16.xlu0 %v2718, %s2723
        %v2725 = vpop.permute.xlu0 %2724
        %v2726 = vlaneseq
        %v2727 = vshrl.u32 %v2726, 7
        %v2728 = vsub.s32 1, %v2727
        %v2729 = vrot.slane %v2702, %v2728
        %2731 = vbcast.lane.c.b16.xlu0 %v2729, 256
        %v2732 = vpop.permute.xlu0 %2731
        %s2734 = sor.u32 256, 16
        %2735 = vbcast.lane.c.b16.xlu0 %v2729, %s2734
        %v2736 = vpop.permute.xlu0 %2735
        %v2737 = vlaneseq
        %v2738 = vshrl.u32 %v2737, 7
        %v2739 = vsub.s32 2, %v2738
        %v2740 = vrot.slane %v2688, %v2739
        %2742 = vbcast.lane.c.b16.xlu0 %v2740, 256
        %v2743 = vpop.permute.xlu0 %2742
        %s2745 = sor.u32 256, 16
        %2746 = vbcast.lane.c.b16.xlu0 %v2740, %s2745
        %v2747 = vpop.permute.xlu0 %2746
        %v2748 = vlaneseq
        %v2749 = vshrl.u32 %v2748, 7
        %v2750 = vsub.s32 2, %v2749
        %v2751 = vrot.slane %v2702, %v2750
        %2753 = vbcast.lane.c.b16.xlu0 %v2751, 256
        %v2754 = vpop.permute.xlu0 %2753
        %s2756 = sor.u32 256, 16
        %2757 = vbcast.lane.c.b16.xlu0 %v2751, %s2756
        %v2758 = vpop.permute.xlu0 %2757
        %v2759 = vlaneseq
        %v2760 = vshrl.u32 %v2759, 7
        %v2761 = vsub.s32 3, %v2760
        %v2762 = vrot.slane %v2688, %v2761
        %2764 = vbcast.lane.c.b16.xlu0 %v2762, 256
        %v2765 = vpop.permute.xlu0 %2764
        %s2767 = sor.u32 256, 16
        %2768 = vbcast.lane.c.b16.xlu0 %v2762, %s2767
        %v2769 = vpop.permute.xlu0 %2768
        %v2770 = vlaneseq
        %v2771 = vshrl.u32 %v2770, 7
        %v2772 = vsub.s32 3, %v2771
        %v2773 = vrot.slane %v2702, %v2772
        %2775 = vbcast.lane.c.b16.xlu0 %v2773, 256
        %v2776 = vpop.permute.xlu0 %2775
        %s2778 = sor.u32 256, 16
        %2779 = vbcast.lane.c.b16.xlu0 %v2773, %s2778
        %v2780 = vpop.permute.xlu0 %2779
        %v2781 = vlaneseq
        %v2782 = vshrl.u32 %v2781, 7
        %v2783 = vsub.s32 4, %v2782
        %v2784 = vrot.slane %v2688, %v2783
        %2786 = vbcast.lane.c.b16.xlu0 %v2784, 256
        %v2787 = vpop.permute.xlu0 %2786
        %s2789 = sor.u32 256, 16
        %2790 = vbcast.lane.c.b16.xlu0 %v2784, %s2789
        %v2791 = vpop.permute.xlu0 %2790
        %v2792 = vlaneseq
        %v2793 = vshrl.u32 %v2792, 7
        %v2794 = vsub.s32 4, %v2793
        %v2795 = vrot.slane %v2702, %v2794
        %2797 = vbcast.lane.c.b16.xlu0 %v2795, 256
        %v2798 = vpop.permute.xlu0 %2797
        %s2800 = sor.u32 256, 16
        %2801 = vbcast.lane.c.b16.xlu0 %v2795, %s2800
        %v2802 = vpop.permute.xlu0 %2801
        %v2803 = vlaneseq
        %v2804 = vshrl.u32 %v2803, 7
        %v2805 = vsub.s32 5, %v2804
        %v2806 = vrot.slane %v2688, %v2805
        %2808 = vbcast.lane.c.b16.xlu0 %v2806, 256
        %v2809 = vpop.permute.xlu0 %2808
        %s2811 = sor.u32 256, 16
        %2812 = vbcast.lane.c.b16.xlu0 %v2806, %s2811
        %v2813 = vpop.permute.xlu0 %2812
        %v2814 = vlaneseq
        %v2815 = vshrl.u32 %v2814, 7
        %v2816 = vsub.s32 5, %v2815
        %v2817 = vrot.slane %v2702, %v2816
        %2819 = vbcast.lane.c.b16.xlu0 %v2817, 256
        %v2820 = vpop.permute.xlu0 %2819
        %s2822 = sor.u32 256, 16
        %2823 = vbcast.lane.c.b16.xlu0 %v2817, %s2822
        %v2824 = vpop.permute.xlu0 %2823
        %v2825 = vlaneseq
        %v2826 = vshrl.u32 %v2825, 7
        %v2827 = vsub.s32 6, %v2826
        %v2828 = vrot.slane %v2688, %v2827
        %2830 = vbcast.lane.c.b16.xlu0 %v2828, 256
        %v2831 = vpop.permute.xlu0 %2830
        %s2833 = sor.u32 256, 16
        %2834 = vbcast.lane.c.b16.xlu0 %v2828, %s2833
        %v2835 = vpop.permute.xlu0 %2834
        %v2836 = vlaneseq
        %v2837 = vshrl.u32 %v2836, 7
        %v2838 = vsub.s32 6, %v2837
        %v2839 = vrot.slane %v2702, %v2838
        %2841 = vbcast.lane.c.b16.xlu0 %v2839, 256
        %v2842 = vpop.permute.xlu0 %2841
        %s2844 = sor.u32 256, 16
        %2845 = vbcast.lane.c.b16.xlu0 %v2839, %s2844
        %v2846 = vpop.permute.xlu0 %2845
        %v2847 = vlaneseq
        %v2848 = vshrl.u32 %v2847, 7
        %v2849 = vsub.s32 7, %v2848
        %v2850 = vrot.slane %v2688, %v2849
        %2852 = vbcast.lane.c.b16.xlu0 %v2850, 256
        %v2853 = vpop.permute.xlu0 %2852
        %s2855 = sor.u32 256, 16
        %2856 = vbcast.lane.c.b16.xlu0 %v2850, %s2855
        %v2857 = vpop.permute.xlu0 %2856
        %v2858 = vlaneseq
        %v2859 = vshrl.u32 %v2858, 7
        %v2860 = vsub.s32 7, %v2859
        %v2861 = vrot.slane %v2702, %v2860
        %2863 = vbcast.lane.c.b16.xlu0 %v2861, 256
        %v2864 = vpop.permute.xlu0 %2863
        %s2866 = sor.u32 256, 16
        %2867 = vbcast.lane.c.b16.xlu0 %v2861, %s2866
        %v2868 = vpop.permute.xlu0 %2867
        %v2870 = vpack.i.b16 %v2410, %v2410
        %v2872 = vlaneseq
        %v2873 = vshrl.u32 %v2872, 7
        %v2874 = vsub.s32 0, %v2873
        %v2875 = vrot.slane %v2870, %v2874
        %2877 = vbcast.lane.c.b16.xlu0 %v2875, 256
        %v2878 = vpop.permute.xlu0 %2877
        %s2880 = sor.u32 256, 16
        %2881 = vbcast.lane.c.b16.xlu0 %v2875, %s2880
        %v2882 = vpop.permute.xlu0 %2881
        %v2883 = vshrl.u32 %v2410, 16
        %v2884 = vpack.i.b16 %v2883, %v2883
        %v2886 = vlaneseq
        %v2887 = vshrl.u32 %v2886, 7
        %v2888 = vsub.s32 0, %v2887
        %v2889 = vrot.slane %v2884, %v2888
        %2891 = vbcast.lane.c.b16.xlu0 %v2889, 256
        %v2892 = vpop.permute.xlu0 %2891
        %s2894 = sor.u32 256, 16
        %2895 = vbcast.lane.c.b16.xlu0 %v2889, %s2894
        %v2896 = vpop.permute.xlu0 %2895
        %v2897 = vlaneseq
        %v2898 = vshrl.u32 %v2897, 7
        %v2899 = vsub.s32 1, %v2898
        %v2900 = vrot.slane %v2870, %v2899
        %2902 = vbcast.lane.c.b16.xlu0 %v2900, 256
        %v2903 = vpop.permute.xlu0 %2902
        %s2905 = sor.u32 256, 16
        %2906 = vbcast.lane.c.b16.xlu0 %v2900, %s2905
        %v2907 = vpop.permute.xlu0 %2906
        %v2908 = vlaneseq
        %v2909 = vshrl.u32 %v2908, 7
        %v2910 = vsub.s32 1, %v2909
        %v2911 = vrot.slane %v2884, %v2910
        %2913 = vbcast.lane.c.b16.xlu0 %v2911, 256
        %v2914 = vpop.permute.xlu0 %2913
        %s2916 = sor.u32 256, 16
        %2917 = vbcast.lane.c.b16.xlu0 %v2911, %s2916
        %v2918 = vpop.permute.xlu0 %2917
        %v2919 = vlaneseq
        %v2920 = vshrl.u32 %v2919, 7
        %v2921 = vsub.s32 2, %v2920
        %v2922 = vrot.slane %v2870, %v2921
        %2924 = vbcast.lane.c.b16.xlu0 %v2922, 256
        %v2925 = vpop.permute.xlu0 %2924
        %s2927 = sor.u32 256, 16
        %2928 = vbcast.lane.c.b16.xlu0 %v2922, %s2927
        %v2929 = vpop.permute.xlu0 %2928
        %v2930 = vlaneseq
        %v2931 = vshrl.u32 %v2930, 7
        %v2932 = vsub.s32 2, %v2931
        %v2933 = vrot.slane %v2884, %v2932
        %2935 = vbcast.lane.c.b16.xlu0 %v2933, 256
        %v2936 = vpop.permute.xlu0 %2935
        %s2938 = sor.u32 256, 16
        %2939 = vbcast.lane.c.b16.xlu0 %v2933, %s2938
        %v2940 = vpop.permute.xlu0 %2939
        %v2941 = vlaneseq
        %v2942 = vshrl.u32 %v2941, 7
        %v2943 = vsub.s32 3, %v2942
        %v2944 = vrot.slane %v2870, %v2943
        %2946 = vbcast.lane.c.b16.xlu0 %v2944, 256
        %v2947 = vpop.permute.xlu0 %2946
        %s2949 = sor.u32 256, 16
        %2950 = vbcast.lane.c.b16.xlu0 %v2944, %s2949
        %v2951 = vpop.permute.xlu0 %2950
        %v2952 = vlaneseq
        %v2953 = vshrl.u32 %v2952, 7
        %v2954 = vsub.s32 3, %v2953
        %v2955 = vrot.slane %v2884, %v2954
        %2957 = vbcast.lane.c.b16.xlu0 %v2955, 256
        %v2958 = vpop.permute.xlu0 %2957
        %s2960 = sor.u32 256, 16
        %2961 = vbcast.lane.c.b16.xlu0 %v2955, %s2960
        %v2962 = vpop.permute.xlu0 %2961
        %v2963 = vcombine.high %v1681, %v1681
        %v2965 = vunpack.c.l.s4 1966171168
        %v2966 = vunpack.c.0.s8 %v2965
        %v2967 = vlaneseq
        %v2968 = vshrl.u32 %v2967, 7
        %v2969 = vsub.s32 %v2966, %v2968
        %v2970 = vrot.slane %v1681, %v2969
        %v2972 = vunpack.c.l.s4 1966171168
        %v2973 = vunpack.c.0.s8 %v2972
        %v2974 = vlaneseq
        %v2975 = vshrl.u32 %v2974, 7
        %v2976 = vsub.s32 %v2973, %v2975
        %v2977 = vrot.slane %v2963, %v2976
        %v2978 = vcombine.high %v2970, %v2970
        %v2979 = vcombine.high %v2977, %v2977
        %v2981 = vunpack.c.l.s4 1966171168
        %v2982 = vunpack.c.0.s8 %v2981
        %v2983 = vlaneseq
        %v2984 = vshrl.u32 %v2983, 7
        %v2985 = vsub.s32 %v2982, %v2984
        %v2986 = vrot.slane %v2970, %v2985
        %v2988 = vunpack.c.l.s4 1966171168
        %v2989 = vunpack.c.0.s8 %v2988
        %v2990 = vlaneseq
        %v2991 = vshrl.u32 %v2990, 7
        %v2992 = vsub.s32 %v2989, %v2991
        %v2993 = vrot.slane %v2977, %v2992
        %v2995 = vunpack.c.l.s4 1966171168
        %v2996 = vunpack.c.0.s8 %v2995
        %v2997 = vlaneseq
        %v2998 = vshrl.u32 %v2997, 7
        %v2999 = vsub.s32 %v2996, %v2998
        %v3000 = vrot.slane %v2978, %v2999
        %v3002 = vunpack.c.l.s4 1966171168
        %v3003 = vunpack.c.0.s8 %v3002
        %v3004 = vlaneseq
        %v3005 = vshrl.u32 %v3004, 7
        %v3006 = vsub.s32 %v3003, %v3005
        %v3007 = vrot.slane %v2979, %v3006
        %v3008 = vcombine.high %v2986, %v2986
        %v3009 = vcombine.high %v2993, %v2993
        %v3010 = vcombine.high %v3000, %v3000
        %v3011 = vcombine.high %v3007, %v3007
        %v3013 = vunpack.c.l.s4 1966171168
        %v3014 = vunpack.c.0.s8 %v3013
        %v3015 = vlaneseq
        %v3016 = vshrl.u32 %v3015, 7
        %v3017 = vsub.s32 %v3014, %v3016
        %v3018 = vrot.slane %v1682, %v3017
        %v3019 = vcombine.high %v3018, %v3018
        %v3021 = vunpack.c.l.s4 1966171168
        %v3022 = vunpack.c.0.s8 %v3021
        %v3023 = vlaneseq
        %v3024 = vshrl.u32 %v3023, 7
        %v3025 = vsub.s32 %v3022, %v3024
        %v3026 = vrot.slane %v3018, %v3025
        %v3028 = vunpack.c.l.s4 1966171168
        %v3029 = vunpack.c.0.s8 %v3028
        %v3030 = vlaneseq
        %v3031 = vshrl.u32 %v3030, 7
        %v3032 = vsub.s32 %v3029, %v3031
        %v3033 = vrot.slane %v3019, %v3032
        %v3034 = vcombine.high %v3026, %v3026
        %v3035 = vcombine.high %v3033, %v3033
        %v3036 = vcombine.high %v1683, %v1683
        %v3038 = vunpack.c.l.s4 1966171168
        %v3039 = vunpack.c.0.s8 %v3038
        %v3040 = vlaneseq
        %v3041 = vshrl.u32 %v3040, 7
        %v3042 = vsub.s32 %v3039, %v3041
        %v3043 = vrot.slane %v1683, %v3042
        %v3045 = vunpack.c.l.s4 1966171168
        %v3046 = vunpack.c.0.s8 %v3045
        %v3047 = vlaneseq
        %v3048 = vshrl.u32 %v3047, 7
        %v3049 = vsub.s32 %v3046, %v3048
        %v3050 = vrot.slane %v3036, %v3049
        %v3051 = vcombine.high %v3043, %v3043
        %v3052 = vcombine.high %v3050, %v3050
        %v3054 = vunpack.c.l.s4 1966171168
        %v3055 = vunpack.c.0.s8 %v3054
        %v3056 = vlaneseq
        %v3057 = vshrl.u32 %v3056, 7
        %v3058 = vsub.s32 %v3055, %v3057
        %v3059 = vrot.slane %v3043, %v3058
        %v3061 = vunpack.c.l.s4 1966171168
        %v3062 = vunpack.c.0.s8 %v3061
        %v3063 = vlaneseq
        %v3064 = vshrl.u32 %v3063, 7
        %v3065 = vsub.s32 %v3062, %v3064
        %v3066 = vrot.slane %v3050, %v3065
        %v3068 = vunpack.c.l.s4 1966171168
        %v3069 = vunpack.c.0.s8 %v3068
        %v3070 = vlaneseq
        %v3071 = vshrl.u32 %v3070, 7
        %v3072 = vsub.s32 %v3069, %v3071
        %v3073 = vrot.slane %v3051, %v3072
        %v3075 = vunpack.c.l.s4 1966171168
        %v3076 = vunpack.c.0.s8 %v3075
        %v3077 = vlaneseq
        %v3078 = vshrl.u32 %v3077, 7
        %v3079 = vsub.s32 %v3076, %v3078
        %v3080 = vrot.slane %v3052, %v3079
        %v3081 = vcombine.high %v3059, %v3059
        %v3082 = vcombine.high %v3066, %v3066
        %v3083 = vcombine.high %v3073, %v3073
        %v3084 = vcombine.high %v3080, %v3080
        %v3086 = vunpack.c.l.s4 1966171168
        %v3087 = vunpack.c.0.s8 %v3086
        %v3088 = vlaneseq
        %v3089 = vshrl.u32 %v3088, 7
        %v3090 = vsub.s32 %v3087, %v3089
        %v3091 = vrot.slane %v1684, %v3090
        %v3092 = vcombine.high %v3091, %v3091
        %v3094 = vunpack.c.l.s4 1966171168
        %v3095 = vunpack.c.0.s8 %v3094
        %v3096 = vlaneseq
        %v3097 = vshrl.u32 %v3096, 7
        %v3098 = vsub.s32 %v3095, %v3097
        %v3099 = vrot.slane %v3091, %v3098
        %v3101 = vunpack.c.l.s4 1966171168
        %v3102 = vunpack.c.0.s8 %v3101
        %v3103 = vlaneseq
        %v3104 = vshrl.u32 %v3103, 7
        %v3105 = vsub.s32 %v3102, %v3104
        %v3106 = vrot.slane %v3092, %v3105
        %v3107 = vcombine.high %v3099, %v3099
        %v3108 = vcombine.high %v3106, %v3106
        %v3109 = vunpack.i.l.s16 %v2986
        %v3110 = vunpack.i.h.s16 %v2986
        %v3111 = vunpack.i.l.s16 %v3000
        %v3112 = vunpack.i.h.s16 %v3000
        %v3113 = vunpack.i.l.s16 %v3008
        %v3114 = vunpack.i.h.s16 %v3008
        %v3115 = vunpack.i.l.s16 %v3010
        %v3116 = vunpack.i.h.s16 %v3010
        %v3117 = vunpack.i.l.s16 %v2993
        %v3118 = vunpack.i.h.s16 %v2993
        %v3119 = vunpack.i.l.s16 %v3007
        %v3120 = vunpack.i.h.s16 %v3007
        %v3121 = vunpack.i.l.s16 %v3009
        %v3122 = vunpack.i.h.s16 %v3009
        %v3123 = vunpack.i.l.s16 %v3011
        %v3124 = vunpack.i.h.s16 %v3011
        %v3125 = vunpack.i.l.s16 %v3026
        %v3126 = vunpack.i.h.s16 %v3026
        %v3127 = vunpack.i.l.s16 %v3033
        %v3128 = vunpack.i.h.s16 %v3033
        %v3129 = vunpack.i.l.s16 %v3034
        %v3130 = vunpack.i.h.s16 %v3034
        %v3131 = vunpack.i.l.s16 %v3035
        %v3132 = vunpack.i.h.s16 %v3035
        %v3133 = vunpack.i.l.s16 %v3059
        %v3134 = vunpack.i.h.s16 %v3059
        %v3135 = vunpack.i.l.s16 %v3073
        %v3136 = vunpack.i.h.s16 %v3073
        %v3137 = vunpack.i.l.s16 %v3081
        %v3138 = vunpack.i.h.s16 %v3081
        %v3139 = vunpack.i.l.s16 %v3083
        %v3140 = vunpack.i.h.s16 %v3083
        %v3141 = vunpack.i.l.s16 %v3066
        %v3142 = vunpack.i.h.s16 %v3066
        %v3143 = vunpack.i.l.s16 %v3080
        %v3144 = vunpack.i.h.s16 %v3080
        %v3145 = vunpack.i.l.s16 %v3082
        %v3146 = vunpack.i.h.s16 %v3082
        %v3147 = vunpack.i.l.s16 %v3084
        %v3148 = vunpack.i.h.s16 %v3084
        %v3149 = vunpack.i.l.s16 %v3099
        %v3150 = vunpack.i.h.s16 %v3099
        %v3151 = vunpack.i.l.s16 %v3106
        %v3152 = vunpack.i.h.s16 %v3106
        %v3153 = vunpack.i.l.s16 %v3107
        %v3154 = vunpack.i.h.s16 %v3107
        %v3155 = vunpack.i.l.s16 %v3108
        %v3156 = vunpack.i.h.s16 %v3108
        %v3157 = vpack.i.b16 %v3109, %v3109
        %v3158 = vpack.i.b16 %v3110, %v3110
        %v3159 = vpack.i.b16 %v3111, %v3111
        %v3160 = vpack.i.b16 %v3112, %v3112
        %v3161 = vpack.i.b16 %v3113, %v3113
        %v3162 = vpack.i.b16 %v3114, %v3114
        %v3163 = vpack.i.b16 %v3115, %v3115
        %v3164 = vpack.i.b16 %v3116, %v3116
        %v3165 = vpack.i.b16 %v3117, %v3117
        %v3166 = vpack.i.b16 %v3118, %v3118
        %v3167 = vpack.i.b16 %v3119, %v3119
        %v3168 = vpack.i.b16 %v3120, %v3120
        %v3169 = vpack.i.b16 %v3121, %v3121
        %v3170 = vpack.i.b16 %v3122, %v3122
        %v3171 = vpack.i.b16 %v3123, %v3123
        %v3172 = vpack.i.b16 %v3124, %v3124
        %v3173 = vpack.i.b16 %v3125, %v3125
        %v3174 = vpack.i.b16 %v3126, %v3126
        %v3175 = vpack.i.b16 %v3127, %v3127
        %v3176 = vpack.i.b16 %v3128, %v3128
        %v3177 = vpack.i.b16 %v3129, %v3129
        %v3178 = vpack.i.b16 %v3130, %v3130
        %v3179 = vpack.i.b16 %v3131, %v3131
        %v3180 = vpack.i.b16 %v3132, %v3132
        %v3181 = vpack.i.b16 %v3133, %v3133
        %v3182 = vpack.i.b16 %v3134, %v3134
        %v3183 = vpack.i.b16 %v3135, %v3135
        %v3184 = vpack.i.b16 %v3136, %v3136
        %v3185 = vpack.i.b16 %v3137, %v3137
        %v3186 = vpack.i.b16 %v3138, %v3138
        %v3187 = vpack.i.b16 %v3139, %v3139
        %v3188 = vpack.i.b16 %v3140, %v3140
        %v3189 = vpack.i.b16 %v3141, %v3141
        %v3190 = vpack.i.b16 %v3142, %v3142
        %v3191 = vpack.i.b16 %v3143, %v3143
        %v3192 = vpack.i.b16 %v3144, %v3144
        %v3193 = vpack.i.b16 %v3145, %v3145
        %v3194 = vpack.i.b16 %v3146, %v3146
        %v3195 = vpack.i.b16 %v3147, %v3147
        %v3196 = vpack.i.b16 %v3148, %v3148
        %v3197 = vpack.i.b16 %v3149, %v3149
        %v3198 = vpack.i.b16 %v3150, %v3150
        %v3199 = vpack.i.b16 %v3151, %v3151
        %v3200 = vpack.i.b16 %v3152, %v3152
        %v3201 = vpack.i.b16 %v3153, %v3153
        %v3202 = vpack.i.b16 %v3154, %v3154
        %v3203 = vpack.i.b16 %v3155, %v3155
        %v3204 = vpack.i.b16 %v3156, %v3156
        %v3205 = vlaneseq
        %v3206 = vshrl.u32 %v3205, 7
        %v3207 = vsub.s32 0, %v3206
        %v3208 = vrot.slane %v3157, %v3207
        %v3209 = vlaneseq
        %v3210 = vshrl.u32 %v3209, 7
        %v3211 = vsub.s32 0, %v3210
        %v3212 = vrot.slane %v3158, %v3211
        %v3213 = vlaneseq
        %v3214 = vshrl.u32 %v3213, 7
        %v3215 = vsub.s32 0, %v3214
        %v3216 = vrot.slane %v3159, %v3215
        %v3217 = vlaneseq
        %v3218 = vshrl.u32 %v3217, 7
        %v3219 = vsub.s32 0, %v3218
        %v3220 = vrot.slane %v3160, %v3219
        %v3221 = vlaneseq
        %v3222 = vshrl.u32 %v3221, 7
        %v3223 = vsub.s32 0, %v3222
        %v3224 = vrot.slane %v3161, %v3223
        %v3225 = vlaneseq
        %v3226 = vshrl.u32 %v3225, 7
        %v3227 = vsub.s32 0, %v3226
        %v3228 = vrot.slane %v3162, %v3227
        %v3229 = vlaneseq
        %v3230 = vshrl.u32 %v3229, 7
        %v3231 = vsub.s32 0, %v3230
        %v3232 = vrot.slane %v3163, %v3231
        %v3233 = vlaneseq
        %v3234 = vshrl.u32 %v3233, 7
        %v3235 = vsub.s32 0, %v3234
        %v3236 = vrot.slane %v3164, %v3235
        %v3237 = vlaneseq
        %v3238 = vshrl.u32 %v3237, 7
        %v3239 = vsub.s32 0, %v3238
        %v3240 = vrot.slane %v3165, %v3239
        %v3241 = vlaneseq
        %v3242 = vshrl.u32 %v3241, 7
        %v3243 = vsub.s32 0, %v3242
        %v3244 = vrot.slane %v3166, %v3243
        %v3245 = vlaneseq
        %v3246 = vshrl.u32 %v3245, 7
        %v3247 = vsub.s32 0, %v3246
        %v3248 = vrot.slane %v3167, %v3247
        %v3249 = vlaneseq
        %v3250 = vshrl.u32 %v3249, 7
        %v3251 = vsub.s32 0, %v3250
        %v3252 = vrot.slane %v3168, %v3251
        %v3253 = vlaneseq
        %v3254 = vshrl.u32 %v3253, 7
        %v3255 = vsub.s32 0, %v3254
        %v3256 = vrot.slane %v3169, %v3255
        %v3257 = vlaneseq
        %v3258 = vshrl.u32 %v3257, 7
        %v3259 = vsub.s32 0, %v3258
        %v3260 = vrot.slane %v3170, %v3259
        %v3261 = vlaneseq
        %v3262 = vshrl.u32 %v3261, 7
        %v3263 = vsub.s32 0, %v3262
        %v3264 = vrot.slane %v3171, %v3263
        %v3265 = vlaneseq
        %v3266 = vshrl.u32 %v3265, 7
        %v3267 = vsub.s32 0, %v3266
        %v3268 = vrot.slane %v3172, %v3267
        %v3269 = vlaneseq
        %v3270 = vshrl.u32 %v3269, 7
        %v3271 = vsub.s32 0, %v3270
        %v3272 = vrot.slane %v3173, %v3271
        %v3273 = vlaneseq
        %v3274 = vshrl.u32 %v3273, 7
        %v3275 = vsub.s32 0, %v3274
        %v3276 = vrot.slane %v3174, %v3275
        %v3277 = vlaneseq
        %v3278 = vshrl.u32 %v3277, 7
        %v3279 = vsub.s32 0, %v3278
        %v3280 = vrot.slane %v3175, %v3279
        %v3281 = vlaneseq
        %v3282 = vshrl.u32 %v3281, 7
        %v3283 = vsub.s32 0, %v3282
        %v3284 = vrot.slane %v3176, %v3283
        %v3285 = vlaneseq
        %v3286 = vshrl.u32 %v3285, 7
        %v3287 = vsub.s32 0, %v3286
        %v3288 = vrot.slane %v3177, %v3287
        %v3289 = vlaneseq
        %v3290 = vshrl.u32 %v3289, 7
        %v3291 = vsub.s32 0, %v3290
        %v3292 = vrot.slane %v3178, %v3291
        %v3293 = vlaneseq
        %v3294 = vshrl.u32 %v3293, 7
        %v3295 = vsub.s32 0, %v3294
        %v3296 = vrot.slane %v3179, %v3295
        %v3297 = vlaneseq
        %v3298 = vshrl.u32 %v3297, 7
        %v3299 = vsub.s32 0, %v3298
        %v3300 = vrot.slane %v3180, %v3299
        %v3301 = vlaneseq
        %v3302 = vshrl.u32 %v3301, 7
        %v3303 = vsub.s32 0, %v3302
        %v3304 = vrot.slane %v3181, %v3303
        %v3305 = vlaneseq
        %v3306 = vshrl.u32 %v3305, 7
        %v3307 = vsub.s32 0, %v3306
        %v3308 = vrot.slane %v3182, %v3307
        %v3309 = vlaneseq
        %v3310 = vshrl.u32 %v3309, 7
        %v3311 = vsub.s32 0, %v3310
        %v3312 = vrot.slane %v3183, %v3311
        %v3313 = vlaneseq
        %v3314 = vshrl.u32 %v3313, 7
        %v3315 = vsub.s32 0, %v3314
        %v3316 = vrot.slane %v3184, %v3315
        %v3317 = vlaneseq
        %v3318 = vshrl.u32 %v3317, 7
        %v3319 = vsub.s32 0, %v3318
        %v3320 = vrot.slane %v3185, %v3319
        %v3321 = vlaneseq
        %v3322 = vshrl.u32 %v3321, 7
        %v3323 = vsub.s32 0, %v3322
        %v3324 = vrot.slane %v3186, %v3323
        %v3325 = vlaneseq
        %v3326 = vshrl.u32 %v3325, 7
        %v3327 = vsub.s32 0, %v3326
        %v3328 = vrot.slane %v3187, %v3327
        %v3329 = vlaneseq
        %v3330 = vshrl.u32 %v3329, 7
        %v3331 = vsub.s32 0, %v3330
        %v3332 = vrot.slane %v3188, %v3331
        %v3333 = vlaneseq
        %v3334 = vshrl.u32 %v3333, 7
        %v3335 = vsub.s32 0, %v3334
        %v3336 = vrot.slane %v3189, %v3335
        %v3337 = vlaneseq
        %v3338 = vshrl.u32 %v3337, 7
        %v3339 = vsub.s32 0, %v3338
        %v3340 = vrot.slane %v3190, %v3339
        %v3341 = vlaneseq
        %v3342 = vshrl.u32 %v3341, 7
        %v3343 = vsub.s32 0, %v3342
        %v3344 = vrot.slane %v3191, %v3343
        %v3345 = vlaneseq
        %v3346 = vshrl.u32 %v3345, 7
        %v3347 = vsub.s32 0, %v3346
        %v3348 = vrot.slane %v3192, %v3347
        %v3349 = vlaneseq
        %v3350 = vshrl.u32 %v3349, 7
        %v3351 = vsub.s32 0, %v3350
        %v3352 = vrot.slane %v3193, %v3351
        %v3353 = vlaneseq
        %v3354 = vshrl.u32 %v3353, 7
        %v3355 = vsub.s32 0, %v3354
        %v3356 = vrot.slane %v3194, %v3355
        %v3357 = vlaneseq
        %v3358 = vshrl.u32 %v3357, 7
        %v3359 = vsub.s32 0, %v3358
        %v3360 = vrot.slane %v3195, %v3359
        %v3361 = vlaneseq
        %v3362 = vshrl.u32 %v3361, 7
        %v3363 = vsub.s32 0, %v3362
        %v3364 = vrot.slane %v3196, %v3363
        %v3365 = vlaneseq
        %v3366 = vshrl.u32 %v3365, 7
        %v3367 = vsub.s32 0, %v3366
        %v3368 = vrot.slane %v3197, %v3367
        %v3369 = vlaneseq
        %v3370 = vshrl.u32 %v3369, 7
        %v3371 = vsub.s32 0, %v3370
        %v3372 = vrot.slane %v3198, %v3371
        %v3373 = vlaneseq
        %v3374 = vshrl.u32 %v3373, 7
        %v3375 = vsub.s32 0, %v3374
        %v3376 = vrot.slane %v3199, %v3375
        %v3377 = vlaneseq
        %v3378 = vshrl.u32 %v3377, 7
        %v3379 = vsub.s32 0, %v3378
        %v3380 = vrot.slane %v3200, %v3379
        %v3381 = vlaneseq
        %v3382 = vshrl.u32 %v3381, 7
        %v3383 = vsub.s32 0, %v3382
        %v3384 = vrot.slane %v3201, %v3383
        %v3385 = vlaneseq
        %v3386 = vshrl.u32 %v3385, 7
        %v3387 = vsub.s32 0, %v3386
        %v3388 = vrot.slane %v3202, %v3387
        %v3389 = vlaneseq
        %v3390 = vshrl.u32 %v3389, 7
        %v3391 = vsub.s32 0, %v3390
        %v3392 = vrot.slane %v3203, %v3391
        %v3393 = vlaneseq
        %v3394 = vshrl.u32 %v3393, 7
        %v3395 = vsub.s32 0, %v3394
        %v3396 = vrot.slane %v3204, %v3395
        %v3398 = vpack.i.b16 %v3208, %v3208
        %v3400 = vlaneseq
        %v3401 = vshrl.u32 %v3400, 7
        %v3402 = vsub.s32 0, %v3401
        %v3403 = vrot.slane %v3398, %v3402
        %v3405 = vpack.i.b16 %v3212, %v3212
        %v3407 = vlaneseq
        %v3408 = vshrl.u32 %v3407, 7
        %v3409 = vsub.s32 0, %v3408
        %v3410 = vrot.slane %v3405, %v3409
        %v3412 = vpack.i.b16 %v3216, %v3216
        %v3414 = vlaneseq
        %v3415 = vshrl.u32 %v3414, 7
        %v3416 = vsub.s32 0, %v3415
        %v3417 = vrot.slane %v3412, %v3416
        %v3419 = vpack.i.b16 %v3220, %v3220
        %v3421 = vlaneseq
        %v3422 = vshrl.u32 %v3421, 7
        %v3423 = vsub.s32 0, %v3422
        %v3424 = vrot.slane %v3419, %v3423
        %v3426 = vpack.i.b16 %v3224, %v3224
        %v3428 = vlaneseq
        %v3429 = vshrl.u32 %v3428, 7
        %v3430 = vsub.s32 0, %v3429
        %v3431 = vrot.slane %v3426, %v3430
        %v3433 = vpack.i.b16 %v3228, %v3228
        %v3435 = vlaneseq
        %v3436 = vshrl.u32 %v3435, 7
        %v3437 = vsub.s32 0, %v3436
        %v3438 = vrot.slane %v3433, %v3437
        %v3440 = vpack.i.b16 %v3232, %v3232
        %v3442 = vlaneseq
        %v3443 = vshrl.u32 %v3442, 7
        %v3444 = vsub.s32 0, %v3443
        %v3445 = vrot.slane %v3440, %v3444
        %v3447 = vpack.i.b16 %v3236, %v3236
        %v3449 = vlaneseq
        %v3450 = vshrl.u32 %v3449, 7
        %v3451 = vsub.s32 0, %v3450
        %v3452 = vrot.slane %v3447, %v3451
        %v3454 = vpack.i.b16 %v3240, %v3240
        %v3456 = vlaneseq
        %v3457 = vshrl.u32 %v3456, 7
        %v3458 = vsub.s32 0, %v3457
        %v3459 = vrot.slane %v3454, %v3458
        %v3461 = vpack.i.b16 %v3244, %v3244
        %v3463 = vlaneseq
        %v3464 = vshrl.u32 %v3463, 7
        %v3465 = vsub.s32 0, %v3464
        %v3466 = vrot.slane %v3461, %v3465
        %v3468 = vpack.i.b16 %v3248, %v3248
        %v3470 = vlaneseq
        %v3471 = vshrl.u32 %v3470, 7
        %v3472 = vsub.s32 0, %v3471
        %v3473 = vrot.slane %v3468, %v3472
        %v3475 = vpack.i.b16 %v3252, %v3252
        %v3477 = vlaneseq
        %v3478 = vshrl.u32 %v3477, 7
        %v3479 = vsub.s32 0, %v3478
        %v3480 = vrot.slane %v3475, %v3479
        %v3482 = vpack.i.b16 %v3256, %v3256
        %v3484 = vlaneseq
        %v3485 = vshrl.u32 %v3484, 7
        %v3486 = vsub.s32 0, %v3485
        %v3487 = vrot.slane %v3482, %v3486
        %v3489 = vpack.i.b16 %v3260, %v3260
        %v3491 = vlaneseq
        %v3492 = vshrl.u32 %v3491, 7
        %v3493 = vsub.s32 0, %v3492
        %v3494 = vrot.slane %v3489, %v3493
        %v3496 = vpack.i.b16 %v3264, %v3264
        %v3498 = vlaneseq
        %v3499 = vshrl.u32 %v3498, 7
        %v3500 = vsub.s32 0, %v3499
        %v3501 = vrot.slane %v3496, %v3500
        %v3503 = vpack.i.b16 %v3268, %v3268
        %v3505 = vlaneseq
        %v3506 = vshrl.u32 %v3505, 7
        %v3507 = vsub.s32 0, %v3506
        %v3508 = vrot.slane %v3503, %v3507
        %v3510 = vpack.i.b16 %v3272, %v3272
        %v3512 = vlaneseq
        %v3513 = vshrl.u32 %v3512, 7
        %v3514 = vsub.s32 0, %v3513
        %v3515 = vrot.slane %v3510, %v3514
        %v3517 = vpack.i.b16 %v3276, %v3276
        %v3519 = vlaneseq
        %v3520 = vshrl.u32 %v3519, 7
        %v3521 = vsub.s32 0, %v3520
        %v3522 = vrot.slane %v3517, %v3521
        %v3524 = vpack.i.b16 %v3280, %v3280
        %v3526 = vlaneseq
        %v3527 = vshrl.u32 %v3526, 7
        %v3528 = vsub.s32 0, %v3527
        %v3529 = vrot.slane %v3524, %v3528
        %v3531 = vpack.i.b16 %v3284, %v3284
        %v3533 = vlaneseq
        %v3534 = vshrl.u32 %v3533, 7
        %v3535 = vsub.s32 0, %v3534
        %v3536 = vrot.slane %v3531, %v3535
        %v3538 = vpack.i.b16 %v3288, %v3288
        %v3540 = vlaneseq
        %v3541 = vshrl.u32 %v3540, 7
        %v3542 = vsub.s32 0, %v3541
        %v3543 = vrot.slane %v3538, %v3542
        %v3545 = vpack.i.b16 %v3292, %v3292
        %v3547 = vlaneseq
        %v3548 = vshrl.u32 %v3547, 7
        %v3549 = vsub.s32 0, %v3548
        %v3550 = vrot.slane %v3545, %v3549
        %v3552 = vpack.i.b16 %v3296, %v3296
        %v3554 = vlaneseq
        %v3555 = vshrl.u32 %v3554, 7
        %v3556 = vsub.s32 0, %v3555
        %v3557 = vrot.slane %v3552, %v3556
        %v3559 = vpack.i.b16 %v3300, %v3300
        %v3561 = vlaneseq
        %v3562 = vshrl.u32 %v3561, 7
        %v3563 = vsub.s32 0, %v3562
        %v3564 = vrot.slane %v3559, %v3563
        %v3566 = vpack.i.b16 %v3304, %v3304
        %v3568 = vlaneseq
        %v3569 = vshrl.u32 %v3568, 7
        %v3570 = vsub.s32 0, %v3569
        %v3571 = vrot.slane %v3566, %v3570
        %v3573 = vpack.i.b16 %v3308, %v3308
        %v3575 = vlaneseq
        %v3576 = vshrl.u32 %v3575, 7
        %v3577 = vsub.s32 0, %v3576
        %v3578 = vrot.slane %v3573, %v3577
        %v3580 = vpack.i.b16 %v3312, %v3312
        %v3582 = vlaneseq
        %v3583 = vshrl.u32 %v3582, 7
        %v3584 = vsub.s32 0, %v3583
        %v3585 = vrot.slane %v3580, %v3584
        %v3587 = vpack.i.b16 %v3316, %v3316
        %v3589 = vlaneseq
        %v3590 = vshrl.u32 %v3589, 7
        %v3591 = vsub.s32 0, %v3590
        %v3592 = vrot.slane %v3587, %v3591
        %v3594 = vpack.i.b16 %v3320, %v3320
        %v3596 = vlaneseq
        %v3597 = vshrl.u32 %v3596, 7
        %v3598 = vsub.s32 0, %v3597
        %v3599 = vrot.slane %v3594, %v3598
        %v3601 = vpack.i.b16 %v3324, %v3324
        %v3603 = vlaneseq
        %v3604 = vshrl.u32 %v3603, 7
        %v3605 = vsub.s32 0, %v3604
        %v3606 = vrot.slane %v3601, %v3605
        %v3608 = vpack.i.b16 %v3328, %v3328
        %v3610 = vlaneseq
        %v3611 = vshrl.u32 %v3610, 7
        %v3612 = vsub.s32 0, %v3611
        %v3613 = vrot.slane %v3608, %v3612
        %v3615 = vpack.i.b16 %v3332, %v3332
        %v3617 = vlaneseq
        %v3618 = vshrl.u32 %v3617, 7
        %v3619 = vsub.s32 0, %v3618
        %v3620 = vrot.slane %v3615, %v3619
        %v3622 = vpack.i.b16 %v3336, %v3336
        %v3624 = vlaneseq
        %v3625 = vshrl.u32 %v3624, 7
        %v3626 = vsub.s32 0, %v3625
        %v3627 = vrot.slane %v3622, %v3626
        %v3629 = vpack.i.b16 %v3340, %v3340
        %v3631 = vlaneseq
        %v3632 = vshrl.u32 %v3631, 7
        %v3633 = vsub.s32 0, %v3632
        %v3634 = vrot.slane %v3629, %v3633
        %v3636 = vpack.i.b16 %v3344, %v3344
        %v3638 = vlaneseq
        %v3639 = vshrl.u32 %v3638, 7
        %v3640 = vsub.s32 0, %v3639
        %v3641 = vrot.slane %v3636, %v3640
        %v3643 = vpack.i.b16 %v3348, %v3348
        %v3645 = vlaneseq
        %v3646 = vshrl.u32 %v3645, 7
        %v3647 = vsub.s32 0, %v3646
        %v3648 = vrot.slane %v3643, %v3647
        %v3650 = vpack.i.b16 %v3352, %v3352
        %v3652 = vlaneseq
        %v3653 = vshrl.u32 %v3652, 7
        %v3654 = vsub.s32 0, %v3653
        %v3655 = vrot.slane %v3650, %v3654
        %v3657 = vpack.i.b16 %v3356, %v3356
        %v3659 = vlaneseq
        %v3660 = vshrl.u32 %v3659, 7
        %v3661 = vsub.s32 0, %v3660
        %v3662 = vrot.slane %v3657, %v3661
        %v3664 = vpack.i.b16 %v3360, %v3360
        %v3666 = vlaneseq
        %v3667 = vshrl.u32 %v3666, 7
        %v3668 = vsub.s32 0, %v3667
        %v3669 = vrot.slane %v3664, %v3668
        %v3671 = vpack.i.b16 %v3364, %v3364
        %v3673 = vlaneseq
        %v3674 = vshrl.u32 %v3673, 7
        %v3675 = vsub.s32 0, %v3674
        %v3676 = vrot.slane %v3671, %v3675
        %v3678 = vpack.i.b16 %v3368, %v3368
        %v3680 = vlaneseq
        %v3681 = vshrl.u32 %v3680, 7
        %v3682 = vsub.s32 0, %v3681
        %v3683 = vrot.slane %v3678, %v3682
        %v3685 = vpack.i.b16 %v3372, %v3372
        %v3687 = vlaneseq
        %v3688 = vshrl.u32 %v3687, 7
        %v3689 = vsub.s32 0, %v3688
        %v3690 = vrot.slane %v3685, %v3689
        %v3692 = vpack.i.b16 %v3376, %v3376
        %v3694 = vlaneseq
        %v3695 = vshrl.u32 %v3694, 7
        %v3696 = vsub.s32 0, %v3695
        %v3697 = vrot.slane %v3692, %v3696
        %v3699 = vpack.i.b16 %v3380, %v3380
        %v3701 = vlaneseq
        %v3702 = vshrl.u32 %v3701, 7
        %v3703 = vsub.s32 0, %v3702
        %v3704 = vrot.slane %v3699, %v3703
        %v3706 = vpack.i.b16 %v3384, %v3384
        %v3708 = vlaneseq
        %v3709 = vshrl.u32 %v3708, 7
        %v3710 = vsub.s32 0, %v3709
        %v3711 = vrot.slane %v3706, %v3710
        %v3713 = vpack.i.b16 %v3388, %v3388
        %v3715 = vlaneseq
        %v3716 = vshrl.u32 %v3715, 7
        %v3717 = vsub.s32 0, %v3716
        %v3718 = vrot.slane %v3713, %v3717
        %v3720 = vpack.i.b16 %v3392, %v3392
        %v3722 = vlaneseq
        %v3723 = vshrl.u32 %v3722, 7
        %v3724 = vsub.s32 0, %v3723
        %v3725 = vrot.slane %v3720, %v3724
        %v3727 = vpack.i.b16 %v3396, %v3396
        %v3729 = vlaneseq
        %v3730 = vshrl.u32 %v3729, 7
        %v3731 = vsub.s32 0, %v3730
        %v3732 = vrot.slane %v3727, %v3731
        %v3733 = vmul.bf16 %v2420, %v3403
        %v3734 = vmul.bf16 %v2424, %v3403
        %v3735 = vmul.bf16 %v2434, %v3410
        %v3736 = vmul.bf16 %v2438, %v3410
        %v3737 = vmul.bf16 %v2445, %v3417
        %v3738 = vmul.bf16 %v2449, %v3417
        %v3739 = vmul.bf16 %v2456, %v3424
        %v3740 = vmul.bf16 %v2460, %v3424
        %v3741 = vmul.bf16 %v2467, %v3431
        %v3742 = vmul.bf16 %v2471, %v3431
        %v3743 = vmul.bf16 %v2478, %v3438
        %v3744 = vmul.bf16 %v2482, %v3438
        %v3745 = vmul.bf16 %v2489, %v3445
        %v3746 = vmul.bf16 %v2493, %v3445
        %v3747 = vmul.bf16 %v2500, %v3452
        %v3748 = vmul.bf16 %v2504, %v3452
        %v3749 = vmul.bf16 %v2511, %v3459
        %v3750 = vmul.bf16 %v2515, %v3459
        %v3751 = vmul.bf16 %v2522, %v3466
        %v3752 = vmul.bf16 %v2526, %v3466
        %v3753 = vmul.bf16 %v2533, %v3473
        %v3754 = vmul.bf16 %v2537, %v3473
        %v3755 = vmul.bf16 %v2544, %v3480
        %v3756 = vmul.bf16 %v2548, %v3480
        %v3757 = vmul.bf16 %v2555, %v3487
        %v3758 = vmul.bf16 %v2559, %v3487
        %v3759 = vmul.bf16 %v2566, %v3494
        %v3760 = vmul.bf16 %v2570, %v3494
        %v3761 = vmul.bf16 %v2577, %v3501
        %v3762 = vmul.bf16 %v2581, %v3501
        %v3763 = vmul.bf16 %v2588, %v3508
        %v3764 = vmul.bf16 %v2592, %v3508
        %v3765 = vmul.bf16 %v2602, %v3515
        %v3766 = vmul.bf16 %v2606, %v3515
        %v3767 = vmul.bf16 %v2616, %v3522
        %v3768 = vmul.bf16 %v2620, %v3522
        %v3769 = vmul.bf16 %v2627, %v3529
        %v3770 = vmul.bf16 %v2631, %v3529
        %v3771 = vmul.bf16 %v2638, %v3536
        %v3772 = vmul.bf16 %v2642, %v3536
        %v3773 = vmul.bf16 %v2649, %v3543
        %v3774 = vmul.bf16 %v2653, %v3543
        %v3775 = vmul.bf16 %v2660, %v3550
        %v3776 = vmul.bf16 %v2664, %v3550
        %v3777 = vmul.bf16 %v2671, %v3557
        %v3778 = vmul.bf16 %v2675, %v3557
        %v3779 = vmul.bf16 %v2682, %v3564
        %v3780 = vmul.bf16 %v2686, %v3564
        %v3781 = vmul.bf16 %v2696, %v3571
        %v3782 = vmul.bf16 %v2700, %v3571
        %v3783 = vmul.bf16 %v2710, %v3578
        %v3784 = vmul.bf16 %v2714, %v3578
        %v3785 = vmul.bf16 %v2721, %v3585
        %v3786 = vmul.bf16 %v2725, %v3585
        %v3787 = vmul.bf16 %v2732, %v3592
        %v3788 = vmul.bf16 %v2736, %v3592
        %v3789 = vmul.bf16 %v2743, %v3599
        %v3790 = vmul.bf16 %v2747, %v3599
        %v3791 = vmul.bf16 %v2754, %v3606
        %v3792 = vmul.bf16 %v2758, %v3606
        %v3793 = vmul.bf16 %v2765, %v3613
        %v3794 = vmul.bf16 %v2769, %v3613
        %v3795 = vmul.bf16 %v2776, %v3620
        %v3796 = vmul.bf16 %v2780, %v3620
        %v3797 = vmul.bf16 %v2787, %v3627
        %v3798 = vmul.bf16 %v2791, %v3627
        %v3799 = vmul.bf16 %v2798, %v3634
        %v3800 = vmul.bf16 %v2802, %v3634
        %v3801 = vmul.bf16 %v2809, %v3641
        %v3802 = vmul.bf16 %v2813, %v3641
        %v3803 = vmul.bf16 %v2820, %v3648
        %v3804 = vmul.bf16 %v2824, %v3648
        %v3805 = vmul.bf16 %v2831, %v3655
        %v3806 = vmul.bf16 %v2835, %v3655
        %v3807 = vmul.bf16 %v2842, %v3662
        %v3808 = vmul.bf16 %v2846, %v3662
        %v3809 = vmul.bf16 %v2853, %v3669
        %v3810 = vmul.bf16 %v2857, %v3669
        %v3811 = vmul.bf16 %v2864, %v3676
        %v3812 = vmul.bf16 %v2868, %v3676
        %v3813 = vmul.bf16 %v2878, %v3683
        %v3814 = vmul.bf16 %v2882, %v3683
        %v3815 = vmul.bf16 %v2892, %v3690
        %v3816 = vmul.bf16 %v2896, %v3690
        %v3817 = vmul.bf16 %v2903, %v3697
        %v3818 = vmul.bf16 %v2907, %v3697
        %v3819 = vmul.bf16 %v2914, %v3704
        %v3820 = vmul.bf16 %v2918, %v3704
        %v3821 = vmul.bf16 %v2925, %v3711
        %v3822 = vmul.bf16 %v2929, %v3711
        %v3823 = vmul.bf16 %v2936, %v3718
        %v3824 = vmul.bf16 %v2940, %v3718
        %v3825 = vmul.bf16 %v2947, %v3725
        %v3826 = vmul.bf16 %v2951, %v3725
        %v3827 = vmul.bf16 %v2958, %v3732
        %v3828 = vmul.bf16 %v2962, %v3732
        %v3829 = vmul.bf16 %v3733, %v2166
        %v3830 = vmul.bf16 %v3734, %v2167
        %v3831 = vmul.bf16 %v3735, %v2166
        %v3832 = vmul.bf16 %v3736, %v2167
        %v3833 = vmul.bf16 %v3737, %v2166
        %v3834 = vmul.bf16 %v3738, %v2167
        %v3835 = vmul.bf16 %v3739, %v2166
        %v3836 = vmul.bf16 %v3740, %v2167
        %v3837 = vmul.bf16 %v3741, %v2166
        %v3838 = vmul.bf16 %v3742, %v2167
        %v3839 = vmul.bf16 %v3743, %v2166
        %v3840 = vmul.bf16 %v3744, %v2167
        %v3841 = vmul.bf16 %v3745, %v2166
        %v3842 = vmul.bf16 %v3746, %v2167
        %v3843 = vmul.bf16 %v3747, %v2166
        %v3844 = vmul.bf16 %v3748, %v2167
        %v3845 = vmul.bf16 %v3749, %v2166
        %v3846 = vmul.bf16 %v3750, %v2167
        %v3847 = vmul.bf16 %v3751, %v2166
        %v3848 = vmul.bf16 %v3752, %v2167
        %v3849 = vmul.bf16 %v3753, %v2166
        %v3850 = vmul.bf16 %v3754, %v2167
        %v3851 = vmul.bf16 %v3755, %v2166
        %v3852 = vmul.bf16 %v3756, %v2167
        %v3853 = vmul.bf16 %v3757, %v2166
        %v3854 = vmul.bf16 %v3758, %v2167
        %v3855 = vmul.bf16 %v3759, %v2166
        %v3856 = vmul.bf16 %v3760, %v2167
        %v3857 = vmul.bf16 %v3761, %v2166
        %v3858 = vmul.bf16 %v3762, %v2167
        %v3859 = vmul.bf16 %v3763, %v2166
        %v3860 = vmul.bf16 %v3764, %v2167
        %v3861 = vmul.bf16 %v3765, %v2166
        %v3862 = vmul.bf16 %v3766, %v2167
        %v3863 = vmul.bf16 %v3767, %v2166
        %v3864 = vmul.bf16 %v3768, %v2167
        %v3865 = vmul.bf16 %v3769, %v2166
        %v3866 = vmul.bf16 %v3770, %v2167
        %v3867 = vmul.bf16 %v3771, %v2166
        %v3868 = vmul.bf16 %v3772, %v2167
        %v3869 = vmul.bf16 %v3773, %v2166
        %v3870 = vmul.bf16 %v3774, %v2167
        %v3871 = vmul.bf16 %v3775, %v2166
        %v3872 = vmul.bf16 %v3776, %v2167
        %v3873 = vmul.bf16 %v3777, %v2166
        %v3874 = vmul.bf16 %v3778, %v2167
        %v3875 = vmul.bf16 %v3779, %v2166
        %v3876 = vmul.bf16 %v3780, %v2167
        %v3877 = vmul.bf16 %v3781, %v2168
        %v3878 = vmul.bf16 %v3782, %v2169
        %v3879 = vmul.bf16 %v3783, %v2168
        %v3880 = vmul.bf16 %v3784, %v2169
        %v3881 = vmul.bf16 %v3785, %v2168
        %v3882 = vmul.bf16 %v3786, %v2169
        %v3883 = vmul.bf16 %v3787, %v2168
        %v3884 = vmul.bf16 %v3788, %v2169
        %v3885 = vmul.bf16 %v3789, %v2168
        %v3886 = vmul.bf16 %v3790, %v2169
        %v3887 = vmul.bf16 %v3791, %v2168
        %v3888 = vmul.bf16 %v3792, %v2169
        %v3889 = vmul.bf16 %v3793, %v2168
        %v3890 = vmul.bf16 %v3794, %v2169
        %v3891 = vmul.bf16 %v3795, %v2168
        %v3892 = vmul.bf16 %v3796, %v2169
        %v3893 = vmul.bf16 %v3797, %v2168
        %v3894 = vmul.bf16 %v3798, %v2169
        %v3895 = vmul.bf16 %v3799, %v2168
        %v3896 = vmul.bf16 %v3800, %v2169
        %v3897 = vmul.bf16 %v3801, %v2168
        %v3898 = vmul.bf16 %v3802, %v2169
        %v3899 = vmul.bf16 %v3803, %v2168
        %v3900 = vmul.bf16 %v3804, %v2169
        %v3901 = vmul.bf16 %v3805, %v2168
        %v3902 = vmul.bf16 %v3806, %v2169
        %v3903 = vmul.bf16 %v3807, %v2168
        %v3904 = vmul.bf16 %v3808, %v2169
        %v3905 = vmul.bf16 %v3809, %v2168
        %v3906 = vmul.bf16 %v3810, %v2169
        %v3907 = vmul.bf16 %v3811, %v2168
        %v3908 = vmul.bf16 %v3812, %v2169
        %v3909 = vmul.bf16 %v3813, %v2168
        %v3910 = vmul.bf16 %v3814, %v2169
        %v3911 = vmul.bf16 %v3815, %v2168
        %v3912 = vmul.bf16 %v3816, %v2169
        %v3913 = vmul.bf16 %v3817, %v2168
        %v3914 = vmul.bf16 %v3818, %v2169
        %v3915 = vmul.bf16 %v3819, %v2168
        %v3916 = vmul.bf16 %v3820, %v2169
        %v3917 = vmul.bf16 %v3821, %v2168
        %v3918 = vmul.bf16 %v3822, %v2169
        %v3919 = vmul.bf16 %v3823, %v2168
        %v3920 = vmul.bf16 %v3824, %v2169
        %v3921 = vmul.bf16 %v3825, %v2168
        %v3922 = vmul.bf16 %v3826, %v2169
        %v3923 = vmul.bf16 %v3827, %v2168
        %v3924 = vmul.bf16 %v3828, %v2169
        %v4021 = vunpack.c.l.b16 %v3829
        %v4022 = vunpack.c.h.b16 %v3829
        %v4023 = vunpack.c.l.b16 %v3830
        %v4024 = vunpack.c.l.b16 %v3831
        %v4025 = vunpack.c.h.b16 %v3831
        %v4026 = vunpack.c.l.b16 %v3832
        %v4027 = vunpack.c.l.b16 %v3833
        %v4028 = vunpack.c.h.b16 %v3833
        %v4029 = vunpack.c.l.b16 %v3834
        %v4030 = vunpack.c.l.b16 %v3835
        %v4031 = vunpack.c.h.b16 %v3835
        %v4032 = vunpack.c.l.b16 %v3836
        %v4033 = vunpack.c.l.b16 %v3837
        %v4034 = vunpack.c.h.b16 %v3837
        %v4035 = vunpack.c.l.b16 %v3838
        %v4036 = vunpack.c.l.b16 %v3839
        %v4037 = vunpack.c.h.b16 %v3839
        %v4038 = vunpack.c.l.b16 %v3840
        %v4039 = vunpack.c.l.b16 %v3841
        %v4040 = vunpack.c.h.b16 %v3841
        %v4041 = vunpack.c.l.b16 %v3842
        %v4042 = vunpack.c.l.b16 %v3843
        %v4043 = vunpack.c.h.b16 %v3843
        %v4044 = vunpack.c.l.b16 %v3844
        %v4045 = vunpack.c.l.b16 %v3845
        %v4046 = vunpack.c.h.b16 %v3845
        %v4047 = vunpack.c.l.b16 %v3846
        %v4048 = vunpack.c.l.b16 %v3847
        %v4049 = vunpack.c.h.b16 %v3847
        %v4050 = vunpack.c.l.b16 %v3848
        %v4051 = vunpack.c.l.b16 %v3849
        %v4052 = vunpack.c.h.b16 %v3849
        %v4053 = vunpack.c.l.b16 %v3850
        %v4054 = vunpack.c.l.b16 %v3851
        %v4055 = vunpack.c.h.b16 %v3851
        %v4056 = vunpack.c.l.b16 %v3852
        %v4057 = vunpack.c.l.b16 %v3853
        %v4058 = vunpack.c.h.b16 %v3853
        %v4059 = vunpack.c.l.b16 %v3854
        %v4060 = vunpack.c.l.b16 %v3855
        %v4061 = vunpack.c.h.b16 %v3855
        %v4062 = vunpack.c.l.b16 %v3856
        %v4063 = vunpack.c.l.b16 %v3857
        %v4064 = vunpack.c.h.b16 %v3857
        %v4065 = vunpack.c.l.b16 %v3858
        %v4066 = vunpack.c.l.b16 %v3859
        %v4067 = vunpack.c.h.b16 %v3859
        %v4068 = vunpack.c.l.b16 %v3860
        %v4069 = vunpack.c.l.b16 %v3861
        %v4070 = vunpack.c.h.b16 %v3861
        %v4071 = vunpack.c.l.b16 %v3862
        %v4072 = vunpack.c.l.b16 %v3863
        %v4073 = vunpack.c.h.b16 %v3863
        %v4074 = vunpack.c.l.b16 %v3864
        %v4075 = vunpack.c.l.b16 %v3865
        %v4076 = vunpack.c.h.b16 %v3865
        %v4077 = vunpack.c.l.b16 %v3866
        %v4078 = vunpack.c.l.b16 %v3867
        %v4079 = vunpack.c.h.b16 %v3867
        %v4080 = vunpack.c.l.b16 %v3868
        %v4081 = vunpack.c.l.b16 %v3869
        %v4082 = vunpack.c.h.b16 %v3869
        %v4083 = vunpack.c.l.b16 %v3870
        %v4084 = vunpack.c.l.b16 %v3871
        %v4085 = vunpack.c.h.b16 %v3871
        %v4086 = vunpack.c.l.b16 %v3872
        %v4087 = vunpack.c.l.b16 %v3873
        %v4088 = vunpack.c.h.b16 %v3873
        %v4089 = vunpack.c.l.b16 %v3874
        %v4090 = vunpack.c.l.b16 %v3875
        %v4091 = vunpack.c.h.b16 %v3875
        %v4092 = vunpack.c.l.b16 %v3876
        %v4093 = vunpack.c.l.b16 %v3877
        %v4094 = vunpack.c.h.b16 %v3877
        %v4095 = vunpack.c.l.b16 %v3878
        %v4096 = vunpack.c.l.b16 %v3879
        %v4097 = vunpack.c.h.b16 %v3879
        %v4098 = vunpack.c.l.b16 %v3880
        %v4099 = vunpack.c.l.b16 %v3881
        %v4100 = vunpack.c.h.b16 %v3881
        %v4101 = vunpack.c.l.b16 %v3882
        %v4102 = vunpack.c.l.b16 %v3883
        %v4103 = vunpack.c.h.b16 %v3883
        %v4104 = vunpack.c.l.b16 %v3884
        %v4105 = vunpack.c.l.b16 %v3885
        %v4106 = vunpack.c.h.b16 %v3885
        %v4107 = vunpack.c.l.b16 %v3886
        %v4108 = vunpack.c.l.b16 %v3887
        %v4109 = vunpack.c.h.b16 %v3887
        %v4110 = vunpack.c.l.b16 %v3888
        %v4111 = vunpack.c.l.b16 %v3889
        %v4112 = vunpack.c.h.b16 %v3889
        %v4113 = vunpack.c.l.b16 %v3890
        %v4114 = vunpack.c.l.b16 %v3891
        %v4115 = vunpack.c.h.b16 %v3891
        %v4116 = vunpack.c.l.b16 %v3892
        %v4117 = vunpack.c.l.b16 %v3893
        %v4118 = vunpack.c.h.b16 %v3893
        %v4119 = vunpack.c.l.b16 %v3894
        %v4120 = vunpack.c.l.b16 %v3895
        %v4121 = vunpack.c.h.b16 %v3895
        %v4122 = vunpack.c.l.b16 %v3896
        %v4123 = vunpack.c.l.b16 %v3897
        %v4124 = vunpack.c.h.b16 %v3897
        %v4125 = vunpack.c.l.b16 %v3898
        %v4126 = vunpack.c.l.b16 %v3899
        %v4127 = vunpack.c.h.b16 %v3899
        %v4128 = vunpack.c.l.b16 %v3900
        %v4129 = vunpack.c.l.b16 %v3901
        %v4130 = vunpack.c.h.b16 %v3901
        %v4131 = vunpack.c.l.b16 %v3902
        %v4132 = vunpack.c.l.b16 %v3903
        %v4133 = vunpack.c.h.b16 %v3903
        %v4134 = vunpack.c.l.b16 %v3904
        %v4135 = vunpack.c.l.b16 %v3905
        %v4136 = vunpack.c.h.b16 %v3905
        %v4137 = vunpack.c.l.b16 %v3906
        %v4138 = vunpack.c.l.b16 %v3907
        %v4139 = vunpack.c.h.b16 %v3907
        %v4140 = vunpack.c.l.b16 %v3908
        %v4141 = vunpack.c.l.b16 %v3909
        %v4142 = vunpack.c.h.b16 %v3909
        %v4143 = vunpack.c.l.b16 %v3910
        %v4144 = vunpack.c.l.b16 %v3911
        %v4145 = vunpack.c.h.b16 %v3911
        %v4146 = vunpack.c.l.b16 %v3912
        %v4147 = vunpack.c.l.b16 %v3913
        %v4148 = vunpack.c.h.b16 %v3913
        %v4149 = vunpack.c.l.b16 %v3914
        %v4150 = vunpack.c.l.b16 %v3915
        %v4151 = vunpack.c.h.b16 %v3915
        %v4152 = vunpack.c.l.b16 %v3916
        %v4153 = vunpack.c.l.b16 %v3917
        %v4154 = vunpack.c.h.b16 %v3917
        %v4155 = vunpack.c.l.b16 %v3918
        %v4156 = vunpack.c.l.b16 %v3919
        %v4157 = vunpack.c.h.b16 %v3919
        %v4158 = vunpack.c.l.b16 %v3920
        %v4159 = vunpack.c.l.b16 %v3921
        %v4160 = vunpack.c.h.b16 %v3921
        %v4161 = vunpack.c.l.b16 %v3922
        %v4162 = vunpack.c.l.b16 %v3923
        %v4163 = vunpack.c.h.b16 %v3923
        %v4164 = vunpack.c.l.b16 %v3924
        %v4165 = vld [vmem:[#allocation22] sm:$0xf]
        %v4166 = vld [vmem:[#allocation22 + $0x4] sm:$0xf]
        %v4167 = vld [vmem:[#allocation22 + $0x8] sm:$0xf]
        %v4168 = vld [vmem:[#allocation22 + $0xc] sm:$0xf]
        %v4169 = vld [vmem:[#allocation22 + $0x10] sm:$0xf]
        %v4170 = vld [vmem:[#allocation22 + $0x14] sm:$0xf]
        %v4171 = vld [vmem:[#allocation22 + $0x18] sm:$0xf]
        %v4172 = vld [vmem:[#allocation22 + $0x1c] sm:$0xf]
        %v4173 = vld [vmem:[#allocation22 + $0x20] sm:$0xf]
        %v4174 = vld [vmem:[#allocation22 + $0x24] sm:$0xf]
        %v4175 = vld [vmem:[#allocation22 + $0x28] sm:$0xf]
        %v4176 = vld [vmem:[#allocation22 + $0x2c] sm:$0xf]
        %v4177 = vld [vmem:[#allocation22 + $0x30] sm:$0xf]
        %v4178 = vld [vmem:[#allocation22 + $0x34] sm:$0xf]
        %v4179 = vld [vmem:[#allocation22 + $0x38] sm:$0xf]
        %v4180 = vld [vmem:[#allocation22 + $0x3c] sm:$0xf]
        %v4181 = vld [vmem:[#allocation24] sm:$0x1]
        %v4183 = vlaneseq
        %v4184 = vshrl.u32 %v4183, 7
        %v4185 = vsub.s32 0, %v4184
        %v4186 = vrot.slane %v4181, %v4185
        %v4188 = vpack.c.b16 %v4022, %v4021
        %v4189 = vpack.c.b16 %v4024, %v4023
        %v4190 = vpack.c.b16 %v4026, %v4025
        %v4191 = vpack.c.b16 %v4028, %v4027
        %v4192 = vpack.c.b16 %v4030, %v4029
        %v4193 = vpack.c.b16 %v4032, %v4031
        %v4194 = vpack.c.b16 %v4034, %v4033
        %v4195 = vpack.c.b16 %v4036, %v4035
        %v4196 = vpack.c.b16 %v4038, %v4037
        %v4197 = vpack.c.b16 %v4040, %v4039
        %v4198 = vpack.c.b16 %v4042, %v4041
        %v4199 = vpack.c.b16 %v4044, %v4043
        %v4200 = vpack.c.b16 %v4046, %v4045
        %v4201 = vpack.c.b16 %v4048, %v4047
        %v4202 = vpack.c.b16 %v4050, %v4049
        %v4203 = vpack.c.b16 %v4052, %v4051
        %v4204 = vpack.c.b16 %v4054, %v4053
        %v4205 = vpack.c.b16 %v4056, %v4055
        %v4206 = vpack.c.b16 %v4058, %v4057
        %v4207 = vpack.c.b16 %v4060, %v4059
        %v4208 = vpack.c.b16 %v4062, %v4061
        %v4209 = vpack.c.b16 %v4064, %v4063
        %v4210 = vpack.c.b16 %v4066, %v4065
        %v4211 = vpack.c.b16 %v4068, %v4067
        %v4212 = vpack.c.b16 %v4070, %v4069
        %v4213 = vpack.c.b16 %v4072, %v4071
        %v4214 = vpack.c.b16 %v4074, %v4073
        %v4215 = vpack.c.b16 %v4076, %v4075
        %v4216 = vpack.c.b16 %v4078, %v4077
        %v4217 = vpack.c.b16 %v4080, %v4079
        %v4218 = vpack.c.b16 %v4082, %v4081
        %v4219 = vpack.c.b16 %v4084, %v4083
        %v4220 = vpack.c.b16 %v4086, %v4085
        %v4221 = vpack.c.b16 %v4088, %v4087
        %v4222 = vpack.c.b16 %v4090, %v4089
        %v4223 = vpack.c.b16 %v4092, %v4091
        %v4224 = vpack.c.b16 %v4094, %v4093
        %v4225 = vpack.c.b16 %v4096, %v4095
        %v4226 = vpack.c.b16 %v4098, %v4097
        %v4227 = vpack.c.b16 %v4100, %v4099
        %v4228 = vpack.c.b16 %v4102, %v4101
        %v4229 = vpack.c.b16 %v4104, %v4103
        %v4230 = vpack.c.b16 %v4106, %v4105
        %v4231 = vpack.c.b16 %v4108, %v4107
        %v4232 = vpack.c.b16 %v4110, %v4109
        %v4233 = vpack.c.b16 %v4112, %v4111
        %v4234 = vpack.c.b16 %v4114, %v4113
        %v4235 = vpack.c.b16 %v4116, %v4115
        %v4236 = vpack.c.b16 %v4118, %v4117
        %v4237 = vpack.c.b16 %v4120, %v4119
        %v4238 = vpack.c.b16 %v4122, %v4121
        %v4239 = vpack.c.b16 %v4124, %v4123
        %v4240 = vpack.c.b16 %v4126, %v4125
        %v4241 = vpack.c.b16 %v4128, %v4127
        %v4242 = vpack.c.b16 %v4130, %v4129
        %v4243 = vpack.c.b16 %v4132, %v4131
        %v4244 = vpack.c.b16 %v4134, %v4133
        %v4245 = vpack.c.b16 %v4136, %v4135
        %v4246 = vpack.c.b16 %v4138, %v4137
        %v4247 = vpack.c.b16 %v4140, %v4139
        %v4248 = vpack.c.b16 %v4142, %v4141
        %v4249 = vpack.c.b16 %v4144, %v4143
        %v4250 = vpack.c.b16 %v4146, %v4145
        %v4251 = vpack.c.b16 %v4148, %v4147
        %v4252 = vpack.c.b16 %v4150, %v4149
        %v4253 = vpack.c.b16 %v4152, %v4151
        %v4254 = vpack.c.b16 %v4154, %v4153
        %v4255 = vpack.c.b16 %v4156, %v4155
        %v4256 = vpack.c.b16 %v4158, %v4157
        %v4257 = vpack.c.b16 %v4160, %v4159
        %v4258 = vpack.c.b16 %v4162, %v4161
        %v4259 = vpack.c.b16 %v4164, %v4163
        %v4348 = vunpack.c.l.b16 %v4165
        %v4349 = vunpack.c.l.b16 %v4166
        %v4350 = vunpack.c.l.b16 %v4167
        %v4351 = vunpack.c.l.b16 %v4168
        %v4352 = vunpack.c.l.b16 %v4169
        %v4353 = vunpack.c.l.b16 %v4170
        %v4354 = vunpack.c.l.b16 %v4171
        %v4355 = vunpack.c.l.b16 %v4172
        %v4356 = vunpack.c.l.b16 %v4173
        %v4357 = vunpack.c.l.b16 %v4174
        %v4358 = vunpack.c.l.b16 %v4175
        %v4359 = vunpack.c.l.b16 %v4176
        %v4360 = vunpack.c.l.b16 %v4177
        %v4361 = vunpack.c.l.b16 %v4178
        %v4362 = vunpack.c.l.b16 %v4179
        %v4363 = vunpack.c.l.b16 %v4180
        %v4364 = vpack.c.b16 %v4349, %v4348
        %v4365 = vpack.c.b16 %v4351, %v4350
        %v4366 = vpack.c.b16 %v4353, %v4352
        %v4367 = vpack.c.b16 %v4355, %v4354
        %v4368 = vpack.c.b16 %v4357, %v4356
        %v4369 = vpack.c.b16 %v4359, %v4358
        %v4370 = vpack.c.b16 %v4361, %v4360
        %v4371 = vpack.c.b16 %v4363, %v4362
        %4380 = vmatprep.subr.bf16.mxu0 0
        %4381 = vmatpush1.bf16.msra.mxu0 %v4364
        %4382 = vmatprep.subr.bf16.mxu0 0
        %4383 = vmatpush1.bf16.msra.mxu0 %v4365
        %4384 = vmatprep.subr.bf16.mxu0 0
        %4385 = vmatpush1.bf16.msra.mxu0 %v4366
        %4386 = vmatprep.subr.bf16.mxu0 0
        %4387 = vmatpush1.bf16.msra.mxu0 %v4367
        %4388 = vmatprep.subr.bf16.mxu0 0
        %4389 = vmatpush1.bf16.msra.mxu0 %v4368
        %4390 = vmatprep.subr.bf16.mxu0 0
        %4391 = vmatpush1.bf16.msra.mxu0 %v4369
        %4392 = vmatprep.subr.bf16.mxu0 0
        %4393 = vmatpush1.bf16.msra.mxu0 %v4370
        %4394 = vmatprep.subr.bf16.mxu0 0
        %4395 = vmatpush1.bf16.msra.mxu0 %v4371
        %4396 = vmatprep.subr.bf16.mxu0 0
        %4397 = vmatpush1.bf16.msra.mxu0 0
        %4398 = vmatprep.subr.bf16.mxu0 0
        %4399 = vmatpush1.bf16.msra.mxu0 0
        %4400 = vmatprep.subr.bf16.mxu0 0
        %4401 = vmatpush1.bf16.msra.mxu0 0
        %4402 = vmatprep.subr.bf16.mxu0 0
        %4403 = vmatpush1.bf16.msra.mxu0 0
        %4404 = vmatprep.subr.bf16.mxu0 0
        %4405 = vmatpush1.bf16.msra.mxu0 0
        %4406 = vmatprep.subr.bf16.mxu0 0
        %4407 = vmatpush1.bf16.msra.mxu0 0
        %4408 = vmatprep.subr.bf16.mxu0 0
        %4409 = vmatpush1.bf16.msra.mxu0 0
        %4410 = vmatprep.subr.bf16.mxu0 0
        %4411 = vmatpush1.bf16.msra.mxu0 0
        %4412 = vmatprep.mubr.bf16.mxu0 0
        %4413 = vmatmul.mubr.bf16.gmra.mrb[0].mxu0 %v4188
        %v4414 = vpop.f32.mrb[0].mxu0
        %v4415 = vadd.f32 %v4186, %v4414
        %v4416 = vpop.f32.mrb[0].mxu0
        %v4417 = vpop.f32.mrb[0].mxu0
        %v4418 = vadd.f32 %v4186, %v4417
        %v4419 = vpop.f32.mrb[0].mxu0
        %4420 = vmatprep.mubr.bf16.mxu0 0
        %4421 = vmatmul.mubr.bf16.gmra.mrb[0].mxu0 %v4189
        %v4422 = vpop.f32.mrb[0].mxu0
        %v4423 = vadd.f32 %v4186, %v4422
        %v4424 = vpop.f32.mrb[0].mxu0
        %v4425 = vpop.f32.mrb[0].mxu0
        %v4426 = vadd.f32 %v4186, %v4425
        %v4427 = vpop.f32.mrb[0].mxu0
        %4428 = vmatprep.mubr.bf16.mxu0 0
        %4429 = vmatmul.mubr.bf16.gmra.mrb[0].mxu0 %v4190
        %v4430 = vpop.f32.mrb[0].mxu0
        %v4431 = vadd.f32 %v4186, %v4430
        %v4432 = vpop.f32.mrb[0].mxu0
        %v4433 = vpop.f32.mrb[0].mxu0
        %v4434 = vadd.f32 %v4186, %v4433
        %v4435 = vpop.f32.mrb[0].mxu0
        %4436 = vmatprep.mubr.bf16.mxu0 0
        %4437 = vmatmul.mubr.bf16.gmra.mrb[0].mxu0 %v4191
        %v4438 = vpop.f32.mrb[0].mxu0
        %v4439 = vadd.f32 %v4186, %v4438
        %v4440 = vpop.f32.mrb[0].mxu0
        %v4441 = vpop.f32.mrb[0].mxu0
        %v4442 = vadd.f32 %v4186, %v4441
        %v4443 = vpop.f32.mrb[0].mxu0
        %4444 = vmatprep.mubr.bf16.mxu0 0
        %4445 = vmatmul.mubr.bf16.gmra.mrb[0].mxu0 %v4192
        %v4446 = vpop.f32.mrb[0].mxu0
        %v4447 = vadd.f32 %v4186, %v4446
        %v4448 = vpop.f32.mrb[0].mxu0
        %v4449 = vpop.f32.mrb[0].mxu0
        %v4450 = vadd.f32 %v4186, %v4449
        %v4451 = vpop.f32.mrb[0].mxu0
        %4452 = vmatprep.mubr.bf16.mxu0 0
        %4453 = vmatmul.mubr.bf16.gmra.mrb[0].mxu0 %v4193
        %v4454 = vpop.f32.mrb[0].mxu0
        %v4455 = vadd.f32 %v4186, %v4454
        %v4456 = vpop.f32.mrb[0].mxu0
        %v4457 = vpop.f32.mrb[0].mxu0
        %v4458 = vadd.f32 %v4186, %v4457
        %v4459 = vpop.f32.mrb[0].mxu0
        %4460 = vmatprep.mubr.bf16.mxu0 0
        %4461 = vmatmul.mubr.bf16.gmra.mrb[0].mxu0 %v4194
        %v4462 = vpop.f32.mrb[0].mxu0
        %v4463 = vadd.f32 %v4186, %v4462
        %v4464 = vpop.f32.mrb[0].mxu0
        %v4465 = vpop.f32.mrb[0].mxu0
        %v4466 = vadd.f32 %v4186, %v4465
        %v4467 = vpop.f32.mrb[0].mxu0
        %4468 = vmatprep.mubr.bf16.mxu0 0
        %4469 = vmatmul.mubr.bf16.gmra.mrb[0].mxu0 %v4195
        %v4470 = vpop.f32.mrb[0].mxu0
        %v4471 = vadd.f32 %v4186, %v4470
        %v4472 = vpop.f32.mrb[0].mxu0
        %v4473 = vpop.f32.mrb[0].mxu0
        %v4474 = vadd.f32 %v4186, %v4473
        %v4475 = vpop.f32.mrb[0].mxu0
        %4476 = vmatprep.mubr.bf16.mxu0 0
        %4477 = vmatmul.mubr.bf16.gmra.mrb[0].mxu0 %v4196
        %v4478 = vpop.f32.mrb[0].mxu0
        %v4479 = vadd.f32 %v4186, %v4478
        %v4480 = vpop.f32.mrb[0].mxu0
        %v4481 = vpop.f32.mrb[0].mxu0
        %v4482 = vadd.f32 %v4186, %v4481
        %v4483 = vpop.f32.mrb[0].mxu0
        %4484 = vmatprep.mubr.bf16.mxu0 0
        %4485 = vmatmul.mubr.bf16.gmra.mrb[0].mxu0 %v4197
        %v4486 = vpop.f32.mrb[0].mxu0
        %v4487 = vadd.f32 %v4186, %v4486
        %v4488 = vpop.f32.mrb[0].mxu0
        %v4489 = vpop.f32.mrb[0].mxu0
        %v4490 = vadd.f32 %v4186, %v4489
        %v4491 = vpop.f32.mrb[0].mxu0
        %4492 = vmatprep.mubr.bf16.mxu0 0
        %4493 = vmatmul.mubr.bf16.gmra.mrb[0].mxu0 %v4198
        %v4494 = vpop.f32.mrb[0].mxu0
        %v4495 = vadd.f32 %v4186, %v4494
        %v4496 = vpop.f32.mrb[0].mxu0
        %v4497 = vpop.f32.mrb[0].mxu0
        %v4498 = vadd.f32 %v4186, %v4497
        %v4499 = vpop.f32.mrb[0].mxu0
        %4500 = vmatprep.mubr.bf16.mxu0 0
        %4501 = vmatmul.mubr.bf16.gmra.mrb[0].mxu0 %v4199
        %v4502 = vpop.f32.mrb[0].mxu0
        %v4503 = vadd.f32 %v4186, %v4502
        %v4504 = vpop.f32.mrb[0].mxu0
        %v4505 = vpop.f32.mrb[0].mxu0
        %v4506 = vadd.f32 %v4186, %v4505
        %v4507 = vpop.f32.mrb[0].mxu0
        %4508 = vmatprep.mubr.bf16.mxu0 0
        %4509 = vmatmul.mubr.bf16.gmra.mrb[0].mxu0 %v4200
        %v4510 = vpop.f32.mrb[0].mxu0
        %v4511 = vadd.f32 %v4186, %v4510
        %v4512 = vpop.f32.mrb[0].mxu0
        %v4513 = vpop.f32.mrb[0].mxu0
        %v4514 = vadd.f32 %v4186, %v4513
        %v4515 = vpop.f32.mrb[0].mxu0
        %4516 = vmatprep.mubr.bf16.mxu0 0
        %4517 = vmatmul.mubr.bf16.gmra.mrb[0].mxu0 %v4201
        %v4518 = vpop.f32.mrb[0].mxu0
        %v4519 = vadd.f32 %v4186, %v4518
        %v4520 = vpop.f32.mrb[0].mxu0
        %v4521 = vpop.f32.mrb[0].mxu0
        %v4522 = vadd.f32 %v4186, %v4521
        %v4523 = vpop.f32.mrb[0].mxu0
        %4524 = vmatprep.mubr.bf16.mxu0 0
        %4525 = vmatmul.mubr.bf16.gmra.mrb[0].mxu0 %v4202
        %v4526 = vpop.f32.mrb[0].mxu0
        %v4527 = vadd.f32 %v4186, %v4526
        %v4528 = vpop.f32.mrb[0].mxu0
        %v4529 = vpop.f32.mrb[0].mxu0
        %v4530 = vadd.f32 %v4186, %v4529
        %v4531 = vpop.f32.mrb[0].mxu0
        %4532 = vmatprep.mubr.bf16.mxu0 0
        %4533 = vmatmul.mubr.bf16.gmra.mrb[0].mxu0 %v4203
        %v4534 = vpop.f32.mrb[0].mxu0
        %v4535 = vadd.f32 %v4186, %v4534
        %v4536 = vpop.f32.mrb[0].mxu0
        %v4537 = vpop.f32.mrb[0].mxu0
        %v4538 = vadd.f32 %v4186, %v4537
        %v4539 = vpop.f32.mrb[0].mxu0
        %4540 = vmatprep.mubr.bf16.mxu0 0
        %4541 = vmatmul.mubr.bf16.gmra.mrb[0].mxu0 %v4204
        %v4542 = vpop.f32.mrb[0].mxu0
        %v4543 = vadd.f32 %v4186, %v4542
        %v4544 = vpop.f32.mrb[0].mxu0
        %v4545 = vpop.f32.mrb[0].mxu0
        %v4546 = vadd.f32 %v4186, %v4545
        %v4547 = vpop.f32.mrb[0].mxu0
        %4548 = vmatprep.mubr.bf16.mxu0 0
        %4549 = vmatmul.mubr.bf16.gmra.mrb[0].mxu0 %v4205
        %v4550 = vpop.f32.mrb[0].mxu0
        %v4551 = vadd.f32 %v4186, %v4550
        %v4552 = vpop.f32.mrb[0].mxu0
        %v4553 = vpop.f32.mrb[0].mxu0
        %v4554 = vadd.f32 %v4186, %v4553
        %v4555 = vpop.f32.mrb[0].mxu0
        %4556 = vmatprep.mubr.bf16.mxu0 0
        %4557 = vmatmul.mubr.bf16.gmra.mrb[0].mxu0 %v4206
        %v4558 = vpop.f32.mrb[0].mxu0
        %v4559 = vadd.f32 %v4186, %v4558
        %v4560 = vpop.f32.mrb[0].mxu0
        %v4561 = vpop.f32.mrb[0].mxu0
        %v4562 = vadd.f32 %v4186, %v4561
        %v4563 = vpop.f32.mrb[0].mxu0
        %4564 = vmatprep.mubr.bf16.mxu0 0
        %4565 = vmatmul.mubr.bf16.gmra.mrb[0].mxu0 %v4207
        %v4566 = vpop.f32.mrb[0].mxu0
        %v4567 = vadd.f32 %v4186, %v4566
        %v4568 = vpop.f32.mrb[0].mxu0
        %v4569 = vpop.f32.mrb[0].mxu0
        %v4570 = vadd.f32 %v4186, %v4569
        %v4571 = vpop.f32.mrb[0].mxu0
        %4572 = vmatprep.mubr.bf16.mxu0 0
        %4573 = vmatmul.mubr.bf16.gmra.mrb[0].mxu0 %v4208
        %v4574 = vpop.f32.mrb[0].mxu0
        %v4575 = vadd.f32 %v4186, %v4574
        %v4576 = vpop.f32.mrb[0].mxu0
        %v4577 = vpop.f32.mrb[0].mxu0
        %v4578 = vadd.f32 %v4186, %v4577
        %v4579 = vpop.f32.mrb[0].mxu0
        %4580 = vmatprep.mubr.bf16.mxu0 0
        %4581 = vmatmul.mubr.bf16.gmra.mrb[0].mxu0 %v4209
        %v4582 = vpop.f32.mrb[0].mxu0
        %v4583 = vadd.f32 %v4186, %v4582
        %v4584 = vpop.f32.mrb[0].mxu0
        %v4585 = vpop.f32.mrb[0].mxu0
        %v4586 = vadd.f32 %v4186, %v4585
        %v4587 = vpop.f32.mrb[0].mxu0
        %4588 = vmatprep.mubr.bf16.mxu0 0
        %4589 = vmatmul.mubr.bf16.gmra.mrb[0].mxu0 %v4210
        %v4590 = vpop.f32.mrb[0].mxu0
        %v4591 = vadd.f32 %v4186, %v4590
        %v4592 = vpop.f32.mrb[0].mxu0
        %v4593 = vpop.f32.mrb[0].mxu0
        %v4594 = vadd.f32 %v4186, %v4593
        %v4595 = vpop.f32.mrb[0].mxu0
        %4596 = vmatprep.mubr.bf16.mxu0 0
        %4597 = vmatmul.mubr.bf16.gmra.mrb[0].mxu0 %v4211
        %v4598 = vpop.f32.mrb[0].mxu0
        %v4599 = vadd.f32 %v4186, %v4598
        %v4600 = vpop.f32.mrb[0].mxu0
        %v4601 = vpop.f32.mrb[0].mxu0
        %v4602 = vadd.f32 %v4186, %v4601
        %v4603 = vpop.f32.mrb[0].mxu0
        %4604 = vmatprep.mubr.bf16.mxu0 0
        %4605 = vmatmul.mubr.bf16.gmra.mrb[0].mxu0 %v4212
        %v4606 = vpop.f32.mrb[0].mxu0
        %v4607 = vadd.f32 %v4186, %v4606
        %v4608 = vpop.f32.mrb[0].mxu0
        %v4609 = vpop.f32.mrb[0].mxu0
        %v4610 = vadd.f32 %v4186, %v4609
        %v4611 = vpop.f32.mrb[0].mxu0
        %4612 = vmatprep.mubr.bf16.mxu0 0
        %4613 = vmatmul.mubr.bf16.gmra.mrb[0].mxu0 %v4213
        %v4614 = vpop.f32.mrb[0].mxu0
        %v4615 = vadd.f32 %v4186, %v4614
        %v4616 = vpop.f32.mrb[0].mxu0
        %v4617 = vpop.f32.mrb[0].mxu0
        %v4618 = vadd.f32 %v4186, %v4617
        %v4619 = vpop.f32.mrb[0].mxu0
        %4620 = vmatprep.mubr.bf16.mxu0 0
        %4621 = vmatmul.mubr.bf16.gmra.mrb[0].mxu0 %v4214
        %v4622 = vpop.f32.mrb[0].mxu0
        %v4623 = vadd.f32 %v4186, %v4622
        %v4624 = vpop.f32.mrb[0].mxu0
        %v4625 = vpop.f32.mrb[0].mxu0
        %v4626 = vadd.f32 %v4186, %v4625
        %v4627 = vpop.f32.mrb[0].mxu0
        %4628 = vmatprep.mubr.bf16.mxu0 0
        %4629 = vmatmul.mubr.bf16.gmra.mrb[0].mxu0 %v4215
        %v4630 = vpop.f32.mrb[0].mxu0
        %v4631 = vadd.f32 %v4186, %v4630
        %v4632 = vpop.f32.mrb[0].mxu0
        %v4633 = vpop.f32.mrb[0].mxu0
        %v4634 = vadd.f32 %v4186, %v4633
        %v4635 = vpop.f32.mrb[0].mxu0
        %4636 = vmatprep.mubr.bf16.mxu0 0
        %4637 = vmatmul.mubr.bf16.gmra.mrb[0].mxu0 %v4216
        %v4638 = vpop.f32.mrb[0].mxu0
        %v4639 = vadd.f32 %v4186, %v4638
        %v4640 = vpop.f32.mrb[0].mxu0
        %v4641 = vpop.f32.mrb[0].mxu0
        %v4642 = vadd.f32 %v4186, %v4641
        %v4643 = vpop.f32.mrb[0].mxu0
        %4644 = vmatprep.mubr.bf16.mxu0 0
        %4645 = vmatmul.mubr.bf16.gmra.mrb[0].mxu0 %v4217
        %v4646 = vpop.f32.mrb[0].mxu0
        %v4647 = vadd.f32 %v4186, %v4646
        %v4648 = vpop.f32.mrb[0].mxu0
        %v4649 = vpop.f32.mrb[0].mxu0
        %v4650 = vadd.f32 %v4186, %v4649
        %v4651 = vpop.f32.mrb[0].mxu0
        %4652 = vmatprep.mubr.bf16.mxu0 0
        %4653 = vmatmul.mubr.bf16.gmra.mrb[0].mxu0 %v4218
        %v4654 = vpop.f32.mrb[0].mxu0
        %v4655 = vadd.f32 %v4186, %v4654
        %v4656 = vpop.f32.mrb[0].mxu0
        %v4657 = vpop.f32.mrb[0].mxu0
        %v4658 = vadd.f32 %v4186, %v4657
        %v4659 = vpop.f32.mrb[0].mxu0
        %4660 = vmatprep.mubr.bf16.mxu0 0
        %4661 = vmatmul.mubr.bf16.gmra.mrb[0].mxu0 %v4219
        %v4662 = vpop.f32.mrb[0].mxu0
        %v4663 = vadd.f32 %v4186, %v4662
        %v4664 = vpop.f32.mrb[0].mxu0
        %v4665 = vpop.f32.mrb[0].mxu0
        %v4666 = vadd.f32 %v4186, %v4665
        %v4667 = vpop.f32.mrb[0].mxu0
        %4668 = vmatprep.mubr.bf16.mxu0 0
        %4669 = vmatmul.mubr.bf16.gmra.mrb[0].mxu0 %v4220
        %v4670 = vpop.f32.mrb[0].mxu0
        %v4671 = vadd.f32 %v4186, %v4670
        %v4672 = vpop.f32.mrb[0].mxu0
        %v4673 = vpop.f32.mrb[0].mxu0
        %v4674 = vadd.f32 %v4186, %v4673
        %v4675 = vpop.f32.mrb[0].mxu0
        %4676 = vmatprep.mubr.bf16.mxu0 0
        %4677 = vmatmul.mubr.bf16.gmra.mrb[0].mxu0 %v4221
        %v4678 = vpop.f32.mrb[0].mxu0
        %v4679 = vadd.f32 %v4186, %v4678
        %v4680 = vpop.f32.mrb[0].mxu0
        %v4681 = vpop.f32.mrb[0].mxu0
        %v4682 = vadd.f32 %v4186, %v4681
        %v4683 = vpop.f32.mrb[0].mxu0
        %4684 = vmatprep.mubr.bf16.mxu0 0
        %4685 = vmatmul.mubr.bf16.gmra.mrb[0].mxu0 %v4222
        %v4686 = vpop.f32.mrb[0].mxu0
        %v4687 = vadd.f32 %v4186, %v4686
        %v4688 = vpop.f32.mrb[0].mxu0
        %v4689 = vpop.f32.mrb[0].mxu0
        %v4690 = vadd.f32 %v4186, %v4689
        %v4691 = vpop.f32.mrb[0].mxu0
        %4692 = vmatprep.mubr.bf16.mxu0 0
        %4693 = vmatmul.mubr.bf16.gmra.mrb[0].mxu0 %v4223
        %v4694 = vpop.f32.mrb[0].mxu0
        %v4695 = vadd.f32 %v4186, %v4694
        %v4696 = vpop.f32.mrb[0].mxu0
        %v4697 = vpop.f32.mrb[0].mxu0
        %v4698 = vadd.f32 %v4186, %v4697
        %v4699 = vpop.f32.mrb[0].mxu0
        %4700 = vmatprep.mubr.bf16.mxu0 0
        %4701 = vmatmul.mubr.bf16.gmra.mrb[0].mxu0 %v4224
        %v4702 = vpop.f32.mrb[0].mxu0
        %v4703 = vadd.f32 %v4186, %v4702
        %v4704 = vpop.f32.mrb[0].mxu0
        %v4705 = vpop.f32.mrb[0].mxu0
        %v4706 = vadd.f32 %v4186, %v4705
        %v4707 = vpop.f32.mrb[0].mxu0
        %4708 = vmatprep.mubr.bf16.mxu0 0
        %4709 = vmatmul.mubr.bf16.gmra.mrb[0].mxu0 %v4225
        %v4710 = vpop.f32.mrb[0].mxu0
        %v4711 = vadd.f32 %v4186, %v4710
        %v4712 = vpop.f32.mrb[0].mxu0
        %v4713 = vpop.f32.mrb[0].mxu0
        %v4714 = vadd.f32 %v4186, %v4713
        %v4715 = vpop.f32.mrb[0].mxu0
        %4716 = vmatprep.mubr.bf16.mxu0 0
        %4717 = vmatmul.mubr.bf16.gmra.mrb[0].mxu0 %v4226
        %v4718 = vpop.f32.mrb[0].mxu0
        %v4719 = vadd.f32 %v4186, %v4718
        %v4720 = vpop.f32.mrb[0].mxu0
        %v4721 = vpop.f32.mrb[0].mxu0
        %v4722 = vadd.f32 %v4186, %v4721
        %v4723 = vpop.f32.mrb[0].mxu0
        %4724 = vmatprep.mubr.bf16.mxu0 0
        %4725 = vmatmul.mubr.bf16.gmra.mrb[0].mxu0 %v4227
        %v4726 = vpop.f32.mrb[0].mxu0
        %v4727 = vadd.f32 %v4186, %v4726
        %v4728 = vpop.f32.mrb[0].mxu0
        %v4729 = vpop.f32.mrb[0].mxu0
        %v4730 = vadd.f32 %v4186, %v4729
        %v4731 = vpop.f32.mrb[0].mxu0
        %4732 = vmatprep.mubr.bf16.mxu0 0
        %4733 = vmatmul.mubr.bf16.gmra.mrb[0].mxu0 %v4228
        %v4734 = vpop.f32.mrb[0].mxu0
        %v4735 = vadd.f32 %v4186, %v4734
        %v4736 = vpop.f32.mrb[0].mxu0
        %v4737 = vpop.f32.mrb[0].mxu0
        %v4738 = vadd.f32 %v4186, %v4737
        %v4739 = vpop.f32.mrb[0].mxu0
        %4740 = vmatprep.mubr.bf16.mxu0 0
        %4741 = vmatmul.mubr.bf16.gmra.mrb[0].mxu0 %v4229
        %v4742 = vpop.f32.mrb[0].mxu0
        %v4743 = vadd.f32 %v4186, %v4742
        %v4744 = vpop.f32.mrb[0].mxu0
        %v4745 = vpop.f32.mrb[0].mxu0
        %v4746 = vadd.f32 %v4186, %v4745
        %v4747 = vpop.f32.mrb[0].mxu0
        %4748 = vmatprep.mubr.bf16.mxu0 0
        %4749 = vmatmul.mubr.bf16.gmra.mrb[0].mxu0 %v4230
        %v4750 = vpop.f32.mrb[0].mxu0
        %v4751 = vadd.f32 %v4186, %v4750
        %v4752 = vpop.f32.mrb[0].mxu0
        %v4753 = vpop.f32.mrb[0].mxu0
        %v4754 = vadd.f32 %v4186, %v4753
        %v4755 = vpop.f32.mrb[0].mxu0
        %4756 = vmatprep.mubr.bf16.mxu0 0
        %4757 = vmatmul.mubr.bf16.gmra.mrb[0].mxu0 %v4231
        %v4758 = vpop.f32.mrb[0].mxu0
        %v4759 = vadd.f32 %v4186, %v4758
        %v4760 = vpop.f32.mrb[0].mxu0
        %v4761 = vpop.f32.mrb[0].mxu0
        %v4762 = vadd.f32 %v4186, %v4761
        %v4763 = vpop.f32.mrb[0].mxu0
        %4764 = vmatprep.mubr.bf16.mxu0 0
        %4765 = vmatmul.mubr.bf16.gmra.mrb[0].mxu0 %v4232
        %v4766 = vpop.f32.mrb[0].mxu0
        %v4767 = vadd.f32 %v4186, %v4766
        %v4768 = vpop.f32.mrb[0].mxu0
        %v4769 = vpop.f32.mrb[0].mxu0
        %v4770 = vadd.f32 %v4186, %v4769
        %v4771 = vpop.f32.mrb[0].mxu0
        %4772 = vmatprep.mubr.bf16.mxu0 0
        %4773 = vmatmul.mubr.bf16.gmra.mrb[0].mxu0 %v4233
        %v4774 = vpop.f32.mrb[0].mxu0
        %v4775 = vadd.f32 %v4186, %v4774
        %v4776 = vpop.f32.mrb[0].mxu0
        %v4777 = vpop.f32.mrb[0].mxu0
        %v4778 = vadd.f32 %v4186, %v4777
        %v4779 = vpop.f32.mrb[0].mxu0
        %4780 = vmatprep.mubr.bf16.mxu0 0
        %4781 = vmatmul.mubr.bf16.gmra.mrb[0].mxu0 %v4234
        %v4782 = vpop.f32.mrb[0].mxu0
        %v4783 = vadd.f32 %v4186, %v4782
        %v4784 = vpop.f32.mrb[0].mxu0
        %v4785 = vpop.f32.mrb[0].mxu0
        %v4786 = vadd.f32 %v4186, %v4785
        %v4787 = vpop.f32.mrb[0].mxu0
        %4788 = vmatprep.mubr.bf16.mxu0 0
        %4789 = vmatmul.mubr.bf16.gmra.mrb[0].mxu0 %v4235
        %v4790 = vpop.f32.mrb[0].mxu0
        %v4791 = vadd.f32 %v4186, %v4790
        %v4792 = vpop.f32.mrb[0].mxu0
        %v4793 = vpop.f32.mrb[0].mxu0
        %v4794 = vadd.f32 %v4186, %v4793
        %v4795 = vpop.f32.mrb[0].mxu0
        %4796 = vmatprep.mubr.bf16.mxu0 0
        %4797 = vmatmul.mubr.bf16.gmra.mrb[0].mxu0 %v4236
        %v4798 = vpop.f32.mrb[0].mxu0
        %v4799 = vadd.f32 %v4186, %v4798
        %v4800 = vpop.f32.mrb[0].mxu0
        %v4801 = vpop.f32.mrb[0].mxu0
        %v4802 = vadd.f32 %v4186, %v4801
        %v4803 = vpop.f32.mrb[0].mxu0
        %4804 = vmatprep.mubr.bf16.mxu0 0
        %4805 = vmatmul.mubr.bf16.gmra.mrb[0].mxu0 %v4237
        %v4806 = vpop.f32.mrb[0].mxu0
        %v4807 = vadd.f32 %v4186, %v4806
        %v4808 = vpop.f32.mrb[0].mxu0
        %v4809 = vpop.f32.mrb[0].mxu0
        %v4810 = vadd.f32 %v4186, %v4809
        %v4811 = vpop.f32.mrb[0].mxu0
        %4812 = vmatprep.mubr.bf16.mxu0 0
        %4813 = vmatmul.mubr.bf16.gmra.mrb[0].mxu0 %v4238
        %v4814 = vpop.f32.mrb[0].mxu0
        %v4815 = vadd.f32 %v4186, %v4814
        %v4816 = vpop.f32.mrb[0].mxu0
        %v4817 = vpop.f32.mrb[0].mxu0
        %v4818 = vadd.f32 %v4186, %v4817
        %v4819 = vpop.f32.mrb[0].mxu0
        %4820 = vmatprep.mubr.bf16.mxu0 0
        %4821 = vmatmul.mubr.bf16.gmra.mrb[0].mxu0 %v4239
        %v4822 = vpop.f32.mrb[0].mxu0
        %v4823 = vadd.f32 %v4186, %v4822
        %v4824 = vpop.f32.mrb[0].mxu0
        %v4825 = vpop.f32.mrb[0].mxu0
        %v4826 = vadd.f32 %v4186, %v4825
        %v4827 = vpop.f32.mrb[0].mxu0
        %4828 = vmatprep.mubr.bf16.mxu0 0
        %4829 = vmatmul.mubr.bf16.gmra.mrb[0].mxu0 %v4240
        %v4830 = vpop.f32.mrb[0].mxu0
        %v4831 = vadd.f32 %v4186, %v4830
        %v4832 = vpop.f32.mrb[0].mxu0
        %v4833 = vpop.f32.mrb[0].mxu0
        %v4834 = vadd.f32 %v4186, %v4833
        %v4835 = vpop.f32.mrb[0].mxu0
        %4836 = vmatprep.mubr.bf16.mxu0 0
        %4837 = vmatmul.mubr.bf16.gmra.mrb[0].mxu0 %v4241
        %v4838 = vpop.f32.mrb[0].mxu0
        %v4839 = vadd.f32 %v4186, %v4838
        %v4840 = vpop.f32.mrb[0].mxu0
        %v4841 = vpop.f32.mrb[0].mxu0
        %v4842 = vadd.f32 %v4186, %v4841
        %v4843 = vpop.f32.mrb[0].mxu0
        %4844 = vmatprep.mubr.bf16.mxu0 0
        %4845 = vmatmul.mubr.bf16.gmra.mrb[0].mxu0 %v4242
        %v4846 = vpop.f32.mrb[0].mxu0
        %v4847 = vadd.f32 %v4186, %v4846
        %v4848 = vpop.f32.mrb[0].mxu0
        %v4849 = vpop.f32.mrb[0].mxu0
        %v4850 = vadd.f32 %v4186, %v4849
        %v4851 = vpop.f32.mrb[0].mxu0
        %4852 = vmatprep.mubr.bf16.mxu0 0
        %4853 = vmatmul.mubr.bf16.gmra.mrb[0].mxu0 %v4243
        %v4854 = vpop.f32.mrb[0].mxu0
        %v4855 = vadd.f32 %v4186, %v4854
        %v4856 = vpop.f32.mrb[0].mxu0
        %v4857 = vpop.f32.mrb[0].mxu0
        %v4858 = vadd.f32 %v4186, %v4857
        %v4859 = vpop.f32.mrb[0].mxu0
        %4860 = vmatprep.mubr.bf16.mxu0 0
        %4861 = vmatmul.mubr.bf16.gmra.mrb[0].mxu0 %v4244
        %v4862 = vpop.f32.mrb[0].mxu0
        %v4863 = vadd.f32 %v4186, %v4862
        %v4864 = vpop.f32.mrb[0].mxu0
        %v4865 = vpop.f32.mrb[0].mxu0
        %v4866 = vadd.f32 %v4186, %v4865
        %v4867 = vpop.f32.mrb[0].mxu0
        %4868 = vmatprep.mubr.bf16.mxu0 0
        %4869 = vmatmul.mubr.bf16.gmra.mrb[0].mxu0 %v4245
        %v4870 = vpop.f32.mrb[0].mxu0
        %v4871 = vadd.f32 %v4186, %v4870
        %v4872 = vpop.f32.mrb[0].mxu0
        %v4873 = vpop.f32.mrb[0].mxu0
        %v4874 = vadd.f32 %v4186, %v4873
        %v4875 = vpop.f32.mrb[0].mxu0
        %4876 = vmatprep.mubr.bf16.mxu0 0
        %4877 = vmatmul.mubr.bf16.gmra.mrb[0].mxu0 %v4246
        %v4878 = vpop.f32.mrb[0].mxu0
        %v4879 = vadd.f32 %v4186, %v4878
        %v4880 = vpop.f32.mrb[0].mxu0
        %v4881 = vpop.f32.mrb[0].mxu0
        %v4882 = vadd.f32 %v4186, %v4881
        %v4883 = vpop.f32.mrb[0].mxu0
        %4884 = vmatprep.mubr.bf16.mxu0 0
        %4885 = vmatmul.mubr.bf16.gmra.mrb[0].mxu0 %v4247
        %v4886 = vpop.f32.mrb[0].mxu0
        %v4887 = vadd.f32 %v4186, %v4886
        %v4888 = vpop.f32.mrb[0].mxu0
        %v4889 = vpop.f32.mrb[0].mxu0
        %v4890 = vadd.f32 %v4186, %v4889
        %v4891 = vpop.f32.mrb[0].mxu0
        %4892 = vmatprep.mubr.bf16.mxu0 0
        %4893 = vmatmul.mubr.bf16.gmra.mrb[0].mxu0 %v4248
        %v4894 = vpop.f32.mrb[0].mxu0
        %v4895 = vadd.f32 %v4186, %v4894
        %v4896 = vpop.f32.mrb[0].mxu0
        %v4897 = vpop.f32.mrb[0].mxu0
        %v4898 = vadd.f32 %v4186, %v4897
        %v4899 = vpop.f32.mrb[0].mxu0
        %4900 = vmatprep.mubr.bf16.mxu0 0
        %4901 = vmatmul.mubr.bf16.gmra.mrb[0].mxu0 %v4249
        %v4902 = vpop.f32.mrb[0].mxu0
        %v4903 = vadd.f32 %v4186, %v4902
        %v4904 = vpop.f32.mrb[0].mxu0
        %v4905 = vpop.f32.mrb[0].mxu0
        %v4906 = vadd.f32 %v4186, %v4905
        %v4907 = vpop.f32.mrb[0].mxu0
        %4908 = vmatprep.mubr.bf16.mxu0 0
        %4909 = vmatmul.mubr.bf16.gmra.mrb[0].mxu0 %v4250
        %v4910 = vpop.f32.mrb[0].mxu0
        %v4911 = vadd.f32 %v4186, %v4910
        %v4912 = vpop.f32.mrb[0].mxu0
        %v4913 = vpop.f32.mrb[0].mxu0
        %v4914 = vadd.f32 %v4186, %v4913
        %v4915 = vpop.f32.mrb[0].mxu0
        %4916 = vmatprep.mubr.bf16.mxu0 0
        %4917 = vmatmul.mubr.bf16.gmra.mrb[0].mxu0 %v4251
        %v4918 = vpop.f32.mrb[0].mxu0
        %v4919 = vadd.f32 %v4186, %v4918
        %v4920 = vpop.f32.mrb[0].mxu0
        %v4921 = vpop.f32.mrb[0].mxu0
        %v4922 = vadd.f32 %v4186, %v4921
        %v4923 = vpop.f32.mrb[0].mxu0
        %4924 = vmatprep.mubr.bf16.mxu0 0
        %4925 = vmatmul.mubr.bf16.gmra.mrb[0].mxu0 %v4252
        %v4926 = vpop.f32.mrb[0].mxu0
        %v4927 = vadd.f32 %v4186, %v4926
        %v4928 = vpop.f32.mrb[0].mxu0
        %v4929 = vpop.f32.mrb[0].mxu0
        %v4930 = vadd.f32 %v4186, %v4929
        %v4931 = vpop.f32.mrb[0].mxu0
        %4932 = vmatprep.mubr.bf16.mxu0 0
        %4933 = vmatmul.mubr.bf16.gmra.mrb[0].mxu0 %v4253
        %v4934 = vpop.f32.mrb[0].mxu0
        %v4935 = vadd.f32 %v4186, %v4934
        %v4936 = vpop.f32.mrb[0].mxu0
        %v4937 = vpop.f32.mrb[0].mxu0
        %v4938 = vadd.f32 %v4186, %v4937
        %v4939 = vpop.f32.mrb[0].mxu0
        %4940 = vmatprep.mubr.bf16.mxu0 0
        %4941 = vmatmul.mubr.bf16.gmra.mrb[0].mxu0 %v4254
        %v4942 = vpop.f32.mrb[0].mxu0
        %v4943 = vadd.f32 %v4186, %v4942
        %v4944 = vpop.f32.mrb[0].mxu0
        %v4945 = vpop.f32.mrb[0].mxu0
        %v4946 = vadd.f32 %v4186, %v4945
        %v4947 = vpop.f32.mrb[0].mxu0
        %4948 = vmatprep.mubr.bf16.mxu0 0
        %4949 = vmatmul.mubr.bf16.gmra.mrb[0].mxu0 %v4255
        %v4950 = vpop.f32.mrb[0].mxu0
        %v4951 = vadd.f32 %v4186, %v4950
        %v4952 = vpop.f32.mrb[0].mxu0
        %v4953 = vpop.f32.mrb[0].mxu0
        %v4954 = vadd.f32 %v4186, %v4953
        %v4955 = vpop.f32.mrb[0].mxu0
        %4956 = vmatprep.mubr.bf16.mxu0 0
        %4957 = vmatmul.mubr.bf16.gmra.mrb[0].mxu0 %v4256
        %v4958 = vpop.f32.mrb[0].mxu0
        %v4959 = vadd.f32 %v4186, %v4958
        %v4960 = vpop.f32.mrb[0].mxu0
        %v4961 = vpop.f32.mrb[0].mxu0
        %v4962 = vadd.f32 %v4186, %v4961
        %v4963 = vpop.f32.mrb[0].mxu0
        %4964 = vmatprep.mubr.bf16.mxu0 0
        %4965 = vmatmul.mubr.bf16.gmra.mrb[0].mxu0 %v4257
        %v4966 = vpop.f32.mrb[0].mxu0
        %v4967 = vadd.f32 %v4186, %v4966
        %v4968 = vpop.f32.mrb[0].mxu0
        %v4969 = vpop.f32.mrb[0].mxu0
        %v4970 = vadd.f32 %v4186, %v4969
        %v4971 = vpop.f32.mrb[0].mxu0
        %4972 = vmatprep.mubr.bf16.mxu0 0
        %4973 = vmatmul.mubr.bf16.gmra.mrb[0].mxu0 %v4258
        %v4974 = vpop.f32.mrb[0].mxu0
        %v4975 = vadd.f32 %v4186, %v4974
        %v4976 = vpop.f32.mrb[0].mxu0
        %v4977 = vpop.f32.mrb[0].mxu0
        %v4978 = vadd.f32 %v4186, %v4977
        %v4979 = vpop.f32.mrb[0].mxu0
        %4980 = vmatprep.mubr.bf16.mxu0 0
        %4981 = vmatmul.mubr.bf16.gmra.mrb[0].mxu0 %v4259
        %v4982 = vpop.f32.mrb[0].mxu0
        %v4983 = vadd.f32 %v4186, %v4982
        %v4984 = vpop.f32.mrb[0].mxu0
        %v4985 = vpop.f32.mrb[0].mxu0
        %v4986 = vadd.f32 %v4186, %v4985
        %v4987 = vpop.f32.mrb[0].mxu0
        %4988 = vdwg.mxu0
        %v4989 = vmax.f32 %v4415, 0.0
        %v4990 = vmax.f32 %v4418, 0.0
        %v4991 = vmax.f32 %v4423, 0.0
        %v4992 = vmax.f32 %v4426, 0.0
        %v4993 = vmax.f32 %v4431, 0.0
        %v4994 = vmax.f32 %v4434, 0.0
        %v4995 = vmax.f32 %v4439, 0.0
        %v4996 = vmax.f32 %v4442, 0.0
        %v4997 = vmax.f32 %v4447, 0.0
        %v4998 = vmax.f32 %v4450, 0.0
        %v4999 = vmax.f32 %v4455, 0.0
        %v5000 = vmax.f32 %v4458, 0.0
        %v5001 = vmax.f32 %v4463, 0.0
        %v5002 = vmax.f32 %v4466, 0.0
        %v5003 = vmax.f32 %v4471, 0.0
        %v5004 = vmax.f32 %v4474, 0.0
        %v5005 = vmax.f32 %v4479, 0.0
        %v5006 = vmax.f32 %v4482, 0.0
        %v5007 = vmax.f32 %v4487, 0.0
        %v5008 = vmax.f32 %v4490, 0.0
        %v5009 = vmax.f32 %v4495, 0.0
        %v5010 = vmax.f32 %v4498, 0.0
        %v5011 = vmax.f32 %v4503, 0.0
        %v5012 = vmax.f32 %v4506, 0.0
        %v5013 = vmax.f32 %v4511, 0.0
        %v5014 = vmax.f32 %v4514, 0.0
        %v5015 = vmax.f32 %v4519, 0.0
        %v5016 = vmax.f32 %v4522, 0.0
        %v5017 = vmax.f32 %v4527, 0.0
        %v5018 = vmax.f32 %v4530, 0.0
        %v5019 = vmax.f32 %v4535, 0.0
        %v5020 = vmax.f32 %v4538, 0.0
        %v5021 = vmax.f32 %v4543, 0.0
        %v5022 = vmax.f32 %v4546, 0.0
        %v5023 = vmax.f32 %v4551, 0.0
        %v5024 = vmax.f32 %v4554, 0.0
        %v5025 = vmax.f32 %v4559, 0.0
        %v5026 = vmax.f32 %v4562, 0.0
        %v5027 = vmax.f32 %v4567, 0.0
        %v5028 = vmax.f32 %v4570, 0.0
        %v5029 = vmax.f32 %v4575, 0.0
        %v5030 = vmax.f32 %v4578, 0.0
        %v5031 = vmax.f32 %v4583, 0.0
        %v5032 = vmax.f32 %v4586, 0.0
        %v5033 = vmax.f32 %v4591, 0.0
        %v5034 = vmax.f32 %v4594, 0.0
        %v5035 = vmax.f32 %v4599, 0.0
        %v5036 = vmax.f32 %v4602, 0.0
        %v5037 = vmax.f32 %v4607, 0.0
        %v5038 = vmax.f32 %v4610, 0.0
        %v5039 = vmax.f32 %v4615, 0.0
        %v5040 = vmax.f32 %v4618, 0.0
        %v5041 = vmax.f32 %v4623, 0.0
        %v5042 = vmax.f32 %v4626, 0.0
        %v5043 = vmax.f32 %v4631, 0.0
        %v5044 = vmax.f32 %v4634, 0.0
        %v5045 = vmax.f32 %v4639, 0.0
        %v5046 = vmax.f32 %v4642, 0.0
        %v5047 = vmax.f32 %v4647, 0.0
        %v5048 = vmax.f32 %v4650, 0.0
        %v5049 = vmax.f32 %v4655, 0.0
        %v5050 = vmax.f32 %v4658, 0.0
        %v5051 = vmax.f32 %v4663, 0.0
        %v5052 = vmax.f32 %v4666, 0.0
        %v5053 = vmax.f32 %v4671, 0.0
        %v5054 = vmax.f32 %v4674, 0.0
        %v5055 = vmax.f32 %v4679, 0.0
        %v5056 = vmax.f32 %v4682, 0.0
        %v5057 = vmax.f32 %v4687, 0.0
        %v5058 = vmax.f32 %v4690, 0.0
        %v5059 = vmax.f32 %v4695, 0.0
        %v5060 = vmax.f32 %v4698, 0.0
        %v5061 = vmax.f32 %v4703, 0.0
        %v5062 = vmax.f32 %v4706, 0.0
        %v5063 = vmax.f32 %v4711, 0.0
        %v5064 = vmax.f32 %v4714, 0.0
        %v5065 = vmax.f32 %v4719, 0.0
        %v5066 = vmax.f32 %v4722, 0.0
        %v5067 = vmax.f32 %v4727, 0.0
        %v5068 = vmax.f32 %v4730, 0.0
        %v5069 = vmax.f32 %v4735, 0.0
        %v5070 = vmax.f32 %v4738, 0.0
        %v5071 = vmax.f32 %v4743, 0.0
        %v5072 = vmax.f32 %v4746, 0.0
        %v5073 = vmax.f32 %v4751, 0.0
        %v5074 = vmax.f32 %v4754, 0.0
        %v5075 = vmax.f32 %v4759, 0.0
        %v5076 = vmax.f32 %v4762, 0.0
        %v5077 = vmax.f32 %v4767, 0.0
        %v5078 = vmax.f32 %v4770, 0.0
        %v5079 = vmax.f32 %v4775, 0.0
        %v5080 = vmax.f32 %v4778, 0.0
        %v5081 = vmax.f32 %v4783, 0.0
        %v5082 = vmax.f32 %v4786, 0.0
        %v5083 = vmax.f32 %v4791, 0.0
        %v5084 = vmax.f32 %v4794, 0.0
        %v5085 = vmax.f32 %v4799, 0.0
        %v5086 = vmax.f32 %v4802, 0.0
        %v5087 = vmax.f32 %v4807, 0.0
        %v5088 = vmax.f32 %v4810, 0.0
        %v5089 = vmax.f32 %v4815, 0.0
        %v5090 = vmax.f32 %v4818, 0.0
        %v5091 = vmax.f32 %v4823, 0.0
        %v5092 = vmax.f32 %v4826, 0.0
        %v5093 = vmax.f32 %v4831, 0.0
        %v5094 = vmax.f32 %v4834, 0.0
        %v5095 = vmax.f32 %v4839, 0.0
        %v5096 = vmax.f32 %v4842, 0.0
        %v5097 = vmax.f32 %v4847, 0.0
        %v5098 = vmax.f32 %v4850, 0.0
        %v5099 = vmax.f32 %v4855, 0.0
        %v5100 = vmax.f32 %v4858, 0.0
        %v5101 = vmax.f32 %v4863, 0.0
        %v5102 = vmax.f32 %v4866, 0.0
        %v5103 = vmax.f32 %v4871, 0.0
        %v5104 = vmax.f32 %v4874, 0.0
        %v5105 = vmax.f32 %v4879, 0.0
        %v5106 = vmax.f32 %v4882, 0.0
        %v5107 = vmax.f32 %v4887, 0.0
        %v5108 = vmax.f32 %v4890, 0.0
        %v5109 = vmax.f32 %v4895, 0.0
        %v5110 = vmax.f32 %v4898, 0.0
        %v5111 = vmax.f32 %v4903, 0.0
        %v5112 = vmax.f32 %v4906, 0.0
        %v5113 = vmax.f32 %v4911, 0.0
        %v5114 = vmax.f32 %v4914, 0.0
        %v5115 = vmax.f32 %v4919, 0.0
        %v5116 = vmax.f32 %v4922, 0.0
        %v5117 = vmax.f32 %v4927, 0.0
        %v5118 = vmax.f32 %v4930, 0.0
        %v5119 = vmax.f32 %v4935, 0.0
        %v5120 = vmax.f32 %v4938, 0.0
        %v5121 = vmax.f32 %v4943, 0.0
        %v5122 = vmax.f32 %v4946, 0.0
        %v5123 = vmax.f32 %v4951, 0.0
        %v5124 = vmax.f32 %v4954, 0.0
        %v5125 = vmax.f32 %v4959, 0.0
        %v5126 = vmax.f32 %v4962, 0.0
        %v5127 = vmax.f32 %v4967, 0.0
        %v5128 = vmax.f32 %v4970, 0.0
        %v5129 = vmax.f32 %v4975, 0.0
        %v5130 = vmax.f32 %v4978, 0.0
        %v5131 = vmax.f32 %v4983, 0.0
        %v5132 = vmax.f32 %v4986, 0.0
        %v5133 = vpack.c.bf16 %v4990, %v4989
        %v5134 = vpack.c.bf16 %v4992, %v4991
        %v5135 = vpack.c.bf16 %v4994, %v4993
        %v5136 = vpack.c.bf16 %v4996, %v4995
        %v5137 = vpack.c.bf16 %v4998, %v4997
        %v5138 = vpack.c.bf16 %v5000, %v4999
        %v5139 = vpack.c.bf16 %v5002, %v5001
        %v5140 = vpack.c.bf16 %v5004, %v5003
        %v5141 = vpack.c.bf16 %v5006, %v5005
        %v5142 = vpack.c.bf16 %v5008, %v5007
        %v5143 = vpack.c.bf16 %v5010, %v5009
        %v5144 = vpack.c.bf16 %v5012, %v5011
        %v5145 = vpack.c.bf16 %v5014, %v5013
        %v5146 = vpack.c.bf16 %v5016, %v5015
        %v5147 = vpack.c.bf16 %v5018, %v5017
        %v5148 = vpack.c.bf16 %v5020, %v5019
        %v5149 = vpack.c.bf16 %v5022, %v5021
        %v5150 = vpack.c.bf16 %v5024, %v5023
        %v5151 = vpack.c.bf16 %v5026, %v5025
        %v5152 = vpack.c.bf16 %v5028, %v5027
        %v5153 = vpack.c.bf16 %v5030, %v5029
        %v5154 = vpack.c.bf16 %v5032, %v5031
        %v5155 = vpack.c.bf16 %v5034, %v5033
        %v5156 = vpack.c.bf16 %v5036, %v5035
        %v5157 = vpack.c.bf16 %v5038, %v5037
        %v5158 = vpack.c.bf16 %v5040, %v5039
        %v5159 = vpack.c.bf16 %v5042, %v5041
        %v5160 = vpack.c.bf16 %v5044, %v5043
        %v5161 = vpack.c.bf16 %v5046, %v5045
        %v5162 = vpack.c.bf16 %v5048, %v5047
        %v5163 = vpack.c.bf16 %v5050, %v5049
        %v5164 = vpack.c.bf16 %v5052, %v5051
        %v5165 = vpack.c.bf16 %v5054, %v5053
        %v5166 = vpack.c.bf16 %v5056, %v5055
        %v5167 = vpack.c.bf16 %v5058, %v5057
        %v5168 = vpack.c.bf16 %v5060, %v5059
        %v5169 = vpack.c.bf16 %v5062, %v5061
        %v5170 = vpack.c.bf16 %v5064, %v5063
        %v5171 = vpack.c.bf16 %v5066, %v5065
        %v5172 = vpack.c.bf16 %v5068, %v5067
        %v5173 = vpack.c.bf16 %v5070, %v5069
        %v5174 = vpack.c.bf16 %v5072, %v5071
        %v5175 = vpack.c.bf16 %v5074, %v5073
        %v5176 = vpack.c.bf16 %v5076, %v5075
        %v5177 = vpack.c.bf16 %v5078, %v5077
        %v5178 = vpack.c.bf16 %v5080, %v5079
        %v5179 = vpack.c.bf16 %v5082, %v5081
        %v5180 = vpack.c.bf16 %v5084, %v5083
        %v5181 = vpack.c.bf16 %v5086, %v5085
        %v5182 = vpack.c.bf16 %v5088, %v5087
        %v5183 = vpack.c.bf16 %v5090, %v5089
        %v5184 = vpack.c.bf16 %v5092, %v5091
        %v5185 = vpack.c.bf16 %v5094, %v5093
        %v5186 = vpack.c.bf16 %v5096, %v5095
        %v5187 = vpack.c.bf16 %v5098, %v5097
        %v5188 = vpack.c.bf16 %v5100, %v5099
        %v5189 = vpack.c.bf16 %v5102, %v5101
        %v5190 = vpack.c.bf16 %v5104, %v5103
        %v5191 = vpack.c.bf16 %v5106, %v5105
        %v5192 = vpack.c.bf16 %v5108, %v5107
        %v5193 = vpack.c.bf16 %v5110, %v5109
        %v5194 = vpack.c.bf16 %v5112, %v5111
        %v5195 = vpack.c.bf16 %v5114, %v5113
        %v5196 = vpack.c.bf16 %v5116, %v5115
        %v5197 = vpack.c.bf16 %v5118, %v5117
        %v5198 = vpack.c.bf16 %v5120, %v5119
        %v5199 = vpack.c.bf16 %v5122, %v5121
        %v5200 = vpack.c.bf16 %v5124, %v5123
        %v5201 = vpack.c.bf16 %v5126, %v5125
        %v5202 = vpack.c.bf16 %v5128, %v5127
        %v5203 = vpack.c.bf16 %v5130, %v5129
        %v5204 = vpack.c.bf16 %v5132, %v5131
        %v5205 = vld [vmem:[#allocation25] sm:$0xf]
        %v5206 = vld [vmem:[#allocation25 + $0x4] sm:$0xf]
        %v5207 = vld [vmem:[#allocation25 + $0x8] sm:$0xf]
        %v5208 = vld [vmem:[#allocation25 + $0xc] sm:$0xf]
        %v5209 = vld [vmem:[#allocation25 + $0x10] sm:$0xf]
        %v5210 = vld [vmem:[#allocation25 + $0x14] sm:$0xf]
        %v5211 = vld [vmem:[#allocation25 + $0x18] sm:$0xf]
        %v5212 = vld [vmem:[#allocation25 + $0x1c] sm:$0xf]
        %v5213 = vld [vmem:[#allocation27] sm:$0x1]
        %v5215 = vlaneseq
        %v5216 = vshrl.u32 %v5215, 7
        %v5217 = vsub.s32 0, %v5216
        %v5218 = vrot.slane %v5213, %v5217
        %v5228 = vunpack.c.l.b16 %v5205
        %v5229 = vunpack.c.l.b16 %v5206
        %v5230 = vunpack.c.l.b16 %v5207
        %v5231 = vunpack.c.l.b16 %v5208
        %v5232 = vunpack.c.l.b16 %v5209
        %v5233 = vunpack.c.l.b16 %v5210
        %v5234 = vunpack.c.l.b16 %v5211
        %v5235 = vunpack.c.l.b16 %v5212
        %v5236 = vpack.c.b16 %v5229, %v5228
        %v5237 = vpack.c.b16 %v5231, %v5230
        %v5238 = vpack.c.b16 %v5233, %v5232
        %v5239 = vpack.c.b16 %v5235, %v5234
        %vm5244 = vcmask 523264
        %v5246 = vsel %vm5244, %v5133, 0
        %v5249 = vsel %vm5244, %v5134, 0
        %v5252 = vsel %vm5244, %v5135, 0
        %v5255 = vsel %vm5244, %v5136, 0
        %v5258 = vsel %vm5244, %v5137, 0
        %v5261 = vsel %vm5244, %v5138, 0
        %v5264 = vsel %vm5244, %v5139, 0
        %v5267 = vsel %vm5244, %v5140, 0
        %v5270 = vsel %vm5244, %v5141, 0
        %v5273 = vsel %vm5244, %v5142, 0
        %v5276 = vsel %vm5244, %v5143, 0
        %v5279 = vsel %vm5244, %v5144, 0
        %v5282 = vsel %vm5244, %v5145, 0
        %v5285 = vsel %vm5244, %v5146, 0
        %v5288 = vsel %vm5244, %v5147, 0
        %v5291 = vsel %vm5244, %v5148, 0
        %v5294 = vsel %vm5244, %v5149, 0
        %v5297 = vsel %vm5244, %v5150, 0
        %v5300 = vsel %vm5244, %v5151, 0
        %v5303 = vsel %vm5244, %v5152, 0
        %v5306 = vsel %vm5244, %v5153, 0
        %v5309 = vsel %vm5244, %v5154, 0
        %v5312 = vsel %vm5244, %v5155, 0
        %v5315 = vsel %vm5244, %v5156, 0
        %v5318 = vsel %vm5244, %v5157, 0
        %v5321 = vsel %vm5244, %v5158, 0
        %v5324 = vsel %vm5244, %v5159, 0
        %v5327 = vsel %vm5244, %v5160, 0
        %v5330 = vsel %vm5244, %v5161, 0
        %v5333 = vsel %vm5244, %v5162, 0
        %v5336 = vsel %vm5244, %v5163, 0
        %v5339 = vsel %vm5244, %v5164, 0
        %v5342 = vsel %vm5244, %v5165, 0
        %v5345 = vsel %vm5244, %v5166, 0
        %v5348 = vsel %vm5244, %v5167, 0
        %v5351 = vsel %vm5244, %v5168, 0
        %v5354 = vsel %vm5244, %v5169, 0
        %v5357 = vsel %vm5244, %v5170, 0
        %v5360 = vsel %vm5244, %v5171, 0
        %v5363 = vsel %vm5244, %v5172, 0
        %v5366 = vsel %vm5244, %v5173, 0
        %v5369 = vsel %vm5244, %v5174, 0
        %v5372 = vsel %vm5244, %v5175, 0
        %v5375 = vsel %vm5244, %v5176, 0
        %v5378 = vsel %vm5244, %v5177, 0
        %v5381 = vsel %vm5244, %v5178, 0
        %v5384 = vsel %vm5244, %v5179, 0
        %v5387 = vsel %vm5244, %v5180, 0
        %v5390 = vsel %vm5244, %v5181, 0
        %v5393 = vsel %vm5244, %v5182, 0
        %v5396 = vsel %vm5244, %v5183, 0
        %v5399 = vsel %vm5244, %v5184, 0
        %v5402 = vsel %vm5244, %v5185, 0
        %v5405 = vsel %vm5244, %v5186, 0
        %v5408 = vsel %vm5244, %v5187, 0
        %v5411 = vsel %vm5244, %v5188, 0
        %v5414 = vsel %vm5244, %v5189, 0
        %v5417 = vsel %vm5244, %v5190, 0
        %v5420 = vsel %vm5244, %v5191, 0
        %v5423 = vsel %vm5244, %v5192, 0
        %v5426 = vsel %vm5244, %v5193, 0
        %v5429 = vsel %vm5244, %v5194, 0
        %v5432 = vsel %vm5244, %v5195, 0
        %v5435 = vsel %vm5244, %v5196, 0
        %v5438 = vsel %vm5244, %v5197, 0
        %v5441 = vsel %vm5244, %v5198, 0
        %v5444 = vsel %vm5244, %v5199, 0
        %v5447 = vsel %vm5244, %v5200, 0
        %v5450 = vsel %vm5244, %v5201, 0
        %v5453 = vsel %vm5244, %v5202, 0
        %v5456 = vsel %vm5244, %v5203, 0
        %v5459 = vsel %vm5244, %v5204, 0
        %5461 = vmatprep.subr.bf16.mxu0 0
        %5462 = vmatpush1.bf16.msra.mxu0 %v5236
        %5463 = vmatprep.subr.bf16.mxu0 0
        %5464 = vmatpush1.bf16.msra.mxu0 %v5237
        %5465 = vmatprep.subr.bf16.mxu0 0
        %5466 = vmatpush1.bf16.msra.mxu0 %v5238
        %5467 = vmatprep.subr.bf16.mxu0 0
        %5468 = vmatpush1.bf16.msra.mxu0 %v5239
        %5469 = vmatprep.subr.bf16.mxu0 0
        %5470 = vmatpush1.bf16.msra.mxu0 0
        %5471 = vmatprep.subr.bf16.mxu0 0
        %5472 = vmatpush1.bf16.msra.mxu0 0
        %5473 = vmatprep.subr.bf16.mxu0 0
        %5474 = vmatpush1.bf16.msra.mxu0 0
        %5475 = vmatprep.subr.bf16.mxu0 0
        %5476 = vmatpush1.bf16.msra.mxu0 0
        %5477 = vmatprep.subr.bf16.mxu0 0
        %5478 = vmatpush1.bf16.msra.mxu0 0
        %5479 = vmatprep.subr.bf16.mxu0 0
        %5480 = vmatpush1.bf16.msra.mxu0 0
        %5481 = vmatprep.subr.bf16.mxu0 0
        %5482 = vmatpush1.bf16.msra.mxu0 0
        %5483 = vmatprep.subr.bf16.mxu0 0
        %5484 = vmatpush1.bf16.msra.mxu0 0
        %5485 = vmatprep.subr.bf16.mxu0 0
        %5486 = vmatpush1.bf16.msra.mxu0 0
        %5487 = vmatprep.subr.bf16.mxu0 0
        %5488 = vmatpush1.bf16.msra.mxu0 0
        %5489 = vmatprep.subr.bf16.mxu0 0
        %5490 = vmatpush1.bf16.msra.mxu0 0
        %5491 = vmatprep.subr.bf16.mxu0 0
        %5492 = vmatpush1.bf16.msra.mxu0 0
        %5493 = vmatprep.mubr.bf16.mxu0 0
        %5494 = vmatmul.mubr.bf16.gmra.mrb[0].mxu0 %v5246
        %v5495 = vpop.f32.mrb[0].mxu0
        %v5496 = vadd.f32 %v5218, %v5495
        %v5497 = vpop.f32.mrb[0].mxu0
        %v5498 = vpop.f32.mrb[0].mxu0
        %v5499 = vadd.f32 %v5218, %v5498
        %v5500 = vpop.f32.mrb[0].mxu0
        %5501 = vmatprep.mubr.bf16.mxu0 0
        %5502 = vmatmul.mubr.bf16.gmra.mrb[0].mxu0 %v5249
        %v5503 = vpop.f32.mrb[0].mxu0
        %v5504 = vadd.f32 %v5218, %v5503
        %v5505 = vpop.f32.mrb[0].mxu0
        %v5506 = vpop.f32.mrb[0].mxu0
        %v5507 = vadd.f32 %v5218, %v5506
        %v5508 = vpop.f32.mrb[0].mxu0
        %5509 = vmatprep.mubr.bf16.mxu0 0
        %5510 = vmatmul.mubr.bf16.gmra.mrb[0].mxu0 %v5252
        %v5511 = vpop.f32.mrb[0].mxu0
        %v5512 = vadd.f32 %v5218, %v5511
        %v5513 = vpop.f32.mrb[0].mxu0
        %v5514 = vpop.f32.mrb[0].mxu0
        %v5515 = vadd.f32 %v5218, %v5514
        %v5516 = vpop.f32.mrb[0].mxu0
        %5517 = vmatprep.mubr.bf16.mxu0 0
        %5518 = vmatmul.mubr.bf16.gmra.mrb[0].mxu0 %v5255
        %v5519 = vpop.f32.mrb[0].mxu0
        %v5520 = vadd.f32 %v5218, %v5519
        %v5521 = vpop.f32.mrb[0].mxu0
        %v5522 = vpop.f32.mrb[0].mxu0
        %v5523 = vadd.f32 %v5218, %v5522
        %v5524 = vpop.f32.mrb[0].mxu0
        %5525 = vmatprep.mubr.bf16.mxu0 0
        %5526 = vmatmul.mubr.bf16.gmra.mrb[0].mxu0 %v5258
        %v5527 = vpop.f32.mrb[0].mxu0
        %v5528 = vadd.f32 %v5218, %v5527
        %v5529 = vpop.f32.mrb[0].mxu0
        %v5530 = vpop.f32.mrb[0].mxu0
        %v5531 = vadd.f32 %v5218, %v5530
        %v5532 = vpop.f32.mrb[0].mxu0
        %5533 = vmatprep.mubr.bf16.mxu0 0
        %5534 = vmatmul.mubr.bf16.gmra.mrb[0].mxu0 %v5261
        %v5535 = vpop.f32.mrb[0].mxu0
        %v5536 = vadd.f32 %v5218, %v5535
        %v5537 = vpop.f32.mrb[0].mxu0
        %v5538 = vpop.f32.mrb[0].mxu0
        %v5539 = vadd.f32 %v5218, %v5538
        %v5540 = vpop.f32.mrb[0].mxu0
        %5541 = vmatprep.mubr.bf16.mxu0 0
        %5542 = vmatmul.mubr.bf16.gmra.mrb[0].mxu0 %v5264
        %v5543 = vpop.f32.mrb[0].mxu0
        %v5544 = vadd.f32 %v5218, %v5543
        %v5545 = vpop.f32.mrb[0].mxu0
        %v5546 = vpop.f32.mrb[0].mxu0
        %v5547 = vadd.f32 %v5218, %v5546
        %v5548 = vpop.f32.mrb[0].mxu0
        %5549 = vmatprep.mubr.bf16.mxu0 0
        %5550 = vmatmul.mubr.bf16.gmra.mrb[0].mxu0 %v5267
        %v5551 = vpop.f32.mrb[0].mxu0
        %v5552 = vadd.f32 %v5218, %v5551
        %v5553 = vpop.f32.mrb[0].mxu0
        %v5554 = vpop.f32.mrb[0].mxu0
        %v5555 = vadd.f32 %v5218, %v5554
        %v5556 = vpop.f32.mrb[0].mxu0
        %5557 = vmatprep.mubr.bf16.mxu0 0
        %5558 = vmatmul.mubr.bf16.gmra.mrb[0].mxu0 %v5270
        %v5559 = vpop.f32.mrb[0].mxu0
        %v5560 = vadd.f32 %v5218, %v5559
        %v5561 = vpop.f32.mrb[0].mxu0
        %v5562 = vpop.f32.mrb[0].mxu0
        %v5563 = vadd.f32 %v5218, %v5562
        %v5564 = vpop.f32.mrb[0].mxu0
        %5565 = vmatprep.mubr.bf16.mxu0 0
        %5566 = vmatmul.mubr.bf16.gmra.mrb[0].mxu0 %v5273
        %v5567 = vpop.f32.mrb[0].mxu0
        %v5568 = vadd.f32 %v5218, %v5567
        %v5569 = vpop.f32.mrb[0].mxu0
        %v5570 = vpop.f32.mrb[0].mxu0
        %v5571 = vadd.f32 %v5218, %v5570
        %v5572 = vpop.f32.mrb[0].mxu0
        %5573 = vmatprep.mubr.bf16.mxu0 0
        %5574 = vmatmul.mubr.bf16.gmra.mrb[0].mxu0 %v5276
        %v5575 = vpop.f32.mrb[0].mxu0
        %v5576 = vadd.f32 %v5218, %v5575
        %v5577 = vpop.f32.mrb[0].mxu0
        %v5578 = vpop.f32.mrb[0].mxu0
        %v5579 = vadd.f32 %v5218, %v5578
        %v5580 = vpop.f32.mrb[0].mxu0
        %5581 = vmatprep.mubr.bf16.mxu0 0
        %5582 = vmatmul.mubr.bf16.gmra.mrb[0].mxu0 %v5279
        %v5583 = vpop.f32.mrb[0].mxu0
        %v5584 = vadd.f32 %v5218, %v5583
        %v5585 = vpop.f32.mrb[0].mxu0
        %v5586 = vpop.f32.mrb[0].mxu0
        %v5587 = vadd.f32 %v5218, %v5586
        %v5588 = vpop.f32.mrb[0].mxu0
        %5589 = vmatprep.mubr.bf16.mxu0 0
        %5590 = vmatmul.mubr.bf16.gmra.mrb[0].mxu0 %v5282
        %v5591 = vpop.f32.mrb[0].mxu0
        %v5592 = vadd.f32 %v5218, %v5591
        %v5593 = vpop.f32.mrb[0].mxu0
        %v5594 = vpop.f32.mrb[0].mxu0
        %v5595 = vadd.f32 %v5218, %v5594
        %v5596 = vpop.f32.mrb[0].mxu0
        %5597 = vmatprep.mubr.bf16.mxu0 0
        %5598 = vmatmul.mubr.bf16.gmra.mrb[0].mxu0 %v5285
        %v5599 = vpop.f32.mrb[0].mxu0
        %v5600 = vadd.f32 %v5218, %v5599
        %v5601 = vpop.f32.mrb[0].mxu0
        %v5602 = vpop.f32.mrb[0].mxu0
        %v5603 = vadd.f32 %v5218, %v5602
        %v5604 = vpop.f32.mrb[0].mxu0
        %5605 = vmatprep.mubr.bf16.mxu0 0
        %5606 = vmatmul.mubr.bf16.gmra.mrb[0].mxu0 %v5288
        %v5607 = vpop.f32.mrb[0].mxu0
        %v5608 = vadd.f32 %v5218, %v5607
        %v5609 = vpop.f32.mrb[0].mxu0
        %v5610 = vpop.f32.mrb[0].mxu0
        %v5611 = vadd.f32 %v5218, %v5610
        %v5612 = vpop.f32.mrb[0].mxu0
        %5613 = vmatprep.mubr.bf16.mxu0 0
        %5614 = vmatmul.mubr.bf16.gmra.mrb[0].mxu0 %v5291
        %v5615 = vpop.f32.mrb[0].mxu0
        %v5616 = vadd.f32 %v5218, %v5615
        %v5617 = vpop.f32.mrb[0].mxu0
        %v5618 = vpop.f32.mrb[0].mxu0
        %v5619 = vadd.f32 %v5218, %v5618
        %v5620 = vpop.f32.mrb[0].mxu0
        %5621 = vmatprep.mubr.bf16.mxu0 0
        %5622 = vmatmul.mubr.bf16.gmra.mrb[0].mxu0 %v5294
        %v5623 = vpop.f32.mrb[0].mxu0
        %v5624 = vadd.f32 %v5218, %v5623
        %v5625 = vpop.f32.mrb[0].mxu0
        %v5626 = vpop.f32.mrb[0].mxu0
        %v5627 = vadd.f32 %v5218, %v5626
        %v5628 = vpop.f32.mrb[0].mxu0
        %5629 = vmatprep.mubr.bf16.mxu0 0
        %5630 = vmatmul.mubr.bf16.gmra.mrb[0].mxu0 %v5297
        %v5631 = vpop.f32.mrb[0].mxu0
        %v5632 = vadd.f32 %v5218, %v5631
        %v5633 = vpop.f32.mrb[0].mxu0
        %v5634 = vpop.f32.mrb[0].mxu0
        %v5635 = vadd.f32 %v5218, %v5634
        %v5636 = vpop.f32.mrb[0].mxu0
        %5637 = vmatprep.mubr.bf16.mxu0 0
        %5638 = vmatmul.mubr.bf16.gmra.mrb[0].mxu0 %v5300
        %v5639 = vpop.f32.mrb[0].mxu0
        %v5640 = vadd.f32 %v5218, %v5639
        %v5641 = vpop.f32.mrb[0].mxu0
        %v5642 = vpop.f32.mrb[0].mxu0
        %v5643 = vadd.f32 %v5218, %v5642
        %v5644 = vpop.f32.mrb[0].mxu0
        %5645 = vmatprep.mubr.bf16.mxu0 0
        %5646 = vmatmul.mubr.bf16.gmra.mrb[0].mxu0 %v5303
        %v5647 = vpop.f32.mrb[0].mxu0
        %v5648 = vadd.f32 %v5218, %v5647
        %v5649 = vpop.f32.mrb[0].mxu0
        %v5650 = vpop.f32.mrb[0].mxu0
        %v5651 = vadd.f32 %v5218, %v5650
        %v5652 = vpop.f32.mrb[0].mxu0
        %5653 = vmatprep.mubr.bf16.mxu0 0
        %5654 = vmatmul.mubr.bf16.gmra.mrb[0].mxu0 %v5306
        %v5655 = vpop.f32.mrb[0].mxu0
        %v5656 = vadd.f32 %v5218, %v5655
        %v5657 = vpop.f32.mrb[0].mxu0
        %v5658 = vpop.f32.mrb[0].mxu0
        %v5659 = vadd.f32 %v5218, %v5658
        %v5660 = vpop.f32.mrb[0].mxu0
        %5661 = vmatprep.mubr.bf16.mxu0 0
        %5662 = vmatmul.mubr.bf16.gmra.mrb[0].mxu0 %v5309
        %v5663 = vpop.f32.mrb[0].mxu0
        %v5664 = vadd.f32 %v5218, %v5663
        %v5665 = vpop.f32.mrb[0].mxu0
        %v5666 = vpop.f32.mrb[0].mxu0
        %v5667 = vadd.f32 %v5218, %v5666
        %v5668 = vpop.f32.mrb[0].mxu0
        %5669 = vmatprep.mubr.bf16.mxu0 0
        %5670 = vmatmul.mubr.bf16.gmra.mrb[0].mxu0 %v5312
        %v5671 = vpop.f32.mrb[0].mxu0
        %v5672 = vadd.f32 %v5218, %v5671
        %v5673 = vpop.f32.mrb[0].mxu0
        %v5674 = vpop.f32.mrb[0].mxu0
        %v5675 = vadd.f32 %v5218, %v5674
        %v5676 = vpop.f32.mrb[0].mxu0
        %5677 = vmatprep.mubr.bf16.mxu0 0
        %5678 = vmatmul.mubr.bf16.gmra.mrb[0].mxu0 %v5315
        %v5679 = vpop.f32.mrb[0].mxu0
        %v5680 = vadd.f32 %v5218, %v5679
        %v5681 = vpop.f32.mrb[0].mxu0
        %v5682 = vpop.f32.mrb[0].mxu0
        %v5683 = vadd.f32 %v5218, %v5682
        %v5684 = vpop.f32.mrb[0].mxu0
        %5685 = vmatprep.mubr.bf16.mxu0 0
        %5686 = vmatmul.mubr.bf16.gmra.mrb[0].mxu0 %v5318
        %v5687 = vpop.f32.mrb[0].mxu0
        %v5688 = vadd.f32 %v5218, %v5687
        %v5689 = vpop.f32.mrb[0].mxu0
        %v5690 = vpop.f32.mrb[0].mxu0
        %v5691 = vadd.f32 %v5218, %v5690
        %v5692 = vpop.f32.mrb[0].mxu0
        %5693 = vmatprep.mubr.bf16.mxu0 0
        %5694 = vmatmul.mubr.bf16.gmra.mrb[0].mxu0 %v5321
        %v5695 = vpop.f32.mrb[0].mxu0
        %v5696 = vadd.f32 %v5218, %v5695
        %v5697 = vpop.f32.mrb[0].mxu0
        %v5698 = vpop.f32.mrb[0].mxu0
        %v5699 = vadd.f32 %v5218, %v5698
        %v5700 = vpop.f32.mrb[0].mxu0
        %5701 = vmatprep.mubr.bf16.mxu0 0
        %5702 = vmatmul.mubr.bf16.gmra.mrb[0].mxu0 %v5324
        %v5703 = vpop.f32.mrb[0].mxu0
        %v5704 = vadd.f32 %v5218, %v5703
        %v5705 = vpop.f32.mrb[0].mxu0
        %v5706 = vpop.f32.mrb[0].mxu0
        %v5707 = vadd.f32 %v5218, %v5706
        %v5708 = vpop.f32.mrb[0].mxu0
        %5709 = vmatprep.mubr.bf16.mxu0 0
        %5710 = vmatmul.mubr.bf16.gmra.mrb[0].mxu0 %v5327
        %v5711 = vpop.f32.mrb[0].mxu0
        %v5712 = vadd.f32 %v5218, %v5711
        %v5713 = vpop.f32.mrb[0].mxu0
        %v5714 = vpop.f32.mrb[0].mxu0
        %v5715 = vadd.f32 %v5218, %v5714
        %v5716 = vpop.f32.mrb[0].mxu0
        %5717 = vmatprep.mubr.bf16.mxu0 0
        %5718 = vmatmul.mubr.bf16.gmra.mrb[0].mxu0 %v5330
        %v5719 = vpop.f32.mrb[0].mxu0
        %v5720 = vadd.f32 %v5218, %v5719
        %v5721 = vpop.f32.mrb[0].mxu0
        %v5722 = vpop.f32.mrb[0].mxu0
        %v5723 = vadd.f32 %v5218, %v5722
        %v5724 = vpop.f32.mrb[0].mxu0
        %5725 = vmatprep.mubr.bf16.mxu0 0
        %5726 = vmatmul.mubr.bf16.gmra.mrb[0].mxu0 %v5333
        %v5727 = vpop.f32.mrb[0].mxu0
        %v5728 = vadd.f32 %v5218, %v5727
        %v5729 = vpop.f32.mrb[0].mxu0
        %v5730 = vpop.f32.mrb[0].mxu0
        %v5731 = vadd.f32 %v5218, %v5730
        %v5732 = vpop.f32.mrb[0].mxu0
        %5733 = vmatprep.mubr.bf16.mxu0 0
        %5734 = vmatmul.mubr.bf16.gmra.mrb[0].mxu0 %v5336
        %v5735 = vpop.f32.mrb[0].mxu0
        %v5736 = vadd.f32 %v5218, %v5735
        %v5737 = vpop.f32.mrb[0].mxu0
        %v5738 = vpop.f32.mrb[0].mxu0
        %v5739 = vadd.f32 %v5218, %v5738
        %v5740 = vpop.f32.mrb[0].mxu0
        %5741 = vmatprep.mubr.bf16.mxu0 0
        %5742 = vmatmul.mubr.bf16.gmra.mrb[0].mxu0 %v5339
        %v5743 = vpop.f32.mrb[0].mxu0
        %v5744 = vadd.f32 %v5218, %v5743
        %v5745 = vpop.f32.mrb[0].mxu0
        %v5746 = vpop.f32.mrb[0].mxu0
        %v5747 = vadd.f32 %v5218, %v5746
        %v5748 = vpop.f32.mrb[0].mxu0
        %5749 = vmatprep.mubr.bf16.mxu0 0
        %5750 = vmatmul.mubr.bf16.gmra.mrb[0].mxu0 %v5342
        %v5751 = vpop.f32.mrb[0].mxu0
        %v5752 = vadd.f32 %v5218, %v5751
        %v5753 = vpop.f32.mrb[0].mxu0
        %v5754 = vpop.f32.mrb[0].mxu0
        %v5755 = vadd.f32 %v5218, %v5754
        %v5756 = vpop.f32.mrb[0].mxu0
        %5757 = vmatprep.mubr.bf16.mxu0 0
        %5758 = vmatmul.mubr.bf16.gmra.mrb[0].mxu0 %v5345
        %v5759 = vpop.f32.mrb[0].mxu0
        %v5760 = vadd.f32 %v5218, %v5759
        %v5761 = vpop.f32.mrb[0].mxu0
        %v5762 = vpop.f32.mrb[0].mxu0
        %v5763 = vadd.f32 %v5218, %v5762
        %v5764 = vpop.f32.mrb[0].mxu0
        %5765 = vmatprep.mubr.bf16.mxu0 0
        %5766 = vmatmul.mubr.bf16.gmra.mrb[0].mxu0 %v5348
        %v5767 = vpop.f32.mrb[0].mxu0
        %v5768 = vadd.f32 %v5218, %v5767
        %v5769 = vpop.f32.mrb[0].mxu0
        %v5770 = vpop.f32.mrb[0].mxu0
        %v5771 = vadd.f32 %v5218, %v5770
        %v5772 = vpop.f32.mrb[0].mxu0
        %5773 = vmatprep.mubr.bf16.mxu0 0
        %5774 = vmatmul.mubr.bf16.gmra.mrb[0].mxu0 %v5351
        %v5775 = vpop.f32.mrb[0].mxu0
        %v5776 = vadd.f32 %v5218, %v5775
        %v5777 = vpop.f32.mrb[0].mxu0
        %v5778 = vpop.f32.mrb[0].mxu0
        %v5779 = vadd.f32 %v5218, %v5778
        %v5780 = vpop.f32.mrb[0].mxu0
        %5781 = vmatprep.mubr.bf16.mxu0 0
        %5782 = vmatmul.mubr.bf16.gmra.mrb[0].mxu0 %v5354
        %v5783 = vpop.f32.mrb[0].mxu0
        %v5784 = vadd.f32 %v5218, %v5783
        %v5785 = vpop.f32.mrb[0].mxu0
        %v5786 = vpop.f32.mrb[0].mxu0
        %v5787 = vadd.f32 %v5218, %v5786
        %v5788 = vpop.f32.mrb[0].mxu0
        %5789 = vmatprep.mubr.bf16.mxu0 0
        %5790 = vmatmul.mubr.bf16.gmra.mrb[0].mxu0 %v5357
        %v5791 = vpop.f32.mrb[0].mxu0
        %v5792 = vadd.f32 %v5218, %v5791
        %v5793 = vpop.f32.mrb[0].mxu0
        %v5794 = vpop.f32.mrb[0].mxu0
        %v5795 = vadd.f32 %v5218, %v5794
        %v5796 = vpop.f32.mrb[0].mxu0
        %5797 = vmatprep.mubr.bf16.mxu0 0
        %5798 = vmatmul.mubr.bf16.gmra.mrb[0].mxu0 %v5360
        %v5799 = vpop.f32.mrb[0].mxu0
        %v5800 = vadd.f32 %v5218, %v5799
        %v5801 = vpop.f32.mrb[0].mxu0
        %v5802 = vpop.f32.mrb[0].mxu0
        %v5803 = vadd.f32 %v5218, %v5802
        %v5804 = vpop.f32.mrb[0].mxu0
        %5805 = vmatprep.mubr.bf16.mxu0 0
        %5806 = vmatmul.mubr.bf16.gmra.mrb[0].mxu0 %v5363
        %v5807 = vpop.f32.mrb[0].mxu0
        %v5808 = vadd.f32 %v5218, %v5807
        %v5809 = vpop.f32.mrb[0].mxu0
        %v5810 = vpop.f32.mrb[0].mxu0
        %v5811 = vadd.f32 %v5218, %v5810
        %v5812 = vpop.f32.mrb[0].mxu0
        %5813 = vmatprep.mubr.bf16.mxu0 0
        %5814 = vmatmul.mubr.bf16.gmra.mrb[0].mxu0 %v5366
        %v5815 = vpop.f32.mrb[0].mxu0
        %v5816 = vadd.f32 %v5218, %v5815
        %v5817 = vpop.f32.mrb[0].mxu0
        %v5818 = vpop.f32.mrb[0].mxu0
        %v5819 = vadd.f32 %v5218, %v5818
        %v5820 = vpop.f32.mrb[0].mxu0
        %5821 = vmatprep.mubr.bf16.mxu0 0
        %5822 = vmatmul.mubr.bf16.gmra.mrb[0].mxu0 %v5369
        %v5823 = vpop.f32.mrb[0].mxu0
        %v5824 = vadd.f32 %v5218, %v5823
        %v5825 = vpop.f32.mrb[0].mxu0
        %v5826 = vpop.f32.mrb[0].mxu0
        %v5827 = vadd.f32 %v5218, %v5826
        %v5828 = vpop.f32.mrb[0].mxu0
        %5829 = vmatprep.mubr.bf16.mxu0 0
        %5830 = vmatmul.mubr.bf16.gmra.mrb[0].mxu0 %v5372
        %v5831 = vpop.f32.mrb[0].mxu0
        %v5832 = vadd.f32 %v5218, %v5831
        %v5833 = vpop.f32.mrb[0].mxu0
        %v5834 = vpop.f32.mrb[0].mxu0
        %v5835 = vadd.f32 %v5218, %v5834
        %v5836 = vpop.f32.mrb[0].mxu0
        %5837 = vmatprep.mubr.bf16.mxu0 0
        %5838 = vmatmul.mubr.bf16.gmra.mrb[0].mxu0 %v5375
        %v5839 = vpop.f32.mrb[0].mxu0
        %v5840 = vadd.f32 %v5218, %v5839
        %v5841 = vpop.f32.mrb[0].mxu0
        %v5842 = vpop.f32.mrb[0].mxu0
        %v5843 = vadd.f32 %v5218, %v5842
        %v5844 = vpop.f32.mrb[0].mxu0
        %5845 = vmatprep.mubr.bf16.mxu0 0
        %5846 = vmatmul.mubr.bf16.gmra.mrb[0].mxu0 %v5378
        %v5847 = vpop.f32.mrb[0].mxu0
        %v5848 = vadd.f32 %v5218, %v5847
        %v5849 = vpop.f32.mrb[0].mxu0
        %v5850 = vpop.f32.mrb[0].mxu0
        %v5851 = vadd.f32 %v5218, %v5850
        %v5852 = vpop.f32.mrb[0].mxu0
        %5853 = vmatprep.mubr.bf16.mxu0 0
        %5854 = vmatmul.mubr.bf16.gmra.mrb[0].mxu0 %v5381
        %v5855 = vpop.f32.mrb[0].mxu0
        %v5856 = vadd.f32 %v5218, %v5855
        %v5857 = vpop.f32.mrb[0].mxu0
        %v5858 = vpop.f32.mrb[0].mxu0
        %v5859 = vadd.f32 %v5218, %v5858
        %v5860 = vpop.f32.mrb[0].mxu0
        %5861 = vmatprep.mubr.bf16.mxu0 0
        %5862 = vmatmul.mubr.bf16.gmra.mrb[0].mxu0 %v5384
        %v5863 = vpop.f32.mrb[0].mxu0
        %v5864 = vadd.f32 %v5218, %v5863
        %v5865 = vpop.f32.mrb[0].mxu0
        %v5866 = vpop.f32.mrb[0].mxu0
        %v5867 = vadd.f32 %v5218, %v5866
        %v5868 = vpop.f32.mrb[0].mxu0
        %5869 = vmatprep.mubr.bf16.mxu0 0
        %5870 = vmatmul.mubr.bf16.gmra.mrb[0].mxu0 %v5387
        %v5871 = vpop.f32.mrb[0].mxu0
        %v5872 = vadd.f32 %v5218, %v5871
        %v5873 = vpop.f32.mrb[0].mxu0
        %v5874 = vpop.f32.mrb[0].mxu0
        %v5875 = vadd.f32 %v5218, %v5874
        %v5876 = vpop.f32.mrb[0].mxu0
        %5877 = vmatprep.mubr.bf16.mxu0 0
        %5878 = vmatmul.mubr.bf16.gmra.mrb[0].mxu0 %v5390
        %v5879 = vpop.f32.mrb[0].mxu0
        %v5880 = vadd.f32 %v5218, %v5879
        %v5881 = vpop.f32.mrb[0].mxu0
        %v5882 = vpop.f32.mrb[0].mxu0
        %v5883 = vadd.f32 %v5218, %v5882
        %v5884 = vpop.f32.mrb[0].mxu0
        %5885 = vmatprep.mubr.bf16.mxu0 0
        %5886 = vmatmul.mubr.bf16.gmra.mrb[0].mxu0 %v5393
        %v5887 = vpop.f32.mrb[0].mxu0
        %v5888 = vadd.f32 %v5218, %v5887
        %v5889 = vpop.f32.mrb[0].mxu0
        %v5890 = vpop.f32.mrb[0].mxu0
        %v5891 = vadd.f32 %v5218, %v5890
        %v5892 = vpop.f32.mrb[0].mxu0
        %5893 = vmatprep.mubr.bf16.mxu0 0
        %5894 = vmatmul.mubr.bf16.gmra.mrb[0].mxu0 %v5396
        %v5895 = vpop.f32.mrb[0].mxu0
        %v5896 = vadd.f32 %v5218, %v5895
        %v5897 = vpop.f32.mrb[0].mxu0
        %v5898 = vpop.f32.mrb[0].mxu0
        %v5899 = vadd.f32 %v5218, %v5898
        %v5900 = vpop.f32.mrb[0].mxu0
        %5901 = vmatprep.mubr.bf16.mxu0 0
        %5902 = vmatmul.mubr.bf16.gmra.mrb[0].mxu0 %v5399
        %v5903 = vpop.f32.mrb[0].mxu0
        %v5904 = vadd.f32 %v5218, %v5903
        %v5905 = vpop.f32.mrb[0].mxu0
        %v5906 = vpop.f32.mrb[0].mxu0
        %v5907 = vadd.f32 %v5218, %v5906
        %v5908 = vpop.f32.mrb[0].mxu0
        %5909 = vmatprep.mubr.bf16.mxu0 0
        %5910 = vmatmul.mubr.bf16.gmra.mrb[0].mxu0 %v5402
        %v5911 = vpop.f32.mrb[0].mxu0
        %v5912 = vadd.f32 %v5218, %v5911
        %v5913 = vpop.f32.mrb[0].mxu0
        %v5914 = vpop.f32.mrb[0].mxu0
        %v5915 = vadd.f32 %v5218, %v5914
        %v5916 = vpop.f32.mrb[0].mxu0
        %5917 = vmatprep.mubr.bf16.mxu0 0
        %5918 = vmatmul.mubr.bf16.gmra.mrb[0].mxu0 %v5405
        %v5919 = vpop.f32.mrb[0].mxu0
        %v5920 = vadd.f32 %v5218, %v5919
        %v5921 = vpop.f32.mrb[0].mxu0
        %v5922 = vpop.f32.mrb[0].mxu0
        %v5923 = vadd.f32 %v5218, %v5922
        %v5924 = vpop.f32.mrb[0].mxu0
        %5925 = vmatprep.mubr.bf16.mxu0 0
        %5926 = vmatmul.mubr.bf16.gmra.mrb[0].mxu0 %v5408
        %v5927 = vpop.f32.mrb[0].mxu0
        %v5928 = vadd.f32 %v5218, %v5927
        %v5929 = vpop.f32.mrb[0].mxu0
        %v5930 = vpop.f32.mrb[0].mxu0
        %v5931 = vadd.f32 %v5218, %v5930
        %v5932 = vpop.f32.mrb[0].mxu0
        %5933 = vmatprep.mubr.bf16.mxu0 0
        %5934 = vmatmul.mubr.bf16.gmra.mrb[0].mxu0 %v5411
        %v5935 = vpop.f32.mrb[0].mxu0
        %v5936 = vadd.f32 %v5218, %v5935
        %v5937 = vpop.f32.mrb[0].mxu0
        %v5938 = vpop.f32.mrb[0].mxu0
        %v5939 = vadd.f32 %v5218, %v5938
        %v5940 = vpop.f32.mrb[0].mxu0
        %5941 = vmatprep.mubr.bf16.mxu0 0
        %5942 = vmatmul.mubr.bf16.gmra.mrb[0].mxu0 %v5414
        %v5943 = vpop.f32.mrb[0].mxu0
        %v5944 = vadd.f32 %v5218, %v5943
        %v5945 = vpop.f32.mrb[0].mxu0
        %v5946 = vpop.f32.mrb[0].mxu0
        %v5947 = vadd.f32 %v5218, %v5946
        %v5948 = vpop.f32.mrb[0].mxu0
        %5949 = vmatprep.mubr.bf16.mxu0 0
        %5950 = vmatmul.mubr.bf16.gmra.mrb[0].mxu0 %v5417
        %v5951 = vpop.f32.mrb[0].mxu0
        %v5952 = vadd.f32 %v5218, %v5951
        %v5953 = vpop.f32.mrb[0].mxu0
        %v5954 = vpop.f32.mrb[0].mxu0
        %v5955 = vadd.f32 %v5218, %v5954
        %v5956 = vpop.f32.mrb[0].mxu0
        %5957 = vmatprep.mubr.bf16.mxu0 0
        %5958 = vmatmul.mubr.bf16.gmra.mrb[0].mxu0 %v5420
        %v5959 = vpop.f32.mrb[0].mxu0
        %v5960 = vadd.f32 %v5218, %v5959
        %v5961 = vpop.f32.mrb[0].mxu0
        %v5962 = vpop.f32.mrb[0].mxu0
        %v5963 = vadd.f32 %v5218, %v5962
        %v5964 = vpop.f32.mrb[0].mxu0
        %5965 = vmatprep.mubr.bf16.mxu0 0
        %5966 = vmatmul.mubr.bf16.gmra.mrb[0].mxu0 %v5423
        %v5967 = vpop.f32.mrb[0].mxu0
        %v5968 = vadd.f32 %v5218, %v5967
        %v5969 = vpop.f32.mrb[0].mxu0
        %v5970 = vpop.f32.mrb[0].mxu0
        %v5971 = vadd.f32 %v5218, %v5970
        %v5972 = vpop.f32.mrb[0].mxu0
        %5973 = vmatprep.mubr.bf16.mxu0 0
        %5974 = vmatmul.mubr.bf16.gmra.mrb[0].mxu0 %v5426
        %v5975 = vpop.f32.mrb[0].mxu0
        %v5976 = vadd.f32 %v5218, %v5975
        %v5977 = vpop.f32.mrb[0].mxu0
        %v5978 = vpop.f32.mrb[0].mxu0
        %v5979 = vadd.f32 %v5218, %v5978
        %v5980 = vpop.f32.mrb[0].mxu0
        %5981 = vmatprep.mubr.bf16.mxu0 0
        %5982 = vmatmul.mubr.bf16.gmra.mrb[0].mxu0 %v5429
        %v5983 = vpop.f32.mrb[0].mxu0
        %v5984 = vadd.f32 %v5218, %v5983
        %v5985 = vpop.f32.mrb[0].mxu0
        %v5986 = vpop.f32.mrb[0].mxu0
        %v5987 = vadd.f32 %v5218, %v5986
        %v5988 = vpop.f32.mrb[0].mxu0
        %5989 = vmatprep.mubr.bf16.mxu0 0
        %5990 = vmatmul.mubr.bf16.gmra.mrb[0].mxu0 %v5432
        %v5991 = vpop.f32.mrb[0].mxu0
        %v5992 = vadd.f32 %v5218, %v5991
        %v5993 = vpop.f32.mrb[0].mxu0
        %v5994 = vpop.f32.mrb[0].mxu0
        %v5995 = vadd.f32 %v5218, %v5994
        %v5996 = vpop.f32.mrb[0].mxu0
        %5997 = vmatprep.mubr.bf16.mxu0 0
        %5998 = vmatmul.mubr.bf16.gmra.mrb[0].mxu0 %v5435
        %v5999 = vpop.f32.mrb[0].mxu0
        %v6000 = vadd.f32 %v5218, %v5999
        %v6001 = vpop.f32.mrb[0].mxu0
        %v6002 = vpop.f32.mrb[0].mxu0
        %v6003 = vadd.f32 %v5218, %v6002
        %v6004 = vpop.f32.mrb[0].mxu0
        %6005 = vmatprep.mubr.bf16.mxu0 0
        %6006 = vmatmul.mubr.bf16.gmra.mrb[0].mxu0 %v5438
        %v6007 = vpop.f32.mrb[0].mxu0
        %v6008 = vadd.f32 %v5218, %v6007
        %v6009 = vpop.f32.mrb[0].mxu0
        %v6010 = vpop.f32.mrb[0].mxu0
        %v6011 = vadd.f32 %v5218, %v6010
        %v6012 = vpop.f32.mrb[0].mxu0
        %6013 = vmatprep.mubr.bf16.mxu0 0
        %6014 = vmatmul.mubr.bf16.gmra.mrb[0].mxu0 %v5441
        %v6015 = vpop.f32.mrb[0].mxu0
        %v6016 = vadd.f32 %v5218, %v6015
        %v6017 = vpop.f32.mrb[0].mxu0
        %v6018 = vpop.f32.mrb[0].mxu0
        %v6019 = vadd.f32 %v5218, %v6018
        %v6020 = vpop.f32.mrb[0].mxu0
        %6021 = vmatprep.mubr.bf16.mxu0 0
        %6022 = vmatmul.mubr.bf16.gmra.mrb[0].mxu0 %v5444
        %v6023 = vpop.f32.mrb[0].mxu0
        %v6024 = vadd.f32 %v5218, %v6023
        %v6025 = vpop.f32.mrb[0].mxu0
        %v6026 = vpop.f32.mrb[0].mxu0
        %v6027 = vadd.f32 %v5218, %v6026
        %v6028 = vpop.f32.mrb[0].mxu0
        %6029 = vmatprep.mubr.bf16.mxu0 0
        %6030 = vmatmul.mubr.bf16.gmra.mrb[0].mxu0 %v5447
        %v6031 = vpop.f32.mrb[0].mxu0
        %v6032 = vadd.f32 %v5218, %v6031
        %v6033 = vpop.f32.mrb[0].mxu0
        %v6034 = vpop.f32.mrb[0].mxu0
        %v6035 = vadd.f32 %v5218, %v6034
        %v6036 = vpop.f32.mrb[0].mxu0
        %6037 = vmatprep.mubr.bf16.mxu0 0
        %6038 = vmatmul.mubr.bf16.gmra.mrb[0].mxu0 %v5450
        %v6039 = vpop.f32.mrb[0].mxu0
        %v6040 = vadd.f32 %v5218, %v6039
        %v6041 = vpop.f32.mrb[0].mxu0
        %v6042 = vpop.f32.mrb[0].mxu0
        %v6043 = vadd.f32 %v5218, %v6042
        %v6044 = vpop.f32.mrb[0].mxu0
        %6045 = vmatprep.mubr.bf16.mxu0 0
        %6046 = vmatmul.mubr.bf16.gmra.mrb[0].mxu0 %v5453
        %v6047 = vpop.f32.mrb[0].mxu0
        %v6048 = vadd.f32 %v5218, %v6047
        %v6049 = vpop.f32.mrb[0].mxu0
        %v6050 = vpop.f32.mrb[0].mxu0
        %v6051 = vadd.f32 %v5218, %v6050
        %v6052 = vpop.f32.mrb[0].mxu0
        %6053 = vmatprep.mubr.bf16.mxu0 0
        %6054 = vmatmul.mubr.bf16.gmra.mrb[0].mxu0 %v5456
        %v6055 = vpop.f32.mrb[0].mxu0
        %v6056 = vadd.f32 %v5218, %v6055
        %v6057 = vpop.f32.mrb[0].mxu0
        %v6058 = vpop.f32.mrb[0].mxu0
        %v6059 = vadd.f32 %v5218, %v6058
        %v6060 = vpop.f32.mrb[0].mxu0
        %6061 = vmatprep.mubr.bf16.mxu0 0
        %6062 = vmatmul.mubr.bf16.gmra.mrb[0].mxu0 %v5459
        %v6063 = vpop.f32.mrb[0].mxu0
        %v6064 = vadd.f32 %v5218, %v6063
        %v6065 = vpop.f32.mrb[0].mxu0
        %v6066 = vpop.f32.mrb[0].mxu0
        %v6067 = vadd.f32 %v5218, %v6066
        %v6068 = vpop.f32.mrb[0].mxu0
        %6069 = vdwg.mxu0
        %v6070 = vmax.f32 %v5496, 0.0
        %v6071 = vmax.f32 %v5499, 0.0
        %v6072 = vmax.f32 %v5504, 0.0
        %v6073 = vmax.f32 %v5507, 0.0
        %v6074 = vmax.f32 %v5512, 0.0
        %v6075 = vmax.f32 %v5515, 0.0
        %v6076 = vmax.f32 %v5520, 0.0
        %v6077 = vmax.f32 %v5523, 0.0
        %v6078 = vmax.f32 %v5528, 0.0
        %v6079 = vmax.f32 %v5531, 0.0
        %v6080 = vmax.f32 %v5536, 0.0
        %v6081 = vmax.f32 %v5539, 0.0
        %v6082 = vmax.f32 %v5544, 0.0
        %v6083 = vmax.f32 %v5547, 0.0
        %v6084 = vmax.f32 %v5552, 0.0
        %v6085 = vmax.f32 %v5555, 0.0
        %v6086 = vmax.f32 %v5560, 0.0
        %v6087 = vmax.f32 %v5563, 0.0
        %v6088 = vmax.f32 %v5568, 0.0
        %v6089 = vmax.f32 %v5571, 0.0
        %v6090 = vmax.f32 %v5576, 0.0
        %v6091 = vmax.f32 %v5579, 0.0
        %v6092 = vmax.f32 %v5584, 0.0
        %v6093 = vmax.f32 %v5587, 0.0
        %v6094 = vmax.f32 %v5592, 0.0
        %v6095 = vmax.f32 %v5595, 0.0
        %v6096 = vmax.f32 %v5600, 0.0
        %v6097 = vmax.f32 %v5603, 0.0
        %v6098 = vmax.f32 %v5608, 0.0
        %v6099 = vmax.f32 %v5611, 0.0
        %v6100 = vmax.f32 %v5616, 0.0
        %v6101 = vmax.f32 %v5619, 0.0
        %v6102 = vmax.f32 %v5624, 0.0
        %v6103 = vmax.f32 %v5627, 0.0
        %v6104 = vmax.f32 %v5632, 0.0
        %v6105 = vmax.f32 %v5635, 0.0
        %v6106 = vmax.f32 %v5640, 0.0
        %v6107 = vmax.f32 %v5643, 0.0
        %v6108 = vmax.f32 %v5648, 0.0
        %v6109 = vmax.f32 %v5651, 0.0
        %v6110 = vmax.f32 %v5656, 0.0
        %v6111 = vmax.f32 %v5659, 0.0
        %v6112 = vmax.f32 %v5664, 0.0
        %v6113 = vmax.f32 %v5667, 0.0
        %v6114 = vmax.f32 %v5672, 0.0
        %v6115 = vmax.f32 %v5675, 0.0
        %v6116 = vmax.f32 %v5680, 0.0
        %v6117 = vmax.f32 %v5683, 0.0
        %v6118 = vmax.f32 %v5688, 0.0
        %v6119 = vmax.f32 %v5691, 0.0
        %v6120 = vmax.f32 %v5696, 0.0
        %v6121 = vmax.f32 %v5699, 0.0
        %v6122 = vmax.f32 %v5704, 0.0
        %v6123 = vmax.f32 %v5707, 0.0
        %v6124 = vmax.f32 %v5712, 0.0
        %v6125 = vmax.f32 %v5715, 0.0
        %v6126 = vmax.f32 %v5720, 0.0
        %v6127 = vmax.f32 %v5723, 0.0
        %v6128 = vmax.f32 %v5728, 0.0
        %v6129 = vmax.f32 %v5731, 0.0
        %v6130 = vmax.f32 %v5736, 0.0
        %v6131 = vmax.f32 %v5739, 0.0
        %v6132 = vmax.f32 %v5744, 0.0
        %v6133 = vmax.f32 %v5747, 0.0
        %v6134 = vmax.f32 %v5752, 0.0
        %v6135 = vmax.f32 %v5755, 0.0
        %v6136 = vmax.f32 %v5760, 0.0
        %v6137 = vmax.f32 %v5763, 0.0
        %v6138 = vmax.f32 %v5768, 0.0
        %v6139 = vmax.f32 %v5771, 0.0
        %v6140 = vmax.f32 %v5776, 0.0
        %v6141 = vmax.f32 %v5779, 0.0
        %v6142 = vmax.f32 %v5784, 0.0
        %v6143 = vmax.f32 %v5787, 0.0
        %v6144 = vmax.f32 %v5792, 0.0
        %v6145 = vmax.f32 %v5795, 0.0
        %v6146 = vmax.f32 %v5800, 0.0
        %v6147 = vmax.f32 %v5803, 0.0
        %v6148 = vmax.f32 %v5808, 0.0
        %v6149 = vmax.f32 %v5811, 0.0
        %v6150 = vmax.f32 %v5816, 0.0
        %v6151 = vmax.f32 %v5819, 0.0
        %v6152 = vmax.f32 %v5824, 0.0
        %v6153 = vmax.f32 %v5827, 0.0
        %v6154 = vmax.f32 %v5832, 0.0
        %v6155 = vmax.f32 %v5835, 0.0
        %v6156 = vmax.f32 %v5840, 0.0
        %v6157 = vmax.f32 %v5843, 0.0
        %v6158 = vmax.f32 %v5848, 0.0
        %v6159 = vmax.f32 %v5851, 0.0
        %v6160 = vmax.f32 %v5856, 0.0
        %v6161 = vmax.f32 %v5859, 0.0
        %v6162 = vmax.f32 %v5864, 0.0
        %v6163 = vmax.f32 %v5867, 0.0
        %v6164 = vmax.f32 %v5872, 0.0
        %v6165 = vmax.f32 %v5875, 0.0
        %v6166 = vmax.f32 %v5880, 0.0
        %v6167 = vmax.f32 %v5883, 0.0
        %v6168 = vmax.f32 %v5888, 0.0
        %v6169 = vmax.f32 %v5891, 0.0
        %v6170 = vmax.f32 %v5896, 0.0
        %v6171 = vmax.f32 %v5899, 0.0
        %v6172 = vmax.f32 %v5904, 0.0
        %v6173 = vmax.f32 %v5907, 0.0
        %v6174 = vmax.f32 %v5912, 0.0
        %v6175 = vmax.f32 %v5915, 0.0
        %v6176 = vmax.f32 %v5920, 0.0
        %v6177 = vmax.f32 %v5923, 0.0
        %v6178 = vmax.f32 %v5928, 0.0
        %v6179 = vmax.f32 %v5931, 0.0
        %v6180 = vmax.f32 %v5936, 0.0
        %v6181 = vmax.f32 %v5939, 0.0
        %v6182 = vmax.f32 %v5944, 0.0
        %v6183 = vmax.f32 %v5947, 0.0
        %v6184 = vmax.f32 %v5952, 0.0
        %v6185 = vmax.f32 %v5955, 0.0
        %v6186 = vmax.f32 %v5960, 0.0
        %v6187 = vmax.f32 %v5963, 0.0
        %v6188 = vmax.f32 %v5968, 0.0
        %v6189 = vmax.f32 %v5971, 0.0
        %v6190 = vmax.f32 %v5976, 0.0
        %v6191 = vmax.f32 %v5979, 0.0
        %v6192 = vmax.f32 %v5984, 0.0
        %v6193 = vmax.f32 %v5987, 0.0
        %v6194 = vmax.f32 %v5992, 0.0
        %v6195 = vmax.f32 %v5995, 0.0
        %v6196 = vmax.f32 %v6000, 0.0
        %v6197 = vmax.f32 %v6003, 0.0
        %v6198 = vmax.f32 %v6008, 0.0
        %v6199 = vmax.f32 %v6011, 0.0
        %v6200 = vmax.f32 %v6016, 0.0
        %v6201 = vmax.f32 %v6019, 0.0
        %v6202 = vmax.f32 %v6024, 0.0
        %v6203 = vmax.f32 %v6027, 0.0
        %v6204 = vmax.f32 %v6032, 0.0
        %v6205 = vmax.f32 %v6035, 0.0
        %v6206 = vmax.f32 %v6040, 0.0
        %v6207 = vmax.f32 %v6043, 0.0
        %v6208 = vmax.f32 %v6048, 0.0
        %v6209 = vmax.f32 %v6051, 0.0
        %v6210 = vmax.f32 %v6056, 0.0
        %v6211 = vmax.f32 %v6059, 0.0
        %v6212 = vmax.f32 %v6064, 0.0
        %v6213 = vmax.f32 %v6067, 0.0
        %v6214 = vmax.f32 %v4181, 0.0
        %v6215 = vpack.c.bf16 %v6214, %v6214
        %v6217 = vsel %vm5244, %v6215, 0
        %6219 = vmatprep.subr.bf16.mxu0 0
        %6220 = vmatpush1.bf16.msra.mxu0 %v5236
        %6221 = vmatprep.subr.bf16.mxu0 0
        %6222 = vmatpush1.bf16.msra.mxu0 %v5237
        %6223 = vmatprep.subr.bf16.mxu0 0
        %6224 = vmatpush1.bf16.msra.mxu0 %v5238
        %6225 = vmatprep.subr.bf16.mxu0 0
        %6226 = vmatpush1.bf16.msra.mxu0 %v5239
        %6227 = vmatprep.subr.bf16.mxu0 0
        %6228 = vmatpush1.bf16.msra.mxu0 0
        %6229 = vmatprep.subr.bf16.mxu0 0
        %6230 = vmatpush1.bf16.msra.mxu0 0
        %6231 = vmatprep.subr.bf16.mxu0 0
        %6232 = vmatpush1.bf16.msra.mxu0 0
        %6233 = vmatprep.subr.bf16.mxu0 0
        %6234 = vmatpush1.bf16.msra.mxu0 0
        %6235 = vmatprep.subr.bf16.mxu0 0
        %6236 = vmatpush1.bf16.msra.mxu0 0
        %6237 = vmatprep.subr.bf16.mxu0 0
        %6238 = vmatpush1.bf16.msra.mxu0 0
        %6239 = vmatprep.subr.bf16.mxu0 0
        %6240 = vmatpush1.bf16.msra.mxu0 0
        %6241 = vmatprep.subr.bf16.mxu0 0
        %6242 = vmatpush1.bf16.msra.mxu0 0
        %6243 = vmatprep.subr.bf16.mxu0 0
        %6244 = vmatpush1.bf16.msra.mxu0 0
        %6245 = vmatprep.subr.bf16.mxu0 0
        %6246 = vmatpush1.bf16.msra.mxu0 0
        %6247 = vmatprep.subr.bf16.mxu0 0
        %6248 = vmatpush1.bf16.msra.mxu0 0
        %6249 = vmatprep.subr.bf16.mxu0 0
        %6250 = vmatpush1.bf16.msra.mxu0 0
        %6251 = vmatprep.mubr.bf16.mxu0 0
        %6252 = vmatmul.mubr.bf16.gmra.mrb[0].mxu0 %v6217
        %v6253 = vpop.f32.mrb[0].mxu0
        %v6254 = vadd.f32 %v5213, %v6253
        %v6255 = vpop.f32.mrb[0].mxu0
        %v6256 = vpop.f32.mrb[0].mxu0
        %v6257 = vpop.f32.mrb[0].mxu0
        %6258 = vdwg.mxu0
        %v6259 = vmax.f32 %v6254, 0.0
        %vm6260 = vcmask 261120
        %v6261 = vsel %vm6260, %v6070, 0.0
        %v6262 = vsel %vm6260, %v6071, 0.0
        %v6263 = vadd.f32 %v6261, %v6262
        %v6264 = vsel %vm6260, %v6072, 0.0
        %v6265 = vadd.f32 %v6263, %v6264
        %v6266 = vsel %vm6260, %v6073, 0.0
        %v6267 = vadd.f32 %v6265, %v6266
        %v6268 = vsel %vm6260, %v6074, 0.0
        %v6269 = vadd.f32 %v6267, %v6268
        %v6270 = vsel %vm6260, %v6075, 0.0
        %v6271 = vadd.f32 %v6269, %v6270
        %v6272 = vsel %vm6260, %v6076, 0.0
        %v6273 = vadd.f32 %v6271, %v6272
        %v6274 = vsel %vm6260, %v6077, 0.0
        %v6275 = vadd.f32 %v6273, %v6274
        %v6276 = vsel %vm6260, %v6078, 0.0
        %v6277 = vadd.f32 %v6275, %v6276
        %v6278 = vsel %vm6260, %v6079, 0.0
        %v6279 = vadd.f32 %v6277, %v6278
        %v6280 = vsel %vm6260, %v6080, 0.0
        %v6281 = vadd.f32 %v6279, %v6280
        %v6282 = vsel %vm6260, %v6081, 0.0
        %v6283 = vadd.f32 %v6281, %v6282
        %v6284 = vsel %vm6260, %v6082, 0.0
        %v6285 = vadd.f32 %v6283, %v6284
        %v6286 = vsel %vm6260, %v6083, 0.0
        %v6287 = vadd.f32 %v6285, %v6286
        %v6288 = vsel %vm6260, %v6084, 0.0
        %v6289 = vadd.f32 %v6287, %v6288
        %v6290 = vsel %vm6260, %v6085, 0.0
        %v6291 = vadd.f32 %v6289, %v6290
        %v6292 = vsel %vm6260, %v6086, 0.0
        %v6293 = vadd.f32 %v6291, %v6292
        %v6294 = vsel %vm6260, %v6087, 0.0
        %v6295 = vadd.f32 %v6293, %v6294
        %v6296 = vsel %vm6260, %v6088, 0.0
        %v6297 = vadd.f32 %v6295, %v6296
        %v6298 = vsel %vm6260, %v6089, 0.0
        %v6299 = vadd.f32 %v6297, %v6298
        %v6300 = vsel %vm6260, %v6090, 0.0
        %v6301 = vadd.f32 %v6299, %v6300
        %v6302 = vsel %vm6260, %v6091, 0.0
        %v6303 = vadd.f32 %v6301, %v6302
        %v6304 = vsel %vm6260, %v6092, 0.0
        %v6305 = vadd.f32 %v6303, %v6304
        %v6306 = vsel %vm6260, %v6093, 0.0
        %v6307 = vadd.f32 %v6305, %v6306
        %v6308 = vsel %vm6260, %v6094, 0.0
        %v6309 = vadd.f32 %v6307, %v6308
        %v6310 = vsel %vm6260, %v6095, 0.0
        %v6311 = vadd.f32 %v6309, %v6310
        %v6312 = vsel %vm6260, %v6096, 0.0
        %v6313 = vadd.f32 %v6311, %v6312
        %v6314 = vsel %vm6260, %v6097, 0.0
        %v6315 = vadd.f32 %v6313, %v6314
        %v6316 = vsel %vm6260, %v6098, 0.0
        %v6317 = vadd.f32 %v6315, %v6316
        %v6318 = vsel %vm6260, %v6099, 0.0
        %v6319 = vadd.f32 %v6317, %v6318
        %v6320 = vsel %vm6260, %v6100, 0.0
        %v6321 = vadd.f32 %v6319, %v6320
        %v6322 = vsel %vm6260, %v6101, 0.0
        %v6323 = vadd.f32 %v6321, %v6322
        %v6324 = vsel %vm6260, %v6102, 0.0
        %v6325 = vadd.f32 %v6323, %v6324
        %v6326 = vsel %vm6260, %v6103, 0.0
        %v6327 = vadd.f32 %v6325, %v6326
        %v6328 = vsel %vm6260, %v6104, 0.0
        %v6329 = vadd.f32 %v6327, %v6328
        %v6330 = vsel %vm6260, %v6105, 0.0
        %v6331 = vadd.f32 %v6329, %v6330
        %v6332 = vsel %vm6260, %v6106, 0.0
        %v6333 = vadd.f32 %v6331, %v6332
        %v6334 = vsel %vm6260, %v6107, 0.0
        %v6335 = vadd.f32 %v6333, %v6334
        %v6336 = vsel %vm6260, %v6108, 0.0
        %v6337 = vadd.f32 %v6335, %v6336
        %v6338 = vsel %vm6260, %v6109, 0.0
        %v6339 = vadd.f32 %v6337, %v6338
        %v6340 = vsel %vm6260, %v6110, 0.0
        %v6341 = vadd.f32 %v6339, %v6340
        %v6342 = vsel %vm6260, %v6111, 0.0
        %v6343 = vadd.f32 %v6341, %v6342
        %v6344 = vsel %vm6260, %v6112, 0.0
        %v6345 = vadd.f32 %v6343, %v6344
        %v6346 = vsel %vm6260, %v6113, 0.0
        %v6347 = vadd.f32 %v6345, %v6346
        %v6348 = vsel %vm6260, %v6114, 0.0
        %v6349 = vadd.f32 %v6347, %v6348
        %v6350 = vsel %vm6260, %v6115, 0.0
        %v6351 = vadd.f32 %v6349, %v6350
        %v6352 = vsel %vm6260, %v6116, 0.0
        %v6353 = vadd.f32 %v6351, %v6352
        %v6354 = vsel %vm6260, %v6117, 0.0
        %v6355 = vadd.f32 %v6353, %v6354
        %v6356 = vsel %vm6260, %v6118, 0.0
        %v6357 = vadd.f32 %v6355, %v6356
        %v6358 = vsel %vm6260, %v6119, 0.0
        %v6359 = vadd.f32 %v6357, %v6358
        %v6360 = vsel %vm6260, %v6120, 0.0
        %v6361 = vadd.f32 %v6359, %v6360
        %v6362 = vsel %vm6260, %v6121, 0.0
        %v6363 = vadd.f32 %v6361, %v6362
        %v6364 = vsel %vm6260, %v6122, 0.0
        %v6365 = vadd.f32 %v6363, %v6364
        %v6366 = vsel %vm6260, %v6123, 0.0
        %v6367 = vadd.f32 %v6365, %v6366
        %v6368 = vsel %vm6260, %v6124, 0.0
        %v6369 = vadd.f32 %v6367, %v6368
        %v6370 = vsel %vm6260, %v6125, 0.0
        %v6371 = vadd.f32 %v6369, %v6370
        %v6372 = vsel %vm6260, %v6126, 0.0
        %v6373 = vadd.f32 %v6371, %v6372
        %v6374 = vsel %vm6260, %v6127, 0.0
        %v6375 = vadd.f32 %v6373, %v6374
        %v6376 = vsel %vm6260, %v6128, 0.0
        %v6377 = vadd.f32 %v6375, %v6376
        %v6378 = vsel %vm6260, %v6129, 0.0
        %v6379 = vadd.f32 %v6377, %v6378
        %v6380 = vsel %vm6260, %v6130, 0.0
        %v6381 = vadd.f32 %v6379, %v6380
        %v6382 = vsel %vm6260, %v6131, 0.0
        %v6383 = vadd.f32 %v6381, %v6382
        %v6384 = vsel %vm6260, %v6132, 0.0
        %v6385 = vadd.f32 %v6383, %v6384
        %v6386 = vsel %vm6260, %v6133, 0.0
        %v6387 = vadd.f32 %v6385, %v6386
        %v6388 = vsel %vm6260, %v6134, 0.0
        %v6389 = vadd.f32 %v6387, %v6388
        %v6390 = vsel %vm6260, %v6135, 0.0
        %v6391 = vadd.f32 %v6389, %v6390
        %v6392 = vsel %vm6260, %v6136, 0.0
        %v6393 = vadd.f32 %v6391, %v6392
        %v6394 = vsel %vm6260, %v6137, 0.0
        %v6395 = vadd.f32 %v6393, %v6394
        %v6396 = vsel %vm6260, %v6138, 0.0
        %v6397 = vadd.f32 %v6395, %v6396
        %v6398 = vsel %vm6260, %v6139, 0.0
        %v6399 = vadd.f32 %v6397, %v6398
        %v6400 = vsel %vm6260, %v6140, 0.0
        %v6401 = vadd.f32 %v6399, %v6400
        %v6402 = vsel %vm6260, %v6141, 0.0
        %v6403 = vadd.f32 %v6401, %v6402
        %v6404 = vrot.slane %v6403, 4
        %v6405 = vadd.f32 %v6403, %v6404
        %v6406 = vrot.slane %v6405, 2
        %v6407 = vadd.f32 %v6405, %v6406
        %v6408 = vrot.slane %v6407, 1
        %v6409 = vadd.f32 %v6407, %v6408
        %v6410 = vsel %vm6260, %v6142, 0.0
        %v6411 = vsel %vm6260, %v6143, 0.0
        %v6412 = vadd.f32 %v6410, %v6411
        %v6413 = vsel %vm6260, %v6144, 0.0
        %v6414 = vadd.f32 %v6412, %v6413
        %v6415 = vsel %vm6260, %v6145, 0.0
        %v6416 = vadd.f32 %v6414, %v6415
        %v6417 = vsel %vm6260, %v6146, 0.0
        %v6418 = vadd.f32 %v6416, %v6417
        %v6419 = vsel %vm6260, %v6147, 0.0
        %v6420 = vadd.f32 %v6418, %v6419
        %v6421 = vsel %vm6260, %v6148, 0.0
        %v6422 = vadd.f32 %v6420, %v6421
        %v6423 = vsel %vm6260, %v6149, 0.0
        %v6424 = vadd.f32 %v6422, %v6423
        %v6425 = vsel %vm6260, %v6150, 0.0
        %v6426 = vadd.f32 %v6424, %v6425
        %v6427 = vsel %vm6260, %v6151, 0.0
        %v6428 = vadd.f32 %v6426, %v6427
        %v6429 = vsel %vm6260, %v6152, 0.0
        %v6430 = vadd.f32 %v6428, %v6429
        %v6431 = vsel %vm6260, %v6153, 0.0
        %v6432 = vadd.f32 %v6430, %v6431
        %v6433 = vsel %vm6260, %v6154, 0.0
        %v6434 = vadd.f32 %v6432, %v6433
        %v6435 = vsel %vm6260, %v6155, 0.0
        %v6436 = vadd.f32 %v6434, %v6435
        %v6437 = vsel %vm6260, %v6156, 0.0
        %v6438 = vadd.f32 %v6436, %v6437
        %v6439 = vsel %vm6260, %v6157, 0.0
        %v6440 = vadd.f32 %v6438, %v6439
        %v6441 = vsel %vm6260, %v6158, 0.0
        %v6442 = vadd.f32 %v6440, %v6441
        %v6443 = vsel %vm6260, %v6159, 0.0
        %v6444 = vadd.f32 %v6442, %v6443
        %v6445 = vsel %vm6260, %v6160, 0.0
        %v6446 = vadd.f32 %v6444, %v6445
        %v6447 = vsel %vm6260, %v6161, 0.0
        %v6448 = vadd.f32 %v6446, %v6447
        %v6449 = vsel %vm6260, %v6162, 0.0
        %v6450 = vadd.f32 %v6448, %v6449
        %v6451 = vsel %vm6260, %v6163, 0.0
        %v6452 = vadd.f32 %v6450, %v6451
        %v6453 = vsel %vm6260, %v6164, 0.0
        %v6454 = vadd.f32 %v6452, %v6453
        %v6455 = vsel %vm6260, %v6165, 0.0
        %v6456 = vadd.f32 %v6454, %v6455
        %v6457 = vsel %vm6260, %v6166, 0.0
        %v6458 = vadd.f32 %v6456, %v6457
        %v6459 = vsel %vm6260, %v6167, 0.0
        %v6460 = vadd.f32 %v6458, %v6459
        %v6461 = vsel %vm6260, %v6168, 0.0
        %v6462 = vadd.f32 %v6460, %v6461
        %v6463 = vsel %vm6260, %v6169, 0.0
        %v6464 = vadd.f32 %v6462, %v6463
        %v6465 = vsel %vm6260, %v6170, 0.0
        %v6466 = vadd.f32 %v6464, %v6465
        %v6467 = vsel %vm6260, %v6171, 0.0
        %v6468 = vadd.f32 %v6466, %v6467
        %v6469 = vsel %vm6260, %v6172, 0.0
        %v6470 = vadd.f32 %v6468, %v6469
        %v6471 = vsel %vm6260, %v6173, 0.0
        %v6472 = vadd.f32 %v6470, %v6471
        %v6473 = vsel %vm6260, %v6174, 0.0
        %v6474 = vadd.f32 %v6472, %v6473
        %v6475 = vsel %vm6260, %v6175, 0.0
        %v6476 = vadd.f32 %v6474, %v6475
        %v6477 = vsel %vm6260, %v6176, 0.0
        %v6478 = vadd.f32 %v6476, %v6477
        %v6479 = vsel %vm6260, %v6177, 0.0
        %v6480 = vadd.f32 %v6478, %v6479
        %v6481 = vsel %vm6260, %v6178, 0.0
        %v6482 = vadd.f32 %v6480, %v6481
        %v6483 = vsel %vm6260, %v6179, 0.0
        %v6484 = vadd.f32 %v6482, %v6483
        %v6485 = vsel %vm6260, %v6180, 0.0
        %v6486 = vadd.f32 %v6484, %v6485
        %v6487 = vsel %vm6260, %v6181, 0.0
        %v6488 = vadd.f32 %v6486, %v6487
        %v6489 = vsel %vm6260, %v6182, 0.0
        %v6490 = vadd.f32 %v6488, %v6489
        %v6491 = vsel %vm6260, %v6183, 0.0
        %v6492 = vadd.f32 %v6490, %v6491
        %v6493 = vsel %vm6260, %v6184, 0.0
        %v6494 = vadd.f32 %v6492, %v6493
        %v6495 = vsel %vm6260, %v6185, 0.0
        %v6496 = vadd.f32 %v6494, %v6495
        %v6497 = vsel %vm6260, %v6186, 0.0
        %v6498 = vadd.f32 %v6496, %v6497
        %v6499 = vsel %vm6260, %v6187, 0.0
        %v6500 = vadd.f32 %v6498, %v6499
        %v6501 = vsel %vm6260, %v6188, 0.0
        %v6502 = vadd.f32 %v6500, %v6501
        %v6503 = vsel %vm6260, %v6189, 0.0
        %v6504 = vadd.f32 %v6502, %v6503
        %v6505 = vsel %vm6260, %v6190, 0.0
        %v6506 = vadd.f32 %v6504, %v6505
        %v6507 = vsel %vm6260, %v6191, 0.0
        %v6508 = vadd.f32 %v6506, %v6507
        %v6509 = vsel %vm6260, %v6192, 0.0
        %v6510 = vadd.f32 %v6508, %v6509
        %v6511 = vsel %vm6260, %v6193, 0.0
        %v6512 = vadd.f32 %v6510, %v6511
        %v6513 = vsel %vm6260, %v6194, 0.0
        %v6514 = vadd.f32 %v6512, %v6513
        %v6515 = vsel %vm6260, %v6195, 0.0
        %v6516 = vadd.f32 %v6514, %v6515
        %v6517 = vsel %vm6260, %v6196, 0.0
        %v6518 = vadd.f32 %v6516, %v6517
        %v6519 = vsel %vm6260, %v6197, 0.0
        %v6520 = vadd.f32 %v6518, %v6519
        %v6521 = vsel %vm6260, %v6198, 0.0
        %v6522 = vadd.f32 %v6520, %v6521
        %v6523 = vsel %vm6260, %v6199, 0.0
        %v6524 = vadd.f32 %v6522, %v6523
        %v6525 = vsel %vm6260, %v6200, 0.0
        %v6526 = vadd.f32 %v6524, %v6525
        %v6527 = vsel %vm6260, %v6201, 0.0
        %v6528 = vadd.f32 %v6526, %v6527
        %v6529 = vsel %vm6260, %v6202, 0.0
        %v6530 = vadd.f32 %v6528, %v6529
        %v6531 = vsel %vm6260, %v6203, 0.0
        %v6532 = vadd.f32 %v6530, %v6531
        %v6533 = vsel %vm6260, %v6204, 0.0
        %v6534 = vadd.f32 %v6532, %v6533
        %v6535 = vsel %vm6260, %v6205, 0.0
        %v6536 = vadd.f32 %v6534, %v6535
        %v6537 = vsel %vm6260, %v6206, 0.0
        %v6538 = vadd.f32 %v6536, %v6537
        %v6539 = vsel %vm6260, %v6207, 0.0
        %v6540 = vadd.f32 %v6538, %v6539
        %v6541 = vsel %vm6260, %v6208, 0.0
        %v6542 = vadd.f32 %v6540, %v6541
        %v6543 = vsel %vm6260, %v6209, 0.0
        %v6544 = vadd.f32 %v6542, %v6543
        %v6545 = vsel %vm6260, %v6210, 0.0
        %v6546 = vadd.f32 %v6544, %v6545
        %v6547 = vsel %vm6260, %v6211, 0.0
        %v6548 = vadd.f32 %v6546, %v6547
        %v6549 = vsel %vm6260, %v6212, 0.0
        %v6550 = vadd.f32 %v6548, %v6549
        %v6551 = vsel %vm6260, %v6213, 0.0
        %v6552 = vadd.f32 %v6550, %v6551
        %v6553 = vrot.slane %v6552, 4
        %v6554 = vadd.f32 %v6552, %v6553
        %v6555 = vrot.slane %v6554, 2
        %v6556 = vadd.f32 %v6554, %v6555
        %v6557 = vrot.slane %v6556, 1
        %v6558 = vadd.f32 %v6556, %v6557
        %v6559 = vmul.f32 %v6259, 287.0
        %v6560 = vlaneseq
        %v6561 = vshrl.u32 %v6560, 7
        %v6562 = vsub.s32 0, %v6561
        %v6563 = vrot.slane %v6559, %v6562
        %v6564 = vsub.f32 %v6409, %v6563
        %v6565 = vsub.f32 %v6558, %v6563
        %v6566 = vmul.f32 %v6564, 0.0034602077
        %v6567 = vmul.f32 %v6565, 0.0034602077
        %v6568 = vld [vmem:[#allocation28] sm:$0xff]
        %v6569 = vld [vmem:[#allocation28 + $0x8] sm:$0xff]
        %v6570 = vld [vmem:[#allocation28 + $0x10] sm:$0xff]
        %v6571 = vld [vmem:[#allocation28 + $0x18] sm:$0xff]
        %v6572 = vld [vmem:[#allocation30] sm:$0x1]
        %v6574 = vlaneseq
        %v6575 = vshrl.u32 %v6574, 7
        %v6576 = vsub.s32 0, %v6575
        %v6577 = vrot.slane %v6572, %v6576
        %v6581 = vrot.slane %v6567, 7
        %vm6582 = vcmask 1041409
        %v6583 = vsel %vm6582, %v6581, %v6566
        %v6584 = vsel %vm6260, %v6583, 0
        %6586 = vmatprep.subr.mxu0 0.0
        %6587 = vmatpush1.msra.mxu0 %v6568
        %6588 = vmatprep.subr.mxu0 0.0
        %6589 = vmatpush1.msra.mxu0 %v6569
        %6590 = vmatprep.subr.mxu0 0.0
        %6591 = vmatpush1.msra.mxu0 %v6570
        %6592 = vmatprep.subr.mxu0 0.0
        %6593 = vmatpush1.msra.mxu0 %v6571
        %6594 = vmatprep.subr.mxu0 0.0
        %6595 = vmatpush1.msra.mxu0 0.0
        %6596 = vmatprep.subr.mxu0 0.0
        %6597 = vmatpush1.msra.mxu0 0.0
        %6598 = vmatprep.subr.mxu0 0.0
        %6599 = vmatpush1.msra.mxu0 0.0
        %6600 = vmatprep.subr.mxu0 0.0
        %6601 = vmatpush1.msra.mxu0 0.0
        %6602 = vmatprep.subr.mxu0 0.0
        %6603 = vmatpush1.msra.mxu0 0.0
        %6604 = vmatprep.subr.mxu0 0.0
        %6605 = vmatpush1.msra.mxu0 0.0
        %6606 = vmatprep.subr.mxu0 0.0
        %6607 = vmatpush1.msra.mxu0 0.0
        %6608 = vmatprep.subr.mxu0 0.0
        %6609 = vmatpush1.msra.mxu0 0.0
        %6610 = vmatprep.subr.mxu0 0.0
        %6611 = vmatpush1.msra.mxu0 0.0
        %6612 = vmatprep.subr.mxu0 0.0
        %6613 = vmatpush1.msra.mxu0 0.0
        %6614 = vmatprep.subr.mxu0 0.0
        %6615 = vmatpush1.msra.mxu0 0.0
        %6616 = vmatprep.subr.mxu0 0.0
        %6617 = vmatpush1.msra.mxu0 0.0
        %6618 = vmatprep.subr.mxu0 0.0
        %6619 = vmatpush1.msra.mxu0 0.0
        %6620 = vmatprep.subr.mxu0 0.0
        %6621 = vmatpush1.msra.mxu0 0.0
        %6622 = vmatprep.subr.mxu0 0.0
        %6623 = vmatpush1.msra.mxu0 0.0
        %6624 = vmatprep.subr.mxu0 0.0
        %6625 = vmatpush1.msra.mxu0 0.0
        %6626 = vmatprep.subr.mxu0 0.0
        %6627 = vmatpush1.msra.mxu0 0.0
        %6628 = vmatprep.subr.mxu0 0.0
        %6629 = vmatpush1.msra.mxu0 0.0
        %6630 = vmatprep.subr.mxu0 0.0
        %6631 = vmatpush1.msra.mxu0 0.0
        %6632 = vmatprep.subr.mxu0 0.0
        %6633 = vmatpush1.msra.mxu0 0.0
        %6634 = vmatprep.subr.mxu0 0.0
        %6635 = vmatpush1.msra.mxu0 0.0
        %6636 = vmatprep.subr.mxu0 0.0
        %6637 = vmatpush1.msra.mxu0 0.0
        %6638 = vmatprep.subr.mxu0 0.0
        %6639 = vmatpush1.msra.mxu0 0.0
        %6640 = vmatprep.subr.mxu0 0.0
        %6641 = vmatpush1.msra.mxu0 0.0
        %6642 = vmatprep.subr.mxu0 0.0
        %6643 = vmatpush1.msra.mxu0 0.0
        %6644 = vmatprep.subr.mxu0 0.0
        %6645 = vmatpush1.msra.mxu0 0.0
        %6646 = vmatprep.subr.mxu0 0.0
        %6647 = vmatpush1.msra.mxu0 0.0
        %6648 = vmatprep.subr.mxu0 0.0
        %6649 = vmatpush1.msra.mxu0 0.0
        %6650 = vmatprep.mubr.f32.mxu0 0.0
        %6651 = vmatmul.mubr.f32.gmra.mrb[0].mxu0 %v6584
        %v6652 = vpop.f32.mrb[0].mxu0
        %v6653 = vadd.f32 %v6577, %v6652
        %v6654 = vpop.f32.mrb[0].mxu0
        %6655 = vdwg.mxu0
        %v6656 = vmax.f32 %v6653, 0.0
        %v6657 = vld [vmem:[#allocation31] sm:$0xff]
        %v6658 = vld [vmem:[#allocation31 + $0x8] sm:$0xff]
        %v6659 = vld [vmem:[#allocation2] sm:$0x1]
        %v6661 = vlaneseq
        %v6662 = vshrl.u32 %v6661, 7
        %v6663 = vsub.s32 0, %v6662
        %v6664 = vrot.slane %v6659, %v6663
        %vm6666 = vcmask 130048
        %v6668 = vsel %vm6666, %v6656, 0
        %6670 = vmatprep.subr.mxu0 0.0
        %6671 = vmatpush1.msra.mxu0 %v6657
        %6672 = vmatprep.subr.mxu0 0.0
        %6673 = vmatpush1.msra.mxu0 %v6658
        %6674 = vmatprep.subr.mxu0 0.0
        %6675 = vmatpush1.msra.mxu0 0.0
        %6676 = vmatprep.subr.mxu0 0.0
        %6677 = vmatpush1.msra.mxu0 0.0
        %6678 = vmatprep.subr.mxu0 0.0
        %6679 = vmatpush1.msra.mxu0 0.0
        %6680 = vmatprep.subr.mxu0 0.0
        %6681 = vmatpush1.msra.mxu0 0.0
        %6682 = vmatprep.subr.mxu0 0.0
        %6683 = vmatpush1.msra.mxu0 0.0
        %6684 = vmatprep.subr.mxu0 0.0
        %6685 = vmatpush1.msra.mxu0 0.0
        %6686 = vmatprep.subr.mxu0 0.0
        %6687 = vmatpush1.msra.mxu0 0.0
        %6688 = vmatprep.subr.mxu0 0.0
        %6689 = vmatpush1.msra.mxu0 0.0
        %6690 = vmatprep.subr.mxu0 0.0
        %6691 = vmatpush1.msra.mxu0 0.0
        %6692 = vmatprep.subr.mxu0 0.0
        %6693 = vmatpush1.msra.mxu0 0.0
        %6694 = vmatprep.subr.mxu0 0.0
        %6695 = vmatpush1.msra.mxu0 0.0
        %6696 = vmatprep.subr.mxu0 0.0
        %6697 = vmatpush1.msra.mxu0 0.0
        %6698 = vmatprep.subr.mxu0 0.0
        %6699 = vmatpush1.msra.mxu0 0.0
        %6700 = vmatprep.subr.mxu0 0.0
        %6701 = vmatpush1.msra.mxu0 0.0
        %6702 = vmatprep.subr.mxu0 0.0
        %6703 = vmatpush1.msra.mxu0 0.0
        %6704 = vmatprep.subr.mxu0 0.0
        %6705 = vmatpush1.msra.mxu0 0.0
        %6706 = vmatprep.subr.mxu0 0.0
        %6707 = vmatpush1.msra.mxu0 0.0
        %6708 = vmatprep.subr.mxu0 0.0
        %6709 = vmatpush1.msra.mxu0 0.0
        %6710 = vmatprep.subr.mxu0 0.0
        %6711 = vmatpush1.msra.mxu0 0.0
        %6712 = vmatprep.subr.mxu0 0.0
        %6713 = vmatpush1.msra.mxu0 0.0
        %6714 = vmatprep.subr.mxu0 0.0
        %6715 = vmatpush1.msra.mxu0 0.0
        %6716 = vmatprep.subr.mxu0 0.0
        %6717 = vmatpush1.msra.mxu0 0.0
        %6718 = vmatprep.subr.mxu0 0.0
        %6719 = vmatpush1.msra.mxu0 0.0
        %6720 = vmatprep.subr.mxu0 0.0
        %6721 = vmatpush1.msra.mxu0 0.0
        %6722 = vmatprep.subr.mxu0 0.0
        %6723 = vmatpush1.msra.mxu0 0.0
        %6724 = vmatprep.subr.mxu0 0.0
        %6725 = vmatpush1.msra.mxu0 0.0
        %6726 = vmatprep.subr.mxu0 0.0
        %6727 = vmatpush1.msra.mxu0 0.0
        %6728 = vmatprep.subr.mxu0 0.0
        %6729 = vmatpush1.msra.mxu0 0.0
        %6730 = vmatprep.subr.mxu0 0.0
        %6731 = vmatpush1.msra.mxu0 0.0
        %6732 = vmatprep.subr.mxu0 0.0
        %6733 = vmatpush1.msra.mxu0 0.0
        %6734 = vmatprep.mubr.f32.mxu0 0.0
        %6735 = vmatmul.mubr.f32.gmra.mrb[0].mxu0 %v6668
        %v6736 = vpop.f32.mrb[0].mxu0
        %v6737 = vadd.f32 %v6664, %v6736
        %v6738 = vpop.f32.mrb[0].mxu0
        %6739 = vdwg.mxu0
        %v6740 = vand.u32 2147483647, %v6737
        %v6741 = vsub.f32 0.0, %v6740
        %v6742 = vmul.f32 %v6741, 1.442695
        %v6743 = vpow.pop %v6742
        %vm6744 = vcmp.ge.f32.partialorder %v6737, 0.0
        %v6745 = vadd.f32 %v6743, 1.0
        %v6746 = vrcp.pop %v6745
        %v6747 = vmul.f32 1.0, %v6746
        %v6748 = vmul.f32 %v6743, %v6746
        %v6749 = vsel %vm6744, %v6747, %v6748
        %v6750 = vpack.c.bf16 %v6071, %v6070
        %v6751 = vpack.c.bf16 %v6073, %v6072
        %v6752 = vpack.c.bf16 %v6075, %v6074
        %v6753 = vpack.c.bf16 %v6077, %v6076
        %v6754 = vpack.c.bf16 %v6079, %v6078
        %v6755 = vpack.c.bf16 %v6081, %v6080
        %v6756 = vpack.c.bf16 %v6083, %v6082
        %v6757 = vpack.c.bf16 %v6085, %v6084
        %v6758 = vpack.c.bf16 %v6087, %v6086
        %v6759 = vpack.c.bf16 %v6089, %v6088
        %v6760 = vpack.c.bf16 %v6091, %v6090
        %v6761 = vpack.c.bf16 %v6093, %v6092
        %v6762 = vpack.c.bf16 %v6095, %v6094
        %v6763 = vpack.c.bf16 %v6097, %v6096
        %v6764 = vpack.c.bf16 %v6099, %v6098
        %v6765 = vpack.c.bf16 %v6101, %v6100
        %v6766 = vpack.c.bf16 %v6103, %v6102
        %v6767 = vpack.c.bf16 %v6105, %v6104
        %v6768 = vpack.c.bf16 %v6107, %v6106
        %v6769 = vpack.c.bf16 %v6109, %v6108
        %v6770 = vpack.c.bf16 %v6111, %v6110
        %v6771 = vpack.c.bf16 %v6113, %v6112
        %v6772 = vpack.c.bf16 %v6115, %v6114
        %v6773 = vpack.c.bf16 %v6117, %v6116
        %v6774 = vpack.c.bf16 %v6119, %v6118
        %v6775 = vpack.c.bf16 %v6121, %v6120
        %v6776 = vpack.c.bf16 %v6123, %v6122
        %v6777 = vpack.c.bf16 %v6125, %v6124
        %v6778 = vpack.c.bf16 %v6127, %v6126
        %v6779 = vpack.c.bf16 %v6129, %v6128
        %v6780 = vpack.c.bf16 %v6131, %v6130
        %v6781 = vpack.c.bf16 %v6133, %v6132
        %v6782 = vpack.c.bf16 %v6135, %v6134
        %v6783 = vpack.c.bf16 %v6137, %v6136
        %v6784 = vpack.c.bf16 %v6139, %v6138
        %v6785 = vpack.c.bf16 %v6141, %v6140
        %v6786 = vpack.c.bf16 %v6143, %v6142
        %v6787 = vpack.c.bf16 %v6145, %v6144
        %v6788 = vpack.c.bf16 %v6147, %v6146
        %v6789 = vpack.c.bf16 %v6149, %v6148
        %v6790 = vpack.c.bf16 %v6151, %v6150
        %v6791 = vpack.c.bf16 %v6153, %v6152
        %v6792 = vpack.c.bf16 %v6155, %v6154
        %v6793 = vpack.c.bf16 %v6157, %v6156
        %v6794 = vpack.c.bf16 %v6159, %v6158
        %v6795 = vpack.c.bf16 %v6161, %v6160
        %v6796 = vpack.c.bf16 %v6163, %v6162
        %v6797 = vpack.c.bf16 %v6165, %v6164
        %v6798 = vpack.c.bf16 %v6167, %v6166
        %v6799 = vpack.c.bf16 %v6169, %v6168
        %v6800 = vpack.c.bf16 %v6171, %v6170
        %v6801 = vpack.c.bf16 %v6173, %v6172
        %v6802 = vpack.c.bf16 %v6175, %v6174
        %v6803 = vpack.c.bf16 %v6177, %v6176
        %v6804 = vpack.c.bf16 %v6179, %v6178
        %v6805 = vpack.c.bf16 %v6181, %v6180
        %v6806 = vpack.c.bf16 %v6183, %v6182
        %v6807 = vpack.c.bf16 %v6185, %v6184
        %v6808 = vpack.c.bf16 %v6187, %v6186
        %v6809 = vpack.c.bf16 %v6189, %v6188
        %v6810 = vpack.c.bf16 %v6191, %v6190
        %v6811 = vpack.c.bf16 %v6193, %v6192
        %v6812 = vpack.c.bf16 %v6195, %v6194
        %v6813 = vpack.c.bf16 %v6197, %v6196
        %v6814 = vpack.c.bf16 %v6199, %v6198
        %v6815 = vpack.c.bf16 %v6201, %v6200
        %v6816 = vpack.c.bf16 %v6203, %v6202
        %v6817 = vpack.c.bf16 %v6205, %v6204
        %v6818 = vpack.c.bf16 %v6207, %v6206
        %v6819 = vpack.c.bf16 %v6209, %v6208
        %v6820 = vpack.c.bf16 %v6211, %v6210
        %v6821 = vpack.c.bf16 %v6213, %v6212
        %v6822 = vld [vmem:[#allocation33] sm:$0xf]
        %v6823 = vld [vmem:[#allocation33 + $0x4] sm:$0xf]
        %v6824 = vld [vmem:[#allocation33 + $0x8] sm:$0xf]
        %v6825 = vld [vmem:[#allocation33 + $0xc] sm:$0xf]
        %v6830 = vunpack.c.l.b16 %v6822
        %v6831 = vunpack.c.l.b16 %v6823
        %v6832 = vunpack.c.l.b16 %v6824
        %v6833 = vunpack.c.l.b16 %v6825
        %v6834 = vpack.c.b16 %v6831, %v6830
        %v6835 = vpack.c.b16 %v6833, %v6832
        %v6839 = vsel %vm6260, %v6750, 0
        %v6842 = vsel %vm6260, %v6751, 0
        %v6845 = vsel %vm6260, %v6752, 0
        %v6848 = vsel %vm6260, %v6753, 0
        %v6851 = vsel %vm6260, %v6754, 0
        %v6854 = vsel %vm6260, %v6755, 0
        %v6857 = vsel %vm6260, %v6756, 0
        %v6860 = vsel %vm6260, %v6757, 0
        %v6863 = vsel %vm6260, %v6758, 0
        %v6866 = vsel %vm6260, %v6759, 0
        %v6869 = vsel %vm6260, %v6760, 0
        %v6872 = vsel %vm6260, %v6761, 0
        %v6875 = vsel %vm6260, %v6762, 0
        %v6878 = vsel %vm6260, %v6763, 0
        %v6881 = vsel %vm6260, %v6764, 0
        %v6884 = vsel %vm6260, %v6765, 0
        %v6887 = vsel %vm6260, %v6766, 0
        %v6890 = vsel %vm6260, %v6767, 0
        %v6893 = vsel %vm6260, %v6768, 0
        %v6896 = vsel %vm6260, %v6769, 0
        %v6899 = vsel %vm6260, %v6770, 0
        %v6902 = vsel %vm6260, %v6771, 0
        %v6905 = vsel %vm6260, %v6772, 0
        %v6908 = vsel %vm6260, %v6773, 0
        %v6911 = vsel %vm6260, %v6774, 0
        %v6914 = vsel %vm6260, %v6775, 0
        %v6917 = vsel %vm6260, %v6776, 0
        %v6920 = vsel %vm6260, %v6777, 0
        %v6923 = vsel %vm6260, %v6778, 0
        %v6926 = vsel %vm6260, %v6779, 0
        %v6929 = vsel %vm6260, %v6780, 0
        %v6932 = vsel %vm6260, %v6781, 0
        %v6935 = vsel %vm6260, %v6782, 0
        %v6938 = vsel %vm6260, %v6783, 0
        %v6941 = vsel %vm6260, %v6784, 0
        %v6944 = vsel %vm6260, %v6785, 0
        %v6947 = vsel %vm6260, %v6786, 0
        %v6950 = vsel %vm6260, %v6787, 0
        %v6953 = vsel %vm6260, %v6788, 0
        %v6956 = vsel %vm6260, %v6789, 0
        %v6959 = vsel %vm6260, %v6790, 0
        %v6962 = vsel %vm6260, %v6791, 0
        %v6965 = vsel %vm6260, %v6792, 0
        %v6968 = vsel %vm6260, %v6793, 0
        %v6971 = vsel %vm6260, %v6794, 0
        %v6974 = vsel %vm6260, %v6795, 0
        %v6977 = vsel %vm6260, %v6796, 0
        %v6980 = vsel %vm6260, %v6797, 0
        %v6983 = vsel %vm6260, %v6798, 0
        %v6986 = vsel %vm6260, %v6799, 0
        %v6989 = vsel %vm6260, %v6800, 0
        %v6992 = vsel %vm6260, %v6801, 0
        %v6995 = vsel %vm6260, %v6802, 0
        %v6998 = vsel %vm6260, %v6803, 0
        %v7001 = vsel %vm6260, %v6804, 0
        %v7004 = vsel %vm6260, %v6805, 0
        %v7007 = vsel %vm6260, %v6806, 0
        %v7010 = vsel %vm6260, %v6807, 0
        %v7013 = vsel %vm6260, %v6808, 0
        %v7016 = vsel %vm6260, %v6809, 0
        %v7019 = vsel %vm6260, %v6810, 0
        %v7022 = vsel %vm6260, %v6811, 0
        %v7025 = vsel %vm6260, %v6812, 0
        %v7028 = vsel %vm6260, %v6813, 0
        %v7031 = vsel %vm6260, %v6814, 0
        %v7034 = vsel %vm6260, %v6815, 0
        %v7037 = vsel %vm6260, %v6816, 0
        %v7040 = vsel %vm6260, %v6817, 0
        %v7043 = vsel %vm6260, %v6818, 0
        %v7046 = vsel %vm6260, %v6819, 0
        %v7049 = vsel %vm6260, %v6820, 0
        %v7052 = vsel %vm6260, %v6821, 0
        %7054 = vmatprep.subr.bf16.mxu0 0
        %7055 = vmatpush1.bf16.msra.mxu0 %v6834
        %7056 = vmatprep.subr.bf16.mxu0 0
        %7057 = vmatpush1.bf16.msra.mxu0 %v6835
        %7058 = vmatprep.subr.bf16.mxu0 0
        %7059 = vmatpush1.bf16.msra.mxu0 0
        %7060 = vmatprep.subr.bf16.mxu0 0
        %7061 = vmatpush1.bf16.msra.mxu0 0
        %7062 = vmatprep.subr.bf16.mxu0 0
        %7063 = vmatpush1.bf16.msra.mxu0 0
        %7064 = vmatprep.subr.bf16.mxu0 0
        %7065 = vmatpush1.bf16.msra.mxu0 0
        %7066 = vmatprep.subr.bf16.mxu0 0
        %7067 = vmatpush1.bf16.msra.mxu0 0
        %7068 = vmatprep.subr.bf16.mxu0 0
        %7069 = vmatpush1.bf16.msra.mxu0 0
        %7070 = vmatprep.subr.bf16.mxu0 0
        %7071 = vmatpush1.bf16.msra.mxu0 0
        %7072 = vmatprep.subr.bf16.mxu0 0
        %7073 = vmatpush1.bf16.msra.mxu0 0
        %7074 = vmatprep.subr.bf16.mxu0 0
        %7075 = vmatpush1.bf16.msra.mxu0 0
        %7076 = vmatprep.subr.bf16.mxu0 0
        %7077 = vmatpush1.bf16.msra.mxu0 0
        %7078 = vmatprep.subr.bf16.mxu0 0
        %7079 = vmatpush1.bf16.msra.mxu0 0
        %7080 = vmatprep.subr.bf16.mxu0 0
        %7081 = vmatpush1.bf16.msra.mxu0 0
        %7082 = vmatprep.subr.bf16.mxu0 0
        %7083 = vmatpush1.bf16.msra.mxu0 0
        %7084 = vmatprep.subr.bf16.mxu0 0
        %7085 = vmatpush1.bf16.msra.mxu0 0
        %7086 = vmatprep.mubr.bf16.mxu0 0
        %7087 = vmatmul.mubr.bf16.gmra.mrb[0].mxu0 %v6839
        %v7088 = vpop.f32.mrb[0].mxu0
        %v7089 = vadd.f32 0.0, %v7088
        %v7090 = vpop.f32.mrb[0].mxu0
        %v7091 = vpop.f32.mrb[0].mxu0
        %v7092 = vadd.f32 0.0, %v7091
        %v7093 = vpop.f32.mrb[0].mxu0
        %7094 = vmatprep.mubr.bf16.mxu0 0
        %7095 = vmatmul.mubr.bf16.gmra.mrb[0].mxu0 %v6842
        %v7096 = vpop.f32.mrb[0].mxu0
        %v7097 = vadd.f32 0.0, %v7096
        %v7098 = vpop.f32.mrb[0].mxu0
        %v7099 = vpop.f32.mrb[0].mxu0
        %v7100 = vadd.f32 0.0, %v7099
        %v7101 = vpop.f32.mrb[0].mxu0
        %7102 = vmatprep.mubr.bf16.mxu0 0
        %7103 = vmatmul.mubr.bf16.gmra.mrb[0].mxu0 %v6845
        %v7104 = vpop.f32.mrb[0].mxu0
        %v7105 = vadd.f32 0.0, %v7104
        %v7106 = vpop.f32.mrb[0].mxu0
        %v7107 = vpop.f32.mrb[0].mxu0
        %v7108 = vadd.f32 0.0, %v7107
        %v7109 = vpop.f32.mrb[0].mxu0
        %7110 = vmatprep.mubr.bf16.mxu0 0
        %7111 = vmatmul.mubr.bf16.gmra.mrb[0].mxu0 %v6848
        %v7112 = vpop.f32.mrb[0].mxu0
        %v7113 = vadd.f32 0.0, %v7112
        %v7114 = vpop.f32.mrb[0].mxu0
        %v7115 = vpop.f32.mrb[0].mxu0
        %v7116 = vadd.f32 0.0, %v7115
        %v7117 = vpop.f32.mrb[0].mxu0
        %7118 = vmatprep.mubr.bf16.mxu0 0
        %7119 = vmatmul.mubr.bf16.gmra.mrb[0].mxu0 %v6851
        %v7120 = vpop.f32.mrb[0].mxu0
        %v7121 = vadd.f32 0.0, %v7120
        %v7122 = vpop.f32.mrb[0].mxu0
        %v7123 = vpop.f32.mrb[0].mxu0
        %v7124 = vadd.f32 0.0, %v7123
        %v7125 = vpop.f32.mrb[0].mxu0
        %7126 = vmatprep.mubr.bf16.mxu0 0
        %7127 = vmatmul.mubr.bf16.gmra.mrb[0].mxu0 %v6854
        %v7128 = vpop.f32.mrb[0].mxu0
        %v7129 = vadd.f32 0.0, %v7128
        %v7130 = vpop.f32.mrb[0].mxu0
        %v7131 = vpop.f32.mrb[0].mxu0
        %v7132 = vadd.f32 0.0, %v7131
        %v7133 = vpop.f32.mrb[0].mxu0
        %7134 = vmatprep.mubr.bf16.mxu0 0
        %7135 = vmatmul.mubr.bf16.gmra.mrb[0].mxu0 %v6857
        %v7136 = vpop.f32.mrb[0].mxu0
        %v7137 = vadd.f32 0.0, %v7136
        %v7138 = vpop.f32.mrb[0].mxu0
        %v7139 = vpop.f32.mrb[0].mxu0
        %v7140 = vadd.f32 0.0, %v7139
        %v7141 = vpop.f32.mrb[0].mxu0
        %7142 = vmatprep.mubr.bf16.mxu0 0
        %7143 = vmatmul.mubr.bf16.gmra.mrb[0].mxu0 %v6860
        %v7144 = vpop.f32.mrb[0].mxu0
        %v7145 = vadd.f32 0.0, %v7144
        %v7146 = vpop.f32.mrb[0].mxu0
        %v7147 = vpop.f32.mrb[0].mxu0
        %v7148 = vadd.f32 0.0, %v7147
        %v7149 = vpop.f32.mrb[0].mxu0
        %7150 = vmatprep.mubr.bf16.mxu0 0
        %7151 = vmatmul.mubr.bf16.gmra.mrb[0].mxu0 %v6863
        %v7152 = vpop.f32.mrb[0].mxu0
        %v7153 = vadd.f32 0.0, %v7152
        %v7154 = vpop.f32.mrb[0].mxu0
        %v7155 = vpop.f32.mrb[0].mxu0
        %v7156 = vadd.f32 0.0, %v7155
        %v7157 = vpop.f32.mrb[0].mxu0
        %7158 = vmatprep.mubr.bf16.mxu0 0
        %7159 = vmatmul.mubr.bf16.gmra.mrb[0].mxu0 %v6866
        %v7160 = vpop.f32.mrb[0].mxu0
        %v7161 = vadd.f32 0.0, %v7160
        %v7162 = vpop.f32.mrb[0].mxu0
        %v7163 = vpop.f32.mrb[0].mxu0
        %v7164 = vadd.f32 0.0, %v7163
        %v7165 = vpop.f32.mrb[0].mxu0
        %7166 = vmatprep.mubr.bf16.mxu0 0
        %7167 = vmatmul.mubr.bf16.gmra.mrb[0].mxu0 %v6869
        %v7168 = vpop.f32.mrb[0].mxu0
        %v7169 = vadd.f32 0.0, %v7168
        %v7170 = vpop.f32.mrb[0].mxu0
        %v7171 = vpop.f32.mrb[0].mxu0
        %v7172 = vadd.f32 0.0, %v7171
        %v7173 = vpop.f32.mrb[0].mxu0
        %7174 = vmatprep.mubr.bf16.mxu0 0
        %7175 = vmatmul.mubr.bf16.gmra.mrb[0].mxu0 %v6872
        %v7176 = vpop.f32.mrb[0].mxu0
        %v7177 = vadd.f32 0.0, %v7176
        %v7178 = vpop.f32.mrb[0].mxu0
        %v7179 = vpop.f32.mrb[0].mxu0
        %v7180 = vadd.f32 0.0, %v7179
        %v7181 = vpop.f32.mrb[0].mxu0
        %7182 = vmatprep.mubr.bf16.mxu0 0
        %7183 = vmatmul.mubr.bf16.gmra.mrb[0].mxu0 %v6875
        %v7184 = vpop.f32.mrb[0].mxu0
        %v7185 = vadd.f32 0.0, %v7184
        %v7186 = vpop.f32.mrb[0].mxu0
        %v7187 = vpop.f32.mrb[0].mxu0
        %v7188 = vadd.f32 0.0, %v7187
        %v7189 = vpop.f32.mrb[0].mxu0
        %7190 = vmatprep.mubr.bf16.mxu0 0
        %7191 = vmatmul.mubr.bf16.gmra.mrb[0].mxu0 %v6878
        %v7192 = vpop.f32.mrb[0].mxu0
        %v7193 = vadd.f32 0.0, %v7192
        %v7194 = vpop.f32.mrb[0].mxu0
        %v7195 = vpop.f32.mrb[0].mxu0
        %v7196 = vadd.f32 0.0, %v7195
        %v7197 = vpop.f32.mrb[0].mxu0
        %7198 = vmatprep.mubr.bf16.mxu0 0
        %7199 = vmatmul.mubr.bf16.gmra.mrb[0].mxu0 %v6881
        %v7200 = vpop.f32.mrb[0].mxu0
        %v7201 = vadd.f32 0.0, %v7200
        %v7202 = vpop.f32.mrb[0].mxu0
        %v7203 = vpop.f32.mrb[0].mxu0
        %v7204 = vadd.f32 0.0, %v7203
        %v7205 = vpop.f32.mrb[0].mxu0
        %7206 = vmatprep.mubr.bf16.mxu0 0
        %7207 = vmatmul.mubr.bf16.gmra.mrb[0].mxu0 %v6884
        %v7208 = vpop.f32.mrb[0].mxu0
        %v7209 = vadd.f32 0.0, %v7208
        %v7210 = vpop.f32.mrb[0].mxu0
        %v7211 = vpop.f32.mrb[0].mxu0
        %v7212 = vadd.f32 0.0, %v7211
        %v7213 = vpop.f32.mrb[0].mxu0
        %7214 = vmatprep.mubr.bf16.mxu0 0
        %7215 = vmatmul.mubr.bf16.gmra.mrb[0].mxu0 %v6887
        %v7216 = vpop.f32.mrb[0].mxu0
        %v7217 = vadd.f32 0.0, %v7216
        %v7218 = vpop.f32.mrb[0].mxu0
        %v7219 = vpop.f32.mrb[0].mxu0
        %v7220 = vadd.f32 0.0, %v7219
        %v7221 = vpop.f32.mrb[0].mxu0
        %7222 = vmatprep.mubr.bf16.mxu0 0
        %7223 = vmatmul.mubr.bf16.gmra.mrb[0].mxu0 %v6890
        %v7224 = vpop.f32.mrb[0].mxu0
        %v7225 = vadd.f32 0.0, %v7224
        %v7226 = vpop.f32.mrb[0].mxu0
        %v7227 = vpop.f32.mrb[0].mxu0
        %v7228 = vadd.f32 0.0, %v7227
        %v7229 = vpop.f32.mrb[0].mxu0
        %7230 = vmatprep.mubr.bf16.mxu0 0
        %7231 = vmatmul.mubr.bf16.gmra.mrb[0].mxu0 %v6893
        %v7232 = vpop.f32.mrb[0].mxu0
        %v7233 = vadd.f32 0.0, %v7232
        %v7234 = vpop.f32.mrb[0].mxu0
        %v7235 = vpop.f32.mrb[0].mxu0
        %v7236 = vadd.f32 0.0, %v7235
        %v7237 = vpop.f32.mrb[0].mxu0
        %7238 = vmatprep.mubr.bf16.mxu0 0
        %7239 = vmatmul.mubr.bf16.gmra.mrb[0].mxu0 %v6896
        %v7240 = vpop.f32.mrb[0].mxu0
        %v7241 = vadd.f32 0.0, %v7240
        %v7242 = vpop.f32.mrb[0].mxu0
        %v7243 = vpop.f32.mrb[0].mxu0
        %v7244 = vadd.f32 0.0, %v7243
        %v7245 = vpop.f32.mrb[0].mxu0
        %7246 = vmatprep.mubr.bf16.mxu0 0
        %7247 = vmatmul.mubr.bf16.gmra.mrb[0].mxu0 %v6899
        %v7248 = vpop.f32.mrb[0].mxu0
        %v7249 = vadd.f32 0.0, %v7248
        %v7250 = vpop.f32.mrb[0].mxu0
        %v7251 = vpop.f32.mrb[0].mxu0
        %v7252 = vadd.f32 0.0, %v7251
        %v7253 = vpop.f32.mrb[0].mxu0
        %7254 = vmatprep.mubr.bf16.mxu0 0
        %7255 = vmatmul.mubr.bf16.gmra.mrb[0].mxu0 %v6902
        %v7256 = vpop.f32.mrb[0].mxu0
        %v7257 = vadd.f32 0.0, %v7256
        %v7258 = vpop.f32.mrb[0].mxu0
        %v7259 = vpop.f32.mrb[0].mxu0
        %v7260 = vadd.f32 0.0, %v7259
        %v7261 = vpop.f32.mrb[0].mxu0
        %7262 = vmatprep.mubr.bf16.mxu0 0
        %7263 = vmatmul.mubr.bf16.gmra.mrb[0].mxu0 %v6905
        %v7264 = vpop.f32.mrb[0].mxu0
        %v7265 = vadd.f32 0.0, %v7264
        %v7266 = vpop.f32.mrb[0].mxu0
        %v7267 = vpop.f32.mrb[0].mxu0
        %v7268 = vadd.f32 0.0, %v7267
        %v7269 = vpop.f32.mrb[0].mxu0
        %7270 = vmatprep.mubr.bf16.mxu0 0
        %7271 = vmatmul.mubr.bf16.gmra.mrb[0].mxu0 %v6908
        %v7272 = vpop.f32.mrb[0].mxu0
        %v7273 = vadd.f32 0.0, %v7272
        %v7274 = vpop.f32.mrb[0].mxu0
        %v7275 = vpop.f32.mrb[0].mxu0
        %v7276 = vadd.f32 0.0, %v7275
        %v7277 = vpop.f32.mrb[0].mxu0
        %7278 = vmatprep.mubr.bf16.mxu0 0
        %7279 = vmatmul.mubr.bf16.gmra.mrb[0].mxu0 %v6911
        %v7280 = vpop.f32.mrb[0].mxu0
        %v7281 = vadd.f32 0.0, %v7280
        %v7282 = vpop.f32.mrb[0].mxu0
        %v7283 = vpop.f32.mrb[0].mxu0
        %v7284 = vadd.f32 0.0, %v7283
        %v7285 = vpop.f32.mrb[0].mxu0
        %7286 = vmatprep.mubr.bf16.mxu0 0
        %7287 = vmatmul.mubr.bf16.gmra.mrb[0].mxu0 %v6914
        %v7288 = vpop.f32.mrb[0].mxu0
        %v7289 = vadd.f32 0.0, %v7288
        %v7290 = vpop.f32.mrb[0].mxu0
        %v7291 = vpop.f32.mrb[0].mxu0
        %v7292 = vadd.f32 0.0, %v7291
        %v7293 = vpop.f32.mrb[0].mxu0
        %7294 = vmatprep.mubr.bf16.mxu0 0
        %7295 = vmatmul.mubr.bf16.gmra.mrb[0].mxu0 %v6917
        %v7296 = vpop.f32.mrb[0].mxu0
        %v7297 = vadd.f32 0.0, %v7296
        %v7298 = vpop.f32.mrb[0].mxu0
        %v7299 = vpop.f32.mrb[0].mxu0
        %v7300 = vadd.f32 0.0, %v7299
        %v7301 = vpop.f32.mrb[0].mxu0
        %7302 = vmatprep.mubr.bf16.mxu0 0
        %7303 = vmatmul.mubr.bf16.gmra.mrb[0].mxu0 %v6920
        %v7304 = vpop.f32.mrb[0].mxu0
        %v7305 = vadd.f32 0.0, %v7304
        %v7306 = vpop.f32.mrb[0].mxu0
        %v7307 = vpop.f32.mrb[0].mxu0
        %v7308 = vadd.f32 0.0, %v7307
        %v7309 = vpop.f32.mrb[0].mxu0
        %7310 = vmatprep.mubr.bf16.mxu0 0
        %7311 = vmatmul.mubr.bf16.gmra.mrb[0].mxu0 %v6923
        %v7312 = vpop.f32.mrb[0].mxu0
        %v7313 = vadd.f32 0.0, %v7312
        %v7314 = vpop.f32.mrb[0].mxu0
        %v7315 = vpop.f32.mrb[0].mxu0
        %v7316 = vadd.f32 0.0, %v7315
        %v7317 = vpop.f32.mrb[0].mxu0
        %7318 = vmatprep.mubr.bf16.mxu0 0
        %7319 = vmatmul.mubr.bf16.gmra.mrb[0].mxu0 %v6926
        %v7320 = vpop.f32.mrb[0].mxu0
        %v7321 = vadd.f32 0.0, %v7320
        %v7322 = vpop.f32.mrb[0].mxu0
        %v7323 = vpop.f32.mrb[0].mxu0
        %v7324 = vadd.f32 0.0, %v7323
        %v7325 = vpop.f32.mrb[0].mxu0
        %7326 = vmatprep.mubr.bf16.mxu0 0
        %7327 = vmatmul.mubr.bf16.gmra.mrb[0].mxu0 %v6929
        %v7328 = vpop.f32.mrb[0].mxu0
        %v7329 = vadd.f32 0.0, %v7328
        %v7330 = vpop.f32.mrb[0].mxu0
        %v7331 = vpop.f32.mrb[0].mxu0
        %v7332 = vadd.f32 0.0, %v7331
        %v7333 = vpop.f32.mrb[0].mxu0
        %7334 = vmatprep.mubr.bf16.mxu0 0
        %7335 = vmatmul.mubr.bf16.gmra.mrb[0].mxu0 %v6932
        %v7336 = vpop.f32.mrb[0].mxu0
        %v7337 = vadd.f32 0.0, %v7336
        %v7338 = vpop.f32.mrb[0].mxu0
        %v7339 = vpop.f32.mrb[0].mxu0
        %v7340 = vadd.f32 0.0, %v7339
        %v7341 = vpop.f32.mrb[0].mxu0
        %7342 = vmatprep.mubr.bf16.mxu0 0
        %7343 = vmatmul.mubr.bf16.gmra.mrb[0].mxu0 %v6935
        %v7344 = vpop.f32.mrb[0].mxu0
        %v7345 = vadd.f32 0.0, %v7344
        %v7346 = vpop.f32.mrb[0].mxu0
        %v7347 = vpop.f32.mrb[0].mxu0
        %v7348 = vadd.f32 0.0, %v7347
        %v7349 = vpop.f32.mrb[0].mxu0
        %7350 = vmatprep.mubr.bf16.mxu0 0
        %7351 = vmatmul.mubr.bf16.gmra.mrb[0].mxu0 %v6938
        %v7352 = vpop.f32.mrb[0].mxu0
        %v7353 = vadd.f32 0.0, %v7352
        %v7354 = vpop.f32.mrb[0].mxu0
        %v7355 = vpop.f32.mrb[0].mxu0
        %v7356 = vadd.f32 0.0, %v7355
        %v7357 = vpop.f32.mrb[0].mxu0
        %7358 = vmatprep.mubr.bf16.mxu0 0
        %7359 = vmatmul.mubr.bf16.gmra.mrb[0].mxu0 %v6941
        %v7360 = vpop.f32.mrb[0].mxu0
        %v7361 = vadd.f32 0.0, %v7360
        %v7362 = vpop.f32.mrb[0].mxu0
        %v7363 = vpop.f32.mrb[0].mxu0
        %v7364 = vadd.f32 0.0, %v7363
        %v7365 = vpop.f32.mrb[0].mxu0
        %7366 = vmatprep.mubr.bf16.mxu0 0
        %7367 = vmatmul.mubr.bf16.gmra.mrb[0].mxu0 %v6944
        %v7368 = vpop.f32.mrb[0].mxu0
        %v7369 = vadd.f32 0.0, %v7368
        %v7370 = vpop.f32.mrb[0].mxu0
        %v7371 = vpop.f32.mrb[0].mxu0
        %v7372 = vadd.f32 0.0, %v7371
        %v7373 = vpop.f32.mrb[0].mxu0
        %7374 = vmatprep.mubr.bf16.mxu0 0
        %7375 = vmatmul.mubr.bf16.gmra.mrb[0].mxu0 %v6947
        %v7376 = vpop.f32.mrb[0].mxu0
        %v7377 = vadd.f32 0.0, %v7376
        %v7378 = vpop.f32.mrb[0].mxu0
        %v7379 = vpop.f32.mrb[0].mxu0
        %v7380 = vadd.f32 0.0, %v7379
        %v7381 = vpop.f32.mrb[0].mxu0
        %7382 = vmatprep.mubr.bf16.mxu0 0
        %7383 = vmatmul.mubr.bf16.gmra.mrb[0].mxu0 %v6950
        %v7384 = vpop.f32.mrb[0].mxu0
        %v7385 = vadd.f32 0.0, %v7384
        %v7386 = vpop.f32.mrb[0].mxu0
        %v7387 = vpop.f32.mrb[0].mxu0
        %v7388 = vadd.f32 0.0, %v7387
        %v7389 = vpop.f32.mrb[0].mxu0
        %7390 = vmatprep.mubr.bf16.mxu0 0
        %7391 = vmatmul.mubr.bf16.gmra.mrb[0].mxu0 %v6953
        %v7392 = vpop.f32.mrb[0].mxu0
        %v7393 = vadd.f32 0.0, %v7392
        %v7394 = vpop.f32.mrb[0].mxu0
        %v7395 = vpop.f32.mrb[0].mxu0
        %v7396 = vadd.f32 0.0, %v7395
        %v7397 = vpop.f32.mrb[0].mxu0
        %7398 = vmatprep.mubr.bf16.mxu0 0
        %7399 = vmatmul.mubr.bf16.gmra.mrb[0].mxu0 %v6956
        %v7400 = vpop.f32.mrb[0].mxu0
        %v7401 = vadd.f32 0.0, %v7400
        %v7402 = vpop.f32.mrb[0].mxu0
        %v7403 = vpop.f32.mrb[0].mxu0
        %v7404 = vadd.f32 0.0, %v7403
        %v7405 = vpop.f32.mrb[0].mxu0
        %7406 = vmatprep.mubr.bf16.mxu0 0
        %7407 = vmatmul.mubr.bf16.gmra.mrb[0].mxu0 %v6959
        %v7408 = vpop.f32.mrb[0].mxu0
        %v7409 = vadd.f32 0.0, %v7408
        %v7410 = vpop.f32.mrb[0].mxu0
        %v7411 = vpop.f32.mrb[0].mxu0
        %v7412 = vadd.f32 0.0, %v7411
        %v7413 = vpop.f32.mrb[0].mxu0
        %7414 = vmatprep.mubr.bf16.mxu0 0
        %7415 = vmatmul.mubr.bf16.gmra.mrb[0].mxu0 %v6962
        %v7416 = vpop.f32.mrb[0].mxu0
        %v7417 = vadd.f32 0.0, %v7416
        %v7418 = vpop.f32.mrb[0].mxu0
        %v7419 = vpop.f32.mrb[0].mxu0
        %v7420 = vadd.f32 0.0, %v7419
        %v7421 = vpop.f32.mrb[0].mxu0
        %7422 = vmatprep.mubr.bf16.mxu0 0
        %7423 = vmatmul.mubr.bf16.gmra.mrb[0].mxu0 %v6965
        %v7424 = vpop.f32.mrb[0].mxu0
        %v7425 = vadd.f32 0.0, %v7424
        %v7426 = vpop.f32.mrb[0].mxu0
        %v7427 = vpop.f32.mrb[0].mxu0
        %v7428 = vadd.f32 0.0, %v7427
        %v7429 = vpop.f32.mrb[0].mxu0
        %7430 = vmatprep.mubr.bf16.mxu0 0
        %7431 = vmatmul.mubr.bf16.gmra.mrb[0].mxu0 %v6968
        %v7432 = vpop.f32.mrb[0].mxu0
        %v7433 = vadd.f32 0.0, %v7432
        %v7434 = vpop.f32.mrb[0].mxu0
        %v7435 = vpop.f32.mrb[0].mxu0
        %v7436 = vadd.f32 0.0, %v7435
        %v7437 = vpop.f32.mrb[0].mxu0
        %7438 = vmatprep.mubr.bf16.mxu0 0
        %7439 = vmatmul.mubr.bf16.gmra.mrb[0].mxu0 %v6971
        %v7440 = vpop.f32.mrb[0].mxu0
        %v7441 = vadd.f32 0.0, %v7440
        %v7442 = vpop.f32.mrb[0].mxu0
        %v7443 = vpop.f32.mrb[0].mxu0
        %v7444 = vadd.f32 0.0, %v7443
        %v7445 = vpop.f32.mrb[0].mxu0
        %7446 = vmatprep.mubr.bf16.mxu0 0
        %7447 = vmatmul.mubr.bf16.gmra.mrb[0].mxu0 %v6974
        %v7448 = vpop.f32.mrb[0].mxu0
        %v7449 = vadd.f32 0.0, %v7448
        %v7450 = vpop.f32.mrb[0].mxu0
        %v7451 = vpop.f32.mrb[0].mxu0
        %v7452 = vadd.f32 0.0, %v7451
        %v7453 = vpop.f32.mrb[0].mxu0
        %7454 = vmatprep.mubr.bf16.mxu0 0
        %7455 = vmatmul.mubr.bf16.gmra.mrb[0].mxu0 %v6977
        %v7456 = vpop.f32.mrb[0].mxu0
        %v7457 = vadd.f32 0.0, %v7456
        %v7458 = vpop.f32.mrb[0].mxu0
        %v7459 = vpop.f32.mrb[0].mxu0
        %v7460 = vadd.f32 0.0, %v7459
        %v7461 = vpop.f32.mrb[0].mxu0
        %7462 = vmatprep.mubr.bf16.mxu0 0
        %7463 = vmatmul.mubr.bf16.gmra.mrb[0].mxu0 %v6980
        %v7464 = vpop.f32.mrb[0].mxu0
        %v7465 = vadd.f32 0.0, %v7464
        %v7466 = vpop.f32.mrb[0].mxu0
        %v7467 = vpop.f32.mrb[0].mxu0
        %v7468 = vadd.f32 0.0, %v7467
        %v7469 = vpop.f32.mrb[0].mxu0
        %7470 = vmatprep.mubr.bf16.mxu0 0
        %7471 = vmatmul.mubr.bf16.gmra.mrb[0].mxu0 %v6983
        %v7472 = vpop.f32.mrb[0].mxu0
        %v7473 = vadd.f32 0.0, %v7472
        %v7474 = vpop.f32.mrb[0].mxu0
        %v7475 = vpop.f32.mrb[0].mxu0
        %v7476 = vadd.f32 0.0, %v7475
        %v7477 = vpop.f32.mrb[0].mxu0
        %7478 = vmatprep.mubr.bf16.mxu0 0
        %7479 = vmatmul.mubr.bf16.gmra.mrb[0].mxu0 %v6986
        %v7480 = vpop.f32.mrb[0].mxu0
        %v7481 = vadd.f32 0.0, %v7480
        %v7482 = vpop.f32.mrb[0].mxu0
        %v7483 = vpop.f32.mrb[0].mxu0
        %v7484 = vadd.f32 0.0, %v7483
        %v7485 = vpop.f32.mrb[0].mxu0
        %7486 = vmatprep.mubr.bf16.mxu0 0
        %7487 = vmatmul.mubr.bf16.gmra.mrb[0].mxu0 %v6989
        %v7488 = vpop.f32.mrb[0].mxu0
        %v7489 = vadd.f32 0.0, %v7488
        %v7490 = vpop.f32.mrb[0].mxu0
        %v7491 = vpop.f32.mrb[0].mxu0
        %v7492 = vadd.f32 0.0, %v7491
        %v7493 = vpop.f32.mrb[0].mxu0
        %7494 = vmatprep.mubr.bf16.mxu0 0
        %7495 = vmatmul.mubr.bf16.gmra.mrb[0].mxu0 %v6992
        %v7496 = vpop.f32.mrb[0].mxu0
        %v7497 = vadd.f32 0.0, %v7496
        %v7498 = vpop.f32.mrb[0].mxu0
        %v7499 = vpop.f32.mrb[0].mxu0
        %v7500 = vadd.f32 0.0, %v7499
        %v7501 = vpop.f32.mrb[0].mxu0
        %7502 = vmatprep.mubr.bf16.mxu0 0
        %7503 = vmatmul.mubr.bf16.gmra.mrb[0].mxu0 %v6995
        %v7504 = vpop.f32.mrb[0].mxu0
        %v7505 = vadd.f32 0.0, %v7504
        %v7506 = vpop.f32.mrb[0].mxu0
        %v7507 = vpop.f32.mrb[0].mxu0
        %v7508 = vadd.f32 0.0, %v7507
        %v7509 = vpop.f32.mrb[0].mxu0
        %7510 = vmatprep.mubr.bf16.mxu0 0
        %7511 = vmatmul.mubr.bf16.gmra.mrb[0].mxu0 %v6998
        %v7512 = vpop.f32.mrb[0].mxu0
        %v7513 = vadd.f32 0.0, %v7512
        %v7514 = vpop.f32.mrb[0].mxu0
        %v7515 = vpop.f32.mrb[0].mxu0
        %v7516 = vadd.f32 0.0, %v7515
        %v7517 = vpop.f32.mrb[0].mxu0
        %7518 = vmatprep.mubr.bf16.mxu0 0
        %7519 = vmatmul.mubr.bf16.gmra.mrb[0].mxu0 %v7001
        %v7520 = vpop.f32.mrb[0].mxu0
        %v7521 = vadd.f32 0.0, %v7520
        %v7522 = vpop.f32.mrb[0].mxu0
        %v7523 = vpop.f32.mrb[0].mxu0
        %v7524 = vadd.f32 0.0, %v7523
        %v7525 = vpop.f32.mrb[0].mxu0
        %7526 = vmatprep.mubr.bf16.mxu0 0
        %7527 = vmatmul.mubr.bf16.gmra.mrb[0].mxu0 %v7004
        %v7528 = vpop.f32.mrb[0].mxu0
        %v7529 = vadd.f32 0.0, %v7528
        %v7530 = vpop.f32.mrb[0].mxu0
        %v7531 = vpop.f32.mrb[0].mxu0
        %v7532 = vadd.f32 0.0, %v7531
        %v7533 = vpop.f32.mrb[0].mxu0
        %7534 = vmatprep.mubr.bf16.mxu0 0
        %7535 = vmatmul.mubr.bf16.gmra.mrb[0].mxu0 %v7007
        %v7536 = vpop.f32.mrb[0].mxu0
        %v7537 = vadd.f32 0.0, %v7536
        %v7538 = vpop.f32.mrb[0].mxu0
        %v7539 = vpop.f32.mrb[0].mxu0
        %v7540 = vadd.f32 0.0, %v7539
        %v7541 = vpop.f32.mrb[0].mxu0
        %7542 = vmatprep.mubr.bf16.mxu0 0
        %7543 = vmatmul.mubr.bf16.gmra.mrb[0].mxu0 %v7010
        %v7544 = vpop.f32.mrb[0].mxu0
        %v7545 = vadd.f32 0.0, %v7544
        %v7546 = vpop.f32.mrb[0].mxu0
        %v7547 = vpop.f32.mrb[0].mxu0
        %v7548 = vadd.f32 0.0, %v7547
        %v7549 = vpop.f32.mrb[0].mxu0
        %7550 = vmatprep.mubr.bf16.mxu0 0
        %7551 = vmatmul.mubr.bf16.gmra.mrb[0].mxu0 %v7013
        %v7552 = vpop.f32.mrb[0].mxu0
        %v7553 = vadd.f32 0.0, %v7552
        %v7554 = vpop.f32.mrb[0].mxu0
        %v7555 = vpop.f32.mrb[0].mxu0
        %v7556 = vadd.f32 0.0, %v7555
        %v7557 = vpop.f32.mrb[0].mxu0
        %7558 = vmatprep.mubr.bf16.mxu0 0
        %7559 = vmatmul.mubr.bf16.gmra.mrb[0].mxu0 %v7016
        %v7560 = vpop.f32.mrb[0].mxu0
        %v7561 = vadd.f32 0.0, %v7560
        %v7562 = vpop.f32.mrb[0].mxu0
        %v7563 = vpop.f32.mrb[0].mxu0
        %v7564 = vadd.f32 0.0, %v7563
        %v7565 = vpop.f32.mrb[0].mxu0
        %7566 = vmatprep.mubr.bf16.mxu0 0
        %7567 = vmatmul.mubr.bf16.gmra.mrb[0].mxu0 %v7019
        %v7568 = vpop.f32.mrb[0].mxu0
        %v7569 = vadd.f32 0.0, %v7568
        %v7570 = vpop.f32.mrb[0].mxu0
        %v7571 = vpop.f32.mrb[0].mxu0
        %v7572 = vadd.f32 0.0, %v7571
        %v7573 = vpop.f32.mrb[0].mxu0
        %7574 = vmatprep.mubr.bf16.mxu0 0
        %7575 = vmatmul.mubr.bf16.gmra.mrb[0].mxu0 %v7022
        %v7576 = vpop.f32.mrb[0].mxu0
        %v7577 = vadd.f32 0.0, %v7576
        %v7578 = vpop.f32.mrb[0].mxu0
        %v7579 = vpop.f32.mrb[0].mxu0
        %v7580 = vadd.f32 0.0, %v7579
        %v7581 = vpop.f32.mrb[0].mxu0
        %7582 = vmatprep.mubr.bf16.mxu0 0
        %7583 = vmatmul.mubr.bf16.gmra.mrb[0].mxu0 %v7025
        %v7584 = vpop.f32.mrb[0].mxu0
        %v7585 = vadd.f32 0.0, %v7584
        %v7586 = vpop.f32.mrb[0].mxu0
        %v7587 = vpop.f32.mrb[0].mxu0
        %v7588 = vadd.f32 0.0, %v7587
        %v7589 = vpop.f32.mrb[0].mxu0
        %7590 = vmatprep.mubr.bf16.mxu0 0
        %7591 = vmatmul.mubr.bf16.gmra.mrb[0].mxu0 %v7028
        %v7592 = vpop.f32.mrb[0].mxu0
        %v7593 = vadd.f32 0.0, %v7592
        %v7594 = vpop.f32.mrb[0].mxu0
        %v7595 = vpop.f32.mrb[0].mxu0
        %v7596 = vadd.f32 0.0, %v7595
        %v7597 = vpop.f32.mrb[0].mxu0
        %7598 = vmatprep.mubr.bf16.mxu0 0
        %7599 = vmatmul.mubr.bf16.gmra.mrb[0].mxu0 %v7031
        %v7600 = vpop.f32.mrb[0].mxu0
        %v7601 = vadd.f32 0.0, %v7600
        %v7602 = vpop.f32.mrb[0].mxu0
        %v7603 = vpop.f32.mrb[0].mxu0
        %v7604 = vadd.f32 0.0, %v7603
        %v7605 = vpop.f32.mrb[0].mxu0
        %7606 = vmatprep.mubr.bf16.mxu0 0
        %7607 = vmatmul.mubr.bf16.gmra.mrb[0].mxu0 %v7034
        %v7608 = vpop.f32.mrb[0].mxu0
        %v7609 = vadd.f32 0.0, %v7608
        %v7610 = vpop.f32.mrb[0].mxu0
        %v7611 = vpop.f32.mrb[0].mxu0
        %v7612 = vadd.f32 0.0, %v7611
        %v7613 = vpop.f32.mrb[0].mxu0
        %7614 = vmatprep.mubr.bf16.mxu0 0
        %7615 = vmatmul.mubr.bf16.gmra.mrb[0].mxu0 %v7037
        %v7616 = vpop.f32.mrb[0].mxu0
        %v7617 = vadd.f32 0.0, %v7616
        %v7618 = vpop.f32.mrb[0].mxu0
        %v7619 = vpop.f32.mrb[0].mxu0
        %v7620 = vadd.f32 0.0, %v7619
        %v7621 = vpop.f32.mrb[0].mxu0
        %7622 = vmatprep.mubr.bf16.mxu0 0
        %7623 = vmatmul.mubr.bf16.gmra.mrb[0].mxu0 %v7040
        %v7624 = vpop.f32.mrb[0].mxu0
        %v7625 = vadd.f32 0.0, %v7624
        %v7626 = vpop.f32.mrb[0].mxu0
        %v7627 = vpop.f32.mrb[0].mxu0
        %v7628 = vadd.f32 0.0, %v7627
        %v7629 = vpop.f32.mrb[0].mxu0
        %7630 = vmatprep.mubr.bf16.mxu0 0
        %7631 = vmatmul.mubr.bf16.gmra.mrb[0].mxu0 %v7043
        %v7632 = vpop.f32.mrb[0].mxu0
        %v7633 = vadd.f32 0.0, %v7632
        %v7634 = vpop.f32.mrb[0].mxu0
        %v7635 = vpop.f32.mrb[0].mxu0
        %v7636 = vadd.f32 0.0, %v7635
        %v7637 = vpop.f32.mrb[0].mxu0
        %7638 = vmatprep.mubr.bf16.mxu0 0
        %7639 = vmatmul.mubr.bf16.gmra.mrb[0].mxu0 %v7046
        %v7640 = vpop.f32.mrb[0].mxu0
        %v7641 = vadd.f32 0.0, %v7640
        %v7642 = vpop.f32.mrb[0].mxu0
        %v7643 = vpop.f32.mrb[0].mxu0
        %v7644 = vadd.f32 0.0, %v7643
        %v7645 = vpop.f32.mrb[0].mxu0
        %7646 = vmatprep.mubr.bf16.mxu0 0
        %7647 = vmatmul.mubr.bf16.gmra.mrb[0].mxu0 %v7049
        %v7648 = vpop.f32.mrb[0].mxu0
        %v7649 = vadd.f32 0.0, %v7648
        %v7650 = vpop.f32.mrb[0].mxu0
        %v7651 = vpop.f32.mrb[0].mxu0
        %v7652 = vadd.f32 0.0, %v7651
        %v7653 = vpop.f32.mrb[0].mxu0
        %7654 = vmatprep.mubr.bf16.mxu0 0
        %7655 = vmatmul.mubr.bf16.gmra.mrb[0].mxu0 %v7052
        %v7656 = vpop.f32.mrb[0].mxu0
        %v7657 = vadd.f32 0.0, %v7656
        %v7658 = vpop.f32.mrb[0].mxu0
        %v7659 = vpop.f32.mrb[0].mxu0
        %v7660 = vadd.f32 0.0, %v7659
        %v7661 = vpop.f32.mrb[0].mxu0
        %7662 = vdwg.mxu0
        %v7665 = vunpack.c.l.s4 1966171168
        %v7666 = vunpack.c.0.s8 %v7665
        %v7667 = vlaneseq
        %v7668 = vshrl.u32 %v7667, 7
        %v7669 = vsub.s32 %v7666, %v7668
        %v7670 = vrot.slane %v6749, %v7669
        %v7671 = vcombine.high %v7670, %v7670
        %v7673 = vunpack.c.l.s4 1966171168
        %v7674 = vunpack.c.0.s8 %v7673
        %v7675 = vlaneseq
        %v7676 = vshrl.u32 %v7675, 7
        %v7677 = vsub.s32 %v7674, %v7676
        %v7678 = vrot.slane %v7670, %v7677
        %v7680 = vunpack.c.l.s4 1966171168
        %v7681 = vunpack.c.0.s8 %v7680
        %v7682 = vlaneseq
        %v7683 = vshrl.u32 %v7682, 7
        %v7684 = vsub.s32 %v7681, %v7683
        %v7685 = vrot.slane %v7671, %v7684
        %v7686 = vlaneseq
        %v7687 = vshrl.u32 %v7686, 7
        %v7688 = vsub.s32 0, %v7687
        %v7689 = vrot.slane %v7678, %v7688
        %v7690 = vlaneseq
        %v7691 = vshrl.u32 %v7690, 7
        %v7692 = vsub.s32 0, %v7691
        %v7693 = vrot.slane %v7685, %v7692
        %7694 = vset.pattern.permute.xlu0 0
        %7695 = vperm.xlu0 %7694, %v7689
        %v7696 = vpop.permute.xlu0 %7695
        %7698 = vset.pattern.permute.xlu0 0
        %7699 = vperm.xlu0 %7698, %v7693
        %v7700 = vpop.permute.xlu0 %7699
        %v7702 = vmul.f32 %v7696, %v7089
        %v7703 = vmul.f32 %v7696, %v7092
        %v7704 = vmul.f32 %v7696, %v7097
        %v7705 = vmul.f32 %v7696, %v7100
        %v7706 = vmul.f32 %v7696, %v7105
        %v7707 = vmul.f32 %v7696, %v7108
        %v7708 = vmul.f32 %v7696, %v7113
        %v7709 = vmul.f32 %v7696, %v7116
        %v7710 = vmul.f32 %v7696, %v7121
        %v7711 = vmul.f32 %v7696, %v7124
        %v7712 = vmul.f32 %v7696, %v7129
        %v7713 = vmul.f32 %v7696, %v7132
        %v7714 = vmul.f32 %v7696, %v7137
        %v7715 = vmul.f32 %v7696, %v7140
        %v7716 = vmul.f32 %v7696, %v7145
        %v7717 = vmul.f32 %v7696, %v7148
        %v7718 = vmul.f32 %v7696, %v7153
        %v7719 = vmul.f32 %v7696, %v7156
        %v7720 = vmul.f32 %v7696, %v7161
        %v7721 = vmul.f32 %v7696, %v7164
        %v7722 = vmul.f32 %v7696, %v7169
        %v7723 = vmul.f32 %v7696, %v7172
        %v7724 = vmul.f32 %v7696, %v7177
        %v7725 = vmul.f32 %v7696, %v7180
        %v7726 = vmul.f32 %v7696, %v7185
        %v7727 = vmul.f32 %v7696, %v7188
        %v7728 = vmul.f32 %v7696, %v7193
        %v7729 = vmul.f32 %v7696, %v7196
        %v7730 = vmul.f32 %v7696, %v7201
        %v7731 = vmul.f32 %v7696, %v7204
        %v7732 = vmul.f32 %v7696, %v7209
        %v7733 = vmul.f32 %v7696, %v7212
        %v7734 = vmul.f32 %v7696, %v7217
        %v7735 = vmul.f32 %v7696, %v7220
        %v7736 = vmul.f32 %v7696, %v7225
        %v7737 = vmul.f32 %v7696, %v7228
        %v7738 = vmul.f32 %v7696, %v7233
        %v7739 = vmul.f32 %v7696, %v7236
        %v7740 = vmul.f32 %v7696, %v7241
        %v7741 = vmul.f32 %v7696, %v7244
        %v7742 = vmul.f32 %v7696, %v7249
        %v7743 = vmul.f32 %v7696, %v7252
        %v7744 = vmul.f32 %v7696, %v7257
        %v7745 = vmul.f32 %v7696, %v7260
        %v7746 = vmul.f32 %v7696, %v7265
        %v7747 = vmul.f32 %v7696, %v7268
        %v7748 = vmul.f32 %v7696, %v7273
        %v7749 = vmul.f32 %v7696, %v7276
        %v7750 = vmul.f32 %v7696, %v7281
        %v7751 = vmul.f32 %v7696, %v7284
        %v7752 = vmul.f32 %v7696, %v7289
        %v7753 = vmul.f32 %v7696, %v7292
        %v7754 = vmul.f32 %v7696, %v7297
        %v7755 = vmul.f32 %v7696, %v7300
        %v7756 = vmul.f32 %v7696, %v7305
        %v7757 = vmul.f32 %v7696, %v7308
        %v7758 = vmul.f32 %v7696, %v7313
        %v7759 = vmul.f32 %v7696, %v7316
        %v7760 = vmul.f32 %v7696, %v7321
        %v7761 = vmul.f32 %v7696, %v7324
        %v7762 = vmul.f32 %v7696, %v7329
        %v7763 = vmul.f32 %v7696, %v7332
        %v7764 = vmul.f32 %v7696, %v7337
        %v7765 = vmul.f32 %v7696, %v7340
        %v7766 = vmul.f32 %v7696, %v7345
        %v7767 = vmul.f32 %v7696, %v7348
        %v7768 = vmul.f32 %v7696, %v7353
        %v7769 = vmul.f32 %v7696, %v7356
        %v7770 = vmul.f32 %v7696, %v7361
        %v7771 = vmul.f32 %v7696, %v7364
        %v7772 = vmul.f32 %v7696, %v7369
        %v7773 = vmul.f32 %v7696, %v7372
        %v7774 = vmul.f32 %v7700, %v7377
        %v7775 = vmul.f32 %v7700, %v7380
        %v7776 = vmul.f32 %v7700, %v7385
        %v7777 = vmul.f32 %v7700, %v7388
        %v7778 = vmul.f32 %v7700, %v7393
        %v7779 = vmul.f32 %v7700, %v7396
        %v7780 = vmul.f32 %v7700, %v7401
        %v7781 = vmul.f32 %v7700, %v7404
        %v7782 = vmul.f32 %v7700, %v7409
        %v7783 = vmul.f32 %v7700, %v7412
        %v7784 = vmul.f32 %v7700, %v7417
        %v7785 = vmul.f32 %v7700, %v7420
        %v7786 = vmul.f32 %v7700, %v7425
        %v7787 = vmul.f32 %v7700, %v7428
        %v7788 = vmul.f32 %v7700, %v7433
        %v7789 = vmul.f32 %v7700, %v7436
        %v7790 = vmul.f32 %v7700, %v7441
        %v7791 = vmul.f32 %v7700, %v7444
        %v7792 = vmul.f32 %v7700, %v7449
        %v7793 = vmul.f32 %v7700, %v7452
        %v7794 = vmul.f32 %v7700, %v7457
        %v7795 = vmul.f32 %v7700, %v7460
        %v7796 = vmul.f32 %v7700, %v7465
        %v7797 = vmul.f32 %v7700, %v7468
        %v7798 = vmul.f32 %v7700, %v7473
        %v7799 = vmul.f32 %v7700, %v7476
        %v7800 = vmul.f32 %v7700, %v7481
        %v7801 = vmul.f32 %v7700, %v7484
        %v7802 = vmul.f32 %v7700, %v7489
        %v7803 = vmul.f32 %v7700, %v7492
        %v7804 = vmul.f32 %v7700, %v7497
        %v7805 = vmul.f32 %v7700, %v7500
        %v7806 = vmul.f32 %v7700, %v7505
        %v7807 = vmul.f32 %v7700, %v7508
        %v7808 = vmul.f32 %v7700, %v7513
        %v7809 = vmul.f32 %v7700, %v7516
        %v7810 = vmul.f32 %v7700, %v7521
        %v7811 = vmul.f32 %v7700, %v7524
        %v7812 = vmul.f32 %v7700, %v7529
        %v7813 = vmul.f32 %v7700, %v7532
        %v7814 = vmul.f32 %v7700, %v7537
        %v7815 = vmul.f32 %v7700, %v7540
        %v7816 = vmul.f32 %v7700, %v7545
        %v7817 = vmul.f32 %v7700, %v7548
        %v7818 = vmul.f32 %v7700, %v7553
        %v7819 = vmul.f32 %v7700, %v7556
        %v7820 = vmul.f32 %v7700, %v7561
        %v7821 = vmul.f32 %v7700, %v7564
        %v7822 = vmul.f32 %v7700, %v7569
        %v7823 = vmul.f32 %v7700, %v7572
        %v7824 = vmul.f32 %v7700, %v7577
        %v7825 = vmul.f32 %v7700, %v7580
        %v7826 = vmul.f32 %v7700, %v7585
        %v7827 = vmul.f32 %v7700, %v7588
        %v7828 = vmul.f32 %v7700, %v7593
        %v7829 = vmul.f32 %v7700, %v7596
        %v7830 = vmul.f32 %v7700, %v7601
        %v7831 = vmul.f32 %v7700, %v7604
        %v7832 = vmul.f32 %v7700, %v7609
        %v7833 = vmul.f32 %v7700, %v7612
        %v7834 = vmul.f32 %v7700, %v7617
        %v7835 = vmul.f32 %v7700, %v7620
        %v7836 = vmul.f32 %v7700, %v7625
        %v7837 = vmul.f32 %v7700, %v7628
        %v7838 = vmul.f32 %v7700, %v7633
        %v7839 = vmul.f32 %v7700, %v7636
        %v7840 = vmul.f32 %v7700, %v7641
        %v7841 = vmul.f32 %v7700, %v7644
        %v7842 = vmul.f32 %v7700, %v7649
        %v7843 = vmul.f32 %v7700, %v7652
        %v7844 = vmul.f32 %v7700, %v7657
        %v7845 = vmul.f32 %v7700, %v7660
        %v7846 = vld [vmem:[#allocation34] sm:$0x1]
        %v7848 = vlaneseq
        %v7849 = vshrl.u32 %v7848, 7
        %v7850 = vsub.s32 0, %v7849
        %v7851 = vrot.slane %v7846, %v7850
        %v7853 = vadd.f32 %v7702, %v7851
        %v7854 = vadd.f32 %v7703, %v7851
        %v7855 = vadd.f32 %v7704, %v7851
        %v7856 = vadd.f32 %v7705, %v7851
        %v7857 = vadd.f32 %v7706, %v7851
        %v7858 = vadd.f32 %v7707, %v7851
        %v7859 = vadd.f32 %v7708, %v7851
        %v7860 = vadd.f32 %v7709, %v7851
        %v7861 = vadd.f32 %v7710, %v7851
        %v7862 = vadd.f32 %v7711, %v7851
        %v7863 = vadd.f32 %v7712, %v7851
        %v7864 = vadd.f32 %v7713, %v7851
        %v7865 = vadd.f32 %v7714, %v7851
        %v7866 = vadd.f32 %v7715, %v7851
        %v7867 = vadd.f32 %v7716, %v7851
        %v7868 = vadd.f32 %v7717, %v7851
        %v7869 = vadd.f32 %v7718, %v7851
        %v7870 = vadd.f32 %v7719, %v7851
        %v7871 = vadd.f32 %v7720, %v7851
        %v7872 = vadd.f32 %v7721, %v7851
        %v7873 = vadd.f32 %v7722, %v7851
        %v7874 = vadd.f32 %v7723, %v7851
        %v7875 = vadd.f32 %v7724, %v7851
        %v7876 = vadd.f32 %v7725, %v7851
        %v7877 = vadd.f32 %v7726, %v7851
        %v7878 = vadd.f32 %v7727, %v7851
        %v7879 = vadd.f32 %v7728, %v7851
        %v7880 = vadd.f32 %v7729, %v7851
        %v7881 = vadd.f32 %v7730, %v7851
        %v7882 = vadd.f32 %v7731, %v7851
        %v7883 = vadd.f32 %v7732, %v7851
        %v7884 = vadd.f32 %v7733, %v7851
        %v7885 = vadd.f32 %v7734, %v7851
        %v7886 = vadd.f32 %v7735, %v7851
        %v7887 = vadd.f32 %v7736, %v7851
        %v7888 = vadd.f32 %v7737, %v7851
        %v7889 = vadd.f32 %v7738, %v7851
        %v7890 = vadd.f32 %v7739, %v7851
        %v7891 = vadd.f32 %v7740, %v7851
        %v7892 = vadd.f32 %v7741, %v7851
        %v7893 = vadd.f32 %v7742, %v7851
        %v7894 = vadd.f32 %v7743, %v7851
        %v7895 = vadd.f32 %v7744, %v7851
        %v7896 = vadd.f32 %v7745, %v7851
        %v7897 = vadd.f32 %v7746, %v7851
        %v7898 = vadd.f32 %v7747, %v7851
        %v7899 = vadd.f32 %v7748, %v7851
        %v7900 = vadd.f32 %v7749, %v7851
        %v7901 = vadd.f32 %v7750, %v7851
        %v7902 = vadd.f32 %v7751, %v7851
        %v7903 = vadd.f32 %v7752, %v7851
        %v7904 = vadd.f32 %v7753, %v7851
        %v7905 = vadd.f32 %v7754, %v7851
        %v7906 = vadd.f32 %v7755, %v7851
        %v7907 = vadd.f32 %v7756, %v7851
        %v7908 = vadd.f32 %v7757, %v7851
        %v7909 = vadd.f32 %v7758, %v7851
        %v7910 = vadd.f32 %v7759, %v7851
        %v7911 = vadd.f32 %v7760, %v7851
        %v7912 = vadd.f32 %v7761, %v7851
        %v7913 = vadd.f32 %v7762, %v7851
        %v7914 = vadd.f32 %v7763, %v7851
        %v7915 = vadd.f32 %v7764, %v7851
        %v7916 = vadd.f32 %v7765, %v7851
        %v7917 = vadd.f32 %v7766, %v7851
        %v7918 = vadd.f32 %v7767, %v7851
        %v7919 = vadd.f32 %v7768, %v7851
        %v7920 = vadd.f32 %v7769, %v7851
        %v7921 = vadd.f32 %v7770, %v7851
        %v7922 = vadd.f32 %v7771, %v7851
        %v7923 = vadd.f32 %v7772, %v7851
        %v7924 = vadd.f32 %v7773, %v7851
        %v7925 = vadd.f32 %v7774, %v7851
        %v7926 = vadd.f32 %v7775, %v7851
        %v7927 = vadd.f32 %v7776, %v7851
        %v7928 = vadd.f32 %v7777, %v7851
        %v7929 = vadd.f32 %v7778, %v7851
        %v7930 = vadd.f32 %v7779, %v7851
        %v7931 = vadd.f32 %v7780, %v7851
        %v7932 = vadd.f32 %v7781, %v7851
        %v7933 = vadd.f32 %v7782, %v7851
        %v7934 = vadd.f32 %v7783, %v7851
        %v7935 = vadd.f32 %v7784, %v7851
        %v7936 = vadd.f32 %v7785, %v7851
        %v7937 = vadd.f32 %v7786, %v7851
        %v7938 = vadd.f32 %v7787, %v7851
        %v7939 = vadd.f32 %v7788, %v7851
        %v7940 = vadd.f32 %v7789, %v7851
        %v7941 = vadd.f32 %v7790, %v7851
        %v7942 = vadd.f32 %v7791, %v7851
        %v7943 = vadd.f32 %v7792, %v7851
        %v7944 = vadd.f32 %v7793, %v7851
        %v7945 = vadd.f32 %v7794, %v7851
        %v7946 = vadd.f32 %v7795, %v7851
        %v7947 = vadd.f32 %v7796, %v7851
        %v7948 = vadd.f32 %v7797, %v7851
        %v7949 = vadd.f32 %v7798, %v7851
        %v7950 = vadd.f32 %v7799, %v7851
        %v7951 = vadd.f32 %v7800, %v7851
        %v7952 = vadd.f32 %v7801, %v7851
        %v7953 = vadd.f32 %v7802, %v7851
        %v7954 = vadd.f32 %v7803, %v7851
        %v7955 = vadd.f32 %v7804, %v7851
        %v7956 = vadd.f32 %v7805, %v7851
        %v7957 = vadd.f32 %v7806, %v7851
        %v7958 = vadd.f32 %v7807, %v7851
        %v7959 = vadd.f32 %v7808, %v7851
        %v7960 = vadd.f32 %v7809, %v7851
        %v7961 = vadd.f32 %v7810, %v7851
        %v7962 = vadd.f32 %v7811, %v7851
        %v7963 = vadd.f32 %v7812, %v7851
        %v7964 = vadd.f32 %v7813, %v7851
        %v7965 = vadd.f32 %v7814, %v7851
        %v7966 = vadd.f32 %v7815, %v7851
        %v7967 = vadd.f32 %v7816, %v7851
        %v7968 = vadd.f32 %v7817, %v7851
        %v7969 = vadd.f32 %v7818, %v7851
        %v7970 = vadd.f32 %v7819, %v7851
        %v7971 = vadd.f32 %v7820, %v7851
        %v7972 = vadd.f32 %v7821, %v7851
        %v7973 = vadd.f32 %v7822, %v7851
        %v7974 = vadd.f32 %v7823, %v7851
        %v7975 = vadd.f32 %v7824, %v7851
        %v7976 = vadd.f32 %v7825, %v7851
        %v7977 = vadd.f32 %v7826, %v7851
        %v7978 = vadd.f32 %v7827, %v7851
        %v7979 = vadd.f32 %v7828, %v7851
        %v7980 = vadd.f32 %v7829, %v7851
        %v7981 = vadd.f32 %v7830, %v7851
        %v7982 = vadd.f32 %v7831, %v7851
        %v7983 = vadd.f32 %v7832, %v7851
        %v7984 = vadd.f32 %v7833, %v7851
        %v7985 = vadd.f32 %v7834, %v7851
        %v7986 = vadd.f32 %v7835, %v7851
        %v7987 = vadd.f32 %v7836, %v7851
        %v7988 = vadd.f32 %v7837, %v7851
        %v7989 = vadd.f32 %v7838, %v7851
        %v7990 = vadd.f32 %v7839, %v7851
        %v7991 = vadd.f32 %v7840, %v7851
        %v7992 = vadd.f32 %v7841, %v7851
        %v7993 = vadd.f32 %v7842, %v7851
        %v7994 = vadd.f32 %v7843, %v7851
        %v7995 = vadd.f32 %v7844, %v7851
        %v7996 = vadd.f32 %v7845, %v7851
        %v7997 = vmax.f32 %v7853, 0.0
        %v7998 = vmax.f32 %v7854, 0.0
        %v7999 = vmax.f32 %v7855, 0.0
        %v8000 = vmax.f32 %v7856, 0.0
        %v8001 = vmax.f32 %v7857, 0.0
        %v8002 = vmax.f32 %v7858, 0.0
        %v8003 = vmax.f32 %v7859, 0.0
        %v8004 = vmax.f32 %v7860, 0.0
        %v8005 = vmax.f32 %v7861, 0.0
        %v8006 = vmax.f32 %v7862, 0.0
        %v8007 = vmax.f32 %v7863, 0.0
        %v8008 = vmax.f32 %v7864, 0.0
        %v8009 = vmax.f32 %v7865, 0.0
        %v8010 = vmax.f32 %v7866, 0.0
        %v8011 = vmax.f32 %v7867, 0.0
        %v8012 = vmax.f32 %v7868, 0.0
        %v8013 = vmax.f32 %v7869, 0.0
        %v8014 = vmax.f32 %v7870, 0.0
        %v8015 = vmax.f32 %v7871, 0.0
        %v8016 = vmax.f32 %v7872, 0.0
        %v8017 = vmax.f32 %v7873, 0.0
        %v8018 = vmax.f32 %v7874, 0.0
        %v8019 = vmax.f32 %v7875, 0.0
        %v8020 = vmax.f32 %v7876, 0.0
        %v8021 = vmax.f32 %v7877, 0.0
        %v8022 = vmax.f32 %v7878, 0.0
        %v8023 = vmax.f32 %v7879, 0.0
        %v8024 = vmax.f32 %v7880, 0.0
        %v8025 = vmax.f32 %v7881, 0.0
        %v8026 = vmax.f32 %v7882, 0.0
        %v8027 = vmax.f32 %v7883, 0.0
        %v8028 = vmax.f32 %v7884, 0.0
        %v8029 = vmax.f32 %v7885, 0.0
        %v8030 = vmax.f32 %v7886, 0.0
        %v8031 = vmax.f32 %v7887, 0.0
        %v8032 = vmax.f32 %v7888, 0.0
        %v8033 = vmax.f32 %v7889, 0.0
        %v8034 = vmax.f32 %v7890, 0.0
        %v8035 = vmax.f32 %v7891, 0.0
        %v8036 = vmax.f32 %v7892, 0.0
        %v8037 = vmax.f32 %v7893, 0.0
        %v8038 = vmax.f32 %v7894, 0.0
        %v8039 = vmax.f32 %v7895, 0.0
        %v8040 = vmax.f32 %v7896, 0.0
        %v8041 = vmax.f32 %v7897, 0.0
        %v8042 = vmax.f32 %v7898, 0.0
        %v8043 = vmax.f32 %v7899, 0.0
        %v8044 = vmax.f32 %v7900, 0.0
        %v8045 = vmax.f32 %v7901, 0.0
        %v8046 = vmax.f32 %v7902, 0.0
        %v8047 = vmax.f32 %v7903, 0.0
        %v8048 = vmax.f32 %v7904, 0.0
        %v8049 = vmax.f32 %v7905, 0.0
        %v8050 = vmax.f32 %v7906, 0.0
        %v8051 = vmax.f32 %v7907, 0.0
        %v8052 = vmax.f32 %v7908, 0.0
        %v8053 = vmax.f32 %v7909, 0.0
        %v8054 = vmax.f32 %v7910, 0.0
        %v8055 = vmax.f32 %v7911, 0.0
        %v8056 = vmax.f32 %v7912, 0.0
        %v8057 = vmax.f32 %v7913, 0.0
        %v8058 = vmax.f32 %v7914, 0.0
        %v8059 = vmax.f32 %v7915, 0.0
        %v8060 = vmax.f32 %v7916, 0.0
        %v8061 = vmax.f32 %v7917, 0.0
        %v8062 = vmax.f32 %v7918, 0.0
        %v8063 = vmax.f32 %v7919, 0.0
        %v8064 = vmax.f32 %v7920, 0.0
        %v8065 = vmax.f32 %v7921, 0.0
        %v8066 = vmax.f32 %v7922, 0.0
        %v8067 = vmax.f32 %v7923, 0.0
        %v8068 = vmax.f32 %v7924, 0.0
        %v8069 = vmax.f32 %v7925, 0.0
        %v8070 = vmax.f32 %v7926, 0.0
        %v8071 = vmax.f32 %v7927, 0.0
        %v8072 = vmax.f32 %v7928, 0.0
        %v8073 = vmax.f32 %v7929, 0.0
        %v8074 = vmax.f32 %v7930, 0.0
        %v8075 = vmax.f32 %v7931, 0.0
        %v8076 = vmax.f32 %v7932, 0.0
        %v8077 = vmax.f32 %v7933, 0.0
        %v8078 = vmax.f32 %v7934, 0.0
        %v8079 = vmax.f32 %v7935, 0.0
        %v8080 = vmax.f32 %v7936, 0.0
        %v8081 = vmax.f32 %v7937, 0.0
        %v8082 = vmax.f32 %v7938, 0.0
        %v8083 = vmax.f32 %v7939, 0.0
        %v8084 = vmax.f32 %v7940, 0.0
        %v8085 = vmax.f32 %v7941, 0.0
        %v8086 = vmax.f32 %v7942, 0.0
        %v8087 = vmax.f32 %v7943, 0.0
        %v8088 = vmax.f32 %v7944, 0.0
        %v8089 = vmax.f32 %v7945, 0.0
        %v8090 = vmax.f32 %v7946, 0.0
        %v8091 = vmax.f32 %v7947, 0.0
        %v8092 = vmax.f32 %v7948, 0.0
        %v8093 = vmax.f32 %v7949, 0.0
        %v8094 = vmax.f32 %v7950, 0.0
        %v8095 = vmax.f32 %v7951, 0.0
        %v8096 = vmax.f32 %v7952, 0.0
        %v8097 = vmax.f32 %v7953, 0.0
        %v8098 = vmax.f32 %v7954, 0.0
        %v8099 = vmax.f32 %v7955, 0.0
        %v8100 = vmax.f32 %v7956, 0.0
        %v8101 = vmax.f32 %v7957, 0.0
        %v8102 = vmax.f32 %v7958, 0.0
        %v8103 = vmax.f32 %v7959, 0.0
        %v8104 = vmax.f32 %v7960, 0.0
        %v8105 = vmax.f32 %v7961, 0.0
        %v8106 = vmax.f32 %v7962, 0.0
        %v8107 = vmax.f32 %v7963, 0.0
        %v8108 = vmax.f32 %v7964, 0.0
        %v8109 = vmax.f32 %v7965, 0.0
        %v8110 = vmax.f32 %v7966, 0.0
        %v8111 = vmax.f32 %v7967, 0.0
        %v8112 = vmax.f32 %v7968, 0.0
        %v8113 = vmax.f32 %v7969, 0.0
        %v8114 = vmax.f32 %v7970, 0.0
        %v8115 = vmax.f32 %v7971, 0.0
        %v8116 = vmax.f32 %v7972, 0.0
        %v8117 = vmax.f32 %v7973, 0.0
        %v8118 = vmax.f32 %v7974, 0.0
        %v8119 = vmax.f32 %v7975, 0.0
        %v8120 = vmax.f32 %v7976, 0.0
        %v8121 = vmax.f32 %v7977, 0.0
        %v8122 = vmax.f32 %v7978, 0.0
        %v8123 = vmax.f32 %v7979, 0.0
        %v8124 = vmax.f32 %v7980, 0.0
        %v8125 = vmax.f32 %v7981, 0.0
        %v8126 = vmax.f32 %v7982, 0.0
        %v8127 = vmax.f32 %v7983, 0.0
        %v8128 = vmax.f32 %v7984, 0.0
        %v8129 = vmax.f32 %v7985, 0.0
        %v8130 = vmax.f32 %v7986, 0.0
        %v8131 = vmax.f32 %v7987, 0.0
        %v8132 = vmax.f32 %v7988, 0.0
        %v8133 = vmax.f32 %v7989, 0.0
        %v8134 = vmax.f32 %v7990, 0.0
        %v8135 = vmax.f32 %v7991, 0.0
        %v8136 = vmax.f32 %v7992, 0.0
        %v8137 = vmax.f32 %v7993, 0.0
        %v8138 = vmax.f32 %v7994, 0.0
        %v8139 = vmax.f32 %v7995, 0.0
        %v8140 = vmax.f32 %v7996, 0.0
        %v8141 = vpack.c.bf16 %v7998, %v7997
        %v8142 = vpack.c.bf16 %v8000, %v7999
        %v8143 = vpack.c.bf16 %v8002, %v8001
        %v8144 = vpack.c.bf16 %v8004, %v8003
        %v8145 = vpack.c.bf16 %v8006, %v8005
        %v8146 = vpack.c.bf16 %v8008, %v8007
        %v8147 = vpack.c.bf16 %v8010, %v8009
        %v8148 = vpack.c.bf16 %v8012, %v8011
        %v8149 = vpack.c.bf16 %v8014, %v8013
        %v8150 = vpack.c.bf16 %v8016, %v8015
        %v8151 = vpack.c.bf16 %v8018, %v8017
        %v8152 = vpack.c.bf16 %v8020, %v8019
        %v8153 = vpack.c.bf16 %v8022, %v8021
        %v8154 = vpack.c.bf16 %v8024, %v8023
        %v8155 = vpack.c.bf16 %v8026, %v8025
        %v8156 = vpack.c.bf16 %v8028, %v8027
        %v8157 = vpack.c.bf16 %v8030, %v8029
        %v8158 = vpack.c.bf16 %v8032, %v8031
        %v8159 = vpack.c.bf16 %v8034, %v8033
        %v8160 = vpack.c.bf16 %v8036, %v8035
        %v8161 = vpack.c.bf16 %v8038, %v8037
        %v8162 = vpack.c.bf16 %v8040, %v8039
        %v8163 = vpack.c.bf16 %v8042, %v8041
        %v8164 = vpack.c.bf16 %v8044, %v8043
        %v8165 = vpack.c.bf16 %v8046, %v8045
        %v8166 = vpack.c.bf16 %v8048, %v8047
        %v8167 = vpack.c.bf16 %v8050, %v8049
        %v8168 = vpack.c.bf16 %v8052, %v8051
        %v8169 = vpack.c.bf16 %v8054, %v8053
        %v8170 = vpack.c.bf16 %v8056, %v8055
        %v8171 = vpack.c.bf16 %v8058, %v8057
        %v8172 = vpack.c.bf16 %v8060, %v8059
        %v8173 = vpack.c.bf16 %v8062, %v8061
        %v8174 = vpack.c.bf16 %v8064, %v8063
        %v8175 = vpack.c.bf16 %v8066, %v8065
        %v8176 = vpack.c.bf16 %v8068, %v8067
        %v8177 = vpack.c.bf16 %v8070, %v8069
        %v8178 = vpack.c.bf16 %v8072, %v8071
        %v8179 = vpack.c.bf16 %v8074, %v8073
        %v8180 = vpack.c.bf16 %v8076, %v8075
        %v8181 = vpack.c.bf16 %v8078, %v8077
        %v8182 = vpack.c.bf16 %v8080, %v8079
        %v8183 = vpack.c.bf16 %v8082, %v8081
        %v8184 = vpack.c.bf16 %v8084, %v8083
        %v8185 = vpack.c.bf16 %v8086, %v8085
        %v8186 = vpack.c.bf16 %v8088, %v8087
        %v8187 = vpack.c.bf16 %v8090, %v8089
        %v8188 = vpack.c.bf16 %v8092, %v8091
        %v8189 = vpack.c.bf16 %v8094, %v8093
        %v8190 = vpack.c.bf16 %v8096, %v8095
        %v8191 = vpack.c.bf16 %v8098, %v8097
        %v8192 = vpack.c.bf16 %v8100, %v8099
        %v8193 = vpack.c.bf16 %v8102, %v8101
        %v8194 = vpack.c.bf16 %v8104, %v8103
        %v8195 = vpack.c.bf16 %v8106, %v8105
        %v8196 = vpack.c.bf16 %v8108, %v8107
        %v8197 = vpack.c.bf16 %v8110, %v8109
        %v8198 = vpack.c.bf16 %v8112, %v8111
        %v8199 = vpack.c.bf16 %v8114, %v8113
        %v8200 = vpack.c.bf16 %v8116, %v8115
        %v8201 = vpack.c.bf16 %v8118, %v8117
        %v8202 = vpack.c.bf16 %v8120, %v8119
        %v8203 = vpack.c.bf16 %v8122, %v8121
        %v8204 = vpack.c.bf16 %v8124, %v8123
        %v8205 = vpack.c.bf16 %v8126, %v8125
        %v8206 = vpack.c.bf16 %v8128, %v8127
        %v8207 = vpack.c.bf16 %v8130, %v8129
        %v8208 = vpack.c.bf16 %v8132, %v8131
        %v8209 = vpack.c.bf16 %v8134, %v8133
        %v8210 = vpack.c.bf16 %v8136, %v8135
        %v8211 = vpack.c.bf16 %v8138, %v8137
        %v8212 = vpack.c.bf16 %v8140, %v8139
        %v8213 = vld [vmem:[#allocation36] sm:$0xf]
        %v8214 = vld [vmem:[#allocation36 + $0x4] sm:$0xf]
        %v8217 = vunpack.c.l.b16 %v8213
        %v8218 = vunpack.c.l.b16 %v8214
        %v8219 = vpack.c.b16 %v8218, %v8217
        %v8222 = vsel %vm6666, %v8141, 0
        %v8225 = vsel %vm6666, %v8142, 0
        %v8228 = vsel %vm6666, %v8143, 0
        %v8231 = vsel %vm6666, %v8144, 0
        %v8234 = vsel %vm6666, %v8145, 0
        %v8237 = vsel %vm6666, %v8146, 0
        %v8240 = vsel %vm6666, %v8147, 0
        %v8243 = vsel %vm6666, %v8148, 0
        %v8246 = vsel %vm6666, %v8149, 0
        %v8249 = vsel %vm6666, %v8150, 0
        %v8252 = vsel %vm6666, %v8151, 0
        %v8255 = vsel %vm6666, %v8152, 0
        %v8258 = vsel %vm6666, %v8153, 0
        %v8261 = vsel %vm6666, %v8154, 0
        %v8264 = vsel %vm6666, %v8155, 0
        %v8267 = vsel %vm6666, %v8156, 0
        %v8270 = vsel %vm6666, %v8157, 0
        %v8273 = vsel %vm6666, %v8158, 0
        %v8276 = vsel %vm6666, %v8159, 0
        %v8279 = vsel %vm6666, %v8160, 0
        %v8282 = vsel %vm6666, %v8161, 0
        %v8285 = vsel %vm6666, %v8162, 0
        %v8288 = vsel %vm6666, %v8163, 0
        %v8291 = vsel %vm6666, %v8164, 0
        %v8294 = vsel %vm6666, %v8165, 0
        %v8297 = vsel %vm6666, %v8166, 0
        %v8300 = vsel %vm6666, %v8167, 0
        %v8303 = vsel %vm6666, %v8168, 0
        %v8306 = vsel %vm6666, %v8169, 0
        %v8309 = vsel %vm6666, %v8170, 0
        %v8312 = vsel %vm6666, %v8171, 0
        %v8315 = vsel %vm6666, %v8172, 0
        %v8318 = vsel %vm6666, %v8173, 0
        %v8321 = vsel %vm6666, %v8174, 0
        %v8324 = vsel %vm6666, %v8175, 0
        %v8327 = vsel %vm6666, %v8176, 0
        %v8330 = vsel %vm6666, %v8177, 0
        %v8333 = vsel %vm6666, %v8178, 0
        %v8336 = vsel %vm6666, %v8179, 0
        %v8339 = vsel %vm6666, %v8180, 0
        %v8342 = vsel %vm6666, %v8181, 0
        %v8345 = vsel %vm6666, %v8182, 0
        %v8348 = vsel %vm6666, %v8183, 0
        %v8351 = vsel %vm6666, %v8184, 0
        %v8354 = vsel %vm6666, %v8185, 0
        %v8357 = vsel %vm6666, %v8186, 0
        %v8360 = vsel %vm6666, %v8187, 0
        %v8363 = vsel %vm6666, %v8188, 0
        %v8366 = vsel %vm6666, %v8189, 0
        %v8369 = vsel %vm6666, %v8190, 0
        %v8372 = vsel %vm6666, %v8191, 0
        %v8375 = vsel %vm6666, %v8192, 0
        %v8378 = vsel %vm6666, %v8193, 0
        %v8381 = vsel %vm6666, %v8194, 0
        %v8384 = vsel %vm6666, %v8195, 0
        %v8387 = vsel %vm6666, %v8196, 0
        %v8390 = vsel %vm6666, %v8197, 0
        %v8393 = vsel %vm6666, %v8198, 0
        %v8396 = vsel %vm6666, %v8199, 0
        %v8399 = vsel %vm6666, %v8200, 0
        %v8402 = vsel %vm6666, %v8201, 0
        %v8405 = vsel %vm6666, %v8202, 0
        %v8408 = vsel %vm6666, %v8203, 0
        %v8411 = vsel %vm6666, %v8204, 0
        %v8414 = vsel %vm6666, %v8205, 0
        %v8417 = vsel %vm6666, %v8206, 0
        %v8420 = vsel %vm6666, %v8207, 0
        %v8423 = vsel %vm6666, %v8208, 0
        %v8426 = vsel %vm6666, %v8209, 0
        %v8429 = vsel %vm6666, %v8210, 0
        %v8432 = vsel %vm6666, %v8211, 0
        %v8435 = vsel %vm6666, %v8212, 0
        %8437 = vmatprep.subr.bf16.mxu0 0
        %8438 = vmatpush1.bf16.msra.mxu0 %v8219
        %8439 = vmatprep.subr.bf16.mxu0 0
        %8440 = vmatpush1.bf16.msra.mxu0 0
        %8441 = vmatprep.subr.bf16.mxu0 0
        %8442 = vmatpush1.bf16.msra.mxu0 0
        %8443 = vmatprep.subr.bf16.mxu0 0
        %8444 = vmatpush1.bf16.msra.mxu0 0
        %8445 = vmatprep.subr.bf16.mxu0 0
        %8446 = vmatpush1.bf16.msra.mxu0 0
        %8447 = vmatprep.subr.bf16.mxu0 0
        %8448 = vmatpush1.bf16.msra.mxu0 0
        %8449 = vmatprep.subr.bf16.mxu0 0
        %8450 = vmatpush1.bf16.msra.mxu0 0
        %8451 = vmatprep.subr.bf16.mxu0 0
        %8452 = vmatpush1.bf16.msra.mxu0 0
        %8453 = vmatprep.subr.bf16.mxu0 0
        %8454 = vmatpush1.bf16.msra.mxu0 0
        %8455 = vmatprep.subr.bf16.mxu0 0
        %8456 = vmatpush1.bf16.msra.mxu0 0
        %8457 = vmatprep.subr.bf16.mxu0 0
        %8458 = vmatpush1.bf16.msra.mxu0 0
        %8459 = vmatprep.subr.bf16.mxu0 0
        %8460 = vmatpush1.bf16.msra.mxu0 0
        %8461 = vmatprep.subr.bf16.mxu0 0
        %8462 = vmatpush1.bf16.msra.mxu0 0
        %8463 = vmatprep.subr.bf16.mxu0 0
        %8464 = vmatpush1.bf16.msra.mxu0 0
        %8465 = vmatprep.subr.bf16.mxu0 0
        %8466 = vmatpush1.bf16.msra.mxu0 0
        %8467 = vmatprep.subr.bf16.mxu0 0
        %8468 = vmatpush1.bf16.msra.mxu0 0
        %8469 = vmatprep.mubr.bf16.mxu0 0
        %8470 = vmatmul.mubr.bf16.gmra.mrb[0].mxu0 %v8222
        %v8471 = vpop.f32.mrb[0].mxu0
        %v8472 = vadd.f32 0.0, %v8471
        %v8473 = vpop.f32.mrb[0].mxu0
        %v8474 = vpop.f32.mrb[0].mxu0
        %v8475 = vadd.f32 0.0, %v8474
        %v8476 = vpop.f32.mrb[0].mxu0
        %8477 = vmatprep.mubr.bf16.mxu0 0
        %8478 = vmatmul.mubr.bf16.gmra.mrb[0].mxu0 %v8225
        %v8479 = vpop.f32.mrb[0].mxu0
        %v8480 = vadd.f32 0.0, %v8479
        %v8481 = vpop.f32.mrb[0].mxu0
        %v8482 = vpop.f32.mrb[0].mxu0
        %v8483 = vadd.f32 0.0, %v8482
        %v8484 = vpop.f32.mrb[0].mxu0
        %8485 = vmatprep.mubr.bf16.mxu0 0
        %8486 = vmatmul.mubr.bf16.gmra.mrb[0].mxu0 %v8228
        %v8487 = vpop.f32.mrb[0].mxu0
        %v8488 = vadd.f32 0.0, %v8487
        %v8489 = vpop.f32.mrb[0].mxu0
        %v8490 = vpop.f32.mrb[0].mxu0
        %v8491 = vadd.f32 0.0, %v8490
        %v8492 = vpop.f32.mrb[0].mxu0
        %8493 = vmatprep.mubr.bf16.mxu0 0
        %8494 = vmatmul.mubr.bf16.gmra.mrb[0].mxu0 %v8231
        %v8495 = vpop.f32.mrb[0].mxu0
        %v8496 = vadd.f32 0.0, %v8495
        %v8497 = vpop.f32.mrb[0].mxu0
        %v8498 = vpop.f32.mrb[0].mxu0
        %v8499 = vadd.f32 0.0, %v8498
        %v8500 = vpop.f32.mrb[0].mxu0
        %8501 = vmatprep.mubr.bf16.mxu0 0
        %8502 = vmatmul.mubr.bf16.gmra.mrb[0].mxu0 %v8234
        %v8503 = vpop.f32.mrb[0].mxu0
        %v8504 = vadd.f32 0.0, %v8503
        %v8505 = vpop.f32.mrb[0].mxu0
        %v8506 = vpop.f32.mrb[0].mxu0
        %v8507 = vadd.f32 0.0, %v8506
        %v8508 = vpop.f32.mrb[0].mxu0
        %8509 = vmatprep.mubr.bf16.mxu0 0
        %8510 = vmatmul.mubr.bf16.gmra.mrb[0].mxu0 %v8237
        %v8511 = vpop.f32.mrb[0].mxu0
        %v8512 = vadd.f32 0.0, %v8511
        %v8513 = vpop.f32.mrb[0].mxu0
        %v8514 = vpop.f32.mrb[0].mxu0
        %v8515 = vadd.f32 0.0, %v8514
        %v8516 = vpop.f32.mrb[0].mxu0
        %8517 = vmatprep.mubr.bf16.mxu0 0
        %8518 = vmatmul.mubr.bf16.gmra.mrb[0].mxu0 %v8240
        %v8519 = vpop.f32.mrb[0].mxu0
        %v8520 = vadd.f32 0.0, %v8519
        %v8521 = vpop.f32.mrb[0].mxu0
        %v8522 = vpop.f32.mrb[0].mxu0
        %v8523 = vadd.f32 0.0, %v8522
        %v8524 = vpop.f32.mrb[0].mxu0
        %8525 = vmatprep.mubr.bf16.mxu0 0
        %8526 = vmatmul.mubr.bf16.gmra.mrb[0].mxu0 %v8243
        %v8527 = vpop.f32.mrb[0].mxu0
        %v8528 = vadd.f32 0.0, %v8527
        %v8529 = vpop.f32.mrb[0].mxu0
        %v8530 = vpop.f32.mrb[0].mxu0
        %v8531 = vadd.f32 0.0, %v8530
        %v8532 = vpop.f32.mrb[0].mxu0
        %8533 = vmatprep.mubr.bf16.mxu0 0
        %8534 = vmatmul.mubr.bf16.gmra.mrb[0].mxu0 %v8246
        %v8535 = vpop.f32.mrb[0].mxu0
        %v8536 = vadd.f32 0.0, %v8535
        %v8537 = vpop.f32.mrb[0].mxu0
        %v8538 = vpop.f32.mrb[0].mxu0
        %v8539 = vadd.f32 0.0, %v8538
        %v8540 = vpop.f32.mrb[0].mxu0
        %8541 = vmatprep.mubr.bf16.mxu0 0
        %8542 = vmatmul.mubr.bf16.gmra.mrb[0].mxu0 %v8249
        %v8543 = vpop.f32.mrb[0].mxu0
        %v8544 = vadd.f32 0.0, %v8543
        %v8545 = vpop.f32.mrb[0].mxu0
        %v8546 = vpop.f32.mrb[0].mxu0
        %v8547 = vadd.f32 0.0, %v8546
        %v8548 = vpop.f32.mrb[0].mxu0
        %8549 = vmatprep.mubr.bf16.mxu0 0
        %8550 = vmatmul.mubr.bf16.gmra.mrb[0].mxu0 %v8252
        %v8551 = vpop.f32.mrb[0].mxu0
        %v8552 = vadd.f32 0.0, %v8551
        %v8553 = vpop.f32.mrb[0].mxu0
        %v8554 = vpop.f32.mrb[0].mxu0
        %v8555 = vadd.f32 0.0, %v8554
        %v8556 = vpop.f32.mrb[0].mxu0
        %8557 = vmatprep.mubr.bf16.mxu0 0
        %8558 = vmatmul.mubr.bf16.gmra.mrb[0].mxu0 %v8255
        %v8559 = vpop.f32.mrb[0].mxu0
        %v8560 = vadd.f32 0.0, %v8559
        %v8561 = vpop.f32.mrb[0].mxu0
        %v8562 = vpop.f32.mrb[0].mxu0
        %v8563 = vadd.f32 0.0, %v8562
        %v8564 = vpop.f32.mrb[0].mxu0
        %8565 = vmatprep.mubr.bf16.mxu0 0
        %8566 = vmatmul.mubr.bf16.gmra.mrb[0].mxu0 %v8258
        %v8567 = vpop.f32.mrb[0].mxu0
        %v8568 = vadd.f32 0.0, %v8567
        %v8569 = vpop.f32.mrb[0].mxu0
        %v8570 = vpop.f32.mrb[0].mxu0
        %v8571 = vadd.f32 0.0, %v8570
        %v8572 = vpop.f32.mrb[0].mxu0
        %8573 = vmatprep.mubr.bf16.mxu0 0
        %8574 = vmatmul.mubr.bf16.gmra.mrb[0].mxu0 %v8261
        %v8575 = vpop.f32.mrb[0].mxu0
        %v8576 = vadd.f32 0.0, %v8575
        %v8577 = vpop.f32.mrb[0].mxu0
        %v8578 = vpop.f32.mrb[0].mxu0
        %v8579 = vadd.f32 0.0, %v8578
        %v8580 = vpop.f32.mrb[0].mxu0
        %8581 = vmatprep.mubr.bf16.mxu0 0
        %8582 = vmatmul.mubr.bf16.gmra.mrb[0].mxu0 %v8264
        %v8583 = vpop.f32.mrb[0].mxu0
        %v8584 = vadd.f32 0.0, %v8583
        %v8585 = vpop.f32.mrb[0].mxu0
        %v8586 = vpop.f32.mrb[0].mxu0
        %v8587 = vadd.f32 0.0, %v8586
        %v8588 = vpop.f32.mrb[0].mxu0
        %8589 = vmatprep.mubr.bf16.mxu0 0
        %8590 = vmatmul.mubr.bf16.gmra.mrb[0].mxu0 %v8267
        %v8591 = vpop.f32.mrb[0].mxu0
        %v8592 = vadd.f32 0.0, %v8591
        %v8593 = vpop.f32.mrb[0].mxu0
        %v8594 = vpop.f32.mrb[0].mxu0
        %v8595 = vadd.f32 0.0, %v8594
        %v8596 = vpop.f32.mrb[0].mxu0
        %8597 = vmatprep.mubr.bf16.mxu0 0
        %8598 = vmatmul.mubr.bf16.gmra.mrb[0].mxu0 %v8270
        %v8599 = vpop.f32.mrb[0].mxu0
        %v8600 = vadd.f32 0.0, %v8599
        %v8601 = vpop.f32.mrb[0].mxu0
        %v8602 = vpop.f32.mrb[0].mxu0
        %v8603 = vadd.f32 0.0, %v8602
        %v8604 = vpop.f32.mrb[0].mxu0
        %8605 = vmatprep.mubr.bf16.mxu0 0
        %8606 = vmatmul.mubr.bf16.gmra.mrb[0].mxu0 %v8273
        %v8607 = vpop.f32.mrb[0].mxu0
        %v8608 = vadd.f32 0.0, %v8607
        %v8609 = vpop.f32.mrb[0].mxu0
        %v8610 = vpop.f32.mrb[0].mxu0
        %v8611 = vadd.f32 0.0, %v8610
        %v8612 = vpop.f32.mrb[0].mxu0
        %8613 = vmatprep.mubr.bf16.mxu0 0
        %8614 = vmatmul.mubr.bf16.gmra.mrb[0].mxu0 %v8276
        %v8615 = vpop.f32.mrb[0].mxu0
        %v8616 = vadd.f32 0.0, %v8615
        %v8617 = vpop.f32.mrb[0].mxu0
        %v8618 = vpop.f32.mrb[0].mxu0
        %v8619 = vadd.f32 0.0, %v8618
        %v8620 = vpop.f32.mrb[0].mxu0
        %8621 = vmatprep.mubr.bf16.mxu0 0
        %8622 = vmatmul.mubr.bf16.gmra.mrb[0].mxu0 %v8279
        %v8623 = vpop.f32.mrb[0].mxu0
        %v8624 = vadd.f32 0.0, %v8623
        %v8625 = vpop.f32.mrb[0].mxu0
        %v8626 = vpop.f32.mrb[0].mxu0
        %v8627 = vadd.f32 0.0, %v8626
        %v8628 = vpop.f32.mrb[0].mxu0
        %8629 = vmatprep.mubr.bf16.mxu0 0
        %8630 = vmatmul.mubr.bf16.gmra.mrb[0].mxu0 %v8282
        %v8631 = vpop.f32.mrb[0].mxu0
        %v8632 = vadd.f32 0.0, %v8631
        %v8633 = vpop.f32.mrb[0].mxu0
        %v8634 = vpop.f32.mrb[0].mxu0
        %v8635 = vadd.f32 0.0, %v8634
        %v8636 = vpop.f32.mrb[0].mxu0
        %8637 = vmatprep.mubr.bf16.mxu0 0
        %8638 = vmatmul.mubr.bf16.gmra.mrb[0].mxu0 %v8285
        %v8639 = vpop.f32.mrb[0].mxu0
        %v8640 = vadd.f32 0.0, %v8639
        %v8641 = vpop.f32.mrb[0].mxu0
        %v8642 = vpop.f32.mrb[0].mxu0
        %v8643 = vadd.f32 0.0, %v8642
        %v8644 = vpop.f32.mrb[0].mxu0
        %8645 = vmatprep.mubr.bf16.mxu0 0
        %8646 = vmatmul.mubr.bf16.gmra.mrb[0].mxu0 %v8288
        %v8647 = vpop.f32.mrb[0].mxu0
        %v8648 = vadd.f32 0.0, %v8647
        %v8649 = vpop.f32.mrb[0].mxu0
        %v8650 = vpop.f32.mrb[0].mxu0
        %v8651 = vadd.f32 0.0, %v8650
        %v8652 = vpop.f32.mrb[0].mxu0
        %8653 = vmatprep.mubr.bf16.mxu0 0
        %8654 = vmatmul.mubr.bf16.gmra.mrb[0].mxu0 %v8291
        %v8655 = vpop.f32.mrb[0].mxu0
        %v8656 = vadd.f32 0.0, %v8655
        %v8657 = vpop.f32.mrb[0].mxu0
        %v8658 = vpop.f32.mrb[0].mxu0
        %v8659 = vadd.f32 0.0, %v8658
        %v8660 = vpop.f32.mrb[0].mxu0
        %8661 = vmatprep.mubr.bf16.mxu0 0
        %8662 = vmatmul.mubr.bf16.gmra.mrb[0].mxu0 %v8294
        %v8663 = vpop.f32.mrb[0].mxu0
        %v8664 = vadd.f32 0.0, %v8663
        %v8665 = vpop.f32.mrb[0].mxu0
        %v8666 = vpop.f32.mrb[0].mxu0
        %v8667 = vadd.f32 0.0, %v8666
        %v8668 = vpop.f32.mrb[0].mxu0
        %8669 = vmatprep.mubr.bf16.mxu0 0
        %8670 = vmatmul.mubr.bf16.gmra.mrb[0].mxu0 %v8297
        %v8671 = vpop.f32.mrb[0].mxu0
        %v8672 = vadd.f32 0.0, %v8671
        %v8673 = vpop.f32.mrb[0].mxu0
        %v8674 = vpop.f32.mrb[0].mxu0
        %v8675 = vadd.f32 0.0, %v8674
        %v8676 = vpop.f32.mrb[0].mxu0
        %8677 = vmatprep.mubr.bf16.mxu0 0
        %8678 = vmatmul.mubr.bf16.gmra.mrb[0].mxu0 %v8300
        %v8679 = vpop.f32.mrb[0].mxu0
        %v8680 = vadd.f32 0.0, %v8679
        %v8681 = vpop.f32.mrb[0].mxu0
        %v8682 = vpop.f32.mrb[0].mxu0
        %v8683 = vadd.f32 0.0, %v8682
        %v8684 = vpop.f32.mrb[0].mxu0
        %8685 = vmatprep.mubr.bf16.mxu0 0
        %8686 = vmatmul.mubr.bf16.gmra.mrb[0].mxu0 %v8303
        %v8687 = vpop.f32.mrb[0].mxu0
        %v8688 = vadd.f32 0.0, %v8687
        %v8689 = vpop.f32.mrb[0].mxu0
        %v8690 = vpop.f32.mrb[0].mxu0
        %v8691 = vadd.f32 0.0, %v8690
        %v8692 = vpop.f32.mrb[0].mxu0
        %8693 = vmatprep.mubr.bf16.mxu0 0
        %8694 = vmatmul.mubr.bf16.gmra.mrb[0].mxu0 %v8306
        %v8695 = vpop.f32.mrb[0].mxu0
        %v8696 = vadd.f32 0.0, %v8695
        %v8697 = vpop.f32.mrb[0].mxu0
        %v8698 = vpop.f32.mrb[0].mxu0
        %v8699 = vadd.f32 0.0, %v8698
        %v8700 = vpop.f32.mrb[0].mxu0
        %8701 = vmatprep.mubr.bf16.mxu0 0
        %8702 = vmatmul.mubr.bf16.gmra.mrb[0].mxu0 %v8309
        %v8703 = vpop.f32.mrb[0].mxu0
        %v8704 = vadd.f32 0.0, %v8703
        %v8705 = vpop.f32.mrb[0].mxu0
        %v8706 = vpop.f32.mrb[0].mxu0
        %v8707 = vadd.f32 0.0, %v8706
        %v8708 = vpop.f32.mrb[0].mxu0
        %8709 = vmatprep.mubr.bf16.mxu0 0
        %8710 = vmatmul.mubr.bf16.gmra.mrb[0].mxu0 %v8312
        %v8711 = vpop.f32.mrb[0].mxu0
        %v8712 = vadd.f32 0.0, %v8711
        %v8713 = vpop.f32.mrb[0].mxu0
        %v8714 = vpop.f32.mrb[0].mxu0
        %v8715 = vadd.f32 0.0, %v8714
        %v8716 = vpop.f32.mrb[0].mxu0
        %8717 = vmatprep.mubr.bf16.mxu0 0
        %8718 = vmatmul.mubr.bf16.gmra.mrb[0].mxu0 %v8315
        %v8719 = vpop.f32.mrb[0].mxu0
        %v8720 = vadd.f32 0.0, %v8719
        %v8721 = vpop.f32.mrb[0].mxu0
        %v8722 = vpop.f32.mrb[0].mxu0
        %v8723 = vadd.f32 0.0, %v8722
        %v8724 = vpop.f32.mrb[0].mxu0
        %8725 = vmatprep.mubr.bf16.mxu0 0
        %8726 = vmatmul.mubr.bf16.gmra.mrb[0].mxu0 %v8318
        %v8727 = vpop.f32.mrb[0].mxu0
        %v8728 = vadd.f32 0.0, %v8727
        %v8729 = vpop.f32.mrb[0].mxu0
        %v8730 = vpop.f32.mrb[0].mxu0
        %v8731 = vadd.f32 0.0, %v8730
        %v8732 = vpop.f32.mrb[0].mxu0
        %8733 = vmatprep.mubr.bf16.mxu0 0
        %8734 = vmatmul.mubr.bf16.gmra.mrb[0].mxu0 %v8321
        %v8735 = vpop.f32.mrb[0].mxu0
        %v8736 = vadd.f32 0.0, %v8735
        %v8737 = vpop.f32.mrb[0].mxu0
        %v8738 = vpop.f32.mrb[0].mxu0
        %v8739 = vadd.f32 0.0, %v8738
        %v8740 = vpop.f32.mrb[0].mxu0
        %8741 = vmatprep.mubr.bf16.mxu0 0
        %8742 = vmatmul.mubr.bf16.gmra.mrb[0].mxu0 %v8324
        %v8743 = vpop.f32.mrb[0].mxu0
        %v8744 = vadd.f32 0.0, %v8743
        %v8745 = vpop.f32.mrb[0].mxu0
        %v8746 = vpop.f32.mrb[0].mxu0
        %v8747 = vadd.f32 0.0, %v8746
        %v8748 = vpop.f32.mrb[0].mxu0
        %8749 = vmatprep.mubr.bf16.mxu0 0
        %8750 = vmatmul.mubr.bf16.gmra.mrb[0].mxu0 %v8327
        %v8751 = vpop.f32.mrb[0].mxu0
        %v8752 = vadd.f32 0.0, %v8751
        %v8753 = vpop.f32.mrb[0].mxu0
        %v8754 = vpop.f32.mrb[0].mxu0
        %v8755 = vadd.f32 0.0, %v8754
        %v8756 = vpop.f32.mrb[0].mxu0
        %8757 = vmatprep.mubr.bf16.mxu0 0
        %8758 = vmatmul.mubr.bf16.gmra.mrb[0].mxu0 %v8330
        %v8759 = vpop.f32.mrb[0].mxu0
        %v8760 = vadd.f32 0.0, %v8759
        %v8761 = vpop.f32.mrb[0].mxu0
        %v8762 = vpop.f32.mrb[0].mxu0
        %v8763 = vadd.f32 0.0, %v8762
        %v8764 = vpop.f32.mrb[0].mxu0
        %8765 = vmatprep.mubr.bf16.mxu0 0
        %8766 = vmatmul.mubr.bf16.gmra.mrb[0].mxu0 %v8333
        %v8767 = vpop.f32.mrb[0].mxu0
        %v8768 = vadd.f32 0.0, %v8767
        %v8769 = vpop.f32.mrb[0].mxu0
        %v8770 = vpop.f32.mrb[0].mxu0
        %v8771 = vadd.f32 0.0, %v8770
        %v8772 = vpop.f32.mrb[0].mxu0
        %8773 = vmatprep.mubr.bf16.mxu0 0
        %8774 = vmatmul.mubr.bf16.gmra.mrb[0].mxu0 %v8336
        %v8775 = vpop.f32.mrb[0].mxu0
        %v8776 = vadd.f32 0.0, %v8775
        %v8777 = vpop.f32.mrb[0].mxu0
        %v8778 = vpop.f32.mrb[0].mxu0
        %v8779 = vadd.f32 0.0, %v8778
        %v8780 = vpop.f32.mrb[0].mxu0
        %8781 = vmatprep.mubr.bf16.mxu0 0
        %8782 = vmatmul.mubr.bf16.gmra.mrb[0].mxu0 %v8339
        %v8783 = vpop.f32.mrb[0].mxu0
        %v8784 = vadd.f32 0.0, %v8783
        %v8785 = vpop.f32.mrb[0].mxu0
        %v8786 = vpop.f32.mrb[0].mxu0
        %v8787 = vadd.f32 0.0, %v8786
        %v8788 = vpop.f32.mrb[0].mxu0
        %8789 = vmatprep.mubr.bf16.mxu0 0
        %8790 = vmatmul.mubr.bf16.gmra.mrb[0].mxu0 %v8342
        %v8791 = vpop.f32.mrb[0].mxu0
        %v8792 = vadd.f32 0.0, %v8791
        %v8793 = vpop.f32.mrb[0].mxu0
        %v8794 = vpop.f32.mrb[0].mxu0
        %v8795 = vadd.f32 0.0, %v8794
        %v8796 = vpop.f32.mrb[0].mxu0
        %8797 = vmatprep.mubr.bf16.mxu0 0
        %8798 = vmatmul.mubr.bf16.gmra.mrb[0].mxu0 %v8345
        %v8799 = vpop.f32.mrb[0].mxu0
        %v8800 = vadd.f32 0.0, %v8799
        %v8801 = vpop.f32.mrb[0].mxu0
        %v8802 = vpop.f32.mrb[0].mxu0
        %v8803 = vadd.f32 0.0, %v8802
        %v8804 = vpop.f32.mrb[0].mxu0
        %8805 = vmatprep.mubr.bf16.mxu0 0
        %8806 = vmatmul.mubr.bf16.gmra.mrb[0].mxu0 %v8348
        %v8807 = vpop.f32.mrb[0].mxu0
        %v8808 = vadd.f32 0.0, %v8807
        %v8809 = vpop.f32.mrb[0].mxu0
        %v8810 = vpop.f32.mrb[0].mxu0
        %v8811 = vadd.f32 0.0, %v8810
        %v8812 = vpop.f32.mrb[0].mxu0
        %8813 = vmatprep.mubr.bf16.mxu0 0
        %8814 = vmatmul.mubr.bf16.gmra.mrb[0].mxu0 %v8351
        %v8815 = vpop.f32.mrb[0].mxu0
        %v8816 = vadd.f32 0.0, %v8815
        %v8817 = vpop.f32.mrb[0].mxu0
        %v8818 = vpop.f32.mrb[0].mxu0
        %v8819 = vadd.f32 0.0, %v8818
        %v8820 = vpop.f32.mrb[0].mxu0
        %8821 = vmatprep.mubr.bf16.mxu0 0
        %8822 = vmatmul.mubr.bf16.gmra.mrb[0].mxu0 %v8354
        %v8823 = vpop.f32.mrb[0].mxu0
        %v8824 = vadd.f32 0.0, %v8823
        %v8825 = vpop.f32.mrb[0].mxu0
        %v8826 = vpop.f32.mrb[0].mxu0
        %v8827 = vadd.f32 0.0, %v8826
        %v8828 = vpop.f32.mrb[0].mxu0
        %8829 = vmatprep.mubr.bf16.mxu0 0
        %8830 = vmatmul.mubr.bf16.gmra.mrb[0].mxu0 %v8357
        %v8831 = vpop.f32.mrb[0].mxu0
        %v8832 = vadd.f32 0.0, %v8831
        %v8833 = vpop.f32.mrb[0].mxu0
        %v8834 = vpop.f32.mrb[0].mxu0
        %v8835 = vadd.f32 0.0, %v8834
        %v8836 = vpop.f32.mrb[0].mxu0
        %8837 = vmatprep.mubr.bf16.mxu0 0
        %8838 = vmatmul.mubr.bf16.gmra.mrb[0].mxu0 %v8360
        %v8839 = vpop.f32.mrb[0].mxu0
        %v8840 = vadd.f32 0.0, %v8839
        %v8841 = vpop.f32.mrb[0].mxu0
        %v8842 = vpop.f32.mrb[0].mxu0
        %v8843 = vadd.f32 0.0, %v8842
        %v8844 = vpop.f32.mrb[0].mxu0
        %8845 = vmatprep.mubr.bf16.mxu0 0
        %8846 = vmatmul.mubr.bf16.gmra.mrb[0].mxu0 %v8363
        %v8847 = vpop.f32.mrb[0].mxu0
        %v8848 = vadd.f32 0.0, %v8847
        %v8849 = vpop.f32.mrb[0].mxu0
        %v8850 = vpop.f32.mrb[0].mxu0
        %v8851 = vadd.f32 0.0, %v8850
        %v8852 = vpop.f32.mrb[0].mxu0
        %8853 = vmatprep.mubr.bf16.mxu0 0
        %8854 = vmatmul.mubr.bf16.gmra.mrb[0].mxu0 %v8366
        %v8855 = vpop.f32.mrb[0].mxu0
        %v8856 = vadd.f32 0.0, %v8855
        %v8857 = vpop.f32.mrb[0].mxu0
        %v8858 = vpop.f32.mrb[0].mxu0
        %v8859 = vadd.f32 0.0, %v8858
        %v8860 = vpop.f32.mrb[0].mxu0
        %8861 = vmatprep.mubr.bf16.mxu0 0
        %8862 = vmatmul.mubr.bf16.gmra.mrb[0].mxu0 %v8369
        %v8863 = vpop.f32.mrb[0].mxu0
        %v8864 = vadd.f32 0.0, %v8863
        %v8865 = vpop.f32.mrb[0].mxu0
        %v8866 = vpop.f32.mrb[0].mxu0
        %v8867 = vadd.f32 0.0, %v8866
        %v8868 = vpop.f32.mrb[0].mxu0
        %8869 = vmatprep.mubr.bf16.mxu0 0
        %8870 = vmatmul.mubr.bf16.gmra.mrb[0].mxu0 %v8372
        %v8871 = vpop.f32.mrb[0].mxu0
        %v8872 = vadd.f32 0.0, %v8871
        %v8873 = vpop.f32.mrb[0].mxu0
        %v8874 = vpop.f32.mrb[0].mxu0
        %v8875 = vadd.f32 0.0, %v8874
        %v8876 = vpop.f32.mrb[0].mxu0
        %8877 = vmatprep.mubr.bf16.mxu0 0
        %8878 = vmatmul.mubr.bf16.gmra.mrb[0].mxu0 %v8375
        %v8879 = vpop.f32.mrb[0].mxu0
        %v8880 = vadd.f32 0.0, %v8879
        %v8881 = vpop.f32.mrb[0].mxu0
        %v8882 = vpop.f32.mrb[0].mxu0
        %v8883 = vadd.f32 0.0, %v8882
        %v8884 = vpop.f32.mrb[0].mxu0
        %8885 = vmatprep.mubr.bf16.mxu0 0
        %8886 = vmatmul.mubr.bf16.gmra.mrb[0].mxu0 %v8378
        %v8887 = vpop.f32.mrb[0].mxu0
        %v8888 = vadd.f32 0.0, %v8887
        %v8889 = vpop.f32.mrb[0].mxu0
        %v8890 = vpop.f32.mrb[0].mxu0
        %v8891 = vadd.f32 0.0, %v8890
        %v8892 = vpop.f32.mrb[0].mxu0
        %8893 = vmatprep.mubr.bf16.mxu0 0
        %8894 = vmatmul.mubr.bf16.gmra.mrb[0].mxu0 %v8381
        %v8895 = vpop.f32.mrb[0].mxu0
        %v8896 = vadd.f32 0.0, %v8895
        %v8897 = vpop.f32.mrb[0].mxu0
        %v8898 = vpop.f32.mrb[0].mxu0
        %v8899 = vadd.f32 0.0, %v8898
        %v8900 = vpop.f32.mrb[0].mxu0
        %8901 = vmatprep.mubr.bf16.mxu0 0
        %8902 = vmatmul.mubr.bf16.gmra.mrb[0].mxu0 %v8384
        %v8903 = vpop.f32.mrb[0].mxu0
        %v8904 = vadd.f32 0.0, %v8903
        %v8905 = vpop.f32.mrb[0].mxu0
        %v8906 = vpop.f32.mrb[0].mxu0
        %v8907 = vadd.f32 0.0, %v8906
        %v8908 = vpop.f32.mrb[0].mxu0
        %8909 = vmatprep.mubr.bf16.mxu0 0
        %8910 = vmatmul.mubr.bf16.gmra.mrb[0].mxu0 %v8387
        %v8911 = vpop.f32.mrb[0].mxu0
        %v8912 = vadd.f32 0.0, %v8911
        %v8913 = vpop.f32.mrb[0].mxu0
        %v8914 = vpop.f32.mrb[0].mxu0
        %v8915 = vadd.f32 0.0, %v8914
        %v8916 = vpop.f32.mrb[0].mxu0
        %8917 = vmatprep.mubr.bf16.mxu0 0
        %8918 = vmatmul.mubr.bf16.gmra.mrb[0].mxu0 %v8390
        %v8919 = vpop.f32.mrb[0].mxu0
        %v8920 = vadd.f32 0.0, %v8919
        %v8921 = vpop.f32.mrb[0].mxu0
        %v8922 = vpop.f32.mrb[0].mxu0
        %v8923 = vadd.f32 0.0, %v8922
        %v8924 = vpop.f32.mrb[0].mxu0
        %8925 = vmatprep.mubr.bf16.mxu0 0
        %8926 = vmatmul.mubr.bf16.gmra.mrb[0].mxu0 %v8393
        %v8927 = vpop.f32.mrb[0].mxu0
        %v8928 = vadd.f32 0.0, %v8927
        %v8929 = vpop.f32.mrb[0].mxu0
        %v8930 = vpop.f32.mrb[0].mxu0
        %v8931 = vadd.f32 0.0, %v8930
        %v8932 = vpop.f32.mrb[0].mxu0
        %8933 = vmatprep.mubr.bf16.mxu0 0
        %8934 = vmatmul.mubr.bf16.gmra.mrb[0].mxu0 %v8396
        %v8935 = vpop.f32.mrb[0].mxu0
        %v8936 = vadd.f32 0.0, %v8935
        %v8937 = vpop.f32.mrb[0].mxu0
        %v8938 = vpop.f32.mrb[0].mxu0
        %v8939 = vadd.f32 0.0, %v8938
        %v8940 = vpop.f32.mrb[0].mxu0
        %8941 = vmatprep.mubr.bf16.mxu0 0
        %8942 = vmatmul.mubr.bf16.gmra.mrb[0].mxu0 %v8399
        %v8943 = vpop.f32.mrb[0].mxu0
        %v8944 = vadd.f32 0.0, %v8943
        %v8945 = vpop.f32.mrb[0].mxu0
        %v8946 = vpop.f32.mrb[0].mxu0
        %v8947 = vadd.f32 0.0, %v8946
        %v8948 = vpop.f32.mrb[0].mxu0
        %8949 = vmatprep.mubr.bf16.mxu0 0
        %8950 = vmatmul.mubr.bf16.gmra.mrb[0].mxu0 %v8402
        %v8951 = vpop.f32.mrb[0].mxu0
        %v8952 = vadd.f32 0.0, %v8951
        %v8953 = vpop.f32.mrb[0].mxu0
        %v8954 = vpop.f32.mrb[0].mxu0
        %v8955 = vadd.f32 0.0, %v8954
        %v8956 = vpop.f32.mrb[0].mxu0
        %8957 = vmatprep.mubr.bf16.mxu0 0
        %8958 = vmatmul.mubr.bf16.gmra.mrb[0].mxu0 %v8405
        %v8959 = vpop.f32.mrb[0].mxu0
        %v8960 = vadd.f32 0.0, %v8959
        %v8961 = vpop.f32.mrb[0].mxu0
        %v8962 = vpop.f32.mrb[0].mxu0
        %v8963 = vadd.f32 0.0, %v8962
        %v8964 = vpop.f32.mrb[0].mxu0
        %8965 = vmatprep.mubr.bf16.mxu0 0
        %8966 = vmatmul.mubr.bf16.gmra.mrb[0].mxu0 %v8408
        %v8967 = vpop.f32.mrb[0].mxu0
        %v8968 = vadd.f32 0.0, %v8967
        %v8969 = vpop.f32.mrb[0].mxu0
        %v8970 = vpop.f32.mrb[0].mxu0
        %v8971 = vadd.f32 0.0, %v8970
        %v8972 = vpop.f32.mrb[0].mxu0
        %8973 = vmatprep.mubr.bf16.mxu0 0
        %8974 = vmatmul.mubr.bf16.gmra.mrb[0].mxu0 %v8411
        %v8975 = vpop.f32.mrb[0].mxu0
        %v8976 = vadd.f32 0.0, %v8975
        %v8977 = vpop.f32.mrb[0].mxu0
        %v8978 = vpop.f32.mrb[0].mxu0
        %v8979 = vadd.f32 0.0, %v8978
        %v8980 = vpop.f32.mrb[0].mxu0
        %8981 = vmatprep.mubr.bf16.mxu0 0
        %8982 = vmatmul.mubr.bf16.gmra.mrb[0].mxu0 %v8414
        %v8983 = vpop.f32.mrb[0].mxu0
        %v8984 = vadd.f32 0.0, %v8983
        %v8985 = vpop.f32.mrb[0].mxu0
        %v8986 = vpop.f32.mrb[0].mxu0
        %v8987 = vadd.f32 0.0, %v8986
        %v8988 = vpop.f32.mrb[0].mxu0
        %8989 = vmatprep.mubr.bf16.mxu0 0
        %8990 = vmatmul.mubr.bf16.gmra.mrb[0].mxu0 %v8417
        %v8991 = vpop.f32.mrb[0].mxu0
        %v8992 = vadd.f32 0.0, %v8991
        %v8993 = vpop.f32.mrb[0].mxu0
        %v8994 = vpop.f32.mrb[0].mxu0
        %v8995 = vadd.f32 0.0, %v8994
        %v8996 = vpop.f32.mrb[0].mxu0
        %8997 = vmatprep.mubr.bf16.mxu0 0
        %8998 = vmatmul.mubr.bf16.gmra.mrb[0].mxu0 %v8420
        %v8999 = vpop.f32.mrb[0].mxu0
        %v9000 = vadd.f32 0.0, %v8999
        %v9001 = vpop.f32.mrb[0].mxu0
        %v9002 = vpop.f32.mrb[0].mxu0
        %v9003 = vadd.f32 0.0, %v9002
        %v9004 = vpop.f32.mrb[0].mxu0
        %9005 = vmatprep.mubr.bf16.mxu0 0
        %9006 = vmatmul.mubr.bf16.gmra.mrb[0].mxu0 %v8423
        %v9007 = vpop.f32.mrb[0].mxu0
        %v9008 = vadd.f32 0.0, %v9007
        %v9009 = vpop.f32.mrb[0].mxu0
        %v9010 = vpop.f32.mrb[0].mxu0
        %v9011 = vadd.f32 0.0, %v9010
        %v9012 = vpop.f32.mrb[0].mxu0
        %9013 = vmatprep.mubr.bf16.mxu0 0
        %9014 = vmatmul.mubr.bf16.gmra.mrb[0].mxu0 %v8426
        %v9015 = vpop.f32.mrb[0].mxu0
        %v9016 = vadd.f32 0.0, %v9015
        %v9017 = vpop.f32.mrb[0].mxu0
        %v9018 = vpop.f32.mrb[0].mxu0
        %v9019 = vadd.f32 0.0, %v9018
        %v9020 = vpop.f32.mrb[0].mxu0
        %9021 = vmatprep.mubr.bf16.mxu0 0
        %9022 = vmatmul.mubr.bf16.gmra.mrb[0].mxu0 %v8429
        %v9023 = vpop.f32.mrb[0].mxu0
        %v9024 = vadd.f32 0.0, %v9023
        %v9025 = vpop.f32.mrb[0].mxu0
        %v9026 = vpop.f32.mrb[0].mxu0
        %v9027 = vadd.f32 0.0, %v9026
        %v9028 = vpop.f32.mrb[0].mxu0
        %9029 = vmatprep.mubr.bf16.mxu0 0
        %9030 = vmatmul.mubr.bf16.gmra.mrb[0].mxu0 %v8432
        %v9031 = vpop.f32.mrb[0].mxu0
        %v9032 = vadd.f32 0.0, %v9031
        %v9033 = vpop.f32.mrb[0].mxu0
        %v9034 = vpop.f32.mrb[0].mxu0
        %v9035 = vadd.f32 0.0, %v9034
        %v9036 = vpop.f32.mrb[0].mxu0
        %9037 = vmatprep.mubr.bf16.mxu0 0
        %9038 = vmatmul.mubr.bf16.gmra.mrb[0].mxu0 %v8435
        %v9039 = vpop.f32.mrb[0].mxu0
        %v9040 = vadd.f32 0.0, %v9039
        %v9041 = vpop.f32.mrb[0].mxu0
        %v9042 = vpop.f32.mrb[0].mxu0
        %v9043 = vadd.f32 0.0, %v9042
        %v9044 = vpop.f32.mrb[0].mxu0
        %9045 = vdwg.mxu0
        %v9046 = vlaneseq
        %v9047 = vshrl.u32 %v9046, 7
        %v9048 = vadd.s32 %v9047, 8
        %v9049 = vadd.s32 %v9047, 16
        %vm9050 = vcmp.lt.s32.totalorder %v9047, 16
        %vm9051 = vcmp.lt.s32.totalorder %v9048, 16
        %vm9052 = vcmp.lt.s32.totalorder %v9049, 16
        %v9053 = vsel %vm9050, 1, 0
        %v9054 = vsel %vm9051, 1, 0
        %v9055 = vsel %vm9052, 1, 0
        %vm9056 = vcmp.eq.s32.totalorder %v9053, 1
        %vm9057 = vcmp.eq.s32.totalorder %v9054, 1
        %vm9058 = vcmp.eq.s32.totalorder %v9055, 1
        %v9059 = vsel %vm9056, %v8472, 0.0
        %v9060 = vsel %vm9057, %v8475, 0.0
        %v9061 = vsel %vm9058, %v8480, 0.0
        %v9062 = vsel %vm9056, %v8483, 0.0
        %v9063 = vsel %vm9057, %v8488, 0.0
        %v9064 = vsel %vm9058, %v8491, 0.0
        %v9065 = vsel %vm9056, %v8496, 0.0
        %v9066 = vsel %vm9057, %v8499, 0.0
        %v9067 = vsel %vm9058, %v8504, 0.0
        %v9068 = vsel %vm9056, %v8507, 0.0
        %v9069 = vsel %vm9057, %v8512, 0.0
        %v9070 = vsel %vm9058, %v8515, 0.0
        %v9071 = vsel %vm9056, %v8520, 0.0
        %v9072 = vsel %vm9057, %v8523, 0.0
        %v9073 = vsel %vm9058, %v8528, 0.0
        %v9074 = vsel %vm9056, %v8531, 0.0
        %v9075 = vsel %vm9057, %v8536, 0.0
        %v9076 = vsel %vm9058, %v8539, 0.0
        %v9077 = vsel %vm9056, %v8544, 0.0
        %v9078 = vsel %vm9057, %v8547, 0.0
        %v9079 = vsel %vm9058, %v8552, 0.0
        %v9080 = vsel %vm9056, %v8555, 0.0
        %v9081 = vsel %vm9057, %v8560, 0.0
        %v9082 = vsel %vm9058, %v8563, 0.0
        %v9083 = vsel %vm9056, %v8568, 0.0
        %v9084 = vsel %vm9057, %v8571, 0.0
        %v9085 = vsel %vm9058, %v8576, 0.0
        %v9086 = vsel %vm9056, %v8579, 0.0
        %v9087 = vsel %vm9057, %v8584, 0.0
        %v9088 = vsel %vm9058, %v8587, 0.0
        %v9089 = vsel %vm9056, %v8592, 0.0
        %v9090 = vsel %vm9057, %v8595, 0.0
        %v9091 = vsel %vm9058, %v8600, 0.0
        %v9092 = vsel %vm9056, %v8603, 0.0
        %v9093 = vsel %vm9057, %v8608, 0.0
        %v9094 = vsel %vm9058, %v8611, 0.0
        %v9095 = vsel %vm9056, %v8616, 0.0
        %v9096 = vsel %vm9057, %v8619, 0.0
        %v9097 = vsel %vm9058, %v8624, 0.0
        %v9098 = vsel %vm9056, %v8627, 0.0
        %v9099 = vsel %vm9057, %v8632, 0.0
        %v9100 = vsel %vm9058, %v8635, 0.0
        %v9101 = vsel %vm9056, %v8640, 0.0
        %v9102 = vsel %vm9057, %v8643, 0.0
        %v9103 = vsel %vm9058, %v8648, 0.0
        %v9104 = vsel %vm9056, %v8651, 0.0
        %v9105 = vsel %vm9057, %v8656, 0.0
        %v9106 = vsel %vm9058, %v8659, 0.0
        %v9107 = vsel %vm9056, %v8664, 0.0
        %v9108 = vsel %vm9057, %v8667, 0.0
        %v9109 = vsel %vm9058, %v8672, 0.0
        %v9110 = vsel %vm9056, %v8675, 0.0
        %v9111 = vsel %vm9057, %v8680, 0.0
        %v9112 = vsel %vm9058, %v8683, 0.0
        %v9113 = vsel %vm9056, %v8688, 0.0
        %v9114 = vsel %vm9057, %v8691, 0.0
        %v9115 = vsel %vm9058, %v8696, 0.0
        %v9116 = vsel %vm9056, %v8699, 0.0
        %v9117 = vsel %vm9057, %v8704, 0.0
        %v9118 = vsel %vm9058, %v8707, 0.0
        %v9119 = vsel %vm9056, %v8712, 0.0
        %v9120 = vsel %vm9057, %v8715, 0.0
        %v9121 = vsel %vm9058, %v8720, 0.0
        %v9122 = vsel %vm9056, %v8723, 0.0
        %v9123 = vsel %vm9057, %v8728, 0.0
        %v9124 = vsel %vm9058, %v8731, 0.0
        %v9125 = vsel %vm9056, %v8736, 0.0
        %v9126 = vsel %vm9057, %v8739, 0.0
        %v9127 = vsel %vm9058, %v8744, 0.0
        %v9128 = vsel %vm9056, %v8747, 0.0
        %v9129 = vsel %vm9057, %v8752, 0.0
        %v9130 = vsel %vm9058, %v8755, 0.0
        %v9131 = vsel %vm9056, %v8760, 0.0
        %v9132 = vsel %vm9057, %v8763, 0.0
        %v9133 = vsel %vm9058, %v8768, 0.0
        %v9134 = vsel %vm9056, %v8771, 0.0
        %v9135 = vsel %vm9057, %v8776, 0.0
        %v9136 = vsel %vm9058, %v8779, 0.0
        %v9137 = vsel %vm9056, %v8784, 0.0
        %v9138 = vsel %vm9057, %v8787, 0.0
        %v9139 = vsel %vm9058, %v8792, 0.0
        %v9140 = vsel %vm9056, %v8795, 0.0
        %v9141 = vsel %vm9057, %v8800, 0.0
        %v9142 = vsel %vm9058, %v8803, 0.0
        %v9143 = vsel %vm9056, %v8808, 0.0
        %v9144 = vsel %vm9057, %v8811, 0.0
        %v9145 = vsel %vm9058, %v8816, 0.0
        %v9146 = vsel %vm9056, %v8819, 0.0
        %v9147 = vsel %vm9057, %v8824, 0.0
        %v9148 = vsel %vm9058, %v8827, 0.0
        %v9149 = vsel %vm9056, %v8832, 0.0
        %v9150 = vsel %vm9057, %v8835, 0.0
        %v9151 = vsel %vm9058, %v8840, 0.0
        %v9152 = vsel %vm9056, %v8843, 0.0
        %v9153 = vsel %vm9057, %v8848, 0.0
        %v9154 = vsel %vm9058, %v8851, 0.0
        %v9155 = vsel %vm9056, %v8856, 0.0
        %v9156 = vsel %vm9057, %v8859, 0.0
        %v9157 = vsel %vm9058, %v8864, 0.0
        %v9158 = vsel %vm9056, %v8867, 0.0
        %v9159 = vsel %vm9057, %v8872, 0.0
        %v9160 = vsel %vm9058, %v8875, 0.0
        %v9161 = vsel %vm9056, %v8880, 0.0
        %v9162 = vsel %vm9057, %v8883, 0.0
        %v9163 = vsel %vm9058, %v8888, 0.0
        %v9164 = vsel %vm9056, %v8891, 0.0
        %v9165 = vsel %vm9057, %v8896, 0.0
        %v9166 = vsel %vm9058, %v8899, 0.0
        %v9167 = vsel %vm9056, %v8904, 0.0
        %v9168 = vsel %vm9057, %v8907, 0.0
        %v9169 = vsel %vm9058, %v8912, 0.0
        %v9170 = vsel %vm9056, %v8915, 0.0
        %v9171 = vsel %vm9057, %v8920, 0.0
        %v9172 = vsel %vm9058, %v8923, 0.0
        %v9173 = vsel %vm9056, %v8928, 0.0
        %v9174 = vsel %vm9057, %v8931, 0.0
        %v9175 = vsel %vm9058, %v8936, 0.0
        %v9176 = vsel %vm9056, %v8939, 0.0
        %v9177 = vsel %vm9057, %v8944, 0.0
        %v9178 = vsel %vm9058, %v8947, 0.0
        %v9179 = vsel %vm9056, %v8952, 0.0
        %v9180 = vsel %vm9057, %v8955, 0.0
        %v9181 = vsel %vm9058, %v8960, 0.0
        %v9182 = vsel %vm9056, %v8963, 0.0
        %v9183 = vsel %vm9057, %v8968, 0.0
        %v9184 = vsel %vm9058, %v8971, 0.0
        %v9185 = vsel %vm9056, %v8976, 0.0
        %v9186 = vsel %vm9057, %v8979, 0.0
        %v9187 = vsel %vm9058, %v8984, 0.0
        %v9188 = vsel %vm9056, %v8987, 0.0
        %v9189 = vsel %vm9057, %v8992, 0.0
        %v9190 = vsel %vm9058, %v8995, 0.0
        %v9191 = vsel %vm9056, %v9000, 0.0
        %v9192 = vsel %vm9057, %v9003, 0.0
        %v9193 = vsel %vm9058, %v9008, 0.0
        %v9194 = vsel %vm9056, %v9011, 0.0
        %v9195 = vsel %vm9057, %v9016, 0.0
        %v9196 = vsel %vm9058, %v9019, 0.0
        %v9197 = vsel %vm9056, %v9024, 0.0
        %v9198 = vsel %vm9057, %v9027, 0.0
        %v9199 = vsel %vm9058, %v9032, 0.0
        %v9200 = vsel %vm9056, %v9035, 0.0
        %v9201 = vsel %vm9057, %v9040, 0.0
        %v9202 = vsel %vm9058, %v9043, 0.0
        %vm9203 = vcmask 7168
        %v9204 = vsel %vm9203, %v9059, 0.0
        %v9205 = vsel %vm9203, %v9060, 0.0
        %v9206 = vadd.f32 %v9204, %v9205
        %v9207 = vsel %vm9203, %v9061, 0.0
        %v9208 = vadd.f32 %v9206, %v9207
        %v9209 = vrot.slane %v9208, 4
        %v9210 = vadd.f32 %v9208, %v9209
        %v9211 = vrot.slane %v9210, 2
        %v9212 = vadd.f32 %v9210, %v9211
        %v9213 = vrot.slane %v9212, 1
        %v9214 = vadd.f32 %v9212, %v9213
        %v9215 = vsel %vm9203, %v9062, 0.0
        %v9216 = vsel %vm9203, %v9063, 0.0
        %v9217 = vadd.f32 %v9215, %v9216
        %v9218 = vsel %vm9203, %v9064, 0.0
        %v9219 = vadd.f32 %v9217, %v9218
        %v9220 = vrot.slane %v9219, 4
        %v9221 = vadd.f32 %v9219, %v9220
        %v9222 = vrot.slane %v9221, 2
        %v9223 = vadd.f32 %v9221, %v9222
        %v9224 = vrot.slane %v9223, 1
        %v9225 = vadd.f32 %v9223, %v9224
        %v9226 = vsel %vm9203, %v9065, 0.0
        %v9227 = vsel %vm9203, %v9066, 0.0
        %v9228 = vadd.f32 %v9226, %v9227
        %v9229 = vsel %vm9203, %v9067, 0.0
        %v9230 = vadd.f32 %v9228, %v9229
        %v9231 = vrot.slane %v9230, 4
        %v9232 = vadd.f32 %v9230, %v9231
        %v9233 = vrot.slane %v9232, 2
        %v9234 = vadd.f32 %v9232, %v9233
        %v9235 = vrot.slane %v9234, 1
        %v9236 = vadd.f32 %v9234, %v9235
        %v9237 = vsel %vm9203, %v9068, 0.0
        %v9238 = vsel %vm9203, %v9069, 0.0
        %v9239 = vadd.f32 %v9237, %v9238
        %v9240 = vsel %vm9203, %v9070, 0.0
        %v9241 = vadd.f32 %v9239, %v9240
        %v9242 = vrot.slane %v9241, 4
        %v9243 = vadd.f32 %v9241, %v9242
        %v9244 = vrot.slane %v9243, 2
        %v9245 = vadd.f32 %v9243, %v9244
        %v9246 = vrot.slane %v9245, 1
        %v9247 = vadd.f32 %v9245, %v9246
        %v9248 = vsel %vm9203, %v9071, 0.0
        %v9249 = vsel %vm9203, %v9072, 0.0
        %v9250 = vadd.f32 %v9248, %v9249
        %v9251 = vsel %vm9203, %v9073, 0.0
        %v9252 = vadd.f32 %v9250, %v9251
        %v9253 = vrot.slane %v9252, 4
        %v9254 = vadd.f32 %v9252, %v9253
        %v9255 = vrot.slane %v9254, 2
        %v9256 = vadd.f32 %v9254, %v9255
        %v9257 = vrot.slane %v9256, 1
        %v9258 = vadd.f32 %v9256, %v9257
        %v9259 = vsel %vm9203, %v9074, 0.0
        %v9260 = vsel %vm9203, %v9075, 0.0
        %v9261 = vadd.f32 %v9259, %v9260
        %v9262 = vsel %vm9203, %v9076, 0.0
        %v9263 = vadd.f32 %v9261, %v9262
        %v9264 = vrot.slane %v9263, 4
        %v9265 = vadd.f32 %v9263, %v9264
        %v9266 = vrot.slane %v9265, 2
        %v9267 = vadd.f32 %v9265, %v9266
        %v9268 = vrot.slane %v9267, 1
        %v9269 = vadd.f32 %v9267, %v9268
        %v9270 = vsel %vm9203, %v9077, 0.0
        %v9271 = vsel %vm9203, %v9078, 0.0
        %v9272 = vadd.f32 %v9270, %v9271
        %v9273 = vsel %vm9203, %v9079, 0.0
        %v9274 = vadd.f32 %v9272, %v9273
        %v9275 = vrot.slane %v9274, 4
        %v9276 = vadd.f32 %v9274, %v9275
        %v9277 = vrot.slane %v9276, 2
        %v9278 = vadd.f32 %v9276, %v9277
        %v9279 = vrot.slane %v9278, 1
        %v9280 = vadd.f32 %v9278, %v9279
        %v9281 = vsel %vm9203, %v9080, 0.0
        %v9282 = vsel %vm9203, %v9081, 0.0
        %v9283 = vadd.f32 %v9281, %v9282
        %v9284 = vsel %vm9203, %v9082, 0.0
        %v9285 = vadd.f32 %v9283, %v9284
        %v9286 = vrot.slane %v9285, 4
        %v9287 = vadd.f32 %v9285, %v9286
        %v9288 = vrot.slane %v9287, 2
        %v9289 = vadd.f32 %v9287, %v9288
        %v9290 = vrot.slane %v9289, 1
        %v9291 = vadd.f32 %v9289, %v9290
        %v9292 = vsel %vm9203, %v9083, 0.0
        %v9293 = vsel %vm9203, %v9084, 0.0
        %v9294 = vadd.f32 %v9292, %v9293
        %v9295 = vsel %vm9203, %v9085, 0.0
        %v9296 = vadd.f32 %v9294, %v9295
        %v9297 = vrot.slane %v9296, 4
        %v9298 = vadd.f32 %v9296, %v9297
        %v9299 = vrot.slane %v9298, 2
        %v9300 = vadd.f32 %v9298, %v9299
        %v9301 = vrot.slane %v9300, 1
        %v9302 = vadd.f32 %v9300, %v9301
        %v9303 = vsel %vm9203, %v9086, 0.0
        %v9304 = vsel %vm9203, %v9087, 0.0
        %v9305 = vadd.f32 %v9303, %v9304
        %v9306 = vsel %vm9203, %v9088, 0.0
        %v9307 = vadd.f32 %v9305, %v9306
        %v9308 = vrot.slane %v9307, 4
        %v9309 = vadd.f32 %v9307, %v9308
        %v9310 = vrot.slane %v9309, 2
        %v9311 = vadd.f32 %v9309, %v9310
        %v9312 = vrot.slane %v9311, 1
        %v9313 = vadd.f32 %v9311, %v9312
        %v9314 = vsel %vm9203, %v9089, 0.0
        %v9315 = vsel %vm9203, %v9090, 0.0
        %v9316 = vadd.f32 %v9314, %v9315
        %v9317 = vsel %vm9203, %v9091, 0.0
        %v9318 = vadd.f32 %v9316, %v9317
        %v9319 = vrot.slane %v9318, 4
        %v9320 = vadd.f32 %v9318, %v9319
        %v9321 = vrot.slane %v9320, 2
        %v9322 = vadd.f32 %v9320, %v9321
        %v9323 = vrot.slane %v9322, 1
        %v9324 = vadd.f32 %v9322, %v9323
        %v9325 = vsel %vm9203, %v9092, 0.0
        %v9326 = vsel %vm9203, %v9093, 0.0
        %v9327 = vadd.f32 %v9325, %v9326
        %v9328 = vsel %vm9203, %v9094, 0.0
        %v9329 = vadd.f32 %v9327, %v9328
        %v9330 = vrot.slane %v9329, 4
        %v9331 = vadd.f32 %v9329, %v9330
        %v9332 = vrot.slane %v9331, 2
        %v9333 = vadd.f32 %v9331, %v9332
        %v9334 = vrot.slane %v9333, 1
        %v9335 = vadd.f32 %v9333, %v9334
        %v9336 = vsel %vm9203, %v9095, 0.0
        %v9337 = vsel %vm9203, %v9096, 0.0
        %v9338 = vadd.f32 %v9336, %v9337
        %v9339 = vsel %vm9203, %v9097, 0.0
        %v9340 = vadd.f32 %v9338, %v9339
        %v9341 = vrot.slane %v9340, 4
        %v9342 = vadd.f32 %v9340, %v9341
        %v9343 = vrot.slane %v9342, 2
        %v9344 = vadd.f32 %v9342, %v9343
        %v9345 = vrot.slane %v9344, 1
        %v9346 = vadd.f32 %v9344, %v9345
        %v9347 = vsel %vm9203, %v9098, 0.0
        %v9348 = vsel %vm9203, %v9099, 0.0
        %v9349 = vadd.f32 %v9347, %v9348
        %v9350 = vsel %vm9203, %v9100, 0.0
        %v9351 = vadd.f32 %v9349, %v9350
        %v9352 = vrot.slane %v9351, 4
        %v9353 = vadd.f32 %v9351, %v9352
        %v9354 = vrot.slane %v9353, 2
        %v9355 = vadd.f32 %v9353, %v9354
        %v9356 = vrot.slane %v9355, 1
        %v9357 = vadd.f32 %v9355, %v9356
        %v9358 = vsel %vm9203, %v9101, 0.0
        %v9359 = vsel %vm9203, %v9102, 0.0
        %v9360 = vadd.f32 %v9358, %v9359
        %v9361 = vsel %vm9203, %v9103, 0.0
        %v9362 = vadd.f32 %v9360, %v9361
        %v9363 = vrot.slane %v9362, 4
        %v9364 = vadd.f32 %v9362, %v9363
        %v9365 = vrot.slane %v9364, 2
        %v9366 = vadd.f32 %v9364, %v9365
        %v9367 = vrot.slane %v9366, 1
        %v9368 = vadd.f32 %v9366, %v9367
        %v9369 = vsel %vm9203, %v9104, 0.0
        %v9370 = vsel %vm9203, %v9105, 0.0
        %v9371 = vadd.f32 %v9369, %v9370
        %v9372 = vsel %vm9203, %v9106, 0.0
        %v9373 = vadd.f32 %v9371, %v9372
        %v9374 = vrot.slane %v9373, 4
        %v9375 = vadd.f32 %v9373, %v9374
        %v9376 = vrot.slane %v9375, 2
        %v9377 = vadd.f32 %v9375, %v9376
        %v9378 = vrot.slane %v9377, 1
        %v9379 = vadd.f32 %v9377, %v9378
        %v9380 = vsel %vm9203, %v9107, 0.0
        %v9381 = vsel %vm9203, %v9108, 0.0
        %v9382 = vadd.f32 %v9380, %v9381
        %v9383 = vsel %vm9203, %v9109, 0.0
        %v9384 = vadd.f32 %v9382, %v9383
        %v9385 = vrot.slane %v9384, 4
        %v9386 = vadd.f32 %v9384, %v9385
        %v9387 = vrot.slane %v9386, 2
        %v9388 = vadd.f32 %v9386, %v9387
        %v9389 = vrot.slane %v9388, 1
        %v9390 = vadd.f32 %v9388, %v9389
        %v9391 = vsel %vm9203, %v9110, 0.0
        %v9392 = vsel %vm9203, %v9111, 0.0
        %v9393 = vadd.f32 %v9391, %v9392
        %v9394 = vsel %vm9203, %v9112, 0.0
        %v9395 = vadd.f32 %v9393, %v9394
        %v9396 = vrot.slane %v9395, 4
        %v9397 = vadd.f32 %v9395, %v9396
        %v9398 = vrot.slane %v9397, 2
        %v9399 = vadd.f32 %v9397, %v9398
        %v9400 = vrot.slane %v9399, 1
        %v9401 = vadd.f32 %v9399, %v9400
        %v9402 = vsel %vm9203, %v9113, 0.0
        %v9403 = vsel %vm9203, %v9114, 0.0
        %v9404 = vadd.f32 %v9402, %v9403
        %v9405 = vsel %vm9203, %v9115, 0.0
        %v9406 = vadd.f32 %v9404, %v9405
        %v9407 = vrot.slane %v9406, 4
        %v9408 = vadd.f32 %v9406, %v9407
        %v9409 = vrot.slane %v9408, 2
        %v9410 = vadd.f32 %v9408, %v9409
        %v9411 = vrot.slane %v9410, 1
        %v9412 = vadd.f32 %v9410, %v9411
        %v9413 = vsel %vm9203, %v9116, 0.0
        %v9414 = vsel %vm9203, %v9117, 0.0
        %v9415 = vadd.f32 %v9413, %v9414
        %v9416 = vsel %vm9203, %v9118, 0.0
        %v9417 = vadd.f32 %v9415, %v9416
        %v9418 = vrot.slane %v9417, 4
        %v9419 = vadd.f32 %v9417, %v9418
        %v9420 = vrot.slane %v9419, 2
        %v9421 = vadd.f32 %v9419, %v9420
        %v9422 = vrot.slane %v9421, 1
        %v9423 = vadd.f32 %v9421, %v9422
        %v9424 = vsel %vm9203, %v9119, 0.0
        %v9425 = vsel %vm9203, %v9120, 0.0
        %v9426 = vadd.f32 %v9424, %v9425
        %v9427 = vsel %vm9203, %v9121, 0.0
        %v9428 = vadd.f32 %v9426, %v9427
        %v9429 = vrot.slane %v9428, 4
        %v9430 = vadd.f32 %v9428, %v9429
        %v9431 = vrot.slane %v9430, 2
        %v9432 = vadd.f32 %v9430, %v9431
        %v9433 = vrot.slane %v9432, 1
        %v9434 = vadd.f32 %v9432, %v9433
        %v9435 = vsel %vm9203, %v9122, 0.0
        %v9436 = vsel %vm9203, %v9123, 0.0
        %v9437 = vadd.f32 %v9435, %v9436
        %v9438 = vsel %vm9203, %v9124, 0.0
        %v9439 = vadd.f32 %v9437, %v9438
        %v9440 = vrot.slane %v9439, 4
        %v9441 = vadd.f32 %v9439, %v9440
        %v9442 = vrot.slane %v9441, 2
        %v9443 = vadd.f32 %v9441, %v9442
        %v9444 = vrot.slane %v9443, 1
        %v9445 = vadd.f32 %v9443, %v9444
        %v9446 = vsel %vm9203, %v9125, 0.0
        %v9447 = vsel %vm9203, %v9126, 0.0
        %v9448 = vadd.f32 %v9446, %v9447
        %v9449 = vsel %vm9203, %v9127, 0.0
        %v9450 = vadd.f32 %v9448, %v9449
        %v9451 = vrot.slane %v9450, 4
        %v9452 = vadd.f32 %v9450, %v9451
        %v9453 = vrot.slane %v9452, 2
        %v9454 = vadd.f32 %v9452, %v9453
        %v9455 = vrot.slane %v9454, 1
        %v9456 = vadd.f32 %v9454, %v9455
        %v9457 = vsel %vm9203, %v9128, 0.0
        %v9458 = vsel %vm9203, %v9129, 0.0
        %v9459 = vadd.f32 %v9457, %v9458
        %v9460 = vsel %vm9203, %v9130, 0.0
        %v9461 = vadd.f32 %v9459, %v9460
        %v9462 = vrot.slane %v9461, 4
        %v9463 = vadd.f32 %v9461, %v9462
        %v9464 = vrot.slane %v9463, 2
        %v9465 = vadd.f32 %v9463, %v9464
        %v9466 = vrot.slane %v9465, 1
        %v9467 = vadd.f32 %v9465, %v9466
        %v9468 = vsel %vm9203, %v9131, 0.0
        %v9469 = vsel %vm9203, %v9132, 0.0
        %v9470 = vadd.f32 %v9468, %v9469
        %v9471 = vsel %vm9203, %v9133, 0.0
        %v9472 = vadd.f32 %v9470, %v9471
        %v9473 = vrot.slane %v9472, 4
        %v9474 = vadd.f32 %v9472, %v9473
        %v9475 = vrot.slane %v9474, 2
        %v9476 = vadd.f32 %v9474, %v9475
        %v9477 = vrot.slane %v9476, 1
        %v9478 = vadd.f32 %v9476, %v9477
        %v9479 = vsel %vm9203, %v9134, 0.0
        %v9480 = vsel %vm9203, %v9135, 0.0
        %v9481 = vadd.f32 %v9479, %v9480
        %v9482 = vsel %vm9203, %v9136, 0.0
        %v9483 = vadd.f32 %v9481, %v9482
        %v9484 = vrot.slane %v9483, 4
        %v9485 = vadd.f32 %v9483, %v9484
        %v9486 = vrot.slane %v9485, 2
        %v9487 = vadd.f32 %v9485, %v9486
        %v9488 = vrot.slane %v9487, 1
        %v9489 = vadd.f32 %v9487, %v9488
        %v9490 = vsel %vm9203, %v9137, 0.0
        %v9491 = vsel %vm9203, %v9138, 0.0
        %v9492 = vadd.f32 %v9490, %v9491
        %v9493 = vsel %vm9203, %v9139, 0.0
        %v9494 = vadd.f32 %v9492, %v9493
        %v9495 = vrot.slane %v9494, 4
        %v9496 = vadd.f32 %v9494, %v9495
        %v9497 = vrot.slane %v9496, 2
        %v9498 = vadd.f32 %v9496, %v9497
        %v9499 = vrot.slane %v9498, 1
        %v9500 = vadd.f32 %v9498, %v9499
        %v9501 = vsel %vm9203, %v9140, 0.0
        %v9502 = vsel %vm9203, %v9141, 0.0
        %v9503 = vadd.f32 %v9501, %v9502
        %v9504 = vsel %vm9203, %v9142, 0.0
        %v9505 = vadd.f32 %v9503, %v9504
        %v9506 = vrot.slane %v9505, 4
        %v9507 = vadd.f32 %v9505, %v9506
        %v9508 = vrot.slane %v9507, 2
        %v9509 = vadd.f32 %v9507, %v9508
        %v9510 = vrot.slane %v9509, 1
        %v9511 = vadd.f32 %v9509, %v9510
        %v9512 = vsel %vm9203, %v9143, 0.0
        %v9513 = vsel %vm9203, %v9144, 0.0
        %v9514 = vadd.f32 %v9512, %v9513
        %v9515 = vsel %vm9203, %v9145, 0.0
        %v9516 = vadd.f32 %v9514, %v9515
        %v9517 = vrot.slane %v9516, 4
        %v9518 = vadd.f32 %v9516, %v9517
        %v9519 = vrot.slane %v9518, 2
        %v9520 = vadd.f32 %v9518, %v9519
        %v9521 = vrot.slane %v9520, 1
        %v9522 = vadd.f32 %v9520, %v9521
        %v9523 = vsel %vm9203, %v9146, 0.0
        %v9524 = vsel %vm9203, %v9147, 0.0
        %v9525 = vadd.f32 %v9523, %v9524
        %v9526 = vsel %vm9203, %v9148, 0.0
        %v9527 = vadd.f32 %v9525, %v9526
        %v9528 = vrot.slane %v9527, 4
        %v9529 = vadd.f32 %v9527, %v9528
        %v9530 = vrot.slane %v9529, 2
        %v9531 = vadd.f32 %v9529, %v9530
        %v9532 = vrot.slane %v9531, 1
        %v9533 = vadd.f32 %v9531, %v9532
        %v9534 = vsel %vm9203, %v9149, 0.0
        %v9535 = vsel %vm9203, %v9150, 0.0
        %v9536 = vadd.f32 %v9534, %v9535
        %v9537 = vsel %vm9203, %v9151, 0.0
        %v9538 = vadd.f32 %v9536, %v9537
        %v9539 = vrot.slane %v9538, 4
        %v9540 = vadd.f32 %v9538, %v9539
        %v9541 = vrot.slane %v9540, 2
        %v9542 = vadd.f32 %v9540, %v9541
        %v9543 = vrot.slane %v9542, 1
        %v9544 = vadd.f32 %v9542, %v9543
        %v9545 = vsel %vm9203, %v9152, 0.0
        %v9546 = vsel %vm9203, %v9153, 0.0
        %v9547 = vadd.f32 %v9545, %v9546
        %v9548 = vsel %vm9203, %v9154, 0.0
        %v9549 = vadd.f32 %v9547, %v9548
        %v9550 = vrot.slane %v9549, 4
        %v9551 = vadd.f32 %v9549, %v9550
        %v9552 = vrot.slane %v9551, 2
        %v9553 = vadd.f32 %v9551, %v9552
        %v9554 = vrot.slane %v9553, 1
        %v9555 = vadd.f32 %v9553, %v9554
        %v9556 = vsel %vm9203, %v9155, 0.0
        %v9557 = vsel %vm9203, %v9156, 0.0
        %v9558 = vadd.f32 %v9556, %v9557
        %v9559 = vsel %vm9203, %v9157, 0.0
        %v9560 = vadd.f32 %v9558, %v9559
        %v9561 = vrot.slane %v9560, 4
        %v9562 = vadd.f32 %v9560, %v9561
        %v9563 = vrot.slane %v9562, 2
        %v9564 = vadd.f32 %v9562, %v9563
        %v9565 = vrot.slane %v9564, 1
        %v9566 = vadd.f32 %v9564, %v9565
        %v9567 = vsel %vm9203, %v9158, 0.0
        %v9568 = vsel %vm9203, %v9159, 0.0
        %v9569 = vadd.f32 %v9567, %v9568
        %v9570 = vsel %vm9203, %v9160, 0.0
        %v9571 = vadd.f32 %v9569, %v9570
        %v9572 = vrot.slane %v9571, 4
        %v9573 = vadd.f32 %v9571, %v9572
        %v9574 = vrot.slane %v9573, 2
        %v9575 = vadd.f32 %v9573, %v9574
        %v9576 = vrot.slane %v9575, 1
        %v9577 = vadd.f32 %v9575, %v9576
        %v9578 = vsel %vm9203, %v9161, 0.0
        %v9579 = vsel %vm9203, %v9162, 0.0
        %v9580 = vadd.f32 %v9578, %v9579
        %v9581 = vsel %vm9203, %v9163, 0.0
        %v9582 = vadd.f32 %v9580, %v9581
        %v9583 = vrot.slane %v9582, 4
        %v9584 = vadd.f32 %v9582, %v9583
        %v9585 = vrot.slane %v9584, 2
        %v9586 = vadd.f32 %v9584, %v9585
        %v9587 = vrot.slane %v9586, 1
        %v9588 = vadd.f32 %v9586, %v9587
        %v9589 = vsel %vm9203, %v9164, 0.0
        %v9590 = vsel %vm9203, %v9165, 0.0
        %v9591 = vadd.f32 %v9589, %v9590
        %v9592 = vsel %vm9203, %v9166, 0.0
        %v9593 = vadd.f32 %v9591, %v9592
        %v9594 = vrot.slane %v9593, 4
        %v9595 = vadd.f32 %v9593, %v9594
        %v9596 = vrot.slane %v9595, 2
        %v9597 = vadd.f32 %v9595, %v9596
        %v9598 = vrot.slane %v9597, 1
        %v9599 = vadd.f32 %v9597, %v9598
        %v9600 = vsel %vm9203, %v9167, 0.0
        %v9601 = vsel %vm9203, %v9168, 0.0
        %v9602 = vadd.f32 %v9600, %v9601
        %v9603 = vsel %vm9203, %v9169, 0.0
        %v9604 = vadd.f32 %v9602, %v9603
        %v9605 = vrot.slane %v9604, 4
        %v9606 = vadd.f32 %v9604, %v9605
        %v9607 = vrot.slane %v9606, 2
        %v9608 = vadd.f32 %v9606, %v9607
        %v9609 = vrot.slane %v9608, 1
        %v9610 = vadd.f32 %v9608, %v9609
        %v9611 = vsel %vm9203, %v9170, 0.0
        %v9612 = vsel %vm9203, %v9171, 0.0
        %v9613 = vadd.f32 %v9611, %v9612
        %v9614 = vsel %vm9203, %v9172, 0.0
        %v9615 = vadd.f32 %v9613, %v9614
        %v9616 = vrot.slane %v9615, 4
        %v9617 = vadd.f32 %v9615, %v9616
        %v9618 = vrot.slane %v9617, 2
        %v9619 = vadd.f32 %v9617, %v9618
        %v9620 = vrot.slane %v9619, 1
        %v9621 = vadd.f32 %v9619, %v9620
        %v9622 = vsel %vm9203, %v9173, 0.0
        %v9623 = vsel %vm9203, %v9174, 0.0
        %v9624 = vadd.f32 %v9622, %v9623
        %v9625 = vsel %vm9203, %v9175, 0.0
        %v9626 = vadd.f32 %v9624, %v9625
        %v9627 = vrot.slane %v9626, 4
        %v9628 = vadd.f32 %v9626, %v9627
        %v9629 = vrot.slane %v9628, 2
        %v9630 = vadd.f32 %v9628, %v9629
        %v9631 = vrot.slane %v9630, 1
        %v9632 = vadd.f32 %v9630, %v9631
        %v9633 = vsel %vm9203, %v9176, 0.0
        %v9634 = vsel %vm9203, %v9177, 0.0
        %v9635 = vadd.f32 %v9633, %v9634
        %v9636 = vsel %vm9203, %v9178, 0.0
        %v9637 = vadd.f32 %v9635, %v9636
        %v9638 = vrot.slane %v9637, 4
        %v9639 = vadd.f32 %v9637, %v9638
        %v9640 = vrot.slane %v9639, 2
        %v9641 = vadd.f32 %v9639, %v9640
        %v9642 = vrot.slane %v9641, 1
        %v9643 = vadd.f32 %v9641, %v9642
        %v9644 = vsel %vm9203, %v9179, 0.0
        %v9645 = vsel %vm9203, %v9180, 0.0
        %v9646 = vadd.f32 %v9644, %v9645
        %v9647 = vsel %vm9203, %v9181, 0.0
        %v9648 = vadd.f32 %v9646, %v9647
        %v9649 = vrot.slane %v9648, 4
        %v9650 = vadd.f32 %v9648, %v9649
        %v9651 = vrot.slane %v9650, 2
        %v9652 = vadd.f32 %v9650, %v9651
        %v9653 = vrot.slane %v9652, 1
        %v9654 = vadd.f32 %v9652, %v9653
        %v9655 = vsel %vm9203, %v9182, 0.0
        %v9656 = vsel %vm9203, %v9183, 0.0
        %v9657 = vadd.f32 %v9655, %v9656
        %v9658 = vsel %vm9203, %v9184, 0.0
        %v9659 = vadd.f32 %v9657, %v9658
        %v9660 = vrot.slane %v9659, 4
        %v9661 = vadd.f32 %v9659, %v9660
        %v9662 = vrot.slane %v9661, 2
        %v9663 = vadd.f32 %v9661, %v9662
        %v9664 = vrot.slane %v9663, 1
        %v9665 = vadd.f32 %v9663, %v9664
        %v9666 = vsel %vm9203, %v9185, 0.0
        %v9667 = vsel %vm9203, %v9186, 0.0
        %v9668 = vadd.f32 %v9666, %v9667
        %v9669 = vsel %vm9203, %v9187, 0.0
        %v9670 = vadd.f32 %v9668, %v9669
        %v9671 = vrot.slane %v9670, 4
        %v9672 = vadd.f32 %v9670, %v9671
        %v9673 = vrot.slane %v9672, 2
        %v9674 = vadd.f32 %v9672, %v9673
        %v9675 = vrot.slane %v9674, 1
        %v9676 = vadd.f32 %v9674, %v9675
        %v9677 = vsel %vm9203, %v9188, 0.0
        %v9678 = vsel %vm9203, %v9189, 0.0
        %v9679 = vadd.f32 %v9677, %v9678
        %v9680 = vsel %vm9203, %v9190, 0.0
        %v9681 = vadd.f32 %v9679, %v9680
        %v9682 = vrot.slane %v9681, 4
        %v9683 = vadd.f32 %v9681, %v9682
        %v9684 = vrot.slane %v9683, 2
        %v9685 = vadd.f32 %v9683, %v9684
        %v9686 = vrot.slane %v9685, 1
        %v9687 = vadd.f32 %v9685, %v9686
        %v9688 = vsel %vm9203, %v9191, 0.0
        %v9689 = vsel %vm9203, %v9192, 0.0
        %v9690 = vadd.f32 %v9688, %v9689
        %v9691 = vsel %vm9203, %v9193, 0.0
        %v9692 = vadd.f32 %v9690, %v9691
        %v9693 = vrot.slane %v9692, 4
        %v9694 = vadd.f32 %v9692, %v9693
        %v9695 = vrot.slane %v9694, 2
        %v9696 = vadd.f32 %v9694, %v9695
        %v9697 = vrot.slane %v9696, 1
        %v9698 = vadd.f32 %v9696, %v9697
        %v9699 = vsel %vm9203, %v9194, 0.0
        %v9700 = vsel %vm9203, %v9195, 0.0
        %v9701 = vadd.f32 %v9699, %v9700
        %v9702 = vsel %vm9203, %v9196, 0.0
        %v9703 = vadd.f32 %v9701, %v9702
        %v9704 = vrot.slane %v9703, 4
        %v9705 = vadd.f32 %v9703, %v9704
        %v9706 = vrot.slane %v9705, 2
        %v9707 = vadd.f32 %v9705, %v9706
        %v9708 = vrot.slane %v9707, 1
        %v9709 = vadd.f32 %v9707, %v9708
        %v9710 = vsel %vm9203, %v9197, 0.0
        %v9711 = vsel %vm9203, %v9198, 0.0
        %v9712 = vadd.f32 %v9710, %v9711
        %v9713 = vsel %vm9203, %v9199, 0.0
        %v9714 = vadd.f32 %v9712, %v9713
        %v9715 = vrot.slane %v9714, 4
        %v9716 = vadd.f32 %v9714, %v9715
        %v9717 = vrot.slane %v9716, 2
        %v9718 = vadd.f32 %v9716, %v9717
        %v9719 = vrot.slane %v9718, 1
        %v9720 = vadd.f32 %v9718, %v9719
        %v9721 = vsel %vm9203, %v9200, 0.0
        %v9722 = vsel %vm9203, %v9201, 0.0
        %v9723 = vadd.f32 %v9721, %v9722
        %v9724 = vsel %vm9203, %v9202, 0.0
        %v9725 = vadd.f32 %v9723, %v9724
        %v9726 = vrot.slane %v9725, 4
        %v9727 = vadd.f32 %v9725, %v9726
        %v9728 = vrot.slane %v9727, 2
        %v9729 = vadd.f32 %v9727, %v9728
        %v9730 = vrot.slane %v9729, 1
        %v9731 = vadd.f32 %v9729, %v9730
        %v9732 = vadd.f32 %v9214, 0.0
        %v9733 = vadd.f32 %v9225, 0.0
        %v9734 = vadd.f32 %v9236, 0.0
        %v9735 = vadd.f32 %v9247, 0.0
        %v9736 = vadd.f32 %v9258, 0.0
        %v9737 = vadd.f32 %v9269, 0.0
        %v9738 = vadd.f32 %v9280, 0.0
        %v9739 = vadd.f32 %v9291, 0.0
        %v9740 = vadd.f32 %v9302, 0.0
        %v9741 = vadd.f32 %v9313, 0.0
        %v9742 = vadd.f32 %v9324, 0.0
        %v9743 = vadd.f32 %v9335, 0.0
        %v9744 = vadd.f32 %v9346, 0.0
        %v9745 = vadd.f32 %v9357, 0.0
        %v9746 = vadd.f32 %v9368, 0.0
        %v9747 = vadd.f32 %v9379, 0.0
        %v9748 = vadd.f32 %v9390, 0.0
        %v9749 = vadd.f32 %v9401, 0.0
        %v9750 = vadd.f32 %v9412, 0.0
        %v9751 = vadd.f32 %v9423, 0.0
        %v9752 = vadd.f32 %v9434, 0.0
        %v9753 = vadd.f32 %v9445, 0.0
        %v9754 = vadd.f32 %v9456, 0.0
        %v9755 = vadd.f32 %v9467, 0.0
        %v9756 = vadd.f32 %v9478, 0.0
        %v9757 = vadd.f32 %v9489, 0.0
        %v9758 = vadd.f32 %v9500, 0.0
        %v9759 = vadd.f32 %v9511, 0.0
        %v9760 = vadd.f32 %v9522, 0.0
        %v9761 = vadd.f32 %v9533, 0.0
        %v9762 = vadd.f32 %v9544, 0.0
        %v9763 = vadd.f32 %v9555, 0.0
        %v9764 = vadd.f32 %v9566, 0.0
        %v9765 = vadd.f32 %v9577, 0.0
        %v9766 = vadd.f32 %v9588, 0.0
        %v9767 = vadd.f32 %v9599, 0.0
        %v9768 = vadd.f32 %v9610, 0.0
        %v9769 = vadd.f32 %v9621, 0.0
        %v9770 = vadd.f32 %v9632, 0.0
        %v9771 = vadd.f32 %v9643, 0.0
        %v9772 = vadd.f32 %v9654, 0.0
        %v9773 = vadd.f32 %v9665, 0.0
        %v9774 = vadd.f32 %v9676, 0.0
        %v9775 = vadd.f32 %v9687, 0.0
        %v9776 = vadd.f32 %v9698, 0.0
        %v9777 = vadd.f32 %v9709, 0.0
        %v9778 = vadd.f32 %v9720, 0.0
        %v9779 = vadd.f32 %v9731, 0.0
        %v9780 = vmul.f32 %v9732, 0.0625
        %v9781 = vmul.f32 %v9733, 0.0625
        %v9782 = vmul.f32 %v9734, 0.0625
        %v9783 = vmul.f32 %v9735, 0.0625
        %v9784 = vmul.f32 %v9736, 0.0625
        %v9785 = vmul.f32 %v9737, 0.0625
        %v9786 = vmul.f32 %v9738, 0.0625
        %v9787 = vmul.f32 %v9739, 0.0625
        %v9788 = vmul.f32 %v9740, 0.0625
        %v9789 = vmul.f32 %v9741, 0.0625
        %v9790 = vmul.f32 %v9742, 0.0625
        %v9791 = vmul.f32 %v9743, 0.0625
        %v9792 = vmul.f32 %v9744, 0.0625
        %v9793 = vmul.f32 %v9745, 0.0625
        %v9794 = vmul.f32 %v9746, 0.0625
        %v9795 = vmul.f32 %v9747, 0.0625
        %v9796 = vmul.f32 %v9748, 0.0625
        %v9797 = vmul.f32 %v9749, 0.0625
        %v9798 = vmul.f32 %v9750, 0.0625
        %v9799 = vmul.f32 %v9751, 0.0625
        %v9800 = vmul.f32 %v9752, 0.0625
        %v9801 = vmul.f32 %v9753, 0.0625
        %v9802 = vmul.f32 %v9754, 0.0625
        %v9803 = vmul.f32 %v9755, 0.0625
        %v9804 = vmul.f32 %v9756, 0.0625
        %v9805 = vmul.f32 %v9757, 0.0625
        %v9806 = vmul.f32 %v9758, 0.0625
        %v9807 = vmul.f32 %v9759, 0.0625
        %v9808 = vmul.f32 %v9760, 0.0625
        %v9809 = vmul.f32 %v9761, 0.0625
        %v9810 = vmul.f32 %v9762, 0.0625
        %v9811 = vmul.f32 %v9763, 0.0625
        %v9812 = vmul.f32 %v9764, 0.0625
        %v9813 = vmul.f32 %v9765, 0.0625
        %v9814 = vmul.f32 %v9766, 0.0625
        %v9815 = vmul.f32 %v9767, 0.0625
        %v9816 = vmul.f32 %v9768, 0.0625
        %v9817 = vmul.f32 %v9769, 0.0625
        %v9818 = vmul.f32 %v9770, 0.0625
        %v9819 = vmul.f32 %v9771, 0.0625
        %v9820 = vmul.f32 %v9772, 0.0625
        %v9821 = vmul.f32 %v9773, 0.0625
        %v9822 = vmul.f32 %v9774, 0.0625
        %v9823 = vmul.f32 %v9775, 0.0625
        %v9824 = vmul.f32 %v9776, 0.0625
        %v9825 = vmul.f32 %v9777, 0.0625
        %v9826 = vmul.f32 %v9778, 0.0625
        %v9827 = vmul.f32 %v9779, 0.0625
        %v9828 = vld [vmem:[#allocation3] sm:$0x1]
        %v9830 = vlaneseq
        %v9831 = vshrl.u32 %v9830, 7
        %v9832 = vsub.s32 0, %v9831
        %v9833 = vrot.slane %v9828, %v9832
        %9834 = vset.pattern.permute.xlu0 0
        %9835 = vperm.xlu0 %9834, %v9833
        %v9836 = vpop.permute.xlu0 %9835
        %v9838 = vadd.f32 %v9780, %v9836
        %v9839 = vadd.f32 %v9781, %v9836
        %v9840 = vadd.f32 %v9782, %v9836
        %v9841 = vadd.f32 %v9783, %v9836
        %v9842 = vadd.f32 %v9784, %v9836
        %v9843 = vadd.f32 %v9785, %v9836
        %v9844 = vadd.f32 %v9786, %v9836
        %v9845 = vadd.f32 %v9787, %v9836
        %v9846 = vadd.f32 %v9788, %v9836
        %v9847 = vadd.f32 %v9789, %v9836
        %v9848 = vadd.f32 %v9790, %v9836
        %v9849 = vadd.f32 %v9791, %v9836
        %v9850 = vadd.f32 %v9792, %v9836
        %v9851 = vadd.f32 %v9793, %v9836
        %v9852 = vadd.f32 %v9794, %v9836
        %v9853 = vadd.f32 %v9795, %v9836
        %v9854 = vadd.f32 %v9796, %v9836
        %v9855 = vadd.f32 %v9797, %v9836
        %v9856 = vadd.f32 %v9798, %v9836
        %v9857 = vadd.f32 %v9799, %v9836
        %v9858 = vadd.f32 %v9800, %v9836
        %v9859 = vadd.f32 %v9801, %v9836
        %v9860 = vadd.f32 %v9802, %v9836
        %v9861 = vadd.f32 %v9803, %v9836
        %v9862 = vadd.f32 %v9804, %v9836
        %v9863 = vadd.f32 %v9805, %v9836
        %v9864 = vadd.f32 %v9806, %v9836
        %v9865 = vadd.f32 %v9807, %v9836
        %v9866 = vadd.f32 %v9808, %v9836
        %v9867 = vadd.f32 %v9809, %v9836
        %v9868 = vadd.f32 %v9810, %v9836
        %v9869 = vadd.f32 %v9811, %v9836
        %v9870 = vadd.f32 %v9812, %v9836
        %v9871 = vadd.f32 %v9813, %v9836
        %v9872 = vadd.f32 %v9814, %v9836
        %v9873 = vadd.f32 %v9815, %v9836
        %v9874 = vadd.f32 %v9816, %v9836
        %v9875 = vadd.f32 %v9817, %v9836
        %v9876 = vadd.f32 %v9818, %v9836
        %v9877 = vadd.f32 %v9819, %v9836
        %v9878 = vadd.f32 %v9820, %v9836
        %v9879 = vadd.f32 %v9821, %v9836
        %v9880 = vadd.f32 %v9822, %v9836
        %v9881 = vadd.f32 %v9823, %v9836
        %v9882 = vadd.f32 %v9824, %v9836
        %v9883 = vadd.f32 %v9825, %v9836
        %v9884 = vadd.f32 %v9826, %v9836
        %v9885 = vadd.f32 %v9827, %v9836
        %v9886 = vand.u32 2147483647, %v9838
        %v9887 = vand.u32 2147483647, %v9839
        %v9888 = vand.u32 2147483647, %v9840
        %v9889 = vand.u32 2147483647, %v9841
        %v9890 = vand.u32 2147483647, %v9842
        %v9891 = vand.u32 2147483647, %v9843
        %v9892 = vand.u32 2147483647, %v9844
        %v9893 = vand.u32 2147483647, %v9845
        %v9894 = vand.u32 2147483647, %v9846
        %v9895 = vand.u32 2147483647, %v9847
        %v9896 = vand.u32 2147483647, %v9848
        %v9897 = vand.u32 2147483647, %v9849
        %v9898 = vand.u32 2147483647, %v9850
        %v9899 = vand.u32 2147483647, %v9851
        %v9900 = vand.u32 2147483647, %v9852
        %v9901 = vand.u32 2147483647, %v9853
        %v9902 = vand.u32 2147483647, %v9854
        %v9903 = vand.u32 2147483647, %v9855
        %v9904 = vand.u32 2147483647, %v9856
        %v9905 = vand.u32 2147483647, %v9857
        %v9906 = vand.u32 2147483647, %v9858
        %v9907 = vand.u32 2147483647, %v9859
        %v9908 = vand.u32 2147483647, %v9860
        %v9909 = vand.u32 2147483647, %v9861
        %v9910 = vand.u32 2147483647, %v9862
        %v9911 = vand.u32 2147483647, %v9863
        %v9912 = vand.u32 2147483647, %v9864
        %v9913 = vand.u32 2147483647, %v9865
        %v9914 = vand.u32 2147483647, %v9866
        %v9915 = vand.u32 2147483647, %v9867
        %v9916 = vand.u32 2147483647, %v9868
        %v9917 = vand.u32 2147483647, %v9869
        %v9918 = vand.u32 2147483647, %v9870
        %v9919 = vand.u32 2147483647, %v9871
        %v9920 = vand.u32 2147483647, %v9872
        %v9921 = vand.u32 2147483647, %v9873
        %v9922 = vand.u32 2147483647, %v9874
        %v9923 = vand.u32 2147483647, %v9875
        %v9924 = vand.u32 2147483647, %v9876
        %v9925 = vand.u32 2147483647, %v9877
        %v9926 = vand.u32 2147483647, %v9878
        %v9927 = vand.u32 2147483647, %v9879
        %v9928 = vand.u32 2147483647, %v9880
        %v9929 = vand.u32 2147483647, %v9881
        %v9930 = vand.u32 2147483647, %v9882
        %v9931 = vand.u32 2147483647, %v9883
        %v9932 = vand.u32 2147483647, %v9884
        %v9933 = vand.u32 2147483647, %v9885
        %v9934 = vsub.f32 0.0, %v9886
        %v9935 = vsub.f32 0.0, %v9887
        %v9936 = vsub.f32 0.0, %v9888
        %v9937 = vsub.f32 0.0, %v9889
        %v9938 = vsub.f32 0.0, %v9890
        %v9939 = vsub.f32 0.0, %v9891
        %v9940 = vsub.f32 0.0, %v9892
        %v9941 = vsub.f32 0.0, %v9893
        %v9942 = vsub.f32 0.0, %v9894
        %v9943 = vsub.f32 0.0, %v9895
        %v9944 = vsub.f32 0.0, %v9896
        %v9945 = vsub.f32 0.0, %v9897
        %v9946 = vsub.f32 0.0, %v9898
        %v9947 = vsub.f32 0.0, %v9899
        %v9948 = vsub.f32 0.0, %v9900
        %v9949 = vsub.f32 0.0, %v9901
        %v9950 = vsub.f32 0.0, %v9902
        %v9951 = vsub.f32 0.0, %v9903
        %v9952 = vsub.f32 0.0, %v9904
        %v9953 = vsub.f32 0.0, %v9905
        %v9954 = vsub.f32 0.0, %v9906
        %v9955 = vsub.f32 0.0, %v9907
        %v9956 = vsub.f32 0.0, %v9908
        %v9957 = vsub.f32 0.0, %v9909
        %v9958 = vsub.f32 0.0, %v9910
        %v9959 = vsub.f32 0.0, %v9911
        %v9960 = vsub.f32 0.0, %v9912
        %v9961 = vsub.f32 0.0, %v9913
        %v9962 = vsub.f32 0.0, %v9914
        %v9963 = vsub.f32 0.0, %v9915
        %v9964 = vsub.f32 0.0, %v9916
        %v9965 = vsub.f32 0.0, %v9917
        %v9966 = vsub.f32 0.0, %v9918
        %v9967 = vsub.f32 0.0, %v9919
        %v9968 = vsub.f32 0.0, %v9920
        %v9969 = vsub.f32 0.0, %v9921
        %v9970 = vsub.f32 0.0, %v9922
        %v9971 = vsub.f32 0.0, %v9923
        %v9972 = vsub.f32 0.0, %v9924
        %v9973 = vsub.f32 0.0, %v9925
        %v9974 = vsub.f32 0.0, %v9926
        %v9975 = vsub.f32 0.0, %v9927
        %v9976 = vsub.f32 0.0, %v9928
        %v9977 = vsub.f32 0.0, %v9929
        %v9978 = vsub.f32 0.0, %v9930
        %v9979 = vsub.f32 0.0, %v9931
        %v9980 = vsub.f32 0.0, %v9932
        %v9981 = vsub.f32 0.0, %v9933
        %v9982 = vmul.f32 %v9934, 1.442695
        %v9983 = vpow.pop %v9982
        %v9984 = vmul.f32 %v9935, 1.442695
        %v9985 = vpow.pop %v9984
        %v9986 = vmul.f32 %v9936, 1.442695
        %v9987 = vpow.pop %v9986
        %v9988 = vmul.f32 %v9937, 1.442695
        %v9989 = vpow.pop %v9988
        %v9990 = vmul.f32 %v9938, 1.442695
        %v9991 = vpow.pop %v9990
        %v9992 = vmul.f32 %v9939, 1.442695
        %v9993 = vpow.pop %v9992
        %v9994 = vmul.f32 %v9940, 1.442695
        %v9995 = vpow.pop %v9994
        %v9996 = vmul.f32 %v9941, 1.442695
        %v9997 = vpow.pop %v9996
        %v9998 = vmul.f32 %v9942, 1.442695
        %v9999 = vpow.pop %v9998
        %v10000 = vmul.f32 %v9943, 1.442695
        %v10001 = vpow.pop %v10000
        %v10002 = vmul.f32 %v9944, 1.442695
        %v10003 = vpow.pop %v10002
        %v10004 = vmul.f32 %v9945, 1.442695
        %v10005 = vpow.pop %v10004
        %v10006 = vmul.f32 %v9946, 1.442695
        %v10007 = vpow.pop %v10006
        %v10008 = vmul.f32 %v9947, 1.442695
        %v10009 = vpow.pop %v10008
        %v10010 = vmul.f32 %v9948, 1.442695
        %v10011 = vpow.pop %v10010
        %v10012 = vmul.f32 %v9949, 1.442695
        %v10013 = vpow.pop %v10012
        %v10014 = vmul.f32 %v9950, 1.442695
        %v10015 = vpow.pop %v10014
        %v10016 = vmul.f32 %v9951, 1.442695
        %v10017 = vpow.pop %v10016
        %v10018 = vmul.f32 %v9952, 1.442695
        %v10019 = vpow.pop %v10018
        %v10020 = vmul.f32 %v9953, 1.442695
        %v10021 = vpow.pop %v10020
        %v10022 = vmul.f32 %v9954, 1.442695
        %v10023 = vpow.pop %v10022
        %v10024 = vmul.f32 %v9955, 1.442695
        %v10025 = vpow.pop %v10024
        %v10026 = vmul.f32 %v9956, 1.442695
        %v10027 = vpow.pop %v10026
        %v10028 = vmul.f32 %v9957, 1.442695
        %v10029 = vpow.pop %v10028
        %v10030 = vmul.f32 %v9958, 1.442695
        %v10031 = vpow.pop %v10030
        %v10032 = vmul.f32 %v9959, 1.442695
        %v10033 = vpow.pop %v10032
        %v10034 = vmul.f32 %v9960, 1.442695
        %v10035 = vpow.pop %v10034
        %v10036 = vmul.f32 %v9961, 1.442695
        %v10037 = vpow.pop %v10036
        %v10038 = vmul.f32 %v9962, 1.442695
        %v10039 = vpow.pop %v10038
        %v10040 = vmul.f32 %v9963, 1.442695
        %v10041 = vpow.pop %v10040
        %v10042 = vmul.f32 %v9964, 1.442695
        %v10043 = vpow.pop %v10042
        %v10044 = vmul.f32 %v9965, 1.442695
        %v10045 = vpow.pop %v10044
        %v10046 = vmul.f32 %v9966, 1.442695
        %v10047 = vpow.pop %v10046
        %v10048 = vmul.f32 %v9967, 1.442695
        %v10049 = vpow.pop %v10048
        %v10050 = vmul.f32 %v9968, 1.442695
        %v10051 = vpow.pop %v10050
        %v10052 = vmul.f32 %v9969, 1.442695
        %v10053 = vpow.pop %v10052
        %v10054 = vmul.f32 %v9970, 1.442695
        %v10055 = vpow.pop %v10054
        %v10056 = vmul.f32 %v9971, 1.442695
        %v10057 = vpow.pop %v10056
        %v10058 = vmul.f32 %v9972, 1.442695
        %v10059 = vpow.pop %v10058
        %v10060 = vmul.f32 %v9973, 1.442695
        %v10061 = vpow.pop %v10060
        %v10062 = vmul.f32 %v9974, 1.442695
        %v10063 = vpow.pop %v10062
        %v10064 = vmul.f32 %v9975, 1.442695
        %v10065 = vpow.pop %v10064
        %v10066 = vmul.f32 %v9976, 1.442695
        %v10067 = vpow.pop %v10066
        %v10068 = vmul.f32 %v9977, 1.442695
        %v10069 = vpow.pop %v10068
        %v10070 = vmul.f32 %v9978, 1.442695
        %v10071 = vpow.pop %v10070
        %v10072 = vmul.f32 %v9979, 1.442695
        %v10073 = vpow.pop %v10072
        %v10074 = vmul.f32 %v9980, 1.442695
        %v10075 = vpow.pop %v10074
        %v10076 = vmul.f32 %v9981, 1.442695
        %v10077 = vpow.pop %v10076
        %vm10078 = vcmp.ge.f32.partialorder %v9838, 0.0
        %vm10079 = vcmp.ge.f32.partialorder %v9839, 0.0
        %vm10080 = vcmp.ge.f32.partialorder %v9840, 0.0
        %vm10081 = vcmp.ge.f32.partialorder %v9841, 0.0
        %vm10082 = vcmp.ge.f32.partialorder %v9842, 0.0
        %vm10083 = vcmp.ge.f32.partialorder %v9843, 0.0
        %vm10084 = vcmp.ge.f32.partialorder %v9844, 0.0
        %vm10085 = vcmp.ge.f32.partialorder %v9845, 0.0
        %vm10086 = vcmp.ge.f32.partialorder %v9846, 0.0
        %vm10087 = vcmp.ge.f32.partialorder %v9847, 0.0
        %vm10088 = vcmp.ge.f32.partialorder %v9848, 0.0
        %vm10089 = vcmp.ge.f32.partialorder %v9849, 0.0
        %vm10090 = vcmp.ge.f32.partialorder %v9850, 0.0
        %vm10091 = vcmp.ge.f32.partialorder %v9851, 0.0
        %vm10092 = vcmp.ge.f32.partialorder %v9852, 0.0
        %vm10093 = vcmp.ge.f32.partialorder %v9853, 0.0
        %vm10094 = vcmp.ge.f32.partialorder %v9854, 0.0
        %vm10095 = vcmp.ge.f32.partialorder %v9855, 0.0
        %vm10096 = vcmp.ge.f32.partialorder %v9856, 0.0
        %vm10097 = vcmp.ge.f32.partialorder %v9857, 0.0
        %vm10098 = vcmp.ge.f32.partialorder %v9858, 0.0
        %vm10099 = vcmp.ge.f32.partialorder %v9859, 0.0
        %vm10100 = vcmp.ge.f32.partialorder %v9860, 0.0
        %vm10101 = vcmp.ge.f32.partialorder %v9861, 0.0
        %vm10102 = vcmp.ge.f32.partialorder %v9862, 0.0
        %vm10103 = vcmp.ge.f32.partialorder %v9863, 0.0
        %vm10104 = vcmp.ge.f32.partialorder %v9864, 0.0
        %vm10105 = vcmp.ge.f32.partialorder %v9865, 0.0
        %vm10106 = vcmp.ge.f32.partialorder %v9866, 0.0
        %vm10107 = vcmp.ge.f32.partialorder %v9867, 0.0
        %vm10108 = vcmp.ge.f32.partialorder %v9868, 0.0
        %vm10109 = vcmp.ge.f32.partialorder %v9869, 0.0
        %vm10110 = vcmp.ge.f32.partialorder %v9870, 0.0
        %vm10111 = vcmp.ge.f32.partialorder %v9871, 0.0
        %vm10112 = vcmp.ge.f32.partialorder %v9872, 0.0
        %vm10113 = vcmp.ge.f32.partialorder %v9873, 0.0
        %vm10114 = vcmp.ge.f32.partialorder %v9874, 0.0
        %vm10115 = vcmp.ge.f32.partialorder %v9875, 0.0
        %vm10116 = vcmp.ge.f32.partialorder %v9876, 0.0
        %vm10117 = vcmp.ge.f32.partialorder %v9877, 0.0
        %vm10118 = vcmp.ge.f32.partialorder %v9878, 0.0
        %vm10119 = vcmp.ge.f32.partialorder %v9879, 0.0
        %vm10120 = vcmp.ge.f32.partialorder %v9880, 0.0
        %vm10121 = vcmp.ge.f32.partialorder %v9881, 0.0
        %vm10122 = vcmp.ge.f32.partialorder %v9882, 0.0
        %vm10123 = vcmp.ge.f32.partialorder %v9883, 0.0
        %vm10124 = vcmp.ge.f32.partialorder %v9884, 0.0
        %vm10125 = vcmp.ge.f32.partialorder %v9885, 0.0
        %v10126 = vadd.f32 %v9983, 1.0
        %v10127 = vadd.f32 %v9985, 1.0
        %v10128 = vadd.f32 %v9987, 1.0
        %v10129 = vadd.f32 %v9989, 1.0
        %v10130 = vadd.f32 %v9991, 1.0
        %v10131 = vadd.f32 %v9993, 1.0
        %v10132 = vadd.f32 %v9995, 1.0
        %v10133 = vadd.f32 %v9997, 1.0
        %v10134 = vadd.f32 %v9999, 1.0
        %v10135 = vadd.f32 %v10001, 1.0
        %v10136 = vadd.f32 %v10003, 1.0
        %v10137 = vadd.f32 %v10005, 1.0
        %v10138 = vadd.f32 %v10007, 1.0
        %v10139 = vadd.f32 %v10009, 1.0
        %v10140 = vadd.f32 %v10011, 1.0
        %v10141 = vadd.f32 %v10013, 1.0
        %v10142 = vadd.f32 %v10015, 1.0
        %v10143 = vadd.f32 %v10017, 1.0
        %v10144 = vadd.f32 %v10019, 1.0
        %v10145 = vadd.f32 %v10021, 1.0
        %v10146 = vadd.f32 %v10023, 1.0
        %v10147 = vadd.f32 %v10025, 1.0
        %v10148 = vadd.f32 %v10027, 1.0
        %v10149 = vadd.f32 %v10029, 1.0
        %v10150 = vadd.f32 %v10031, 1.0
        %v10151 = vadd.f32 %v10033, 1.0
        %v10152 = vadd.f32 %v10035, 1.0
        %v10153 = vadd.f32 %v10037, 1.0
        %v10154 = vadd.f32 %v10039, 1.0
        %v10155 = vadd.f32 %v10041, 1.0
        %v10156 = vadd.f32 %v10043, 1.0
        %v10157 = vadd.f32 %v10045, 1.0
        %v10158 = vadd.f32 %v10047, 1.0
        %v10159 = vadd.f32 %v10049, 1.0
        %v10160 = vadd.f32 %v10051, 1.0
        %v10161 = vadd.f32 %v10053, 1.0
        %v10162 = vadd.f32 %v10055, 1.0
        %v10163 = vadd.f32 %v10057, 1.0
        %v10164 = vadd.f32 %v10059, 1.0
        %v10165 = vadd.f32 %v10061, 1.0
        %v10166 = vadd.f32 %v10063, 1.0
        %v10167 = vadd.f32 %v10065, 1.0
        %v10168 = vadd.f32 %v10067, 1.0
        %v10169 = vadd.f32 %v10069, 1.0
        %v10170 = vadd.f32 %v10071, 1.0
        %v10171 = vadd.f32 %v10073, 1.0
        %v10172 = vadd.f32 %v10075, 1.0
        %v10173 = vadd.f32 %v10077, 1.0
        %v10174 = vrcp.pop %v10126
        %v10175 = vmul.f32 1.0, %v10174
        %v10176 = vrcp.pop %v10127
        %v10177 = vmul.f32 1.0, %v10176
        %v10178 = vrcp.pop %v10128
        %v10179 = vmul.f32 1.0, %v10178
        %v10180 = vrcp.pop %v10129
        %v10181 = vmul.f32 1.0, %v10180
        %v10182 = vrcp.pop %v10130
        %v10183 = vmul.f32 1.0, %v10182
        %v10184 = vrcp.pop %v10131
        %v10185 = vmul.f32 1.0, %v10184
        %v10186 = vrcp.pop %v10132
        %v10187 = vmul.f32 1.0, %v10186
        %v10188 = vrcp.pop %v10133
        %v10189 = vmul.f32 1.0, %v10188
        %v10190 = vrcp.pop %v10134
        %v10191 = vmul.f32 1.0, %v10190
        %v10192 = vrcp.pop %v10135
        %v10193 = vmul.f32 1.0, %v10192
        %v10194 = vrcp.pop %v10136
        %v10195 = vmul.f32 1.0, %v10194
        %v10196 = vrcp.pop %v10137
        %v10197 = vmul.f32 1.0, %v10196
        %v10198 = vrcp.pop %v10138
        %v10199 = vmul.f32 1.0, %v10198
        %v10200 = vrcp.pop %v10139
        %v10201 = vmul.f32 1.0, %v10200
        %v10202 = vrcp.pop %v10140
        %v10203 = vmul.f32 1.0, %v10202
        %v10204 = vrcp.pop %v10141
        %v10205 = vmul.f32 1.0, %v10204
        %v10206 = vrcp.pop %v10142
        %v10207 = vmul.f32 1.0, %v10206
        %v10208 = vrcp.pop %v10143
        %v10209 = vmul.f32 1.0, %v10208
        %v10210 = vrcp.pop %v10144
        %v10211 = vmul.f32 1.0, %v10210
        %v10212 = vrcp.pop %v10145
        %v10213 = vmul.f32 1.0, %v10212
        %v10214 = vrcp.pop %v10146
        %v10215 = vmul.f32 1.0, %v10214
        %v10216 = vrcp.pop %v10147
        %v10217 = vmul.f32 1.0, %v10216
        %v10218 = vrcp.pop %v10148
        %v10219 = vmul.f32 1.0, %v10218
        %v10220 = vrcp.pop %v10149
        %v10221 = vmul.f32 1.0, %v10220
        %v10222 = vrcp.pop %v10150
        %v10223 = vmul.f32 1.0, %v10222
        %v10224 = vrcp.pop %v10151
        %v10225 = vmul.f32 1.0, %v10224
        %v10226 = vrcp.pop %v10152
        %v10227 = vmul.f32 1.0, %v10226
        %v10228 = vrcp.pop %v10153
        %v10229 = vmul.f32 1.0, %v10228
        %v10230 = vrcp.pop %v10154
        %v10231 = vmul.f32 1.0, %v10230
        %v10232 = vrcp.pop %v10155
        %v10233 = vmul.f32 1.0, %v10232
        %v10234 = vrcp.pop %v10156
        %v10235 = vmul.f32 1.0, %v10234
        %v10236 = vrcp.pop %v10157
        %v10237 = vmul.f32 1.0, %v10236
        %v10238 = vrcp.pop %v10158
        %v10239 = vmul.f32 1.0, %v10238
        %v10240 = vrcp.pop %v10159
        %v10241 = vmul.f32 1.0, %v10240
        %v10242 = vrcp.pop %v10160
        %v10243 = vmul.f32 1.0, %v10242
        %v10244 = vrcp.pop %v10161
        %v10245 = vmul.f32 1.0, %v10244
        %v10246 = vrcp.pop %v10162
        %v10247 = vmul.f32 1.0, %v10246
        %v10248 = vrcp.pop %v10163
        %v10249 = vmul.f32 1.0, %v10248
        %v10250 = vrcp.pop %v10164
        %v10251 = vmul.f32 1.0, %v10250
        %v10252 = vrcp.pop %v10165
        %v10253 = vmul.f32 1.0, %v10252
        %v10254 = vrcp.pop %v10166
        %v10255 = vmul.f32 1.0, %v10254
        %v10256 = vrcp.pop %v10167
        %v10257 = vmul.f32 1.0, %v10256
        %v10258 = vrcp.pop %v10168
        %v10259 = vmul.f32 1.0, %v10258
        %v10260 = vrcp.pop %v10169
        %v10261 = vmul.f32 1.0, %v10260
        %v10262 = vrcp.pop %v10170
        %v10263 = vmul.f32 1.0, %v10262
        %v10264 = vrcp.pop %v10171
        %v10265 = vmul.f32 1.0, %v10264
        %v10266 = vrcp.pop %v10172
        %v10267 = vmul.f32 1.0, %v10266
        %v10268 = vrcp.pop %v10173
        %v10269 = vmul.f32 1.0, %v10268
        %v10270 = vmul.f32 %v9983, %v10174
        %v10271 = vmul.f32 %v9985, %v10176
        %v10272 = vmul.f32 %v9987, %v10178
        %v10273 = vmul.f32 %v9989, %v10180
        %v10274 = vmul.f32 %v9991, %v10182
        %v10275 = vmul.f32 %v9993, %v10184
        %v10276 = vmul.f32 %v9995, %v10186
        %v10277 = vmul.f32 %v9997, %v10188
        %v10278 = vmul.f32 %v9999, %v10190
        %v10279 = vmul.f32 %v10001, %v10192
        %v10280 = vmul.f32 %v10003, %v10194
        %v10281 = vmul.f32 %v10005, %v10196
        %v10282 = vmul.f32 %v10007, %v10198
        %v10283 = vmul.f32 %v10009, %v10200
        %v10284 = vmul.f32 %v10011, %v10202
        %v10285 = vmul.f32 %v10013, %v10204
        %v10286 = vmul.f32 %v10015, %v10206
        %v10287 = vmul.f32 %v10017, %v10208
        %v10288 = vmul.f32 %v10019, %v10210
        %v10289 = vmul.f32 %v10021, %v10212
        %v10290 = vmul.f32 %v10023, %v10214
        %v10291 = vmul.f32 %v10025, %v10216
        %v10292 = vmul.f32 %v10027, %v10218
        %v10293 = vmul.f32 %v10029, %v10220
        %v10294 = vmul.f32 %v10031, %v10222
        %v10295 = vmul.f32 %v10033, %v10224
        %v10296 = vmul.f32 %v10035, %v10226
        %v10297 = vmul.f32 %v10037, %v10228
        %v10298 = vmul.f32 %v10039, %v10230
        %v10299 = vmul.f32 %v10041, %v10232
        %v10300 = vmul.f32 %v10043, %v10234
        %v10301 = vmul.f32 %v10045, %v10236
        %v10302 = vmul.f32 %v10047, %v10238
        %v10303 = vmul.f32 %v10049, %v10240
        %v10304 = vmul.f32 %v10051, %v10242
        %v10305 = vmul.f32 %v10053, %v10244
        %v10306 = vmul.f32 %v10055, %v10246
        %v10307 = vmul.f32 %v10057, %v10248
        %v10308 = vmul.f32 %v10059, %v10250
        %v10309 = vmul.f32 %v10061, %v10252
        %v10310 = vmul.f32 %v10063, %v10254
        %v10311 = vmul.f32 %v10065, %v10256
        %v10312 = vmul.f32 %v10067, %v10258
        %v10313 = vmul.f32 %v10069, %v10260
        %v10314 = vmul.f32 %v10071, %v10262
        %v10315 = vmul.f32 %v10073, %v10264
        %v10316 = vmul.f32 %v10075, %v10266
        %v10317 = vmul.f32 %v10077, %v10268
        %v10318 = vsel %vm10078, %v10175, %v10270
        %v10319 = vsel %vm10079, %v10177, %v10271
        %v10320 = vsel %vm10080, %v10179, %v10272
        %v10321 = vsel %vm10081, %v10181, %v10273
        %v10322 = vsel %vm10082, %v10183, %v10274
        %v10323 = vsel %vm10083, %v10185, %v10275
        %v10324 = vsel %vm10084, %v10187, %v10276
        %v10325 = vsel %vm10085, %v10189, %v10277
        %v10326 = vsel %vm10086, %v10191, %v10278
        %v10327 = vsel %vm10087, %v10193, %v10279
        %v10328 = vsel %vm10088, %v10195, %v10280
        %v10329 = vsel %vm10089, %v10197, %v10281
        %v10330 = vsel %vm10090, %v10199, %v10282
        %v10331 = vsel %vm10091, %v10201, %v10283
        %v10332 = vsel %vm10092, %v10203, %v10284
        %v10333 = vsel %vm10093, %v10205, %v10285
        %v10334 = vsel %vm10094, %v10207, %v10286
        %v10335 = vsel %vm10095, %v10209, %v10287
        %v10336 = vsel %vm10096, %v10211, %v10288
        %v10337 = vsel %vm10097, %v10213, %v10289
        %v10338 = vsel %vm10098, %v10215, %v10290
        %v10339 = vsel %vm10099, %v10217, %v10291
        %v10340 = vsel %vm10100, %v10219, %v10292
        %v10341 = vsel %vm10101, %v10221, %v10293
        %v10342 = vsel %vm10102, %v10223, %v10294
        %v10343 = vsel %vm10103, %v10225, %v10295
        %v10344 = vsel %vm10104, %v10227, %v10296
        %v10345 = vsel %vm10105, %v10229, %v10297
        %v10346 = vsel %vm10106, %v10231, %v10298
        %v10347 = vsel %vm10107, %v10233, %v10299
        %v10348 = vsel %vm10108, %v10235, %v10300
        %v10349 = vsel %vm10109, %v10237, %v10301
        %v10350 = vsel %vm10110, %v10239, %v10302
        %v10351 = vsel %vm10111, %v10241, %v10303
        %v10352 = vsel %vm10112, %v10243, %v10304
        %v10353 = vsel %vm10113, %v10245, %v10305
        %v10354 = vsel %vm10114, %v10247, %v10306
        %v10355 = vsel %vm10115, %v10249, %v10307
        %v10356 = vsel %vm10116, %v10251, %v10308
        %v10357 = vsel %vm10117, %v10253, %v10309
        %v10358 = vsel %vm10118, %v10255, %v10310
        %v10359 = vsel %vm10119, %v10257, %v10311
        %v10360 = vsel %vm10120, %v10259, %v10312
        %v10361 = vsel %vm10121, %v10261, %v10313
        %v10362 = vsel %vm10122, %v10263, %v10314
        %v10363 = vsel %vm10123, %v10265, %v10315
        %v10364 = vsel %vm10124, %v10267, %v10316
        %v10365 = vsel %vm10125, %v10269, %v10317
        %v10366 = vlaneseq
        %v10367 = vand.u32 %v10366, 127
        %vm10368 = vcmp.eq.s32.totalorder %v10367, 16
        %10370 = vset.pattern.permute.xlu0 0
        %10371 = vperm.xlu0 %10370, %v6737
        %v10372 = vpop.permute.xlu0 %10371
        %v10422 = vsel %vm6582, %v10319, %v10318
        %vm10423 = vcmask 1042434
        %v10424 = vsel %vm10423, %v10320, %v10422
        %vm10425 = vcmask 1043459
        %v10426 = vsel %vm10425, %v10321, %v10424
        %vm10427 = vcmask 1044484
        %v10428 = vsel %vm10427, %v10322, %v10426
        %vm10429 = vcmask 1045509
        %v10430 = vsel %vm10429, %v10323, %v10428
        %vm10431 = vcmask 1046534
        %v10432 = vsel %vm10431, %v10324, %v10430
        %vm10433 = vcmask 1047559
        %v10434 = vsel %vm10433, %v10325, %v10432
        %v10435 = vsel %vm6582, %v10327, %v10326
        %v10436 = vsel %vm10423, %v10328, %v10435
        %v10437 = vsel %vm10425, %v10329, %v10436
        %v10438 = vsel %vm10427, %v10330, %v10437
        %v10439 = vsel %vm10429, %v10331, %v10438
        %v10440 = vsel %vm10431, %v10332, %v10439
        %v10441 = vsel %vm10433, %v10333, %v10440
        %v10442 = vsel %vm6582, %v10335, %v10334
        %v10443 = vsel %vm10423, %v10336, %v10442
        %v10444 = vsel %vm10425, %v10337, %v10443
        %v10445 = vsel %vm10427, %v10338, %v10444
        %v10446 = vsel %vm10429, %v10339, %v10445
        %v10447 = vsel %vm10431, %v10340, %v10446
        %v10448 = vsel %vm10433, %v10341, %v10447
        %v10449 = vsel %vm6582, %v10343, %v10342
        %v10450 = vsel %vm10423, %v10344, %v10449
        %v10451 = vsel %vm10425, %v10345, %v10450
        %v10452 = vsel %vm10427, %v10346, %v10451
        %v10453 = vsel %vm10429, %v10347, %v10452
        %v10454 = vsel %vm10431, %v10348, %v10453
        %v10455 = vsel %vm10433, %v10349, %v10454
        %v10456 = vsel %vm6582, %v10351, %v10350
        %v10457 = vsel %vm10423, %v10352, %v10456
        %v10458 = vsel %vm10425, %v10353, %v10457
        %v10459 = vsel %vm10427, %v10354, %v10458
        %v10460 = vsel %vm10429, %v10355, %v10459
        %v10461 = vsel %vm10431, %v10356, %v10460
        %v10462 = vsel %vm10433, %v10357, %v10461
        %v10463 = vsel %vm6582, %v10359, %v10358
        %v10464 = vsel %vm10423, %v10360, %v10463
        %v10465 = vsel %vm10425, %v10361, %v10464
        %v10466 = vsel %vm10427, %v10362, %v10465
        %v10467 = vsel %vm10429, %v10363, %v10466
        %v10468 = vsel %vm10431, %v10364, %v10467
        %v10469 = vsel %vm10433, %v10365, %v10468
        %10470 = vset.pattern.permute.xlu0 0
        %10471 = vperm.xlu0 %10470, %v10434
        %v10472 = vpop.permute.xlu0 %10471
        %10473 = vset.pattern.permute.xlu0 0
        %10474 = vperm.xlu0 %10473, %v10441
        %v10475 = vpop.permute.xlu0 %10474
        %10476 = vset.pattern.permute.xlu0 0
        %10477 = vperm.xlu0 %10476, %v10448
        %v10478 = vpop.permute.xlu0 %10477
        %10479 = vset.pattern.permute.xlu0 0
        %10480 = vperm.xlu0 %10479, %v10455
        %v10481 = vpop.permute.xlu0 %10480
        %10482 = vset.pattern.permute.xlu0 0
        %10483 = vperm.xlu0 %10482, %v10462
        %v10484 = vpop.permute.xlu0 %10483
        %10485 = vset.pattern.permute.xlu0 0
        %10486 = vperm.xlu0 %10485, %v10469
        %v10487 = vpop.permute.xlu0 %10486
        %v10488 = vlaneseq
        %v10489 = vshrl.u32 %v10488, 7
        %v10490 = vsub.s32 %v10367, %v10489
        %v10491 = vrot.slane %v10472, %v10490
        %v10492 = vadd.s32 %v10367, 4294967288
        %v10493 = vlaneseq
        %v10494 = vshrl.u32 %v10493, 7
        %v10495 = vsub.s32 %v10492, %v10494
        %v10496 = vrot.slane %v10475, %v10495
        %vm10497 = vcmask 130112
        %v10498 = vsel %vm10497, %v10496, %v10491
        %v10499 = vadd.s32 %v10367, 4294967280
        %v10500 = vlaneseq
        %v10501 = vshrl.u32 %v10500, 7
        %v10502 = vsub.s32 %v10499, %v10501
        %v10503 = vrot.slane %v10478, %v10502
        %vm10504 = vcmask 195712
        %v10505 = vsel %vm10504, %v10503, %v10498
        %v10506 = vlaneseq
        %v10507 = vshrl.u32 %v10506, 7
        %v10508 = vsub.s32 %v10367, %v10507
        %v10509 = vrot.slane %v10481, %v10508
        %v10510 = vlaneseq
        %v10511 = vshrl.u32 %v10510, 7
        %v10512 = vsub.s32 %v10492, %v10511
        %v10513 = vrot.slane %v10484, %v10512
        %v10514 = vsel %vm10497, %v10513, %v10509
        %v10515 = vlaneseq
        %v10516 = vshrl.u32 %v10515, 7
        %v10517 = vsub.s32 %v10499, %v10516
        %v10518 = vrot.slane %v10487, %v10517
        %v10519 = vsel %vm10504, %v10518, %v10514
        %v10520 = vsel %vm6582, %v10519, %v10505
        %v10522 = vsel %vm10368, %v10372, %v10520
        %v10525 = vunpack.c.l.s4 1966171168
        %v10526 = vunpack.c.0.s8 %v10525
        %v10527 = vlaneseq
        %v10528 = vshrl.u32 %v10527, 7
        %v10529 = vsub.s32 %v10526, %v10528
        %v10530 = vrot.slane %v10522, %v10529
        %v10531 = vcombine.high %v10530, %v10530
        %v10533 = vunpack.c.l.s4 1966171168
        %v10534 = vunpack.c.0.s8 %v10533
        %v10535 = vlaneseq
        %v10536 = vshrl.u32 %v10535, 7
        %v10537 = vsub.s32 %v10534, %v10536
        %v10538 = vrot.slane %v10530, %v10537
        %v10540 = vunpack.c.l.s4 1966171168
        %v10541 = vunpack.c.0.s8 %v10540
        %v10542 = vlaneseq
        %v10543 = vshrl.u32 %v10542, 7
        %v10544 = vsub.s32 %v10541, %v10543
        %v10545 = vrot.slane %v10531, %v10544
        %vm10548 = vcmask 188416
        %10549 = vst.msk [vmem:[%s1085] sm:$0x1] %vm10548, %v10538
        %10550 = vst.msk [vmem:[%s1085 + $0x1] sm:$0x1] %vm10548, %v10545
        %s10551 = sand.u32 %s569, 1
        %s10552 = scalar_lea.sflag [#allocation6], %s10551
        %s10553 = sand.u32 %s569, 1
        %s10554 = smul.addr %s10553, 2
        %s10555 = scalar_lea.vmem [#allocation37], %s10554
        // Predicated region
        $region197: #{deep_rna_dti_forward.1} parent=111 // pred_check
          %p10556 = pneg %p579
        $region198: #{deep_rna_dti_forward.1} parent=111 // pred_check_branch
          %10558 = sbr.rel (%p10556) target = $region200
        $region199: #{deep_rna_dti_forward.1} parent=111 // pred_region
          %s10559 = smul.u32 2, %s58
          %s10561 = ssub.s32 32, 32
          %10562 = vsyncadd %s10552, %s10561
          %s10563 = smul.addr %s10559, 16
          %s10564 = scalar_lea.hbm %s23, %s10563
          %s10565 = sshll.u32 %s10555, 4
          %s10566 = int_to_ptr.vmem [resolvable:$true] %s10565
          %10571 = dma.vmem_to_hbm [thread:$0]  %s10566, 32, %s10564, %s10552, 16, 16, 1
        $region200: #{deep_rna_dti_forward.1} parent=111 // pred_fallthru
          _
      $region112: #{deep_rna_dti_forward.1} parent=5 // pred_fallthru
        _
      %p10572 = scmp.le.s32.totalorder 2, %s53
      // Predicated region
      $region201: #{deep_rna_dti_forward.1} parent=5 // pred_check
        %p10573 = pneg %p10572
      $region202: #{deep_rna_dti_forward.1} parent=5 // pred_check_branch
        %10575 = sbr.rel (%p10573) target = $region204
      $region203: #{deep_rna_dti_forward.1} parent=5 // pred_region
        %s10576 = ssub.s32 %s53, 2
        // Predicated region
        $region205: #{deep_rna_dti_forward.1} parent=203 // pred_check
          %p10577 = pneg %p585
        $region206: #{deep_rna_dti_forward.1} parent=203 // pred_check_branch
          %10579 = sbr.rel (%p10577) target = $region208
        $region207: #{deep_rna_dti_forward.1} parent=203 // pred_region
          %s10580 = sand.u32 %s570, 1
          %s10581 = scalar_lea.sflag [#allocation6], %s10580
          %s10582 = sand.u32 %s570, 1
          %s10583 = smul.addr %s10582, 2
          %s10584 = scalar_lea.vmem [#allocation37], %s10583
          %10585 = dma.done %s10581, 32
        $region208: #{deep_rna_dti_forward.1} parent=203 // pred_fallthru
          _
      $region204: #{deep_rna_dti_forward.1} parent=5 // pred_fallthru
        _
    $region6: #{deep_rna_dti_forward.1} parent=1 // loop_footer
      %s57 = sadd.s32 1, %s53
    $region7: #{deep_rna_dti_forward.1} parent=1 // loop_footer_branch
      %52 = sbr.rel target = $region3
    $region8: #{deep_rna_dti_forward.1} parent=1 // loop_exit
      _
    %10586 = vsyncpa [#allocation5], 1
    %s10587 = scalar_lea.sflag [#allocation5], 1
    %10588 = vsyncpa %s10587, 1
    %10589 = vsyncpa [#allocation8], 1
    %s10590 = scalar_lea.sflag [#allocation8], 1
    %10591 = vsyncpa %s10590, 1
    %10592 = vsyncpa [#allocation11], 1
    %s10593 = scalar_lea.sflag [#allocation11], 1
    %10594 = vsyncpa %s10593, 1
    %10595 = vsyncpa [#allocation14], 1
    %10596 = vsyncpa [#allocation17], 1
    %10597 = vsyncpa [#allocation20], 1
    %10598 = vsyncpa [#allocation23], 1
    %10599 = vsyncpa [#allocation26], 1
    %10600 = vsyncpa [#allocation29], 1
    %10601 = vsyncpa [#allocation32], 1
    %10602 = vsyncpa [#allocation35], 1
    %10603 = vsyncpa [#allocation6], 1
    %s10604 = scalar_lea.sflag [#allocation6], 1
    %10605 = vsyncpa %s10604, 1

</llo_original>
